<compile_context>
chip_gen: v7x
topology: tpu7x:2x2x1
jax: 0.10.0
libtpu: 0.0.40
codegen_flags: <defaults>
</compile_context>

<pallas_src>
import functools

import jax
import jax.numpy as jnp
import numpy as np
from jax import lax
from jax.experimental import pallas as pl
from jax.experimental.pallas import tpu as pltpu


def _residual_inner_kernel(x_ref, w_ref, mask_ref, gamma_ref, beta_ref, o_ref,
                           *, dims, off):
    """One grid step = one (sample, group) pair, fully resident in VMEM.

    x_ref:     (1, C, Pext)    bf16  zero-extended flat padded sample
    w_ref:     (1, 27, cg, C)  bf16  conv weights for this group's out-channels
    mask_ref:  (1, Pp)         f32   1.0 at interior voxels, else 0.0
    gamma_ref: (1, cg, 1)      f32   GroupNorm scale (this group)
    beta_ref:  (1, cg, 1)      f32   GroupNorm shift (this group)
    o_ref:     (1, 1, cg, Pp)  f32   ReLU(GN(conv(x))), flat padded layout
    """
    D, H, W = dims
    cg = o_ref.shape[2]
    Pp = o_ref.shape[3]
    n_vox = D * H * W
    eps = 1e-5
    w2 = W + 2
    h2w2 = (H + 2) * (W + 2)

    xb = x_ref[0]          # (C, Pext) bf16 — loaded once, sliced 27x below
    wg = w_ref[0]          # (27, cg, C) bf16

    # ---- Conv3d: 27 tap-accumulating MXU matmuls on lane-shifted flat views.
    # (A shift of kd*(H+2)(W+2)+kh*(W+2)+kw in flat-padded space is exactly the
    # 3-D window shift for every interior voxel.)  No im2col store+reload.
    acc = None
    tap = 0
    for kd in range(3):
        for kh in range(3):
            for kw in range(3):
                shift = (kd - 1) * h2w2 + (kh - 1) * w2 + (kw - 1)
                start = off + shift                               # static, >= 0
                xs = xb[:, start:start + Pp]                      # (C, Pp) bf16
                d = jnp.dot(wg[tap], xs, preferred_element_type=jnp.float32)
                acc = d if acc is None else acc + d
                tap += 1

    # ---- GroupNorm for this (sample, group): masked mean + masked CENTERED
    # sum-of-squares (full reductions -> (1,1)), fused normalize+affine+ReLU.
    mask = mask_ref[...]                                          # (1, Pp)
    cnt = float(cg * n_vox)
    mean = jnp.sum(acc * mask, keepdims=True) / cnt               # (1, 1)
    q = jnp.sum(((acc - mean) * mask) ** 2, keepdims=True)        # (1, 1)
    inv = lax.rsqrt(q / cnt + eps)                                # (1, 1)

    out = (acc - mean) * (inv * gamma_ref[0]) + beta_ref[0]       # (cg, Pp)
    o_ref[0, 0] = jnp.maximum(out, 0.0).astype(o_ref.dtype)       # lane-dense


def _vmem_capacity_bytes():
    """Physical VMEM per core; falls back to the smallest real value (v7x)."""
    try:
        cap = int(pltpu.get_tpu_info().vmem_capacity_bytes)
        if cap > 0:
            return cap
    except Exception:
        pass
    return 64 << 20


@functools.partial(jax.jit, static_argnames=("groups",))
def residual_inner_pallas(x_ncdhw, w_oidhw, gamma, beta, *, groups):
    """x: (N, C, D, H, W) f32; w: (C, C, 3, 3, 3) PyTorch Conv3d OIDHW layout."""
    N, C, D, H, W = x_ncdhw.shape
    if C % groups != 0:
        raise ValueError("channels must be divisible by groups (PyTorch GroupNorm)")
    cg = C // groups

    P = (D + 2) * (H + 2) * (W + 2)                 # flat padded volume
    Pp = ((P + 127) // 128) * 128                   # lane-dense flat length
    max_t = (H + 2) * (W + 2) + (W + 2) + 1         # largest |tap shift|
    OFF = ((max_t + 127) // 128) * 128              # zero extension on each side
    Pext = OFF + Pp + OFF

    # Activations to bf16 in the wrapper (mem-bound regime) — conv still
    # accumulates in f32 and GroupNorm statistics stay f32.
    xpad = jnp.pad(x_ncdhw, ((0, 0), (0, 0), (1, 1), (1, 1), (1, 1)))
    x_flat = xpad.reshape(N, C, P)
    x_ext = jnp.pad(x_flat, ((0, 0), (0, 0), (OFF, OFF + (Pp - P))))
    x_ext = x_ext.astype(jnp.bfloat16)

    # (Co, Ci, kd, kh, kw) -> (groups, 27, cg, Ci), tap-major within a group.
    # (If weights are static across calls, hoist this repack out of the jit.)
    w_t = jnp.transpose(w_oidhw, (2, 3, 4, 0, 1)).reshape(27, C, C)
    w_t = w_t.reshape(27, groups, cg, C).transpose(1, 0, 2, 3)
    w_t = w_t.astype(jnp.bfloat16)

    # Interior-voxel mask over the flat padded volume (GroupNorm statistics).
    dz = jnp.arange(D + 2)[:, None, None]
    hy = jnp.arange(H + 2)[None, :, None]
    wx = jnp.arange(W + 2)[None, None, :]
    interior = ((dz >= 1) & (dz <= D) & (hy >= 1) & (hy <= H)
                & (wx >= 1) & (wx <= W))
    mask = jnp.pad(interior.reshape(1, P).astype(jnp.float32),
                   ((0, 0), (0, Pp - P)))

    gamma3 = gamma.reshape(groups, cg, 1).astype(jnp.float32)
    beta3 = beta.reshape(groups, cg, 1).astype(jnp.float32)

    kernel = functools.partial(_residual_inner_kernel, dims=(D, H, W), off=OFF)

    # VMEM budget: double-buffered input/output blocks, per-group weights,
    # mask, accumulator/working set, plus headroom for Mosaic internal scratch.
    need = (2 * C * Pext * 2          # input block (bf16), double-buffered
            + 2 * cg * Pp * 4         # output block (f32), double-buffered
            + 2 * 27 * cg * C * 2     # per-group weights, double-buffered
            + 2 * Pp * 4              # interior mask
            + C * Pext * 2            # xb working copy
            + 4 * cg * Pp * 4         # acc / fused temporaries
            + (8 << 20))              # headroom
    cap = _vmem_capacity_bytes()
    vmem_limit = int(min(max(need, 32 << 20), int(cap * 0.85)))

    cost = pl.CostEstimate(
        flops=int(2 * 27 * C * C * Pp * N),
        transcendentals=int(N * groups),
        bytes_accessed=int(N * C * Pext * 2 + 27 * C * C * 2 + Pp * 4
                           + 2 * C * 4 + N * C * Pp * 4))

    # TODO(synk): for very large volumes (v7x's 64 MiB VMEM) add a lane-tile
    # grid axis with OFF-sized halos and a two-pass GroupNorm ("arbitrary"
    # reduction axis); for large C prefer one deep-K matmul (M=C) per tile
    # instead of the per-group output-channel split used here.
    out_flat = pl.pallas_call(
        kernel,
        out_shape=jax.ShapeDtypeStruct((N, groups, cg, Pp), jnp.float32),
        grid=(N, groups),
        in_specs=[
            pl.BlockSpec((1, C, Pext), lambda n, g: (n, 0, 0)),
            pl.BlockSpec((1, 27, cg, C), lambda n, g: (g, 0, 0, 0)),
            pl.BlockSpec((1, Pp), lambda n, g: (0, 0)),
            pl.BlockSpec((1, cg, 1), lambda n, g: (g, 0, 0)),
            pl.BlockSpec((1, cg, 1), lambda n, g: (g, 0, 0)),
        ],
        out_specs=pl.BlockSpec((1, 1, cg, Pp), lambda n, g: (n, g, 0, 0)),
        compiler_params=pltpu.CompilerParams(
            dimension_semantics=("parallel", "parallel"),
            vmem_limit_bytes=vmem_limit),
        cost_estimate=cost,
    )(x_ext, w_t, mask, gamma3, beta3)

    # TODO(synk): when chaining ResidualInner blocks, keep this flat-padded
    # (N, groups, cg, Pp) layout (optionally bf16) between blocks and unpad
    # only once at the end to avoid an extra activation HBM pass per block.
    out = out_flat.reshape(N, C, Pp)[:, :, :P].reshape(N, C, D + 2, H + 2, W + 2)
    return out[:, :, 1:D + 1, 1:H + 1, 1:W + 1]


def _reference(x_ncdhw, w_oidhw, gamma, beta, groups):
    """Pure-JAX f32 reference mirroring PyTorch semantics."""
    y = lax.conv_general_dilated(
        x_ncdhw, w_oidhw, window_strides=(1, 1, 1), padding="SAME",
        dimension_numbers=("NCDHW", "OIDHW", "NCDHW"))
    N, C, D, H, W = y.shape
    yg = y.reshape(N, groups, -1)
    mu = jnp.mean(yg, axis=-1, keepdims=True)
    var = jnp.mean((yg - mu) ** 2, axis=-1, keepdims=True)
    yn = ((yg - mu) * lax.rsqrt(var + 1e-5)).reshape(N, C, D, H, W)
    yn = yn * gamma[None, :, None, None, None] + beta[None, :, None, None, None]
    return jnp.maximum(yn, 0.0)


if __name__ == "__main__":
    N, C, D, H, W = 2, 16, 8, 8, 8
    groups = 2

    key = jax.random.PRNGKey(0)
    kx, kw, kg, kb = jax.random.split(key, 4)

    x = jax.random.normal(kx, (N, C, D, H, W), jnp.float32)
    w = jax.random.normal(kw, (C, C, 3, 3, 3), jnp.float32) * 0.1   # Conv3d weight
    gamma = 1.0 + 0.1 * jax.random.normal(kg, (C,), jnp.float32)    # GN weight
    beta = 0.1 * jax.random.normal(kb, (C,), jnp.float32)           # GN bias

    out = jax.block_until_ready(
        residual_inner_pallas(x, w, gamma, beta, groups=groups))
    ref = jax.block_until_ready(_reference(x, w, gamma, beta, groups))

    # Conv operands are bf16 on the MXU with f32 accumulation and f32 GroupNorm
    # statistics -> compare at a bf16-appropriate tolerance.
    np.testing.assert_allclose(np.asarray(out), np.asarray(ref),
                               rtol=2e-2, atol=2e-2)

    print("KERNEL_OK")
</pallas_src>

<mosaic_0001>
module attributes {stable_mosaic.version = 11 : i64} {
  func.func @_residual_inner_kernel(%arg0: i32, %arg1: i32, %arg2: memref<1x16x1280xbf16, #tpu.memory_space<vmem>>, %arg3: memref<1x27x8x16xbf16, #tpu.memory_space<vmem>>, %arg4: memref<1x1024xf32, #tpu.memory_space<vmem>>, %arg5: memref<1x8x1xf32, #tpu.memory_space<vmem>>, %arg6: memref<1x8x1xf32, #tpu.memory_space<vmem>>, %arg7: memref<1x1x8x1024xf32, #tpu.memory_space<vmem>>) attributes {dimension_semantics = [#tpu.dimension_semantics<parallel>, #tpu.dimension_semantics<parallel>], iteration_bounds = array<i64: 2, 2>, scalar_prefetch = 0 : i64, scratch_operands = 0 : i64, tpu.core_type = #tpu.core_type<tc>, window_params = [{transform_indices = @transform_0, window_bounds = array<i64: 1, 16, 1280>}, {transform_indices = @transform_1, window_bounds = array<i64: 1, 27, 8, 16>}, {pipeline_mode = #tpu.pipeline_mode<synchronous>, transform_indices = @transform_2, window_bounds = array<i64: 1, 1024>}, {transform_indices = @transform_3, window_bounds = array<i64: 1, 8, 1>}, {transform_indices = @transform_4, window_bounds = array<i64: 1, 8, 1>}, {transform_indices = @transform_5, window_bounds = array<i64: 1, 1, 8, 1024>}]} {
    %c0 = arith.constant 0 : index
    %c0_0 = arith.constant 0 : index
    %c0_1 = arith.constant 0 : index
    %0 = vector.load %arg2[%c0, %c0_0, %c0_1] : memref<1x16x1280xbf16, #tpu.memory_space<vmem>>, vector<1x16x1280xbf16>
    %1 = vector.shape_cast %0 : vector<1x16x1280xbf16> to vector<16x1280xbf16>
    %c0_2 = arith.constant 0 : index
    %c0_3 = arith.constant 0 : index
    %c0_4 = arith.constant 0 : index
    %c0_5 = arith.constant 0 : index
    %2 = vector.load %arg3[%c0_2, %c0_3, %c0_4, %c0_5] : memref<1x27x8x16xbf16, #tpu.memory_space<vmem>>, vector<1x27x8x16xbf16>
    %3 = vector.shape_cast %2 : vector<1x27x8x16xbf16> to vector<27x8x16xbf16>
    %4 = vector.extract_strided_slice %1 {offsets = [0, 17], sizes = [16, 1024], strides = [1, 1]} : vector<16x1280xbf16> to vector<16x1024xbf16>
    %5 = vector.extract_strided_slice %3 {offsets = [0, 0, 0], sizes = [1, 8, 16], strides = [1, 1, 1]} : vector<27x8x16xbf16> to vector<1x8x16xbf16>
    %6 = vector.shape_cast %5 : vector<1x8x16xbf16> to vector<8x16xbf16>
    %cst = arith.constant dense<0.000000e+00> : vector<8x1024xf32>
    %7 = tpu.matmul %6, %4, %cst {dimension_numbers = #tpu.dot_dimension_numbers<[1], [0], [0], [1], [0, 0, 1, 1], [], []>} : vector<8x16xbf16>, vector<16x1024xbf16>, vector<8x1024xf32> -> vector<8x1024xf32>
    %8 = vector.extract_strided_slice %1 {offsets = [0, 18], sizes = [16, 1024], strides = [1, 1]} : vector<16x1280xbf16> to vector<16x1024xbf16>
    %9 = vector.extract_strided_slice %3 {offsets = [1, 0, 0], sizes = [1, 8, 16], strides = [1, 1, 1]} : vector<27x8x16xbf16> to vector<1x8x16xbf16>
    %10 = vector.shape_cast %9 : vector<1x8x16xbf16> to vector<8x16xbf16>
    %cst_6 = arith.constant dense<0.000000e+00> : vector<8x1024xf32>
    %11 = tpu.matmul %10, %8, %cst_6 {dimension_numbers = #tpu.dot_dimension_numbers<[1], [0], [0], [1], [0, 0, 1, 1], [], []>} : vector<8x16xbf16>, vector<16x1024xbf16>, vector<8x1024xf32> -> vector<8x1024xf32>
    %12 = arith.addf %7, %11 : vector<8x1024xf32>
    %13 = vector.extract_strided_slice %1 {offsets = [0, 19], sizes = [16, 1024], strides = [1, 1]} : vector<16x1280xbf16> to vector<16x1024xbf16>
    %14 = vector.extract_strided_slice %3 {offsets = [2, 0, 0], sizes = [1, 8, 16], strides = [1, 1, 1]} : vector<27x8x16xbf16> to vector<1x8x16xbf16>
    %15 = vector.shape_cast %14 : vector<1x8x16xbf16> to vector<8x16xbf16>
    %cst_7 = arith.constant dense<0.000000e+00> : vector<8x1024xf32>
    %16 = tpu.matmul %15, %13, %cst_7 {dimension_numbers = #tpu.dot_dimension_numbers<[1], [0], [0], [1], [0, 0, 1, 1], [], []>} : vector<8x16xbf16>, vector<16x1024xbf16>, vector<8x1024xf32> -> vector<8x1024xf32>
    %17 = arith.addf %12, %16 : vector<8x1024xf32>
    %18 = vector.extract_strided_slice %1 {offsets = [0, 27], sizes = [16, 1024], strides = [1, 1]} : vector<16x1280xbf16> to vector<16x1024xbf16>
    %19 = vector.extract_strided_slice %3 {offsets = [3, 0, 0], sizes = [1, 8, 16], strides = [1, 1, 1]} : vector<27x8x16xbf16> to vector<1x8x16xbf16>
    %20 = vector.shape_cast %19 : vector<1x8x16xbf16> to vector<8x16xbf16>
    %cst_8 = arith.constant dense<0.000000e+00> : vector<8x1024xf32>
    %21 = tpu.matmul %20, %18, %cst_8 {dimension_numbers = #tpu.dot_dimension_numbers<[1], [0], [0], [1], [0, 0, 1, 1], [], []>} : vector<8x16xbf16>, vector<16x1024xbf16>, vector<8x1024xf32> -> vector<8x1024xf32>
    %22 = arith.addf %17, %21 : vector<8x1024xf32>
    %23 = vector.extract_strided_slice %1 {offsets = [0, 28], sizes = [16, 1024], strides = [1, 1]} : vector<16x1280xbf16> to vector<16x1024xbf16>
    %24 = vector.extract_strided_slice %3 {offsets = [4, 0, 0], sizes = [1, 8, 16], strides = [1, 1, 1]} : vector<27x8x16xbf16> to vector<1x8x16xbf16>
    %25 = vector.shape_cast %24 : vector<1x8x16xbf16> to vector<8x16xbf16>
    %cst_9 = arith.constant dense<0.000000e+00> : vector<8x1024xf32>
    %26 = tpu.matmul %25, %23, %cst_9 {dimension_numbers = #tpu.dot_dimension_numbers<[1], [0], [0], [1], [0, 0, 1, 1], [], []>} : vector<8x16xbf16>, vector<16x1024xbf16>, vector<8x1024xf32> -> vector<8x1024xf32>
    %27 = arith.addf %22, %26 : vector<8x1024xf32>
    %28 = vector.extract_strided_slice %1 {offsets = [0, 29], sizes = [16, 1024], strides = [1, 1]} : vector<16x1280xbf16> to vector<16x1024xbf16>
    %29 = vector.extract_strided_slice %3 {offsets = [5, 0, 0], sizes = [1, 8, 16], strides = [1, 1, 1]} : vector<27x8x16xbf16> to vector<1x8x16xbf16>
    %30 = vector.shape_cast %29 : vector<1x8x16xbf16> to vector<8x16xbf16>
    %cst_10 = arith.constant dense<0.000000e+00> : vector<8x1024xf32>
    %31 = tpu.matmul %30, %28, %cst_10 {dimension_numbers = #tpu.dot_dimension_numbers<[1], [0], [0], [1], [0, 0, 1, 1], [], []>} : vector<8x16xbf16>, vector<16x1024xbf16>, vector<8x1024xf32> -> vector<8x1024xf32>
    %32 = arith.addf %27, %31 : vector<8x1024xf32>
    %33 = vector.extract_strided_slice %1 {offsets = [0, 37], sizes = [16, 1024], strides = [1, 1]} : vector<16x1280xbf16> to vector<16x1024xbf16>
    %34 = vector.extract_strided_slice %3 {offsets = [6, 0, 0], sizes = [1, 8, 16], strides = [1, 1, 1]} : vector<27x8x16xbf16> to vector<1x8x16xbf16>
    %35 = vector.shape_cast %34 : vector<1x8x16xbf16> to vector<8x16xbf16>
    %cst_11 = arith.constant dense<0.000000e+00> : vector<8x1024xf32>
    %36 = tpu.matmul %35, %33, %cst_11 {dimension_numbers = #tpu.dot_dimension_numbers<[1], [0], [0], [1], [0, 0, 1, 1], [], []>} : vector<8x16xbf16>, vector<16x1024xbf16>, vector<8x1024xf32> -> vector<8x1024xf32>
    %37 = arith.addf %32, %36 : vector<8x1024xf32>
    %38 = vector.extract_strided_slice %1 {offsets = [0, 38], sizes = [16, 1024], strides = [1, 1]} : vector<16x1280xbf16> to vector<16x1024xbf16>
    %39 = vector.extract_strided_slice %3 {offsets = [7, 0, 0], sizes = [1, 8, 16], strides = [1, 1, 1]} : vector<27x8x16xbf16> to vector<1x8x16xbf16>
    %40 = vector.shape_cast %39 : vector<1x8x16xbf16> to vector<8x16xbf16>
    %cst_12 = arith.constant dense<0.000000e+00> : vector<8x1024xf32>
    %41 = tpu.matmul %40, %38, %cst_12 {dimension_numbers = #tpu.dot_dimension_numbers<[1], [0], [0], [1], [0, 0, 1, 1], [], []>} : vector<8x16xbf16>, vector<16x1024xbf16>, vector<8x1024xf32> -> vector<8x1024xf32>
    %42 = arith.addf %37, %41 : vector<8x1024xf32>
    %43 = vector.extract_strided_slice %1 {offsets = [0, 39], sizes = [16, 1024], strides = [1, 1]} : vector<16x1280xbf16> to vector<16x1024xbf16>
    %44 = vector.extract_strided_slice %3 {offsets = [8, 0, 0], sizes = [1, 8, 16], strides = [1, 1, 1]} : vector<27x8x16xbf16> to vector<1x8x16xbf16>
    %45 = vector.shape_cast %44 : vector<1x8x16xbf16> to vector<8x16xbf16>
    %cst_13 = arith.constant dense<0.000000e+00> : vector<8x1024xf32>
    %46 = tpu.matmul %45, %43, %cst_13 {dimension_numbers = #tpu.dot_dimension_numbers<[1], [0], [0], [1], [0, 0, 1, 1], [], []>} : vector<8x16xbf16>, vector<16x1024xbf16>, vector<8x1024xf32> -> vector<8x1024xf32>
    %47 = arith.addf %42, %46 : vector<8x1024xf32>
    %48 = vector.extract_strided_slice %1 {offsets = [0, 117], sizes = [16, 1024], strides = [1, 1]} : vector<16x1280xbf16> to vector<16x1024xbf16>
    %49 = vector.extract_strided_slice %3 {offsets = [9, 0, 0], sizes = [1, 8, 16], strides = [1, 1, 1]} : vector<27x8x16xbf16> to vector<1x8x16xbf16>
    %50 = vector.shape_cast %49 : vector<1x8x16xbf16> to vector<8x16xbf16>
    %cst_14 = arith.constant dense<0.000000e+00> : vector<8x1024xf32>
    %51 = tpu.matmul %50, %48, %cst_14 {dimension_numbers = #tpu.dot_dimension_numbers<[1], [0], [0], [1], [0, 0, 1, 1], [], []>} : vector<8x16xbf16>, vector<16x1024xbf16>, vector<8x1024xf32> -> vector<8x1024xf32>
    %52 = arith.addf %47, %51 : vector<8x1024xf32>
    %53 = vector.extract_strided_slice %1 {offsets = [0, 118], sizes = [16, 1024], strides = [1, 1]} : vector<16x1280xbf16> to vector<16x1024xbf16>
    %54 = vector.extract_strided_slice %3 {offsets = [10, 0, 0], sizes = [1, 8, 16], strides = [1, 1, 1]} : vector<27x8x16xbf16> to vector<1x8x16xbf16>
    %55 = vector.shape_cast %54 : vector<1x8x16xbf16> to vector<8x16xbf16>
    %cst_15 = arith.constant dense<0.000000e+00> : vector<8x1024xf32>
    %56 = tpu.matmul %55, %53, %cst_15 {dimension_numbers = #tpu.dot_dimension_numbers<[1], [0], [0], [1], [0, 0, 1, 1], [], []>} : vector<8x16xbf16>, vector<16x1024xbf16>, vector<8x1024xf32> -> vector<8x1024xf32>
    %57 = arith.addf %52, %56 : vector<8x1024xf32>
    %58 = vector.extract_strided_slice %1 {offsets = [0, 119], sizes = [16, 1024], strides = [1, 1]} : vector<16x1280xbf16> to vector<16x1024xbf16>
    %59 = vector.extract_strided_slice %3 {offsets = [11, 0, 0], sizes = [1, 8, 16], strides = [1, 1, 1]} : vector<27x8x16xbf16> to vector<1x8x16xbf16>
    %60 = vector.shape_cast %59 : vector<1x8x16xbf16> to vector<8x16xbf16>
    %cst_16 = arith.constant dense<0.000000e+00> : vector<8x1024xf32>
    %61 = tpu.matmul %60, %58, %cst_16 {dimension_numbers = #tpu.dot_dimension_numbers<[1], [0], [0], [1], [0, 0, 1, 1], [], []>} : vector<8x16xbf16>, vector<16x1024xbf16>, vector<8x1024xf32> -> vector<8x1024xf32>
    %62 = arith.addf %57, %61 : vector<8x1024xf32>
    %63 = vector.extract_strided_slice %1 {offsets = [0, 127], sizes = [16, 1024], strides = [1, 1]} : vector<16x1280xbf16> to vector<16x1024xbf16>
    %64 = vector.extract_strided_slice %3 {offsets = [12, 0, 0], sizes = [1, 8, 16], strides = [1, 1, 1]} : vector<27x8x16xbf16> to vector<1x8x16xbf16>
    %65 = vector.shape_cast %64 : vector<1x8x16xbf16> to vector<8x16xbf16>
    %cst_17 = arith.constant dense<0.000000e+00> : vector<8x1024xf32>
    %66 = tpu.matmul %65, %63, %cst_17 {dimension_numbers = #tpu.dot_dimension_numbers<[1], [0], [0], [1], [0, 0, 1, 1], [], []>} : vector<8x16xbf16>, vector<16x1024xbf16>, vector<8x1024xf32> -> vector<8x1024xf32>
    %67 = arith.addf %62, %66 : vector<8x1024xf32>
    %68 = vector.extract_strided_slice %1 {offsets = [0, 128], sizes = [16, 1024], strides = [1, 1]} : vector<16x1280xbf16> to vector<16x1024xbf16>
    %69 = vector.extract_strided_slice %3 {offsets = [13, 0, 0], sizes = [1, 8, 16], strides = [1, 1, 1]} : vector<27x8x16xbf16> to vector<1x8x16xbf16>
    %70 = vector.shape_cast %69 : vector<1x8x16xbf16> to vector<8x16xbf16>
    %cst_18 = arith.constant dense<0.000000e+00> : vector<8x1024xf32>
    %71 = tpu.matmul %70, %68, %cst_18 {dimension_numbers = #tpu.dot_dimension_numbers<[1], [0], [0], [1], [0, 0, 1, 1], [], []>} : vector<8x16xbf16>, vector<16x1024xbf16>, vector<8x1024xf32> -> vector<8x1024xf32>
    %72 = arith.addf %67, %71 : vector<8x1024xf32>
    %73 = vector.extract_strided_slice %1 {offsets = [0, 129], sizes = [16, 1024], strides = [1, 1]} : vector<16x1280xbf16> to vector<16x1024xbf16>
    %74 = vector.extract_strided_slice %3 {offsets = [14, 0, 0], sizes = [1, 8, 16], strides = [1, 1, 1]} : vector<27x8x16xbf16> to vector<1x8x16xbf16>
    %75 = vector.shape_cast %74 : vector<1x8x16xbf16> to vector<8x16xbf16>
    %cst_19 = arith.constant dense<0.000000e+00> : vector<8x1024xf32>
    %76 = tpu.matmul %75, %73, %cst_19 {dimension_numbers = #tpu.dot_dimension_numbers<[1], [0], [0], [1], [0, 0, 1, 1], [], []>} : vector<8x16xbf16>, vector<16x1024xbf16>, vector<8x1024xf32> -> vector<8x1024xf32>
    %77 = arith.addf %72, %76 : vector<8x1024xf32>
    %78 = vector.extract_strided_slice %1 {offsets = [0, 137], sizes = [16, 1024], strides = [1, 1]} : vector<16x1280xbf16> to vector<16x1024xbf16>
    %79 = vector.extract_strided_slice %3 {offsets = [15, 0, 0], sizes = [1, 8, 16], strides = [1, 1, 1]} : vector<27x8x16xbf16> to vector<1x8x16xbf16>
    %80 = vector.shape_cast %79 : vector<1x8x16xbf16> to vector<8x16xbf16>
    %cst_20 = arith.constant dense<0.000000e+00> : vector<8x1024xf32>
    %81 = tpu.matmul %80, %78, %cst_20 {dimension_numbers = #tpu.dot_dimension_numbers<[1], [0], [0], [1], [0, 0, 1, 1], [], []>} : vector<8x16xbf16>, vector<16x1024xbf16>, vector<8x1024xf32> -> vector<8x1024xf32>
    %82 = arith.addf %77, %81 : vector<8x1024xf32>
    %83 = vector.extract_strided_slice %1 {offsets = [0, 138], sizes = [16, 1024], strides = [1, 1]} : vector<16x1280xbf16> to vector<16x1024xbf16>
    %84 = vector.extract_strided_slice %3 {offsets = [16, 0, 0], sizes = [1, 8, 16], strides = [1, 1, 1]} : vector<27x8x16xbf16> to vector<1x8x16xbf16>
    %85 = vector.shape_cast %84 : vector<1x8x16xbf16> to vector<8x16xbf16>
    %cst_21 = arith.constant dense<0.000000e+00> : vector<8x1024xf32>
    %86 = tpu.matmul %85, %83, %cst_21 {dimension_numbers = #tpu.dot_dimension_numbers<[1], [0], [0], [1], [0, 0, 1, 1], [], []>} : vector<8x16xbf16>, vector<16x1024xbf16>, vector<8x1024xf32> -> vector<8x1024xf32>
    %87 = arith.addf %82, %86 : vector<8x1024xf32>
    %88 = vector.extract_strided_slice %1 {offsets = [0, 139], sizes = [16, 1024], strides = [1, 1]} : vector<16x1280xbf16> to vector<16x1024xbf16>
    %89 = vector.extract_strided_slice %3 {offsets = [17, 0, 0], sizes = [1, 8, 16], strides = [1, 1, 1]} : vector<27x8x16xbf16> to vector<1x8x16xbf16>
    %90 = vector.shape_cast %89 : vector<1x8x16xbf16> to vector<8x16xbf16>
    %cst_22 = arith.constant dense<0.000000e+00> : vector<8x1024xf32>
    %91 = tpu.matmul %90, %88, %cst_22 {dimension_numbers = #tpu.dot_dimension_numbers<[1], [0], [0], [1], [0, 0, 1, 1], [], []>} : vector<8x16xbf16>, vector<16x1024xbf16>, vector<8x1024xf32> -> vector<8x1024xf32>
    %92 = arith.addf %87, %91 : vector<8x1024xf32>
    %93 = vector.extract_strided_slice %1 {offsets = [0, 217], sizes = [16, 1024], strides = [1, 1]} : vector<16x1280xbf16> to vector<16x1024xbf16>
    %94 = vector.extract_strided_slice %3 {offsets = [18, 0, 0], sizes = [1, 8, 16], strides = [1, 1, 1]} : vector<27x8x16xbf16> to vector<1x8x16xbf16>
    %95 = vector.shape_cast %94 : vector<1x8x16xbf16> to vector<8x16xbf16>
    %cst_23 = arith.constant dense<0.000000e+00> : vector<8x1024xf32>
    %96 = tpu.matmul %95, %93, %cst_23 {dimension_numbers = #tpu.dot_dimension_numbers<[1], [0], [0], [1], [0, 0, 1, 1], [], []>} : vector<8x16xbf16>, vector<16x1024xbf16>, vector<8x1024xf32> -> vector<8x1024xf32>
    %97 = arith.addf %92, %96 : vector<8x1024xf32>
    %98 = vector.extract_strided_slice %1 {offsets = [0, 218], sizes = [16, 1024], strides = [1, 1]} : vector<16x1280xbf16> to vector<16x1024xbf16>
    %99 = vector.extract_strided_slice %3 {offsets = [19, 0, 0], sizes = [1, 8, 16], strides = [1, 1, 1]} : vector<27x8x16xbf16> to vector<1x8x16xbf16>
    %100 = vector.shape_cast %99 : vector<1x8x16xbf16> to vector<8x16xbf16>
    %cst_24 = arith.constant dense<0.000000e+00> : vector<8x1024xf32>
    %101 = tpu.matmul %100, %98, %cst_24 {dimension_numbers = #tpu.dot_dimension_numbers<[1], [0], [0], [1], [0, 0, 1, 1], [], []>} : vector<8x16xbf16>, vector<16x1024xbf16>, vector<8x1024xf32> -> vector<8x1024xf32>
    %102 = arith.addf %97, %101 : vector<8x1024xf32>
    %103 = vector.extract_strided_slice %1 {offsets = [0, 219], sizes = [16, 1024], strides = [1, 1]} : vector<16x1280xbf16> to vector<16x1024xbf16>
    %104 = vector.extract_strided_slice %3 {offsets = [20, 0, 0], sizes = [1, 8, 16], strides = [1, 1, 1]} : vector<27x8x16xbf16> to vector<1x8x16xbf16>
    %105 = vector.shape_cast %104 : vector<1x8x16xbf16> to vector<8x16xbf16>
    %cst_25 = arith.constant dense<0.000000e+00> : vector<8x1024xf32>
    %106 = tpu.matmul %105, %103, %cst_25 {dimension_numbers = #tpu.dot_dimension_numbers<[1], [0], [0], [1], [0, 0, 1, 1], [], []>} : vector<8x16xbf16>, vector<16x1024xbf16>, vector<8x1024xf32> -> vector<8x1024xf32>
    %107 = arith.addf %102, %106 : vector<8x1024xf32>
    %108 = vector.extract_strided_slice %1 {offsets = [0, 227], sizes = [16, 1024], strides = [1, 1]} : vector<16x1280xbf16> to vector<16x1024xbf16>
    %109 = vector.extract_strided_slice %3 {offsets = [21, 0, 0], sizes = [1, 8, 16], strides = [1, 1, 1]} : vector<27x8x16xbf16> to vector<1x8x16xbf16>
    %110 = vector.shape_cast %109 : vector<1x8x16xbf16> to vector<8x16xbf16>
    %cst_26 = arith.constant dense<0.000000e+00> : vector<8x1024xf32>
    %111 = tpu.matmul %110, %108, %cst_26 {dimension_numbers = #tpu.dot_dimension_numbers<[1], [0], [0], [1], [0, 0, 1, 1], [], []>} : vector<8x16xbf16>, vector<16x1024xbf16>, vector<8x1024xf32> -> vector<8x1024xf32>
    %112 = arith.addf %107, %111 : vector<8x1024xf32>
    %113 = vector.extract_strided_slice %1 {offsets = [0, 228], sizes = [16, 1024], strides = [1, 1]} : vector<16x1280xbf16> to vector<16x1024xbf16>
    %114 = vector.extract_strided_slice %3 {offsets = [22, 0, 0], sizes = [1, 8, 16], strides = [1, 1, 1]} : vector<27x8x16xbf16> to vector<1x8x16xbf16>
    %115 = vector.shape_cast %114 : vector<1x8x16xbf16> to vector<8x16xbf16>
    %cst_27 = arith.constant dense<0.000000e+00> : vector<8x1024xf32>
    %116 = tpu.matmul %115, %113, %cst_27 {dimension_numbers = #tpu.dot_dimension_numbers<[1], [0], [0], [1], [0, 0, 1, 1], [], []>} : vector<8x16xbf16>, vector<16x1024xbf16>, vector<8x1024xf32> -> vector<8x1024xf32>
    %117 = arith.addf %112, %116 : vector<8x1024xf32>
    %118 = vector.extract_strided_slice %1 {offsets = [0, 229], sizes = [16, 1024], strides = [1, 1]} : vector<16x1280xbf16> to vector<16x1024xbf16>
    %119 = vector.extract_strided_slice %3 {offsets = [23, 0, 0], sizes = [1, 8, 16], strides = [1, 1, 1]} : vector<27x8x16xbf16> to vector<1x8x16xbf16>
    %120 = vector.shape_cast %119 : vector<1x8x16xbf16> to vector<8x16xbf16>
    %cst_28 = arith.constant dense<0.000000e+00> : vector<8x1024xf32>
    %121 = tpu.matmul %120, %118, %cst_28 {dimension_numbers = #tpu.dot_dimension_numbers<[1], [0], [0], [1], [0, 0, 1, 1], [], []>} : vector<8x16xbf16>, vector<16x1024xbf16>, vector<8x1024xf32> -> vector<8x1024xf32>
    %122 = arith.addf %117, %121 : vector<8x1024xf32>
    %123 = vector.extract_strided_slice %1 {offsets = [0, 237], sizes = [16, 1024], strides = [1, 1]} : vector<16x1280xbf16> to vector<16x1024xbf16>
    %124 = vector.extract_strided_slice %3 {offsets = [24, 0, 0], sizes = [1, 8, 16], strides = [1, 1, 1]} : vector<27x8x16xbf16> to vector<1x8x16xbf16>
    %125 = vector.shape_cast %124 : vector<1x8x16xbf16> to vector<8x16xbf16>
    %cst_29 = arith.constant dense<0.000000e+00> : vector<8x1024xf32>
    %126 = tpu.matmul %125, %123, %cst_29 {dimension_numbers = #tpu.dot_dimension_numbers<[1], [0], [0], [1], [0, 0, 1, 1], [], []>} : vector<8x16xbf16>, vector<16x1024xbf16>, vector<8x1024xf32> -> vector<8x1024xf32>
    %127 = arith.addf %122, %126 : vector<8x1024xf32>
    %128 = vector.extract_strided_slice %1 {offsets = [0, 238], sizes = [16, 1024], strides = [1, 1]} : vector<16x1280xbf16> to vector<16x1024xbf16>
    %129 = vector.extract_strided_slice %3 {offsets = [25, 0, 0], sizes = [1, 8, 16], strides = [1, 1, 1]} : vector<27x8x16xbf16> to vector<1x8x16xbf16>
    %130 = vector.shape_cast %129 : vector<1x8x16xbf16> to vector<8x16xbf16>
    %cst_30 = arith.constant dense<0.000000e+00> : vector<8x1024xf32>
    %131 = tpu.matmul %130, %128, %cst_30 {dimension_numbers = #tpu.dot_dimension_numbers<[1], [0], [0], [1], [0, 0, 1, 1], [], []>} : vector<8x16xbf16>, vector<16x1024xbf16>, vector<8x1024xf32> -> vector<8x1024xf32>
    %132 = arith.addf %127, %131 : vector<8x1024xf32>
    %133 = vector.extract_strided_slice %1 {offsets = [0, 239], sizes = [16, 1024], strides = [1, 1]} : vector<16x1280xbf16> to vector<16x1024xbf16>
    %134 = vector.extract_strided_slice %3 {offsets = [26, 0, 0], sizes = [1, 8, 16], strides = [1, 1, 1]} : vector<27x8x16xbf16> to vector<1x8x16xbf16>
    %135 = vector.shape_cast %134 : vector<1x8x16xbf16> to vector<8x16xbf16>
    %cst_31 = arith.constant dense<0.000000e+00> : vector<8x1024xf32>
    %136 = tpu.matmul %135, %133, %cst_31 {dimension_numbers = #tpu.dot_dimension_numbers<[1], [0], [0], [1], [0, 0, 1, 1], [], []>} : vector<8x16xbf16>, vector<16x1024xbf16>, vector<8x1024xf32> -> vector<8x1024xf32>
    %137 = arith.addf %132, %136 : vector<8x1024xf32>
    %c0_32 = arith.constant 0 : index
    %c0_33 = arith.constant 0 : index
    %138 = vector.load %arg4[%c0_32, %c0_33] : memref<1x1024xf32, #tpu.memory_space<vmem>>, vector<1x1024xf32>
    %139 = vector.broadcast %138 : vector<1x1024xf32> to vector<8x1024xf32>
    %140 = arith.mulf %137, %139 : vector<8x1024xf32>
    %141 = vector.shape_cast %140 : vector<8x1024xf32> to vector<1x8x1024xf32>
    %cst_34 = arith.constant dense<0.000000e+00> : vector<1xf32>
    %142 = vector.multi_reduction <add>, %141, %cst_34 [1, 2] : vector<1x8x1024xf32> to vector<1xf32>
    %143 = vector.shape_cast %142 : vector<1xf32> to vector<1x1x1xf32>
    %144 = vector.extract %143[0, 0, 0] : f32 from vector<1x1x1xf32>
    %145 = vector.broadcast %144 : f32 to vector<1x1xf32>
    %cst_35 = arith.constant 4.096000e+03 : f32
    %146 = vector.broadcast %cst_35 : f32 to vector<1x1xf32>
    %147 = arith.divf %145, %146 : vector<1x1xf32>
    %148 = vector.broadcast %147 : vector<1x1xf32> to vector<8x1024xf32>
    %149 = arith.subf %137, %148 : vector<8x1024xf32>
    %150 = vector.broadcast %138 : vector<1x1024xf32> to vector<8x1024xf32>
    %151 = arith.mulf %149, %150 : vector<8x1024xf32>
    %152 = arith.mulf %151, %151 : vector<8x1024xf32>
    %153 = vector.shape_cast %152 : vector<8x1024xf32> to vector<1x8x1024xf32>
    %cst_36 = arith.constant dense<0.000000e+00> : vector<1xf32>
    %154 = vector.multi_reduction <add>, %153, %cst_36 [1, 2] : vector<1x8x1024xf32> to vector<1xf32>
    %155 = vector.shape_cast %154 : vector<1xf32> to vector<1x1x1xf32>
    %156 = vector.extract %155[0, 0, 0] : f32 from vector<1x1x1xf32>
    %157 = vector.broadcast %156 : f32 to vector<1x1xf32>
    %cst_37 = arith.constant 4.096000e+03 : f32
    %158 = vector.broadcast %cst_37 : f32 to vector<1x1xf32>
    %159 = arith.divf %157, %158 : vector<1x1xf32>
    %cst_38 = arith.constant 9.99999974E-6 : f32
    %160 = vector.broadcast %cst_38 : f32 to vector<1x1xf32>
    %161 = arith.addf %159, %160 : vector<1x1xf32>
    %162 = math.rsqrt %161 : vector<1x1xf32>
    %163 = vector.broadcast %147 : vector<1x1xf32> to vector<8x1024xf32>
    %164 = arith.subf %137, %163 : vector<8x1024xf32>
    %c0_39 = arith.constant 0 : index
    %c0_40 = arith.constant 0 : index
    %c0_41 = arith.constant 0 : index
    %165 = vector.load %arg5[%c0_39, %c0_40, %c0_41] : memref<1x8x1xf32, #tpu.memory_space<vmem>>, vector<1x8x1xf32>
    %166 = vector.shape_cast %165 : vector<1x8x1xf32> to vector<8x1xf32>
    %167 = vector.broadcast %162 : vector<1x1xf32> to vector<8x1xf32>
    %168 = arith.mulf %167, %166 : vector<8x1xf32>
    %169 = vector.broadcast %168 : vector<8x1xf32> to vector<8x1024xf32>
    %170 = arith.mulf %164, %169 : vector<8x1024xf32>
    %c0_42 = arith.constant 0 : index
    %c0_43 = arith.constant 0 : index
    %c0_44 = arith.constant 0 : index
    %171 = vector.load %arg6[%c0_42, %c0_43, %c0_44] : memref<1x8x1xf32, #tpu.memory_space<vmem>>, vector<1x8x1xf32>
    %172 = vector.shape_cast %171 : vector<1x8x1xf32> to vector<8x1xf32>
    %173 = vector.broadcast %172 : vector<8x1xf32> to vector<8x1024xf32>
    %174 = arith.addf %170, %173 : vector<8x1024xf32>
    %cst_45 = arith.constant 0.000000e+00 : f32
    %175 = vector.broadcast %cst_45 : f32 to vector<8x1024xf32>
    %176 = arith.maximumf %174, %175 : vector<8x1024xf32>
    %c0_46 = arith.constant 0 : index
    %c0_47 = arith.constant 0 : index
    %c0_48 = arith.constant 0 : index
    %c0_49 = arith.constant 0 : index
    %177 = vector.load %arg7[%c0_46, %c0_47, %c0_48, %c0_49] : memref<1x1x8x1024xf32, #tpu.memory_space<vmem>>, vector<1x1x8x1024xf32>
    %178 = vector.shape_cast %177 : vector<1x1x8x1024xf32> to vector<8x1024xf32>
    %179 = vector.shape_cast %176 : vector<8x1024xf32> to vector<1x1x8x1024xf32>
    tpu.vector_store %arg7[%c0_46, %c0_47, %c0_48, %c0_49], %179 {strides = array<i32>} : memref<1x1x8x1024xf32, #tpu.memory_space<vmem>>, vector<1x1x8x1024xf32>,
    return
  }
  func.func @transform_0(%arg0: i32, %arg1: i32) -> (i32, i32, i32) {
    %c0_i32 = arith.constant 0 : i32
    %c0_i32_0 = arith.constant 0 : i32
    %c0_i32_1 = arith.constant 0 : i32
    return %arg0, %c0_i32, %c0_i32_0 : i32, i32, i32
  }
  func.func @transform_1(%arg0: i32, %arg1: i32) -> (i32, i32, i32, i32) {
    %c0_i32 = arith.constant 0 : i32
    %c0_i32_0 = arith.constant 0 : i32
    %c0_i32_1 = arith.constant 0 : i32
    %c0_i32_2 = arith.constant 0 : i32
    return %arg1, %c0_i32, %c0_i32_0, %c0_i32_1 : i32, i32, i32, i32
  }
  func.func @transform_2(%arg0: i32, %arg1: i32) -> (i32, i32) {
    %c0_i32 = arith.constant 0 : i32
    %c0_i32_0 = arith.constant 0 : i32
    %c0_i32_1 = arith.constant 0 : i32
    return %c0_i32, %c0_i32_0 : i32, i32
  }
  func.func @transform_3(%arg0: i32, %arg1: i32) -> (i32, i32, i32) {
    %c0_i32 = arith.constant 0 : i32
    %c0_i32_0 = arith.constant 0 : i32
    %c0_i32_1 = arith.constant 0 : i32
    return %arg1, %c0_i32, %c0_i32_0 : i32, i32, i32
  }
  func.func @transform_4(%arg0: i32, %arg1: i32) -> (i32, i32, i32) {
    %c0_i32 = arith.constant 0 : i32
    %c0_i32_0 = arith.constant 0 : i32
    %c0_i32_1 = arith.constant 0 : i32
    return %arg1, %c0_i32, %c0_i32_0 : i32, i32, i32
  }
  func.func @transform_5(%arg0: i32, %arg1: i32) -> (i32, i32, i32, i32) {
    %c0_i32 = arith.constant 0 : i32
    %c0_i32_0 = arith.constant 0 : i32
    %c0_i32_1 = arith.constant 0 : i32
    return %arg0, %arg1, %c0_i32, %c0_i32_0 : i32, i32, i32, i32
  }
}

</mosaic_0001>

<llo_original>
// kernel: residual_inner_pallas.1
$region0: #{residual_inner_pallas.1}
  #allocation0 [shape = 'u32[]', space=smem, size = 0x4, offset = 0x4, fixed_abs, tag = 'smem constant byte address 0x4 - core index']
  #allocation1 [shape = 'u32[144,128]{1,0:T(1,128)}', space=vmem, size = 0x12000, scoped, tag = 'internal scratch']
  %s0 = inlined_call_operand.vmem [shape: bf16[2,16,1280], index: 0, kind: input, shape index: {}]
  %s1 = inlined_call_operand.vmem [shape: bf16[2,27,8,16], index: 1, kind: input, shape index: {}]
  %s2 = inlined_call_operand.vmem [shape: f32[1,1024], index: 2, kind: input, shape index: {}]
  %s3 = inlined_call_operand.vmem [shape: f32[2,8,1], index: 3, kind: input, shape index: {}]
  %s4 = inlined_call_operand.vmem [shape: f32[2,8,1], index: 4, kind: input, shape index: {}]
  %s5 = inlined_call_operand.vmem [shape: f32[2,2,8,1024], index: 5, kind: output, shape index: {}]
  %s6 = sld [smem:[#allocation0]]
  $region53: #{residual_inner_pallas.1} parent=0
    _
  %s8 = ssub.s32 1, %s6
  %s9 = scalar_select 0, %s8, %s6
  loop: start=0, step=1, limit=6
  $region2: #{residual_inner_pallas.1} parent=0 // loop_pre_header
    _
  $region3: #{residual_inner_pallas.1} parent=0 // loop_header
    %s11 = sphi 0, %s15
    %p12 = scmp.ge.s32.totalorder %s11, 6
    %s18 = sphi 0, %s30
    %s19 = sphi 0, %s26
    %s20 = sphi 0, %s18
    %s21 = sphi 0, %s19
    %s22 = sphi 0, %s20
    %s23 = sphi 0, %s21
    %s33 = sphi 0, %s35
    %s36 = sphi 0, %s33
    %s37 = sphi 0, %s36
    %s53 = sphi 0, %s37
    %s59 = sphi 0, %s61
    %s62 = sphi 0, %s59
    %s63 = sphi 0, %s62
    %s79 = sphi 0, %s63
    %s83 = sphi 0, %s83
    %s85 = sphi 0, %s83
    %s86 = sphi 0, %s85
    %s100 = sphi 0, %s86
    %s106 = sphi 0, %s108
    %s109 = sphi 0, %s106
    %s110 = sphi 0, %s109
    %s126 = sphi 0, %s110
    %s132 = sphi 0, %s134
    %s135 = sphi 0, %s132
    %s136 = sphi 0, %s135
    %s152 = sphi 0, %s136
    %s160 = sphi 0, %s162
    %s163 = sphi 0, %s160
    %s164 = sphi 0, %s163
    %s180 = sphi 0, %s164
  $region4: #{residual_inner_pallas.1} parent=0 // loop_header_branch
    %14 = sbr.rel (%p12) target = $region8
  $region5: #{residual_inner_pallas.1} parent=0 // loop_body
    %s16 = ssub.s32 %s11, 1
    %s17 = ssub.s32 %s11, 2
    %s24 = sadd.s32 1, %s19
    %p25 = scmp.ge.s32.totalorder %s24, 2
    %s26 = scalar_select %p25, 0, %s24
    %s27 = sadd.s32 1, %s18
    %s28 = scalar_select %p25, %s27, %s18
    %p29 = scmp.ge.s32.totalorder %s28, 2
    %s30 = scalar_select %p29, 0, %s28
    %s31 = ssub.s32 %s18, %s30
    %p32 = scmp.eq.s32.totalorder %s31, 0
    %s34 = sadd.s32 %s33, 1
    %s35 = scalar_select %p32, %s33, %s34
    %p38 = pneg %p32
    %p39 = scmp.eq.s32.totalorder %s11, 3
    %p40 = por %p38, %p39
    %p41 = scmp.ne.s32.totalorder %s33, %s36
    %p42 = scmp.eq.s32.totalorder %s11, 0
    %p43 = por %p41, %p42
    %p44 = scmp.ne.s32.totalorder %s33, %s36
    %p45 = scmp.eq.s32.totalorder %s16, 3
    %p46 = por %p44, %p45
    %p47 = scmp.ne.s32.totalorder %s36, %s37
    %p48 = scmp.eq.s32.totalorder %s16, 0
    %p49 = por %p47, %p48
    %p50 = scmp.ne.s32.totalorder %s36, %s37
    %p51 = scmp.eq.s32.totalorder %s17, 3
    %p52 = por %p50, %p51
    %p54 = scmp.ne.s32.totalorder %s37, %s53
    %p55 = scmp.eq.s32.totalorder %s17, 0
    %p56 = por %p54, %p55
    %s57 = ssub.s32 %s19, %s26
    %p58 = scmp.eq.s32.totalorder %s57, 0
    %s60 = sadd.s32 %s59, 1
    %s61 = scalar_select %p58, %s59, %s60
    %p64 = pneg %p58
    %p65 = scmp.eq.s32.totalorder %s11, 3
    %p66 = por %p64, %p65
    %p67 = scmp.ne.s32.totalorder %s59, %s62
    %p68 = scmp.eq.s32.totalorder %s11, 0
    %p69 = por %p67, %p68
    %p70 = scmp.ne.s32.totalorder %s59, %s62
    %p71 = scmp.eq.s32.totalorder %s16, 3
    %p72 = por %p70, %p71
    %p73 = scmp.ne.s32.totalorder %s62, %s63
    %p74 = scmp.eq.s32.totalorder %s16, 0
    %p75 = por %p73, %p74
    %p76 = scmp.ne.s32.totalorder %s62, %s63
    %p77 = scmp.eq.s32.totalorder %s17, 3
    %p78 = por %p76, %p77
    %p80 = scmp.ne.s32.totalorder %s63, %s79
    %p81 = scmp.eq.s32.totalorder %s17, 0
    %p82 = por %p80, %p81
    %s84 = sadd.s32 %s83, 1
    %p87 = scmp.eq.s32.totalorder %s11, 3
    %p88 = scmp.ne.s32.totalorder %s83, %s85
    %p89 = scmp.eq.s32.totalorder %s11, 0
    %p90 = por %p88, %p89
    %p91 = scmp.ne.s32.totalorder %s83, %s85
    %p92 = scmp.eq.s32.totalorder %s16, 3
    %p93 = por %p91, %p92
    %p94 = scmp.ne.s32.totalorder %s85, %s86
    %p95 = scmp.eq.s32.totalorder %s16, 0
    %p96 = por %p94, %p95
    %p97 = scmp.ne.s32.totalorder %s85, %s86
    %p98 = scmp.eq.s32.totalorder %s17, 3
    %p99 = por %p97, %p98
    %p101 = scmp.ne.s32.totalorder %s86, %s100
    %p102 = scmp.eq.s32.totalorder %s17, 0
    %p103 = por %p101, %p102
    %s104 = ssub.s32 %s19, %s26
    %p105 = scmp.eq.s32.totalorder %s104, 0
    %s107 = sadd.s32 %s106, 1
    %s108 = scalar_select %p105, %s106, %s107
    %p111 = pneg %p105
    %p112 = scmp.eq.s32.totalorder %s11, 3
    %p113 = por %p111, %p112
    %p114 = scmp.ne.s32.totalorder %s106, %s109
    %p115 = scmp.eq.s32.totalorder %s11, 0
    %p116 = por %p114, %p115
    %p117 = scmp.ne.s32.totalorder %s106, %s109
    %p118 = scmp.eq.s32.totalorder %s16, 3
    %p119 = por %p117, %p118
    %p120 = scmp.ne.s32.totalorder %s109, %s110
    %p121 = scmp.eq.s32.totalorder %s16, 0
    %p122 = por %p120, %p121
    %p123 = scmp.ne.s32.totalorder %s109, %s110
    %p124 = scmp.eq.s32.totalorder %s17, 3
    %p125 = por %p123, %p124
    %p127 = scmp.ne.s32.totalorder %s110, %s126
    %p128 = scmp.eq.s32.totalorder %s17, 0
    %p129 = por %p127, %p128
    %s130 = ssub.s32 %s19, %s26
    %p131 = scmp.eq.s32.totalorder %s130, 0
    %s133 = sadd.s32 %s132, 1
    %s134 = scalar_select %p131, %s132, %s133
    %p137 = pneg %p131
    %p138 = scmp.eq.s32.totalorder %s11, 3
    %p139 = por %p137, %p138
    %p140 = scmp.ne.s32.totalorder %s132, %s135
    %p141 = scmp.eq.s32.totalorder %s11, 0
    %p142 = por %p140, %p141
    %p143 = scmp.ne.s32.totalorder %s132, %s135
    %p144 = scmp.eq.s32.totalorder %s16, 3
    %p145 = por %p143, %p144
    %p146 = scmp.ne.s32.totalorder %s135, %s136
    %p147 = scmp.eq.s32.totalorder %s16, 0
    %p148 = por %p146, %p147
    %p149 = scmp.ne.s32.totalorder %s135, %s136
    %p150 = scmp.eq.s32.totalorder %s17, 3
    %p151 = por %p149, %p150
    %p153 = scmp.ne.s32.totalorder %s136, %s152
    %p154 = scmp.eq.s32.totalorder %s17, 0
    %p155 = por %p153, %p154
    %s156 = ssub.s32 %s18, %s30
    %s157 = ssub.s32 %s19, %s26
    %s158 = sor.u32 %s156, %s157
    %p159 = scmp.eq.s32.totalorder %s158, 0
    %s161 = sadd.s32 %s160, 1
    %s162 = scalar_select %p159, %s160, %s161
    %p165 = pneg %p159
    %p166 = scmp.eq.s32.totalorder %s11, 3
    %p167 = por %p165, %p166
    %p168 = scmp.ne.s32.totalorder %s160, %s163
    %p169 = scmp.eq.s32.totalorder %s11, 0
    %p170 = por %p168, %p169
    %p171 = scmp.ne.s32.totalorder %s160, %s163
    %p172 = scmp.eq.s32.totalorder %s16, 3
    %p173 = por %p171, %p172
    %p174 = scmp.ne.s32.totalorder %s163, %s164
    %p175 = scmp.eq.s32.totalorder %s16, 0
    %p176 = por %p174, %p175
    %p177 = scmp.ne.s32.totalorder %s163, %s164
    %p178 = scmp.eq.s32.totalorder %s17, 3
    %p179 = por %p177, %p178
    %p181 = scmp.ne.s32.totalorder %s164, %s180
    %p182 = scmp.eq.s32.totalorder %s17, 0
    %p183 = por %p181, %p182
    %p184 = scmp.le.s32.totalorder 1, %s11
    %p185 = scmp.lt.s32.totalorder %s11, 5
    %p186 = pnand %p184, %p185
    %p187 = pneg %p186
    // Predicated region
    $region9: #{residual_inner_pallas.1} parent=5 // pred_check
      _
    $region10: #{residual_inner_pallas.1} parent=5 // pred_check_branch
      %189 = sbr.rel (%p186) target = $region12
    $region11: #{residual_inner_pallas.1} parent=5 // pred_region
      %s190 = ssub.s32 %s11, 1
      // Predicated region
      $region13: #{residual_inner_pallas.1} parent=11 // pred_check
        %p191 = pneg %p96
      $region14: #{residual_inner_pallas.1} parent=11 // pred_check_branch
        %193 = sbr.rel (%p191) target = $region16
      $region15: #{residual_inner_pallas.1} parent=11 // pred_region
        _
      $region16: #{residual_inner_pallas.1} parent=11 // pred_fallthru
        _
    $region12: #{residual_inner_pallas.1} parent=5 // pred_fallthru
      _
    %p194 = scmp.lt.s32.totalorder %s11, 4
    // Predicated region
    $region17: #{residual_inner_pallas.1} parent=5 // pred_check
      %p195 = pneg %p194
    $region18: #{residual_inner_pallas.1} parent=5 // pred_check_branch
      %197 = sbr.rel (%p195) target = $region20
    $region19: #{residual_inner_pallas.1} parent=5 // pred_region
      // Predicated region
      $region21: #{residual_inner_pallas.1} parent=19 // pred_check
        %p198 = pneg %p43
      $region22: #{residual_inner_pallas.1} parent=19 // pred_check_branch
        %200 = sbr.rel (%p198) target = $region24
      $region23: #{residual_inner_pallas.1} parent=19 // pred_region
        %p201 = scmp.lt.s32.totalorder %s18, 1
        %s202 = scalar_select %p201, %s18, 1
        %s203 = smul.addr %s202, 20
        %s204 = smul.addr %s203, 4
        %s205 = scalar_lea.vmem %s0, %s204
      $region24: #{residual_inner_pallas.1} parent=19 // pred_fallthru
        _
      // Predicated region
      $region25: #{residual_inner_pallas.1} parent=19 // pred_check
        %p206 = pneg %p69
      $region26: #{residual_inner_pallas.1} parent=19 // pred_check_branch
        %208 = sbr.rel (%p206) target = $region28
      $region27: #{residual_inner_pallas.1} parent=19 // pred_region
        %p209 = scmp.lt.s32.totalorder %s19, 1
        %s210 = scalar_select %p209, %s19, 1
        %s211 = smul.addr %s210, 27
        %s212 = smul.addr %s211, 4
        %s213 = scalar_lea.vmem %s1, %s212
      $region28: #{residual_inner_pallas.1} parent=19 // pred_fallthru
        _
      // Predicated region
      $region29: #{residual_inner_pallas.1} parent=19 // pred_check
        %p214 = pneg %p116
      $region30: #{residual_inner_pallas.1} parent=19 // pred_check_branch
        %216 = sbr.rel (%p214) target = $region32
      $region31: #{residual_inner_pallas.1} parent=19 // pred_region
        %p217 = scmp.lt.s32.totalorder %s19, 1
        %s218 = scalar_select %p217, %s19, 1
        %s219 = smul.addr %s218, 8
        %s220 = scalar_lea.vmem %s3, %s219
      $region32: #{residual_inner_pallas.1} parent=19 // pred_fallthru
        _
      // Predicated region
      $region33: #{residual_inner_pallas.1} parent=19 // pred_check
        %p221 = pneg %p142
      $region34: #{residual_inner_pallas.1} parent=19 // pred_check_branch
        %223 = sbr.rel (%p221) target = $region36
      $region35: #{residual_inner_pallas.1} parent=19 // pred_region
        %p224 = scmp.lt.s32.totalorder %s19, 1
        %s225 = scalar_select %p224, %s19, 1
        %s226 = smul.addr %s225, 8
        %s227 = scalar_lea.vmem %s4, %s226
      $region36: #{residual_inner_pallas.1} parent=19 // pred_fallthru
        _
    $region20: #{residual_inner_pallas.1} parent=5 // pred_fallthru
      _
    %p228 = scmp.le.s32.totalorder 1, %s11
    %p229 = scmp.lt.s32.totalorder %s11, 5
    %p230 = pnand %p228, %p229
    %p231 = pneg %p230
    // Predicated region
    $region37: #{residual_inner_pallas.1} parent=5 // pred_check
      _
    $region38: #{residual_inner_pallas.1} parent=5 // pred_check_branch
      %233 = sbr.rel (%p230) target = $region40
    $region39: #{residual_inner_pallas.1} parent=5 // pred_region
      %s234 = ssub.s32 %s11, 1
      %p235 = scmp.lt.s32.totalorder %s20, 1
      %s236 = scalar_select %p235, %s20, 1
      %s237 = smul.addr %s236, 20
      %s238 = smul.addr %s237, 4
      %s239 = scalar_lea.vmem %s0, %s238
      %p240 = pneg %p49
      %p241 = pneg %p46
      %p242 = scmp.lt.s32.totalorder %s21, 1
      %s243 = scalar_select %p242, %s21, 1
      %s244 = smul.addr %s243, 27
      %s245 = smul.addr %s244, 4
      %s246 = scalar_lea.vmem %s1, %s245
      %p247 = pneg %p75
      %p248 = pneg %p72
      %p249 = pneg %p96
      %p250 = pneg %p93
      %p251 = scmp.lt.s32.totalorder %s21, 1
      %s252 = scalar_select %p251, %s21, 1
      %s253 = smul.addr %s252, 8
      %s254 = scalar_lea.vmem %s3, %s253
      %p255 = pneg %p122
      %p256 = pneg %p119
      %p257 = scmp.lt.s32.totalorder %s21, 1
      %s258 = scalar_select %p257, %s21, 1
      %s259 = smul.addr %s258, 8
      %s260 = scalar_lea.vmem %s4, %s259
      %p261 = pneg %p148
      %p262 = pneg %p145
      %p263 = pneg %p176
      %p264 = pneg %p173
      %p265 = scmp.lt.s32.totalorder %s20, 1
      %s266 = scalar_select %p265, %s20, 1
      %p267 = scmp.lt.s32.totalorder %s21, 1
      %s268 = scalar_select %p267, %s21, 1
      %s269 = smul.addr %s268, 8
      %s270 = smul.addr %s266, 16
      %s271 = sadd.s32 %s269, %s270
      %s272 = smul.addr %s271, 8
      %s273 = scalar_lea.vmem %s5, %s272
      %p274 = scmp.lt.s32.totalorder %s20, 1
      %s275 = scalar_select %p274, %s20, 1
      %s276 = smul.addr %s275, 20
      %s277 = smul.addr %s276, 4
      %s278 = scalar_lea.vmem %s0, %s277
      %p279 = scmp.lt.s32.totalorder %s21, 1
      %s280 = scalar_select %p279, %s21, 1
      %s281 = smul.addr %s280, 27
      %s282 = smul.addr %s281, 4
      %s283 = scalar_lea.vmem %s1, %s282
      %p284 = scmp.lt.s32.totalorder %s21, 1
      %s285 = scalar_select %p284, %s21, 1
      %s286 = smul.addr %s285, 8
      %s287 = scalar_lea.vmem %s3, %s286
      %p288 = scmp.lt.s32.totalorder %s21, 1
      %s289 = scalar_select %p288, %s21, 1
      %s290 = smul.addr %s289, 8
      %s291 = scalar_lea.vmem %s4, %s290
      %p292 = scmp.lt.s32.totalorder %s20, 1
      %s293 = scalar_select %p292, %s20, 1
      %p294 = scmp.lt.s32.totalorder %s21, 1
      %s295 = scalar_select %p294, %s21, 1
      %s296 = smul.addr %s295, 8
      %s297 = smul.addr %s293, 16
      %s298 = sadd.s32 %s296, %s297
      %s299 = smul.addr %s298, 8
      %s300 = scalar_lea.vmem %s5, %s299
      %v302 = vld [vmem:[%s278] sm:$0xff]
      %v303 = vld [vmem:[%s278 + $0x8] sm:$0xff]
      %v304 = vld [vmem:[%s278 + $0x10] sm:$0xff]
      %v305 = vld [vmem:[%s278 + $0x18] sm:$0xff]
      %v306 = vld [vmem:[%s278 + $0x20] sm:$0xff]
      %v307 = vld [vmem:[%s278 + $0x28] sm:$0xff]
      %v308 = vld [vmem:[%s278 + $0x30] sm:$0xff]
      %v309 = vld [vmem:[%s278 + $0x38] sm:$0xff]
      %v310 = vld [vmem:[%s278 + $0x40] sm:$0xff]
      %v311 = vld [vmem:[%s278 + $0x48] sm:$0xff]
      %v312 = vld [vmem:[%s283] sm:$0xf]
      %v313 = vld [vmem:[%s283 + $0x4] sm:$0xf]
      %v314 = vld [vmem:[%s283 + $0x8] sm:$0xf]
      %v315 = vld [vmem:[%s283 + $0xc] sm:$0xf]
      %v316 = vld [vmem:[%s283 + $0x10] sm:$0xf]
      %v317 = vld [vmem:[%s283 + $0x14] sm:$0xf]
      %v318 = vld [vmem:[%s283 + $0x18] sm:$0xf]
      %v319 = vld [vmem:[%s283 + $0x1c] sm:$0xf]
      %v320 = vld [vmem:[%s283 + $0x20] sm:$0xf]
      %v321 = vld [vmem:[%s283 + $0x24] sm:$0xf]
      %v322 = vld [vmem:[%s283 + $0x28] sm:$0xf]
      %v323 = vld [vmem:[%s283 + $0x2c] sm:$0xf]
      %v324 = vld [vmem:[%s283 + $0x30] sm:$0xf]
      %v325 = vld [vmem:[%s283 + $0x34] sm:$0xf]
      %v326 = vld [vmem:[%s283 + $0x38] sm:$0xf]
      %v327 = vld [vmem:[%s283 + $0x3c] sm:$0xf]
      %v328 = vld [vmem:[%s283 + $0x40] sm:$0xf]
      %v329 = vld [vmem:[%s283 + $0x44] sm:$0xf]
      %v330 = vld [vmem:[%s283 + $0x48] sm:$0xf]
      %v331 = vld [vmem:[%s283 + $0x4c] sm:$0xf]
      %v332 = vld [vmem:[%s283 + $0x50] sm:$0xf]
      %v333 = vld [vmem:[%s283 + $0x54] sm:$0xf]
      %v334 = vld [vmem:[%s283 + $0x58] sm:$0xf]
      %v335 = vld [vmem:[%s283 + $0x5c] sm:$0xf]
      %v336 = vld [vmem:[%s283 + $0x60] sm:$0xf]
      %v337 = vld [vmem:[%s283 + $0x64] sm:$0xf]
      %v338 = vld [vmem:[%s283 + $0x68] sm:$0xf]
      %v349 = vunpack.c.l.b16 %v302
      %v350 = vunpack.c.h.b16 %v302
      %v351 = vunpack.c.l.b16 %v303
      %v352 = vunpack.c.h.b16 %v303
      %v353 = vunpack.c.l.b16 %v304
      %v354 = vunpack.c.h.b16 %v304
      %v355 = vunpack.c.l.b16 %v305
      %v356 = vunpack.c.h.b16 %v305
      %v357 = vunpack.c.l.b16 %v306
      %v358 = vunpack.c.l.b16 %v307
      %v359 = vunpack.c.h.b16 %v307
      %v360 = vunpack.c.l.b16 %v308
      %v361 = vunpack.c.h.b16 %v308
      %v362 = vunpack.c.l.b16 %v309
      %v363 = vunpack.c.h.b16 %v309
      %v364 = vunpack.c.l.b16 %v310
      %v365 = vunpack.c.h.b16 %v310
      %v366 = vunpack.c.l.b16 %v311
      %v367 = vpack.c.b16 %v358, %v349
      %v368 = vpack.c.b16 %v359, %v350
      %v369 = vpack.c.b16 %v360, %v351
      %v370 = vpack.c.b16 %v361, %v352
      %v371 = vpack.c.b16 %v362, %v353
      %v372 = vpack.c.b16 %v363, %v354
      %v373 = vpack.c.b16 %v364, %v355
      %v374 = vpack.c.b16 %v365, %v356
      %v375 = vpack.c.b16 %v366, %v357
      %376 = vrot.lane.b32.xlu0 %v367, 110
      %v377 = vpop.permute.xlu0 %376
      %378 = vrot.lane.b32.xlu0 %v368, 110
      %v379 = vpop.permute.xlu0 %378
      %380 = vrot.lane.b32.xlu0 %v369, 110
      %v381 = vpop.permute.xlu0 %380
      %382 = vrot.lane.b32.xlu0 %v370, 110
      %v383 = vpop.permute.xlu0 %382
      %384 = vrot.lane.b32.xlu0 %v371, 110
      %v385 = vpop.permute.xlu0 %384
      %386 = vrot.lane.b32.xlu0 %v372, 110
      %v387 = vpop.permute.xlu0 %386
      %388 = vrot.lane.b32.xlu0 %v373, 110
      %v389 = vpop.permute.xlu0 %388
      %390 = vrot.lane.b32.xlu0 %v374, 110
      %v391 = vpop.permute.xlu0 %390
      %392 = vrot.lane.b32.xlu0 %v375, 110
      %v393 = vpop.permute.xlu0 %392
      %vm394 = vcmask 900096
      %v395 = vsel %vm394, %v377, %v379
      %v396 = vsel %vm394, %v379, %v381
      %v397 = vsel %vm394, %v381, %v383
      %v398 = vsel %vm394, %v383, %v385
      %v399 = vsel %vm394, %v385, %v387
      %v400 = vsel %vm394, %v387, %v389
      %v401 = vsel %vm394, %v389, %v391
      %v402 = vsel %vm394, %v391, %v393
      %vm411 = vcmask 130048
      %v413 = vsel %vm411, %v313, 0
      %415 = vmatprep.subr.bf16.mxu0 %v396
      %416 = vmatpush1.bf16.msra.mxu0 %v395
      %417 = vmatprep.subr.bf16.mxu0 0
      %418 = vmatpush1.bf16.msra.mxu0 0
      %419 = vmatprep.subr.bf16.mxu0 0
      %420 = vmatpush1.bf16.msra.mxu0 0
      %421 = vmatprep.subr.bf16.mxu0 0
      %422 = vmatpush1.bf16.msra.mxu0 0
      %423 = vmatprep.subr.bf16.mxu0 0
      %424 = vmatpush1.bf16.msra.mxu0 0
      %425 = vmatprep.subr.bf16.mxu0 0
      %426 = vmatpush1.bf16.msra.mxu0 0
      %427 = vmatprep.subr.bf16.mxu0 0
      %428 = vmatpush1.bf16.msra.mxu0 0
      %429 = vmatprep.subr.bf16.mxu0 0
      %430 = vmatpush1.bf16.msra.mxu0 0
      %431 = vmatprep.subr.bf16.mxu0 0
      %432 = vmatpush1.bf16.msra.mxu0 0
      %433 = vmatprep.subr.bf16.mxu0 0
      %434 = vmatpush1.bf16.msra.mxu0 0
      %435 = vmatprep.subr.bf16.mxu0 0
      %436 = vmatpush1.bf16.msra.mxu0 0
      %437 = vmatprep.subr.bf16.mxu0 0
      %438 = vmatpush1.bf16.msra.mxu0 0
      %439 = vmatprep.subr.bf16.mxu0 0
      %440 = vmatpush1.bf16.msra.mxu0 0
      %441 = vmatprep.subr.bf16.mxu0 0
      %442 = vmatpush1.bf16.msra.mxu0 0
      %443 = vmatprep.subr.bf16.mxu0 0
      %444 = vmatpush1.bf16.msra.mxu0 0
      %445 = vmatprep.subr.bf16.mxu0 0
      %446 = vmatpush1.bf16.msra.mxu0 0
      %447 = vmatprep.mubr.bf16.mxu0 0
      %448 = vmatmul.mubr.bf16.gmra.mrb[0].mxu0 %v413
      %v449 = vpop.f32.mrb[0].mxu0
      %v450 = vadd.f32 0.0, %v449
      %v451 = vpop.f32.mrb[0].mxu0
      %v452 = vadd.f32 0.0, %v451
      %v453 = vpop.f32.mrb[0].mxu0
      %v454 = vpop.f32.mrb[0].mxu0
      %455 = vdwg.mxu0
      %456 = vmatprep.subr.bf16.mxu0 %v398
      %457 = vmatpush1.bf16.msra.mxu0 %v397
      %458 = vmatprep.subr.bf16.mxu0 0
      %459 = vmatpush1.bf16.msra.mxu0 0
      %460 = vmatprep.subr.bf16.mxu0 0
      %461 = vmatpush1.bf16.msra.mxu0 0
      %462 = vmatprep.subr.bf16.mxu0 0
      %463 = vmatpush1.bf16.msra.mxu0 0
      %464 = vmatprep.subr.bf16.mxu0 0
      %465 = vmatpush1.bf16.msra.mxu0 0
      %466 = vmatprep.subr.bf16.mxu0 0
      %467 = vmatpush1.bf16.msra.mxu0 0
      %468 = vmatprep.subr.bf16.mxu0 0
      %469 = vmatpush1.bf16.msra.mxu0 0
      %470 = vmatprep.subr.bf16.mxu0 0
      %471 = vmatpush1.bf16.msra.mxu0 0
      %472 = vmatprep.subr.bf16.mxu0 0
      %473 = vmatpush1.bf16.msra.mxu0 0
      %474 = vmatprep.subr.bf16.mxu0 0
      %475 = vmatpush1.bf16.msra.mxu0 0
      %476 = vmatprep.subr.bf16.mxu0 0
      %477 = vmatpush1.bf16.msra.mxu0 0
      %478 = vmatprep.subr.bf16.mxu0 0
      %479 = vmatpush1.bf16.msra.mxu0 0
      %480 = vmatprep.subr.bf16.mxu0 0
      %481 = vmatpush1.bf16.msra.mxu0 0
      %482 = vmatprep.subr.bf16.mxu0 0
      %483 = vmatpush1.bf16.msra.mxu0 0
      %484 = vmatprep.subr.bf16.mxu0 0
      %485 = vmatpush1.bf16.msra.mxu0 0
      %486 = vmatprep.subr.bf16.mxu0 0
      %487 = vmatpush1.bf16.msra.mxu0 0
      %488 = vmatprep.mubr.bf16.mxu0 0
      %489 = vmatmul.mubr.bf16.gmra.mrb[0].mxu0 %v413
      %v490 = vpop.f32.mrb[0].mxu0
      %v491 = vadd.f32 0.0, %v490
      %v492 = vpop.f32.mrb[0].mxu0
      %v493 = vadd.f32 0.0, %v492
      %v494 = vpop.f32.mrb[0].mxu0
      %v495 = vpop.f32.mrb[0].mxu0
      %496 = vdwg.mxu0
      %497 = vmatprep.subr.bf16.mxu0 %v400
      %498 = vmatpush1.bf16.msra.mxu0 %v399
      %499 = vmatprep.subr.bf16.mxu0 0
      %500 = vmatpush1.bf16.msra.mxu0 0
      %501 = vmatprep.subr.bf16.mxu0 0
      %502 = vmatpush1.bf16.msra.mxu0 0
      %503 = vmatprep.subr.bf16.mxu0 0
      %504 = vmatpush1.bf16.msra.mxu0 0
      %505 = vmatprep.subr.bf16.mxu0 0
      %506 = vmatpush1.bf16.msra.mxu0 0
      %507 = vmatprep.subr.bf16.mxu0 0
      %508 = vmatpush1.bf16.msra.mxu0 0
      %509 = vmatprep.subr.bf16.mxu0 0
      %510 = vmatpush1.bf16.msra.mxu0 0
      %511 = vmatprep.subr.bf16.mxu0 0
      %512 = vmatpush1.bf16.msra.mxu0 0
      %513 = vmatprep.subr.bf16.mxu0 0
      %514 = vmatpush1.bf16.msra.mxu0 0
      %515 = vmatprep.subr.bf16.mxu0 0
      %516 = vmatpush1.bf16.msra.mxu0 0
      %517 = vmatprep.subr.bf16.mxu0 0
      %518 = vmatpush1.bf16.msra.mxu0 0
      %519 = vmatprep.subr.bf16.mxu0 0
      %520 = vmatpush1.bf16.msra.mxu0 0
      %521 = vmatprep.subr.bf16.mxu0 0
      %522 = vmatpush1.bf16.msra.mxu0 0
      %523 = vmatprep.subr.bf16.mxu0 0
      %524 = vmatpush1.bf16.msra.mxu0 0
      %525 = vmatprep.subr.bf16.mxu0 0
      %526 = vmatpush1.bf16.msra.mxu0 0
      %527 = vmatprep.subr.bf16.mxu0 0
      %528 = vmatpush1.bf16.msra.mxu0 0
      %529 = vmatprep.mubr.bf16.mxu0 0
      %530 = vmatmul.mubr.bf16.gmra.mrb[0].mxu0 %v413
      %v531 = vpop.f32.mrb[0].mxu0
      %v532 = vadd.f32 0.0, %v531
      %v533 = vpop.f32.mrb[0].mxu0
      %v534 = vadd.f32 0.0, %v533
      %v535 = vpop.f32.mrb[0].mxu0
      %v536 = vpop.f32.mrb[0].mxu0
      %537 = vdwg.mxu0
      %538 = vmatprep.subr.bf16.mxu0 %v402
      %539 = vmatpush1.bf16.msra.mxu0 %v401
      %540 = vmatprep.subr.bf16.mxu0 0
      %541 = vmatpush1.bf16.msra.mxu0 0
      %542 = vmatprep.subr.bf16.mxu0 0
      %543 = vmatpush1.bf16.msra.mxu0 0
      %544 = vmatprep.subr.bf16.mxu0 0
      %545 = vmatpush1.bf16.msra.mxu0 0
      %546 = vmatprep.subr.bf16.mxu0 0
      %547 = vmatpush1.bf16.msra.mxu0 0
      %548 = vmatprep.subr.bf16.mxu0 0
      %549 = vmatpush1.bf16.msra.mxu0 0
      %550 = vmatprep.subr.bf16.mxu0 0
      %551 = vmatpush1.bf16.msra.mxu0 0
      %552 = vmatprep.subr.bf16.mxu0 0
      %553 = vmatpush1.bf16.msra.mxu0 0
      %554 = vmatprep.subr.bf16.mxu0 0
      %555 = vmatpush1.bf16.msra.mxu0 0
      %556 = vmatprep.subr.bf16.mxu0 0
      %557 = vmatpush1.bf16.msra.mxu0 0
      %558 = vmatprep.subr.bf16.mxu0 0
      %559 = vmatpush1.bf16.msra.mxu0 0
      %560 = vmatprep.subr.bf16.mxu0 0
      %561 = vmatpush1.bf16.msra.mxu0 0
      %562 = vmatprep.subr.bf16.mxu0 0
      %563 = vmatpush1.bf16.msra.mxu0 0
      %564 = vmatprep.subr.bf16.mxu0 0
      %565 = vmatpush1.bf16.msra.mxu0 0
      %566 = vmatprep.subr.bf16.mxu0 0
      %567 = vmatpush1.bf16.msra.mxu0 0
      %568 = vmatprep.subr.bf16.mxu0 0
      %569 = vmatpush1.bf16.msra.mxu0 0
      %570 = vmatprep.mubr.bf16.mxu0 0
      %571 = vmatmul.mubr.bf16.gmra.mrb[0].mxu0 %v413
      %v572 = vpop.f32.mrb[0].mxu0
      %v573 = vadd.f32 0.0, %v572
      %v574 = vpop.f32.mrb[0].mxu0
      %v575 = vadd.f32 0.0, %v574
      %v576 = vpop.f32.mrb[0].mxu0
      %v577 = vpop.f32.mrb[0].mxu0
      %578 = vdwg.mxu0
      %579 = vrot.lane.b32.xlu0 %v367, 111
      %v580 = vpop.permute.xlu0 %579
      %581 = vrot.lane.b32.xlu0 %v368, 111
      %v582 = vpop.permute.xlu0 %581
      %583 = vrot.lane.b32.xlu0 %v369, 111
      %v584 = vpop.permute.xlu0 %583
      %585 = vrot.lane.b32.xlu0 %v370, 111
      %v586 = vpop.permute.xlu0 %585
      %587 = vrot.lane.b32.xlu0 %v371, 111
      %v588 = vpop.permute.xlu0 %587
      %589 = vrot.lane.b32.xlu0 %v372, 111
      %v590 = vpop.permute.xlu0 %589
      %591 = vrot.lane.b32.xlu0 %v373, 111
      %v592 = vpop.permute.xlu0 %591
      %593 = vrot.lane.b32.xlu0 %v374, 111
      %v594 = vpop.permute.xlu0 %593
      %595 = vrot.lane.b32.xlu0 %v375, 111
      %v596 = vpop.permute.xlu0 %595
      %vm597 = vcmask 908288
      %v598 = vsel %vm597, %v580, %v582
      %v599 = vsel %vm597, %v582, %v584
      %v600 = vsel %vm597, %v584, %v586
      %v601 = vsel %vm597, %v586, %v588
      %v602 = vsel %vm597, %v588, %v590
      %v603 = vsel %vm597, %v590, %v592
      %v604 = vsel %vm597, %v592, %v594
      %v605 = vsel %vm597, %v594, %v596
      %v615 = vsel %vm411, %v312, 0
      %617 = vmatprep.subr.bf16.mxu0 %v599
      %618 = vmatpush1.bf16.msra.mxu0 %v598
      %619 = vmatprep.subr.bf16.mxu0 0
      %620 = vmatpush1.bf16.msra.mxu0 0
      %621 = vmatprep.subr.bf16.mxu0 0
      %622 = vmatpush1.bf16.msra.mxu0 0
      %623 = vmatprep.subr.bf16.mxu0 0
      %624 = vmatpush1.bf16.msra.mxu0 0
      %625 = vmatprep.subr.bf16.mxu0 0
      %626 = vmatpush1.bf16.msra.mxu0 0
      %627 = vmatprep.subr.bf16.mxu0 0
      %628 = vmatpush1.bf16.msra.mxu0 0
      %629 = vmatprep.subr.bf16.mxu0 0
      %630 = vmatpush1.bf16.msra.mxu0 0
      %631 = vmatprep.subr.bf16.mxu0 0
      %632 = vmatpush1.bf16.msra.mxu0 0
      %633 = vmatprep.subr.bf16.mxu0 0
      %634 = vmatpush1.bf16.msra.mxu0 0
      %635 = vmatprep.subr.bf16.mxu0 0
      %636 = vmatpush1.bf16.msra.mxu0 0
      %637 = vmatprep.subr.bf16.mxu0 0
      %638 = vmatpush1.bf16.msra.mxu0 0
      %639 = vmatprep.subr.bf16.mxu0 0
      %640 = vmatpush1.bf16.msra.mxu0 0
      %641 = vmatprep.subr.bf16.mxu0 0
      %642 = vmatpush1.bf16.msra.mxu0 0
      %643 = vmatprep.subr.bf16.mxu0 0
      %644 = vmatpush1.bf16.msra.mxu0 0
      %645 = vmatprep.subr.bf16.mxu0 0
      %646 = vmatpush1.bf16.msra.mxu0 0
      %647 = vmatprep.subr.bf16.mxu0 0
      %648 = vmatpush1.bf16.msra.mxu0 0
      %649 = vmatprep.mubr.bf16.mxu0 0
      %650 = vmatmul.mubr.bf16.gmra.mrb[0].mxu0 %v615
      %v651 = vpop.f32.mrb[0].mxu0
      %v652 = vadd.f32 %v450, %v651
      %v653 = vpop.f32.mrb[0].mxu0
      %v654 = vadd.f32 %v452, %v653
      %v655 = vpop.f32.mrb[0].mxu0
      %v656 = vpop.f32.mrb[0].mxu0
      %657 = vdwg.mxu0
      %658 = vmatprep.subr.bf16.mxu0 %v601
      %659 = vmatpush1.bf16.msra.mxu0 %v600
      %660 = vmatprep.subr.bf16.mxu0 0
      %661 = vmatpush1.bf16.msra.mxu0 0
      %662 = vmatprep.subr.bf16.mxu0 0
      %663 = vmatpush1.bf16.msra.mxu0 0
      %664 = vmatprep.subr.bf16.mxu0 0
      %665 = vmatpush1.bf16.msra.mxu0 0
      %666 = vmatprep.subr.bf16.mxu0 0
      %667 = vmatpush1.bf16.msra.mxu0 0
      %668 = vmatprep.subr.bf16.mxu0 0
      %669 = vmatpush1.bf16.msra.mxu0 0
      %670 = vmatprep.subr.bf16.mxu0 0
      %671 = vmatpush1.bf16.msra.mxu0 0
      %672 = vmatprep.subr.bf16.mxu0 0
      %673 = vmatpush1.bf16.msra.mxu0 0
      %674 = vmatprep.subr.bf16.mxu0 0
      %675 = vmatpush1.bf16.msra.mxu0 0
      %676 = vmatprep.subr.bf16.mxu0 0
      %677 = vmatpush1.bf16.msra.mxu0 0
      %678 = vmatprep.subr.bf16.mxu0 0
      %679 = vmatpush1.bf16.msra.mxu0 0
      %680 = vmatprep.subr.bf16.mxu0 0
      %681 = vmatpush1.bf16.msra.mxu0 0
      %682 = vmatprep.subr.bf16.mxu0 0
      %683 = vmatpush1.bf16.msra.mxu0 0
      %684 = vmatprep.subr.bf16.mxu0 0
      %685 = vmatpush1.bf16.msra.mxu0 0
      %686 = vmatprep.subr.bf16.mxu0 0
      %687 = vmatpush1.bf16.msra.mxu0 0
      %688 = vmatprep.subr.bf16.mxu0 0
      %689 = vmatpush1.bf16.msra.mxu0 0
      %690 = vmatprep.mubr.bf16.mxu0 0
      %691 = vmatmul.mubr.bf16.gmra.mrb[0].mxu0 %v615
      %v692 = vpop.f32.mrb[0].mxu0
      %v693 = vadd.f32 %v491, %v692
      %v694 = vpop.f32.mrb[0].mxu0
      %v695 = vadd.f32 %v493, %v694
      %v696 = vpop.f32.mrb[0].mxu0
      %v697 = vpop.f32.mrb[0].mxu0
      %698 = vdwg.mxu0
      %699 = vmatprep.subr.bf16.mxu0 %v603
      %700 = vmatpush1.bf16.msra.mxu0 %v602
      %701 = vmatprep.subr.bf16.mxu0 0
      %702 = vmatpush1.bf16.msra.mxu0 0
      %703 = vmatprep.subr.bf16.mxu0 0
      %704 = vmatpush1.bf16.msra.mxu0 0
      %705 = vmatprep.subr.bf16.mxu0 0
      %706 = vmatpush1.bf16.msra.mxu0 0
      %707 = vmatprep.subr.bf16.mxu0 0
      %708 = vmatpush1.bf16.msra.mxu0 0
      %709 = vmatprep.subr.bf16.mxu0 0
      %710 = vmatpush1.bf16.msra.mxu0 0
      %711 = vmatprep.subr.bf16.mxu0 0
      %712 = vmatpush1.bf16.msra.mxu0 0
      %713 = vmatprep.subr.bf16.mxu0 0
      %714 = vmatpush1.bf16.msra.mxu0 0
      %715 = vmatprep.subr.bf16.mxu0 0
      %716 = vmatpush1.bf16.msra.mxu0 0
      %717 = vmatprep.subr.bf16.mxu0 0
      %718 = vmatpush1.bf16.msra.mxu0 0
      %719 = vmatprep.subr.bf16.mxu0 0
      %720 = vmatpush1.bf16.msra.mxu0 0
      %721 = vmatprep.subr.bf16.mxu0 0
      %722 = vmatpush1.bf16.msra.mxu0 0
      %723 = vmatprep.subr.bf16.mxu0 0
      %724 = vmatpush1.bf16.msra.mxu0 0
      %725 = vmatprep.subr.bf16.mxu0 0
      %726 = vmatpush1.bf16.msra.mxu0 0
      %727 = vmatprep.subr.bf16.mxu0 0
      %728 = vmatpush1.bf16.msra.mxu0 0
      %729 = vmatprep.subr.bf16.mxu0 0
      %730 = vmatpush1.bf16.msra.mxu0 0
      %731 = vmatprep.mubr.bf16.mxu0 0
      %732 = vmatmul.mubr.bf16.gmra.mrb[0].mxu0 %v615
      %v733 = vpop.f32.mrb[0].mxu0
      %v734 = vadd.f32 %v532, %v733
      %v735 = vpop.f32.mrb[0].mxu0
      %v736 = vadd.f32 %v534, %v735
      %v737 = vpop.f32.mrb[0].mxu0
      %v738 = vpop.f32.mrb[0].mxu0
      %739 = vdwg.mxu0
      %740 = vmatprep.subr.bf16.mxu0 %v605
      %741 = vmatpush1.bf16.msra.mxu0 %v604
      %742 = vmatprep.subr.bf16.mxu0 0
      %743 = vmatpush1.bf16.msra.mxu0 0
      %744 = vmatprep.subr.bf16.mxu0 0
      %745 = vmatpush1.bf16.msra.mxu0 0
      %746 = vmatprep.subr.bf16.mxu0 0
      %747 = vmatpush1.bf16.msra.mxu0 0
      %748 = vmatprep.subr.bf16.mxu0 0
      %749 = vmatpush1.bf16.msra.mxu0 0
      %750 = vmatprep.subr.bf16.mxu0 0
      %751 = vmatpush1.bf16.msra.mxu0 0
      %752 = vmatprep.subr.bf16.mxu0 0
      %753 = vmatpush1.bf16.msra.mxu0 0
      %754 = vmatprep.subr.bf16.mxu0 0
      %755 = vmatpush1.bf16.msra.mxu0 0
      %756 = vmatprep.subr.bf16.mxu0 0
      %757 = vmatpush1.bf16.msra.mxu0 0
      %758 = vmatprep.subr.bf16.mxu0 0
      %759 = vmatpush1.bf16.msra.mxu0 0
      %760 = vmatprep.subr.bf16.mxu0 0
      %761 = vmatpush1.bf16.msra.mxu0 0
      %762 = vmatprep.subr.bf16.mxu0 0
      %763 = vmatpush1.bf16.msra.mxu0 0
      %764 = vmatprep.subr.bf16.mxu0 0
      %765 = vmatpush1.bf16.msra.mxu0 0
      %766 = vmatprep.subr.bf16.mxu0 0
      %767 = vmatpush1.bf16.msra.mxu0 0
      %768 = vmatprep.subr.bf16.mxu0 0
      %769 = vmatpush1.bf16.msra.mxu0 0
      %770 = vmatprep.subr.bf16.mxu0 0
      %771 = vmatpush1.bf16.msra.mxu0 0
      %772 = vmatprep.mubr.bf16.mxu0 0
      %773 = vmatmul.mubr.bf16.gmra.mrb[0].mxu0 %v615
      %v774 = vpop.f32.mrb[0].mxu0
      %v775 = vadd.f32 %v573, %v774
      %v776 = vpop.f32.mrb[0].mxu0
      %v777 = vadd.f32 %v575, %v776
      %v778 = vpop.f32.mrb[0].mxu0
      %v779 = vpop.f32.mrb[0].mxu0
      %780 = vdwg.mxu0
      %781 = vrot.lane.b32.xlu0 %v367, 109
      %v782 = vpop.permute.xlu0 %781
      %783 = vrot.lane.b32.xlu0 %v368, 109
      %v784 = vpop.permute.xlu0 %783
      %785 = vrot.lane.b32.xlu0 %v369, 109
      %v786 = vpop.permute.xlu0 %785
      %787 = vrot.lane.b32.xlu0 %v370, 109
      %v788 = vpop.permute.xlu0 %787
      %789 = vrot.lane.b32.xlu0 %v371, 109
      %v790 = vpop.permute.xlu0 %789
      %791 = vrot.lane.b32.xlu0 %v372, 109
      %v792 = vpop.permute.xlu0 %791
      %793 = vrot.lane.b32.xlu0 %v373, 109
      %v794 = vpop.permute.xlu0 %793
      %795 = vrot.lane.b32.xlu0 %v374, 109
      %v796 = vpop.permute.xlu0 %795
      %797 = vrot.lane.b32.xlu0 %v375, 109
      %v798 = vpop.permute.xlu0 %797
      %vm799 = vcmask 891904
      %v800 = vsel %vm799, %v782, %v784
      %v801 = vsel %vm799, %v784, %v786
      %v802 = vsel %vm799, %v786, %v788
      %v803 = vsel %vm799, %v788, %v790
      %v804 = vsel %vm799, %v790, %v792
      %v805 = vsel %vm799, %v792, %v794
      %v806 = vsel %vm799, %v794, %v796
      %v807 = vsel %vm799, %v796, %v798
      %v817 = vsel %vm411, %v314, 0
      %819 = vmatprep.subr.bf16.mxu0 %v801
      %820 = vmatpush1.bf16.msra.mxu0 %v800
      %821 = vmatprep.subr.bf16.mxu0 0
      %822 = vmatpush1.bf16.msra.mxu0 0
      %823 = vmatprep.subr.bf16.mxu0 0
      %824 = vmatpush1.bf16.msra.mxu0 0
      %825 = vmatprep.subr.bf16.mxu0 0
      %826 = vmatpush1.bf16.msra.mxu0 0
      %827 = vmatprep.subr.bf16.mxu0 0
      %828 = vmatpush1.bf16.msra.mxu0 0
      %829 = vmatprep.subr.bf16.mxu0 0
      %830 = vmatpush1.bf16.msra.mxu0 0
      %831 = vmatprep.subr.bf16.mxu0 0
      %832 = vmatpush1.bf16.msra.mxu0 0
      %833 = vmatprep.subr.bf16.mxu0 0
      %834 = vmatpush1.bf16.msra.mxu0 0
      %835 = vmatprep.subr.bf16.mxu0 0
      %836 = vmatpush1.bf16.msra.mxu0 0
      %837 = vmatprep.subr.bf16.mxu0 0
      %838 = vmatpush1.bf16.msra.mxu0 0
      %839 = vmatprep.subr.bf16.mxu0 0
      %840 = vmatpush1.bf16.msra.mxu0 0
      %841 = vmatprep.subr.bf16.mxu0 0
      %842 = vmatpush1.bf16.msra.mxu0 0
      %843 = vmatprep.subr.bf16.mxu0 0
      %844 = vmatpush1.bf16.msra.mxu0 0
      %845 = vmatprep.subr.bf16.mxu0 0
      %846 = vmatpush1.bf16.msra.mxu0 0
      %847 = vmatprep.subr.bf16.mxu0 0
      %848 = vmatpush1.bf16.msra.mxu0 0
      %849 = vmatprep.subr.bf16.mxu0 0
      %850 = vmatpush1.bf16.msra.mxu0 0
      %851 = vmatprep.mubr.bf16.mxu0 0
      %852 = vmatmul.mubr.bf16.gmra.mrb[0].mxu0 %v817
      %v853 = vpop.f32.mrb[0].mxu0
      %v854 = vadd.f32 0.0, %v853
      %v855 = vpop.f32.mrb[0].mxu0
      %v856 = vadd.f32 0.0, %v855
      %v857 = vpop.f32.mrb[0].mxu0
      %v858 = vpop.f32.mrb[0].mxu0
      %859 = vdwg.mxu0
      %860 = vmatprep.subr.bf16.mxu0 %v803
      %861 = vmatpush1.bf16.msra.mxu0 %v802
      %862 = vmatprep.subr.bf16.mxu0 0
      %863 = vmatpush1.bf16.msra.mxu0 0
      %864 = vmatprep.subr.bf16.mxu0 0
      %865 = vmatpush1.bf16.msra.mxu0 0
      %866 = vmatprep.subr.bf16.mxu0 0
      %867 = vmatpush1.bf16.msra.mxu0 0
      %868 = vmatprep.subr.bf16.mxu0 0
      %869 = vmatpush1.bf16.msra.mxu0 0
      %870 = vmatprep.subr.bf16.mxu0 0
      %871 = vmatpush1.bf16.msra.mxu0 0
      %872 = vmatprep.subr.bf16.mxu0 0
      %873 = vmatpush1.bf16.msra.mxu0 0
      %874 = vmatprep.subr.bf16.mxu0 0
      %875 = vmatpush1.bf16.msra.mxu0 0
      %876 = vmatprep.subr.bf16.mxu0 0
      %877 = vmatpush1.bf16.msra.mxu0 0
      %878 = vmatprep.subr.bf16.mxu0 0
      %879 = vmatpush1.bf16.msra.mxu0 0
      %880 = vmatprep.subr.bf16.mxu0 0
      %881 = vmatpush1.bf16.msra.mxu0 0
      %882 = vmatprep.subr.bf16.mxu0 0
      %883 = vmatpush1.bf16.msra.mxu0 0
      %884 = vmatprep.subr.bf16.mxu0 0
      %885 = vmatpush1.bf16.msra.mxu0 0
      %886 = vmatprep.subr.bf16.mxu0 0
      %887 = vmatpush1.bf16.msra.mxu0 0
      %888 = vmatprep.subr.bf16.mxu0 0
      %889 = vmatpush1.bf16.msra.mxu0 0
      %890 = vmatprep.subr.bf16.mxu0 0
      %891 = vmatpush1.bf16.msra.mxu0 0
      %892 = vmatprep.mubr.bf16.mxu0 0
      %893 = vmatmul.mubr.bf16.gmra.mrb[0].mxu0 %v817
      %v894 = vpop.f32.mrb[0].mxu0
      %v895 = vadd.f32 0.0, %v894
      %v896 = vpop.f32.mrb[0].mxu0
      %v897 = vadd.f32 0.0, %v896
      %v898 = vpop.f32.mrb[0].mxu0
      %v899 = vpop.f32.mrb[0].mxu0
      %900 = vdwg.mxu0
      %901 = vmatprep.subr.bf16.mxu0 %v805
      %902 = vmatpush1.bf16.msra.mxu0 %v804
      %903 = vmatprep.subr.bf16.mxu0 0
      %904 = vmatpush1.bf16.msra.mxu0 0
      %905 = vmatprep.subr.bf16.mxu0 0
      %906 = vmatpush1.bf16.msra.mxu0 0
      %907 = vmatprep.subr.bf16.mxu0 0
      %908 = vmatpush1.bf16.msra.mxu0 0
      %909 = vmatprep.subr.bf16.mxu0 0
      %910 = vmatpush1.bf16.msra.mxu0 0
      %911 = vmatprep.subr.bf16.mxu0 0
      %912 = vmatpush1.bf16.msra.mxu0 0
      %913 = vmatprep.subr.bf16.mxu0 0
      %914 = vmatpush1.bf16.msra.mxu0 0
      %915 = vmatprep.subr.bf16.mxu0 0
      %916 = vmatpush1.bf16.msra.mxu0 0
      %917 = vmatprep.subr.bf16.mxu0 0
      %918 = vmatpush1.bf16.msra.mxu0 0
      %919 = vmatprep.subr.bf16.mxu0 0
      %920 = vmatpush1.bf16.msra.mxu0 0
      %921 = vmatprep.subr.bf16.mxu0 0
      %922 = vmatpush1.bf16.msra.mxu0 0
      %923 = vmatprep.subr.bf16.mxu0 0
      %924 = vmatpush1.bf16.msra.mxu0 0
      %925 = vmatprep.subr.bf16.mxu0 0
      %926 = vmatpush1.bf16.msra.mxu0 0
      %927 = vmatprep.subr.bf16.mxu0 0
      %928 = vmatpush1.bf16.msra.mxu0 0
      %929 = vmatprep.subr.bf16.mxu0 0
      %930 = vmatpush1.bf16.msra.mxu0 0
      %931 = vmatprep.subr.bf16.mxu0 0
      %932 = vmatpush1.bf16.msra.mxu0 0
      %933 = vmatprep.mubr.bf16.mxu0 0
      %934 = vmatmul.mubr.bf16.gmra.mrb[0].mxu0 %v817
      %v935 = vpop.f32.mrb[0].mxu0
      %v936 = vadd.f32 0.0, %v935
      %v937 = vpop.f32.mrb[0].mxu0
      %v938 = vadd.f32 0.0, %v937
      %v939 = vpop.f32.mrb[0].mxu0
      %v940 = vpop.f32.mrb[0].mxu0
      %941 = vdwg.mxu0
      %942 = vmatprep.subr.bf16.mxu0 %v807
      %943 = vmatpush1.bf16.msra.mxu0 %v806
      %944 = vmatprep.subr.bf16.mxu0 0
      %945 = vmatpush1.bf16.msra.mxu0 0
      %946 = vmatprep.subr.bf16.mxu0 0
      %947 = vmatpush1.bf16.msra.mxu0 0
      %948 = vmatprep.subr.bf16.mxu0 0
      %949 = vmatpush1.bf16.msra.mxu0 0
      %950 = vmatprep.subr.bf16.mxu0 0
      %951 = vmatpush1.bf16.msra.mxu0 0
      %952 = vmatprep.subr.bf16.mxu0 0
      %953 = vmatpush1.bf16.msra.mxu0 0
      %954 = vmatprep.subr.bf16.mxu0 0
      %955 = vmatpush1.bf16.msra.mxu0 0
      %956 = vmatprep.subr.bf16.mxu0 0
      %957 = vmatpush1.bf16.msra.mxu0 0
      %958 = vmatprep.subr.bf16.mxu0 0
      %959 = vmatpush1.bf16.msra.mxu0 0
      %960 = vmatprep.subr.bf16.mxu0 0
      %961 = vmatpush1.bf16.msra.mxu0 0
      %962 = vmatprep.subr.bf16.mxu0 0
      %963 = vmatpush1.bf16.msra.mxu0 0
      %964 = vmatprep.subr.bf16.mxu0 0
      %965 = vmatpush1.bf16.msra.mxu0 0
      %966 = vmatprep.subr.bf16.mxu0 0
      %967 = vmatpush1.bf16.msra.mxu0 0
      %968 = vmatprep.subr.bf16.mxu0 0
      %969 = vmatpush1.bf16.msra.mxu0 0
      %970 = vmatprep.subr.bf16.mxu0 0
      %971 = vmatpush1.bf16.msra.mxu0 0
      %972 = vmatprep.subr.bf16.mxu0 0
      %973 = vmatpush1.bf16.msra.mxu0 0
      %974 = vmatprep.mubr.bf16.mxu0 0
      %975 = vmatmul.mubr.bf16.gmra.mrb[0].mxu0 %v817
      %v976 = vpop.f32.mrb[0].mxu0
      %v977 = vadd.f32 0.0, %v976
      %v978 = vpop.f32.mrb[0].mxu0
      %v979 = vadd.f32 0.0, %v978
      %v980 = vpop.f32.mrb[0].mxu0
      %v981 = vpop.f32.mrb[0].mxu0
      %982 = vdwg.mxu0
      %v983 = vadd.f32 %v652, %v854
      %v984 = vadd.f32 %v654, %v856
      %v985 = vadd.f32 %v693, %v895
      %v986 = vadd.f32 %v695, %v897
      %v987 = vadd.f32 %v734, %v936
      %v988 = vadd.f32 %v736, %v938
      %v989 = vadd.f32 %v775, %v977
      %v990 = vadd.f32 %v777, %v979
      %991 = vrot.lane.b32.xlu0 %v367, 101
      %v992 = vpop.permute.xlu0 %991
      %993 = vrot.lane.b32.xlu0 %v368, 101
      %v994 = vpop.permute.xlu0 %993
      %995 = vrot.lane.b32.xlu0 %v369, 101
      %v996 = vpop.permute.xlu0 %995
      %997 = vrot.lane.b32.xlu0 %v370, 101
      %v998 = vpop.permute.xlu0 %997
      %999 = vrot.lane.b32.xlu0 %v371, 101
      %v1000 = vpop.permute.xlu0 %999
      %1001 = vrot.lane.b32.xlu0 %v372, 101
      %v1002 = vpop.permute.xlu0 %1001
      %1003 = vrot.lane.b32.xlu0 %v373, 101
      %v1004 = vpop.permute.xlu0 %1003
      %1005 = vrot.lane.b32.xlu0 %v374, 101
      %v1006 = vpop.permute.xlu0 %1005
      %1007 = vrot.lane.b32.xlu0 %v375, 101
      %v1008 = vpop.permute.xlu0 %1007
      %vm1009 = vcmask 826368
      %v1010 = vsel %vm1009, %v992, %v994
      %v1011 = vsel %vm1009, %v994, %v996
      %v1012 = vsel %vm1009, %v996, %v998
      %v1013 = vsel %vm1009, %v998, %v1000
      %v1014 = vsel %vm1009, %v1000, %v1002
      %v1015 = vsel %vm1009, %v1002, %v1004
      %v1016 = vsel %vm1009, %v1004, %v1006
      %v1017 = vsel %vm1009, %v1006, %v1008
      %v1027 = vsel %vm411, %v315, 0
      %1029 = vmatprep.subr.bf16.mxu0 %v1011
      %1030 = vmatpush1.bf16.msra.mxu0 %v1010
      %1031 = vmatprep.subr.bf16.mxu0 0
      %1032 = vmatpush1.bf16.msra.mxu0 0
      %1033 = vmatprep.subr.bf16.mxu0 0
      %1034 = vmatpush1.bf16.msra.mxu0 0
      %1035 = vmatprep.subr.bf16.mxu0 0
      %1036 = vmatpush1.bf16.msra.mxu0 0
      %1037 = vmatprep.subr.bf16.mxu0 0
      %1038 = vmatpush1.bf16.msra.mxu0 0
      %1039 = vmatprep.subr.bf16.mxu0 0
      %1040 = vmatpush1.bf16.msra.mxu0 0
      %1041 = vmatprep.subr.bf16.mxu0 0
      %1042 = vmatpush1.bf16.msra.mxu0 0
      %1043 = vmatprep.subr.bf16.mxu0 0
      %1044 = vmatpush1.bf16.msra.mxu0 0
      %1045 = vmatprep.subr.bf16.mxu0 0
      %1046 = vmatpush1.bf16.msra.mxu0 0
      %1047 = vmatprep.subr.bf16.mxu0 0
      %1048 = vmatpush1.bf16.msra.mxu0 0
      %1049 = vmatprep.subr.bf16.mxu0 0
      %1050 = vmatpush1.bf16.msra.mxu0 0
      %1051 = vmatprep.subr.bf16.mxu0 0
      %1052 = vmatpush1.bf16.msra.mxu0 0
      %1053 = vmatprep.subr.bf16.mxu0 0
      %1054 = vmatpush1.bf16.msra.mxu0 0
      %1055 = vmatprep.subr.bf16.mxu0 0
      %1056 = vmatpush1.bf16.msra.mxu0 0
      %1057 = vmatprep.subr.bf16.mxu0 0
      %1058 = vmatpush1.bf16.msra.mxu0 0
      %1059 = vmatprep.subr.bf16.mxu0 0
      %1060 = vmatpush1.bf16.msra.mxu0 0
      %1061 = vmatprep.mubr.bf16.mxu0 0
      %1062 = vmatmul.mubr.bf16.gmra.mrb[0].mxu0 %v1027
      %v1063 = vpop.f32.mrb[0].mxu0
      %v1064 = vadd.f32 0.0, %v1063
      %v1065 = vpop.f32.mrb[0].mxu0
      %v1066 = vadd.f32 0.0, %v1065
      %v1067 = vpop.f32.mrb[0].mxu0
      %v1068 = vpop.f32.mrb[0].mxu0
      %1069 = vdwg.mxu0
      %1070 = vmatprep.subr.bf16.mxu0 %v1013
      %1071 = vmatpush1.bf16.msra.mxu0 %v1012
      %1072 = vmatprep.subr.bf16.mxu0 0
      %1073 = vmatpush1.bf16.msra.mxu0 0
      %1074 = vmatprep.subr.bf16.mxu0 0
      %1075 = vmatpush1.bf16.msra.mxu0 0
      %1076 = vmatprep.subr.bf16.mxu0 0
      %1077 = vmatpush1.bf16.msra.mxu0 0
      %1078 = vmatprep.subr.bf16.mxu0 0
      %1079 = vmatpush1.bf16.msra.mxu0 0
      %1080 = vmatprep.subr.bf16.mxu0 0
      %1081 = vmatpush1.bf16.msra.mxu0 0
      %1082 = vmatprep.subr.bf16.mxu0 0
      %1083 = vmatpush1.bf16.msra.mxu0 0
      %1084 = vmatprep.subr.bf16.mxu0 0
      %1085 = vmatpush1.bf16.msra.mxu0 0
      %1086 = vmatprep.subr.bf16.mxu0 0
      %1087 = vmatpush1.bf16.msra.mxu0 0
      %1088 = vmatprep.subr.bf16.mxu0 0
      %1089 = vmatpush1.bf16.msra.mxu0 0
      %1090 = vmatprep.subr.bf16.mxu0 0
      %1091 = vmatpush1.bf16.msra.mxu0 0
      %1092 = vmatprep.subr.bf16.mxu0 0
      %1093 = vmatpush1.bf16.msra.mxu0 0
      %1094 = vmatprep.subr.bf16.mxu0 0
      %1095 = vmatpush1.bf16.msra.mxu0 0
      %1096 = vmatprep.subr.bf16.mxu0 0
      %1097 = vmatpush1.bf16.msra.mxu0 0
      %1098 = vmatprep.subr.bf16.mxu0 0
      %1099 = vmatpush1.bf16.msra.mxu0 0
      %1100 = vmatprep.subr.bf16.mxu0 0
      %1101 = vmatpush1.bf16.msra.mxu0 0
      %1102 = vmatprep.mubr.bf16.mxu0 0
      %1103 = vmatmul.mubr.bf16.gmra.mrb[0].mxu0 %v1027
      %v1104 = vpop.f32.mrb[0].mxu0
      %v1105 = vadd.f32 0.0, %v1104
      %v1106 = vpop.f32.mrb[0].mxu0
      %v1107 = vadd.f32 0.0, %v1106
      %v1108 = vpop.f32.mrb[0].mxu0
      %v1109 = vpop.f32.mrb[0].mxu0
      %1110 = vdwg.mxu0
      %1111 = vmatprep.subr.bf16.mxu0 %v1015
      %1112 = vmatpush1.bf16.msra.mxu0 %v1014
      %1113 = vmatprep.subr.bf16.mxu0 0
      %1114 = vmatpush1.bf16.msra.mxu0 0
      %1115 = vmatprep.subr.bf16.mxu0 0
      %1116 = vmatpush1.bf16.msra.mxu0 0
      %1117 = vmatprep.subr.bf16.mxu0 0
      %1118 = vmatpush1.bf16.msra.mxu0 0
      %1119 = vmatprep.subr.bf16.mxu0 0
      %1120 = vmatpush1.bf16.msra.mxu0 0
      %1121 = vmatprep.subr.bf16.mxu0 0
      %1122 = vmatpush1.bf16.msra.mxu0 0
      %1123 = vmatprep.subr.bf16.mxu0 0
      %1124 = vmatpush1.bf16.msra.mxu0 0
      %1125 = vmatprep.subr.bf16.mxu0 0
      %1126 = vmatpush1.bf16.msra.mxu0 0
      %1127 = vmatprep.subr.bf16.mxu0 0
      %1128 = vmatpush1.bf16.msra.mxu0 0
      %1129 = vmatprep.subr.bf16.mxu0 0
      %1130 = vmatpush1.bf16.msra.mxu0 0
      %1131 = vmatprep.subr.bf16.mxu0 0
      %1132 = vmatpush1.bf16.msra.mxu0 0
      %1133 = vmatprep.subr.bf16.mxu0 0
      %1134 = vmatpush1.bf16.msra.mxu0 0
      %1135 = vmatprep.subr.bf16.mxu0 0
      %1136 = vmatpush1.bf16.msra.mxu0 0
      %1137 = vmatprep.subr.bf16.mxu0 0
      %1138 = vmatpush1.bf16.msra.mxu0 0
      %1139 = vmatprep.subr.bf16.mxu0 0
      %1140 = vmatpush1.bf16.msra.mxu0 0
      %1141 = vmatprep.subr.bf16.mxu0 0
      %1142 = vmatpush1.bf16.msra.mxu0 0
      %1143 = vmatprep.mubr.bf16.mxu0 0
      %1144 = vmatmul.mubr.bf16.gmra.mrb[0].mxu0 %v1027
      %v1145 = vpop.f32.mrb[0].mxu0
      %v1146 = vadd.f32 0.0, %v1145
      %v1147 = vpop.f32.mrb[0].mxu0
      %v1148 = vadd.f32 0.0, %v1147
      %v1149 = vpop.f32.mrb[0].mxu0
      %v1150 = vpop.f32.mrb[0].mxu0
      %1151 = vdwg.mxu0
      %1152 = vmatprep.subr.bf16.mxu0 %v1017
      %1153 = vmatpush1.bf16.msra.mxu0 %v1016
      %1154 = vmatprep.subr.bf16.mxu0 0
      %1155 = vmatpush1.bf16.msra.mxu0 0
      %1156 = vmatprep.subr.bf16.mxu0 0
      %1157 = vmatpush1.bf16.msra.mxu0 0
      %1158 = vmatprep.subr.bf16.mxu0 0
      %1159 = vmatpush1.bf16.msra.mxu0 0
      %1160 = vmatprep.subr.bf16.mxu0 0
      %1161 = vmatpush1.bf16.msra.mxu0 0
      %1162 = vmatprep.subr.bf16.mxu0 0
      %1163 = vmatpush1.bf16.msra.mxu0 0
      %1164 = vmatprep.subr.bf16.mxu0 0
      %1165 = vmatpush1.bf16.msra.mxu0 0
      %1166 = vmatprep.subr.bf16.mxu0 0
      %1167 = vmatpush1.bf16.msra.mxu0 0
      %1168 = vmatprep.subr.bf16.mxu0 0
      %1169 = vmatpush1.bf16.msra.mxu0 0
      %1170 = vmatprep.subr.bf16.mxu0 0
      %1171 = vmatpush1.bf16.msra.mxu0 0
      %1172 = vmatprep.subr.bf16.mxu0 0
      %1173 = vmatpush1.bf16.msra.mxu0 0
      %1174 = vmatprep.subr.bf16.mxu0 0
      %1175 = vmatpush1.bf16.msra.mxu0 0
      %1176 = vmatprep.subr.bf16.mxu0 0
      %1177 = vmatpush1.bf16.msra.mxu0 0
      %1178 = vmatprep.subr.bf16.mxu0 0
      %1179 = vmatpush1.bf16.msra.mxu0 0
      %1180 = vmatprep.subr.bf16.mxu0 0
      %1181 = vmatpush1.bf16.msra.mxu0 0
      %1182 = vmatprep.subr.bf16.mxu0 0
      %1183 = vmatpush1.bf16.msra.mxu0 0
      %1184 = vmatprep.mubr.bf16.mxu0 0
      %1185 = vmatmul.mubr.bf16.gmra.mrb[0].mxu0 %v1027
      %v1186 = vpop.f32.mrb[0].mxu0
      %v1187 = vadd.f32 0.0, %v1186
      %v1188 = vpop.f32.mrb[0].mxu0
      %v1189 = vadd.f32 0.0, %v1188
      %v1190 = vpop.f32.mrb[0].mxu0
      %v1191 = vpop.f32.mrb[0].mxu0
      %1192 = vdwg.mxu0
      %v1193 = vadd.f32 %v983, %v1064
      %v1194 = vadd.f32 %v984, %v1066
      %v1195 = vadd.f32 %v985, %v1105
      %v1196 = vadd.f32 %v986, %v1107
      %v1197 = vadd.f32 %v987, %v1146
      %v1198 = vadd.f32 %v988, %v1148
      %v1199 = vadd.f32 %v989, %v1187
      %v1200 = vadd.f32 %v990, %v1189
      %1201 = vrot.lane.b32.xlu0 %v367, 100
      %v1202 = vpop.permute.xlu0 %1201
      %1203 = vrot.lane.b32.xlu0 %v368, 100
      %v1204 = vpop.permute.xlu0 %1203
      %1205 = vrot.lane.b32.xlu0 %v369, 100
      %v1206 = vpop.permute.xlu0 %1205
      %1207 = vrot.lane.b32.xlu0 %v370, 100
      %v1208 = vpop.permute.xlu0 %1207
      %1209 = vrot.lane.b32.xlu0 %v371, 100
      %v1210 = vpop.permute.xlu0 %1209
      %1211 = vrot.lane.b32.xlu0 %v372, 100
      %v1212 = vpop.permute.xlu0 %1211
      %1213 = vrot.lane.b32.xlu0 %v373, 100
      %v1214 = vpop.permute.xlu0 %1213
      %1215 = vrot.lane.b32.xlu0 %v374, 100
      %v1216 = vpop.permute.xlu0 %1215
      %1217 = vrot.lane.b32.xlu0 %v375, 100
      %v1218 = vpop.permute.xlu0 %1217
      %vm1219 = vcmask 818176
      %v1220 = vsel %vm1219, %v1202, %v1204
      %v1221 = vsel %vm1219, %v1204, %v1206
      %v1222 = vsel %vm1219, %v1206, %v1208
      %v1223 = vsel %vm1219, %v1208, %v1210
      %v1224 = vsel %vm1219, %v1210, %v1212
      %v1225 = vsel %vm1219, %v1212, %v1214
      %v1226 = vsel %vm1219, %v1214, %v1216
      %v1227 = vsel %vm1219, %v1216, %v1218
      %v1237 = vsel %vm411, %v316, 0
      %1239 = vmatprep.subr.bf16.mxu0 %v1221
      %1240 = vmatpush1.bf16.msra.mxu0 %v1220
      %1241 = vmatprep.subr.bf16.mxu0 0
      %1242 = vmatpush1.bf16.msra.mxu0 0
      %1243 = vmatprep.subr.bf16.mxu0 0
      %1244 = vmatpush1.bf16.msra.mxu0 0
      %1245 = vmatprep.subr.bf16.mxu0 0
      %1246 = vmatpush1.bf16.msra.mxu0 0
      %1247 = vmatprep.subr.bf16.mxu0 0
      %1248 = vmatpush1.bf16.msra.mxu0 0
      %1249 = vmatprep.subr.bf16.mxu0 0
      %1250 = vmatpush1.bf16.msra.mxu0 0
      %1251 = vmatprep.subr.bf16.mxu0 0
      %1252 = vmatpush1.bf16.msra.mxu0 0
      %1253 = vmatprep.subr.bf16.mxu0 0
      %1254 = vmatpush1.bf16.msra.mxu0 0
      %1255 = vmatprep.subr.bf16.mxu0 0
      %1256 = vmatpush1.bf16.msra.mxu0 0
      %1257 = vmatprep.subr.bf16.mxu0 0
      %1258 = vmatpush1.bf16.msra.mxu0 0
      %1259 = vmatprep.subr.bf16.mxu0 0
      %1260 = vmatpush1.bf16.msra.mxu0 0
      %1261 = vmatprep.subr.bf16.mxu0 0
      %1262 = vmatpush1.bf16.msra.mxu0 0
      %1263 = vmatprep.subr.bf16.mxu0 0
      %1264 = vmatpush1.bf16.msra.mxu0 0
      %1265 = vmatprep.subr.bf16.mxu0 0
      %1266 = vmatpush1.bf16.msra.mxu0 0
      %1267 = vmatprep.subr.bf16.mxu0 0
      %1268 = vmatpush1.bf16.msra.mxu0 0
      %1269 = vmatprep.subr.bf16.mxu0 0
      %1270 = vmatpush1.bf16.msra.mxu0 0
      %1271 = vmatprep.mubr.bf16.mxu0 0
      %1272 = vmatmul.mubr.bf16.gmra.mrb[0].mxu0 %v1237
      %v1273 = vpop.f32.mrb[0].mxu0
      %v1274 = vadd.f32 0.0, %v1273
      %v1275 = vpop.f32.mrb[0].mxu0
      %v1276 = vadd.f32 0.0, %v1275
      %v1277 = vpop.f32.mrb[0].mxu0
      %v1278 = vpop.f32.mrb[0].mxu0
      %1279 = vdwg.mxu0
      %1280 = vmatprep.subr.bf16.mxu0 %v1223
      %1281 = vmatpush1.bf16.msra.mxu0 %v1222
      %1282 = vmatprep.subr.bf16.mxu0 0
      %1283 = vmatpush1.bf16.msra.mxu0 0
      %1284 = vmatprep.subr.bf16.mxu0 0
      %1285 = vmatpush1.bf16.msra.mxu0 0
      %1286 = vmatprep.subr.bf16.mxu0 0
      %1287 = vmatpush1.bf16.msra.mxu0 0
      %1288 = vmatprep.subr.bf16.mxu0 0
      %1289 = vmatpush1.bf16.msra.mxu0 0
      %1290 = vmatprep.subr.bf16.mxu0 0
      %1291 = vmatpush1.bf16.msra.mxu0 0
      %1292 = vmatprep.subr.bf16.mxu0 0
      %1293 = vmatpush1.bf16.msra.mxu0 0
      %1294 = vmatprep.subr.bf16.mxu0 0
      %1295 = vmatpush1.bf16.msra.mxu0 0
      %1296 = vmatprep.subr.bf16.mxu0 0
      %1297 = vmatpush1.bf16.msra.mxu0 0
      %1298 = vmatprep.subr.bf16.mxu0 0
      %1299 = vmatpush1.bf16.msra.mxu0 0
      %1300 = vmatprep.subr.bf16.mxu0 0
      %1301 = vmatpush1.bf16.msra.mxu0 0
      %1302 = vmatprep.subr.bf16.mxu0 0
      %1303 = vmatpush1.bf16.msra.mxu0 0
      %1304 = vmatprep.subr.bf16.mxu0 0
      %1305 = vmatpush1.bf16.msra.mxu0 0
      %1306 = vmatprep.subr.bf16.mxu0 0
      %1307 = vmatpush1.bf16.msra.mxu0 0
      %1308 = vmatprep.subr.bf16.mxu0 0
      %1309 = vmatpush1.bf16.msra.mxu0 0
      %1310 = vmatprep.subr.bf16.mxu0 0
      %1311 = vmatpush1.bf16.msra.mxu0 0
      %1312 = vmatprep.mubr.bf16.mxu0 0
      %1313 = vmatmul.mubr.bf16.gmra.mrb[0].mxu0 %v1237
      %v1314 = vpop.f32.mrb[0].mxu0
      %v1315 = vadd.f32 0.0, %v1314
      %v1316 = vpop.f32.mrb[0].mxu0
      %v1317 = vadd.f32 0.0, %v1316
      %v1318 = vpop.f32.mrb[0].mxu0
      %v1319 = vpop.f32.mrb[0].mxu0
      %1320 = vdwg.mxu0
      %1321 = vmatprep.subr.bf16.mxu0 %v1225
      %1322 = vmatpush1.bf16.msra.mxu0 %v1224
      %1323 = vmatprep.subr.bf16.mxu0 0
      %1324 = vmatpush1.bf16.msra.mxu0 0
      %1325 = vmatprep.subr.bf16.mxu0 0
      %1326 = vmatpush1.bf16.msra.mxu0 0
      %1327 = vmatprep.subr.bf16.mxu0 0
      %1328 = vmatpush1.bf16.msra.mxu0 0
      %1329 = vmatprep.subr.bf16.mxu0 0
      %1330 = vmatpush1.bf16.msra.mxu0 0
      %1331 = vmatprep.subr.bf16.mxu0 0
      %1332 = vmatpush1.bf16.msra.mxu0 0
      %1333 = vmatprep.subr.bf16.mxu0 0
      %1334 = vmatpush1.bf16.msra.mxu0 0
      %1335 = vmatprep.subr.bf16.mxu0 0
      %1336 = vmatpush1.bf16.msra.mxu0 0
      %1337 = vmatprep.subr.bf16.mxu0 0
      %1338 = vmatpush1.bf16.msra.mxu0 0
      %1339 = vmatprep.subr.bf16.mxu0 0
      %1340 = vmatpush1.bf16.msra.mxu0 0
      %1341 = vmatprep.subr.bf16.mxu0 0
      %1342 = vmatpush1.bf16.msra.mxu0 0
      %1343 = vmatprep.subr.bf16.mxu0 0
      %1344 = vmatpush1.bf16.msra.mxu0 0
      %1345 = vmatprep.subr.bf16.mxu0 0
      %1346 = vmatpush1.bf16.msra.mxu0 0
      %1347 = vmatprep.subr.bf16.mxu0 0
      %1348 = vmatpush1.bf16.msra.mxu0 0
      %1349 = vmatprep.subr.bf16.mxu0 0
      %1350 = vmatpush1.bf16.msra.mxu0 0
      %1351 = vmatprep.subr.bf16.mxu0 0
      %1352 = vmatpush1.bf16.msra.mxu0 0
      %1353 = vmatprep.mubr.bf16.mxu0 0
      %1354 = vmatmul.mubr.bf16.gmra.mrb[0].mxu0 %v1237
      %v1355 = vpop.f32.mrb[0].mxu0
      %v1356 = vadd.f32 0.0, %v1355
      %v1357 = vpop.f32.mrb[0].mxu0
      %v1358 = vadd.f32 0.0, %v1357
      %v1359 = vpop.f32.mrb[0].mxu0
      %v1360 = vpop.f32.mrb[0].mxu0
      %1361 = vdwg.mxu0
      %1362 = vmatprep.subr.bf16.mxu0 %v1227
      %1363 = vmatpush1.bf16.msra.mxu0 %v1226
      %1364 = vmatprep.subr.bf16.mxu0 0
      %1365 = vmatpush1.bf16.msra.mxu0 0
      %1366 = vmatprep.subr.bf16.mxu0 0
      %1367 = vmatpush1.bf16.msra.mxu0 0
      %1368 = vmatprep.subr.bf16.mxu0 0
      %1369 = vmatpush1.bf16.msra.mxu0 0
      %1370 = vmatprep.subr.bf16.mxu0 0
      %1371 = vmatpush1.bf16.msra.mxu0 0
      %1372 = vmatprep.subr.bf16.mxu0 0
      %1373 = vmatpush1.bf16.msra.mxu0 0
      %1374 = vmatprep.subr.bf16.mxu0 0
      %1375 = vmatpush1.bf16.msra.mxu0 0
      %1376 = vmatprep.subr.bf16.mxu0 0
      %1377 = vmatpush1.bf16.msra.mxu0 0
      %1378 = vmatprep.subr.bf16.mxu0 0
      %1379 = vmatpush1.bf16.msra.mxu0 0
      %1380 = vmatprep.subr.bf16.mxu0 0
      %1381 = vmatpush1.bf16.msra.mxu0 0
      %1382 = vmatprep.subr.bf16.mxu0 0
      %1383 = vmatpush1.bf16.msra.mxu0 0
      %1384 = vmatprep.subr.bf16.mxu0 0
      %1385 = vmatpush1.bf16.msra.mxu0 0
      %1386 = vmatprep.subr.bf16.mxu0 0
      %1387 = vmatpush1.bf16.msra.mxu0 0
      %1388 = vmatprep.subr.bf16.mxu0 0
      %1389 = vmatpush1.bf16.msra.mxu0 0
      %1390 = vmatprep.subr.bf16.mxu0 0
      %1391 = vmatpush1.bf16.msra.mxu0 0
      %1392 = vmatprep.subr.bf16.mxu0 0
      %1393 = vmatpush1.bf16.msra.mxu0 0
      %1394 = vmatprep.mubr.bf16.mxu0 0
      %1395 = vmatmul.mubr.bf16.gmra.mrb[0].mxu0 %v1237
      %v1396 = vpop.f32.mrb[0].mxu0
      %v1397 = vadd.f32 0.0, %v1396
      %v1398 = vpop.f32.mrb[0].mxu0
      %v1399 = vadd.f32 0.0, %v1398
      %v1400 = vpop.f32.mrb[0].mxu0
      %v1401 = vpop.f32.mrb[0].mxu0
      %1402 = vdwg.mxu0
      %v1403 = vadd.f32 %v1193, %v1274
      %v1404 = vadd.f32 %v1194, %v1276
      %v1405 = vadd.f32 %v1195, %v1315
      %v1406 = vadd.f32 %v1196, %v1317
      %v1407 = vadd.f32 %v1197, %v1356
      %v1408 = vadd.f32 %v1198, %v1358
      %v1409 = vadd.f32 %v1199, %v1397
      %v1410 = vadd.f32 %v1200, %v1399
      %1411 = vrot.lane.b32.xlu0 %v367, 99
      %v1412 = vpop.permute.xlu0 %1411
      %1413 = vrot.lane.b32.xlu0 %v368, 99
      %v1414 = vpop.permute.xlu0 %1413
      %1415 = vrot.lane.b32.xlu0 %v369, 99
      %v1416 = vpop.permute.xlu0 %1415
      %1417 = vrot.lane.b32.xlu0 %v370, 99
      %v1418 = vpop.permute.xlu0 %1417
      %1419 = vrot.lane.b32.xlu0 %v371, 99
      %v1420 = vpop.permute.xlu0 %1419
      %1421 = vrot.lane.b32.xlu0 %v372, 99
      %v1422 = vpop.permute.xlu0 %1421
      %1423 = vrot.lane.b32.xlu0 %v373, 99
      %v1424 = vpop.permute.xlu0 %1423
      %1425 = vrot.lane.b32.xlu0 %v374, 99
      %v1426 = vpop.permute.xlu0 %1425
      %1427 = vrot.lane.b32.xlu0 %v375, 99
      %v1428 = vpop.permute.xlu0 %1427
      %vm1429 = vcmask 809984
      %v1430 = vsel %vm1429, %v1412, %v1414
      %v1431 = vsel %vm1429, %v1414, %v1416
      %v1432 = vsel %vm1429, %v1416, %v1418
      %v1433 = vsel %vm1429, %v1418, %v1420
      %v1434 = vsel %vm1429, %v1420, %v1422
      %v1435 = vsel %vm1429, %v1422, %v1424
      %v1436 = vsel %vm1429, %v1424, %v1426
      %v1437 = vsel %vm1429, %v1426, %v1428
      %v1447 = vsel %vm411, %v317, 0
      %1449 = vmatprep.subr.bf16.mxu0 %v1431
      %1450 = vmatpush1.bf16.msra.mxu0 %v1430
      %1451 = vmatprep.subr.bf16.mxu0 0
      %1452 = vmatpush1.bf16.msra.mxu0 0
      %1453 = vmatprep.subr.bf16.mxu0 0
      %1454 = vmatpush1.bf16.msra.mxu0 0
      %1455 = vmatprep.subr.bf16.mxu0 0
      %1456 = vmatpush1.bf16.msra.mxu0 0
      %1457 = vmatprep.subr.bf16.mxu0 0
      %1458 = vmatpush1.bf16.msra.mxu0 0
      %1459 = vmatprep.subr.bf16.mxu0 0
      %1460 = vmatpush1.bf16.msra.mxu0 0
      %1461 = vmatprep.subr.bf16.mxu0 0
      %1462 = vmatpush1.bf16.msra.mxu0 0
      %1463 = vmatprep.subr.bf16.mxu0 0
      %1464 = vmatpush1.bf16.msra.mxu0 0
      %1465 = vmatprep.subr.bf16.mxu0 0
      %1466 = vmatpush1.bf16.msra.mxu0 0
      %1467 = vmatprep.subr.bf16.mxu0 0
      %1468 = vmatpush1.bf16.msra.mxu0 0
      %1469 = vmatprep.subr.bf16.mxu0 0
      %1470 = vmatpush1.bf16.msra.mxu0 0
      %1471 = vmatprep.subr.bf16.mxu0 0
      %1472 = vmatpush1.bf16.msra.mxu0 0
      %1473 = vmatprep.subr.bf16.mxu0 0
      %1474 = vmatpush1.bf16.msra.mxu0 0
      %1475 = vmatprep.subr.bf16.mxu0 0
      %1476 = vmatpush1.bf16.msra.mxu0 0
      %1477 = vmatprep.subr.bf16.mxu0 0
      %1478 = vmatpush1.bf16.msra.mxu0 0
      %1479 = vmatprep.subr.bf16.mxu0 0
      %1480 = vmatpush1.bf16.msra.mxu0 0
      %1481 = vmatprep.mubr.bf16.mxu0 0
      %1482 = vmatmul.mubr.bf16.gmra.mrb[0].mxu0 %v1447
      %v1483 = vpop.f32.mrb[0].mxu0
      %v1484 = vadd.f32 0.0, %v1483
      %v1485 = vpop.f32.mrb[0].mxu0
      %v1486 = vadd.f32 0.0, %v1485
      %v1487 = vpop.f32.mrb[0].mxu0
      %v1488 = vpop.f32.mrb[0].mxu0
      %1489 = vdwg.mxu0
      %1490 = vmatprep.subr.bf16.mxu0 %v1433
      %1491 = vmatpush1.bf16.msra.mxu0 %v1432
      %1492 = vmatprep.subr.bf16.mxu0 0
      %1493 = vmatpush1.bf16.msra.mxu0 0
      %1494 = vmatprep.subr.bf16.mxu0 0
      %1495 = vmatpush1.bf16.msra.mxu0 0
      %1496 = vmatprep.subr.bf16.mxu0 0
      %1497 = vmatpush1.bf16.msra.mxu0 0
      %1498 = vmatprep.subr.bf16.mxu0 0
      %1499 = vmatpush1.bf16.msra.mxu0 0
      %1500 = vmatprep.subr.bf16.mxu0 0
      %1501 = vmatpush1.bf16.msra.mxu0 0
      %1502 = vmatprep.subr.bf16.mxu0 0
      %1503 = vmatpush1.bf16.msra.mxu0 0
      %1504 = vmatprep.subr.bf16.mxu0 0
      %1505 = vmatpush1.bf16.msra.mxu0 0
      %1506 = vmatprep.subr.bf16.mxu0 0
      %1507 = vmatpush1.bf16.msra.mxu0 0
      %1508 = vmatprep.subr.bf16.mxu0 0
      %1509 = vmatpush1.bf16.msra.mxu0 0
      %1510 = vmatprep.subr.bf16.mxu0 0
      %1511 = vmatpush1.bf16.msra.mxu0 0
      %1512 = vmatprep.subr.bf16.mxu0 0
      %1513 = vmatpush1.bf16.msra.mxu0 0
      %1514 = vmatprep.subr.bf16.mxu0 0
      %1515 = vmatpush1.bf16.msra.mxu0 0
      %1516 = vmatprep.subr.bf16.mxu0 0
      %1517 = vmatpush1.bf16.msra.mxu0 0
      %1518 = vmatprep.subr.bf16.mxu0 0
      %1519 = vmatpush1.bf16.msra.mxu0 0
      %1520 = vmatprep.subr.bf16.mxu0 0
      %1521 = vmatpush1.bf16.msra.mxu0 0
      %1522 = vmatprep.mubr.bf16.mxu0 0
      %1523 = vmatmul.mubr.bf16.gmra.mrb[0].mxu0 %v1447
      %v1524 = vpop.f32.mrb[0].mxu0
      %v1525 = vadd.f32 0.0, %v1524
      %v1526 = vpop.f32.mrb[0].mxu0
      %v1527 = vadd.f32 0.0, %v1526
      %v1528 = vpop.f32.mrb[0].mxu0
      %v1529 = vpop.f32.mrb[0].mxu0
      %1530 = vdwg.mxu0
      %1531 = vmatprep.subr.bf16.mxu0 %v1435
      %1532 = vmatpush1.bf16.msra.mxu0 %v1434
      %1533 = vmatprep.subr.bf16.mxu0 0
      %1534 = vmatpush1.bf16.msra.mxu0 0
      %1535 = vmatprep.subr.bf16.mxu0 0
      %1536 = vmatpush1.bf16.msra.mxu0 0
      %1537 = vmatprep.subr.bf16.mxu0 0
      %1538 = vmatpush1.bf16.msra.mxu0 0
      %1539 = vmatprep.subr.bf16.mxu0 0
      %1540 = vmatpush1.bf16.msra.mxu0 0
      %1541 = vmatprep.subr.bf16.mxu0 0
      %1542 = vmatpush1.bf16.msra.mxu0 0
      %1543 = vmatprep.subr.bf16.mxu0 0
      %1544 = vmatpush1.bf16.msra.mxu0 0
      %1545 = vmatprep.subr.bf16.mxu0 0
      %1546 = vmatpush1.bf16.msra.mxu0 0
      %1547 = vmatprep.subr.bf16.mxu0 0
      %1548 = vmatpush1.bf16.msra.mxu0 0
      %1549 = vmatprep.subr.bf16.mxu0 0
      %1550 = vmatpush1.bf16.msra.mxu0 0
      %1551 = vmatprep.subr.bf16.mxu0 0
      %1552 = vmatpush1.bf16.msra.mxu0 0
      %1553 = vmatprep.subr.bf16.mxu0 0
      %1554 = vmatpush1.bf16.msra.mxu0 0
      %1555 = vmatprep.subr.bf16.mxu0 0
      %1556 = vmatpush1.bf16.msra.mxu0 0
      %1557 = vmatprep.subr.bf16.mxu0 0
      %1558 = vmatpush1.bf16.msra.mxu0 0
      %1559 = vmatprep.subr.bf16.mxu0 0
      %1560 = vmatpush1.bf16.msra.mxu0 0
      %1561 = vmatprep.subr.bf16.mxu0 0
      %1562 = vmatpush1.bf16.msra.mxu0 0
      %1563 = vmatprep.mubr.bf16.mxu0 0
      %1564 = vmatmul.mubr.bf16.gmra.mrb[0].mxu0 %v1447
      %v1565 = vpop.f32.mrb[0].mxu0
      %v1566 = vadd.f32 0.0, %v1565
      %v1567 = vpop.f32.mrb[0].mxu0
      %v1568 = vadd.f32 0.0, %v1567
      %v1569 = vpop.f32.mrb[0].mxu0
      %v1570 = vpop.f32.mrb[0].mxu0
      %1571 = vdwg.mxu0
      %1572 = vmatprep.subr.bf16.mxu0 %v1437
      %1573 = vmatpush1.bf16.msra.mxu0 %v1436
      %1574 = vmatprep.subr.bf16.mxu0 0
      %1575 = vmatpush1.bf16.msra.mxu0 0
      %1576 = vmatprep.subr.bf16.mxu0 0
      %1577 = vmatpush1.bf16.msra.mxu0 0
      %1578 = vmatprep.subr.bf16.mxu0 0
      %1579 = vmatpush1.bf16.msra.mxu0 0
      %1580 = vmatprep.subr.bf16.mxu0 0
      %1581 = vmatpush1.bf16.msra.mxu0 0
      %1582 = vmatprep.subr.bf16.mxu0 0
      %1583 = vmatpush1.bf16.msra.mxu0 0
      %1584 = vmatprep.subr.bf16.mxu0 0
      %1585 = vmatpush1.bf16.msra.mxu0 0
      %1586 = vmatprep.subr.bf16.mxu0 0
      %1587 = vmatpush1.bf16.msra.mxu0 0
      %1588 = vmatprep.subr.bf16.mxu0 0
      %1589 = vmatpush1.bf16.msra.mxu0 0
      %1590 = vmatprep.subr.bf16.mxu0 0
      %1591 = vmatpush1.bf16.msra.mxu0 0
      %1592 = vmatprep.subr.bf16.mxu0 0
      %1593 = vmatpush1.bf16.msra.mxu0 0
      %1594 = vmatprep.subr.bf16.mxu0 0
      %1595 = vmatpush1.bf16.msra.mxu0 0
      %1596 = vmatprep.subr.bf16.mxu0 0
      %1597 = vmatpush1.bf16.msra.mxu0 0
      %1598 = vmatprep.subr.bf16.mxu0 0
      %1599 = vmatpush1.bf16.msra.mxu0 0
      %1600 = vmatprep.subr.bf16.mxu0 0
      %1601 = vmatpush1.bf16.msra.mxu0 0
      %1602 = vmatprep.subr.bf16.mxu0 0
      %1603 = vmatpush1.bf16.msra.mxu0 0
      %1604 = vmatprep.mubr.bf16.mxu0 0
      %1605 = vmatmul.mubr.bf16.gmra.mrb[0].mxu0 %v1447
      %v1606 = vpop.f32.mrb[0].mxu0
      %v1607 = vadd.f32 0.0, %v1606
      %v1608 = vpop.f32.mrb[0].mxu0
      %v1609 = vadd.f32 0.0, %v1608
      %v1610 = vpop.f32.mrb[0].mxu0
      %v1611 = vpop.f32.mrb[0].mxu0
      %1612 = vdwg.mxu0
      %v1613 = vadd.f32 %v1403, %v1484
      %v1614 = vadd.f32 %v1404, %v1486
      %v1615 = vadd.f32 %v1405, %v1525
      %v1616 = vadd.f32 %v1406, %v1527
      %v1617 = vadd.f32 %v1407, %v1566
      %v1618 = vadd.f32 %v1408, %v1568
      %v1619 = vadd.f32 %v1409, %v1607
      %v1620 = vadd.f32 %v1410, %v1609
      %1621 = vrot.lane.b32.xlu0 %v367, 91
      %v1622 = vpop.permute.xlu0 %1621
      %1623 = vrot.lane.b32.xlu0 %v368, 91
      %v1624 = vpop.permute.xlu0 %1623
      %1625 = vrot.lane.b32.xlu0 %v369, 91
      %v1626 = vpop.permute.xlu0 %1625
      %1627 = vrot.lane.b32.xlu0 %v370, 91
      %v1628 = vpop.permute.xlu0 %1627
      %1629 = vrot.lane.b32.xlu0 %v371, 91
      %v1630 = vpop.permute.xlu0 %1629
      %1631 = vrot.lane.b32.xlu0 %v372, 91
      %v1632 = vpop.permute.xlu0 %1631
      %1633 = vrot.lane.b32.xlu0 %v373, 91
      %v1634 = vpop.permute.xlu0 %1633
      %1635 = vrot.lane.b32.xlu0 %v374, 91
      %v1636 = vpop.permute.xlu0 %1635
      %1637 = vrot.lane.b32.xlu0 %v375, 91
      %v1638 = vpop.permute.xlu0 %1637
      %vm1639 = vcmask 744448
      %v1640 = vsel %vm1639, %v1622, %v1624
      %v1641 = vsel %vm1639, %v1624, %v1626
      %v1642 = vsel %vm1639, %v1626, %v1628
      %v1643 = vsel %vm1639, %v1628, %v1630
      %v1644 = vsel %vm1639, %v1630, %v1632
      %v1645 = vsel %vm1639, %v1632, %v1634
      %v1646 = vsel %vm1639, %v1634, %v1636
      %v1647 = vsel %vm1639, %v1636, %v1638
      %v1657 = vsel %vm411, %v318, 0
      %1659 = vmatprep.subr.bf16.mxu0 %v1641
      %1660 = vmatpush1.bf16.msra.mxu0 %v1640
      %1661 = vmatprep.subr.bf16.mxu0 0
      %1662 = vmatpush1.bf16.msra.mxu0 0
      %1663 = vmatprep.subr.bf16.mxu0 0
      %1664 = vmatpush1.bf16.msra.mxu0 0
      %1665 = vmatprep.subr.bf16.mxu0 0
      %1666 = vmatpush1.bf16.msra.mxu0 0
      %1667 = vmatprep.subr.bf16.mxu0 0
      %1668 = vmatpush1.bf16.msra.mxu0 0
      %1669 = vmatprep.subr.bf16.mxu0 0
      %1670 = vmatpush1.bf16.msra.mxu0 0
      %1671 = vmatprep.subr.bf16.mxu0 0
      %1672 = vmatpush1.bf16.msra.mxu0 0
      %1673 = vmatprep.subr.bf16.mxu0 0
      %1674 = vmatpush1.bf16.msra.mxu0 0
      %1675 = vmatprep.subr.bf16.mxu0 0
      %1676 = vmatpush1.bf16.msra.mxu0 0
      %1677 = vmatprep.subr.bf16.mxu0 0
      %1678 = vmatpush1.bf16.msra.mxu0 0
      %1679 = vmatprep.subr.bf16.mxu0 0
      %1680 = vmatpush1.bf16.msra.mxu0 0
      %1681 = vmatprep.subr.bf16.mxu0 0
      %1682 = vmatpush1.bf16.msra.mxu0 0
      %1683 = vmatprep.subr.bf16.mxu0 0
      %1684 = vmatpush1.bf16.msra.mxu0 0
      %1685 = vmatprep.subr.bf16.mxu0 0
      %1686 = vmatpush1.bf16.msra.mxu0 0
      %1687 = vmatprep.subr.bf16.mxu0 0
      %1688 = vmatpush1.bf16.msra.mxu0 0
      %1689 = vmatprep.subr.bf16.mxu0 0
      %1690 = vmatpush1.bf16.msra.mxu0 0
      %1691 = vmatprep.mubr.bf16.mxu0 0
      %1692 = vmatmul.mubr.bf16.gmra.mrb[0].mxu0 %v1657
      %v1693 = vpop.f32.mrb[0].mxu0
      %v1694 = vadd.f32 0.0, %v1693
      %v1695 = vpop.f32.mrb[0].mxu0
      %v1696 = vadd.f32 0.0, %v1695
      %v1697 = vpop.f32.mrb[0].mxu0
      %v1698 = vpop.f32.mrb[0].mxu0
      %1699 = vdwg.mxu0
      %1700 = vmatprep.subr.bf16.mxu0 %v1643
      %1701 = vmatpush1.bf16.msra.mxu0 %v1642
      %1702 = vmatprep.subr.bf16.mxu0 0
      %1703 = vmatpush1.bf16.msra.mxu0 0
      %1704 = vmatprep.subr.bf16.mxu0 0
      %1705 = vmatpush1.bf16.msra.mxu0 0
      %1706 = vmatprep.subr.bf16.mxu0 0
      %1707 = vmatpush1.bf16.msra.mxu0 0
      %1708 = vmatprep.subr.bf16.mxu0 0
      %1709 = vmatpush1.bf16.msra.mxu0 0
      %1710 = vmatprep.subr.bf16.mxu0 0
      %1711 = vmatpush1.bf16.msra.mxu0 0
      %1712 = vmatprep.subr.bf16.mxu0 0
      %1713 = vmatpush1.bf16.msra.mxu0 0
      %1714 = vmatprep.subr.bf16.mxu0 0
      %1715 = vmatpush1.bf16.msra.mxu0 0
      %1716 = vmatprep.subr.bf16.mxu0 0
      %1717 = vmatpush1.bf16.msra.mxu0 0
      %1718 = vmatprep.subr.bf16.mxu0 0
      %1719 = vmatpush1.bf16.msra.mxu0 0
      %1720 = vmatprep.subr.bf16.mxu0 0
      %1721 = vmatpush1.bf16.msra.mxu0 0
      %1722 = vmatprep.subr.bf16.mxu0 0
      %1723 = vmatpush1.bf16.msra.mxu0 0
      %1724 = vmatprep.subr.bf16.mxu0 0
      %1725 = vmatpush1.bf16.msra.mxu0 0
      %1726 = vmatprep.subr.bf16.mxu0 0
      %1727 = vmatpush1.bf16.msra.mxu0 0
      %1728 = vmatprep.subr.bf16.mxu0 0
      %1729 = vmatpush1.bf16.msra.mxu0 0
      %1730 = vmatprep.subr.bf16.mxu0 0
      %1731 = vmatpush1.bf16.msra.mxu0 0
      %1732 = vmatprep.mubr.bf16.mxu0 0
      %1733 = vmatmul.mubr.bf16.gmra.mrb[0].mxu0 %v1657
      %v1734 = vpop.f32.mrb[0].mxu0
      %v1735 = vadd.f32 0.0, %v1734
      %v1736 = vpop.f32.mrb[0].mxu0
      %v1737 = vadd.f32 0.0, %v1736
      %v1738 = vpop.f32.mrb[0].mxu0
      %v1739 = vpop.f32.mrb[0].mxu0
      %1740 = vdwg.mxu0
      %1741 = vmatprep.subr.bf16.mxu0 %v1645
      %1742 = vmatpush1.bf16.msra.mxu0 %v1644
      %1743 = vmatprep.subr.bf16.mxu0 0
      %1744 = vmatpush1.bf16.msra.mxu0 0
      %1745 = vmatprep.subr.bf16.mxu0 0
      %1746 = vmatpush1.bf16.msra.mxu0 0
      %1747 = vmatprep.subr.bf16.mxu0 0
      %1748 = vmatpush1.bf16.msra.mxu0 0
      %1749 = vmatprep.subr.bf16.mxu0 0
      %1750 = vmatpush1.bf16.msra.mxu0 0
      %1751 = vmatprep.subr.bf16.mxu0 0
      %1752 = vmatpush1.bf16.msra.mxu0 0
      %1753 = vmatprep.subr.bf16.mxu0 0
      %1754 = vmatpush1.bf16.msra.mxu0 0
      %1755 = vmatprep.subr.bf16.mxu0 0
      %1756 = vmatpush1.bf16.msra.mxu0 0
      %1757 = vmatprep.subr.bf16.mxu0 0
      %1758 = vmatpush1.bf16.msra.mxu0 0
      %1759 = vmatprep.subr.bf16.mxu0 0
      %1760 = vmatpush1.bf16.msra.mxu0 0
      %1761 = vmatprep.subr.bf16.mxu0 0
      %1762 = vmatpush1.bf16.msra.mxu0 0
      %1763 = vmatprep.subr.bf16.mxu0 0
      %1764 = vmatpush1.bf16.msra.mxu0 0
      %1765 = vmatprep.subr.bf16.mxu0 0
      %1766 = vmatpush1.bf16.msra.mxu0 0
      %1767 = vmatprep.subr.bf16.mxu0 0
      %1768 = vmatpush1.bf16.msra.mxu0 0
      %1769 = vmatprep.subr.bf16.mxu0 0
      %1770 = vmatpush1.bf16.msra.mxu0 0
      %1771 = vmatprep.subr.bf16.mxu0 0
      %1772 = vmatpush1.bf16.msra.mxu0 0
      %1773 = vmatprep.mubr.bf16.mxu0 0
      %1774 = vmatmul.mubr.bf16.gmra.mrb[0].mxu0 %v1657
      %v1775 = vpop.f32.mrb[0].mxu0
      %v1776 = vadd.f32 0.0, %v1775
      %v1777 = vpop.f32.mrb[0].mxu0
      %v1778 = vadd.f32 0.0, %v1777
      %v1779 = vpop.f32.mrb[0].mxu0
      %v1780 = vpop.f32.mrb[0].mxu0
      %1781 = vdwg.mxu0
      %1782 = vmatprep.subr.bf16.mxu0 %v1647
      %1783 = vmatpush1.bf16.msra.mxu0 %v1646
      %1784 = vmatprep.subr.bf16.mxu0 0
      %1785 = vmatpush1.bf16.msra.mxu0 0
      %1786 = vmatprep.subr.bf16.mxu0 0
      %1787 = vmatpush1.bf16.msra.mxu0 0
      %1788 = vmatprep.subr.bf16.mxu0 0
      %1789 = vmatpush1.bf16.msra.mxu0 0
      %1790 = vmatprep.subr.bf16.mxu0 0
      %1791 = vmatpush1.bf16.msra.mxu0 0
      %1792 = vmatprep.subr.bf16.mxu0 0
      %1793 = vmatpush1.bf16.msra.mxu0 0
      %1794 = vmatprep.subr.bf16.mxu0 0
      %1795 = vmatpush1.bf16.msra.mxu0 0
      %1796 = vmatprep.subr.bf16.mxu0 0
      %1797 = vmatpush1.bf16.msra.mxu0 0
      %1798 = vmatprep.subr.bf16.mxu0 0
      %1799 = vmatpush1.bf16.msra.mxu0 0
      %1800 = vmatprep.subr.bf16.mxu0 0
      %1801 = vmatpush1.bf16.msra.mxu0 0
      %1802 = vmatprep.subr.bf16.mxu0 0
      %1803 = vmatpush1.bf16.msra.mxu0 0
      %1804 = vmatprep.subr.bf16.mxu0 0
      %1805 = vmatpush1.bf16.msra.mxu0 0
      %1806 = vmatprep.subr.bf16.mxu0 0
      %1807 = vmatpush1.bf16.msra.mxu0 0
      %1808 = vmatprep.subr.bf16.mxu0 0
      %1809 = vmatpush1.bf16.msra.mxu0 0
      %1810 = vmatprep.subr.bf16.mxu0 0
      %1811 = vmatpush1.bf16.msra.mxu0 0
      %1812 = vmatprep.subr.bf16.mxu0 0
      %1813 = vmatpush1.bf16.msra.mxu0 0
      %1814 = vmatprep.mubr.bf16.mxu0 0
      %1815 = vmatmul.mubr.bf16.gmra.mrb[0].mxu0 %v1657
      %v1816 = vpop.f32.mrb[0].mxu0
      %v1817 = vadd.f32 0.0, %v1816
      %v1818 = vpop.f32.mrb[0].mxu0
      %v1819 = vadd.f32 0.0, %v1818
      %v1820 = vpop.f32.mrb[0].mxu0
      %v1821 = vpop.f32.mrb[0].mxu0
      %1822 = vdwg.mxu0
      %v1823 = vadd.f32 %v1613, %v1694
      %v1824 = vadd.f32 %v1614, %v1696
      %v1825 = vadd.f32 %v1615, %v1735
      %v1826 = vadd.f32 %v1616, %v1737
      %v1827 = vadd.f32 %v1617, %v1776
      %v1828 = vadd.f32 %v1618, %v1778
      %v1829 = vadd.f32 %v1619, %v1817
      %v1830 = vadd.f32 %v1620, %v1819
      %1831 = vrot.lane.b32.xlu0 %v367, 90
      %v1832 = vpop.permute.xlu0 %1831
      %1833 = vrot.lane.b32.xlu0 %v368, 90
      %v1834 = vpop.permute.xlu0 %1833
      %1835 = vrot.lane.b32.xlu0 %v369, 90
      %v1836 = vpop.permute.xlu0 %1835
      %1837 = vrot.lane.b32.xlu0 %v370, 90
      %v1838 = vpop.permute.xlu0 %1837
      %1839 = vrot.lane.b32.xlu0 %v371, 90
      %v1840 = vpop.permute.xlu0 %1839
      %1841 = vrot.lane.b32.xlu0 %v372, 90
      %v1842 = vpop.permute.xlu0 %1841
      %1843 = vrot.lane.b32.xlu0 %v373, 90
      %v1844 = vpop.permute.xlu0 %1843
      %1845 = vrot.lane.b32.xlu0 %v374, 90
      %v1846 = vpop.permute.xlu0 %1845
      %1847 = vrot.lane.b32.xlu0 %v375, 90
      %v1848 = vpop.permute.xlu0 %1847
      %vm1849 = vcmask 736256
      %v1850 = vsel %vm1849, %v1832, %v1834
      %v1851 = vsel %vm1849, %v1834, %v1836
      %v1852 = vsel %vm1849, %v1836, %v1838
      %v1853 = vsel %vm1849, %v1838, %v1840
      %v1854 = vsel %vm1849, %v1840, %v1842
      %v1855 = vsel %vm1849, %v1842, %v1844
      %v1856 = vsel %vm1849, %v1844, %v1846
      %v1857 = vsel %vm1849, %v1846, %v1848
      %v1867 = vsel %vm411, %v319, 0
      %1869 = vmatprep.subr.bf16.mxu0 %v1851
      %1870 = vmatpush1.bf16.msra.mxu0 %v1850
      %1871 = vmatprep.subr.bf16.mxu0 0
      %1872 = vmatpush1.bf16.msra.mxu0 0
      %1873 = vmatprep.subr.bf16.mxu0 0
      %1874 = vmatpush1.bf16.msra.mxu0 0
      %1875 = vmatprep.subr.bf16.mxu0 0
      %1876 = vmatpush1.bf16.msra.mxu0 0
      %1877 = vmatprep.subr.bf16.mxu0 0
      %1878 = vmatpush1.bf16.msra.mxu0 0
      %1879 = vmatprep.subr.bf16.mxu0 0
      %1880 = vmatpush1.bf16.msra.mxu0 0
      %1881 = vmatprep.subr.bf16.mxu0 0
      %1882 = vmatpush1.bf16.msra.mxu0 0
      %1883 = vmatprep.subr.bf16.mxu0 0
      %1884 = vmatpush1.bf16.msra.mxu0 0
      %1885 = vmatprep.subr.bf16.mxu0 0
      %1886 = vmatpush1.bf16.msra.mxu0 0
      %1887 = vmatprep.subr.bf16.mxu0 0
      %1888 = vmatpush1.bf16.msra.mxu0 0
      %1889 = vmatprep.subr.bf16.mxu0 0
      %1890 = vmatpush1.bf16.msra.mxu0 0
      %1891 = vmatprep.subr.bf16.mxu0 0
      %1892 = vmatpush1.bf16.msra.mxu0 0
      %1893 = vmatprep.subr.bf16.mxu0 0
      %1894 = vmatpush1.bf16.msra.mxu0 0
      %1895 = vmatprep.subr.bf16.mxu0 0
      %1896 = vmatpush1.bf16.msra.mxu0 0
      %1897 = vmatprep.subr.bf16.mxu0 0
      %1898 = vmatpush1.bf16.msra.mxu0 0
      %1899 = vmatprep.subr.bf16.mxu0 0
      %1900 = vmatpush1.bf16.msra.mxu0 0
      %1901 = vmatprep.mubr.bf16.mxu0 0
      %1902 = vmatmul.mubr.bf16.gmra.mrb[0].mxu0 %v1867
      %v1903 = vpop.f32.mrb[0].mxu0
      %v1904 = vadd.f32 0.0, %v1903
      %v1905 = vpop.f32.mrb[0].mxu0
      %v1906 = vadd.f32 0.0, %v1905
      %v1907 = vpop.f32.mrb[0].mxu0
      %v1908 = vpop.f32.mrb[0].mxu0
      %1909 = vdwg.mxu0
      %1910 = vmatprep.subr.bf16.mxu0 %v1853
      %1911 = vmatpush1.bf16.msra.mxu0 %v1852
      %1912 = vmatprep.subr.bf16.mxu0 0
      %1913 = vmatpush1.bf16.msra.mxu0 0
      %1914 = vmatprep.subr.bf16.mxu0 0
      %1915 = vmatpush1.bf16.msra.mxu0 0
      %1916 = vmatprep.subr.bf16.mxu0 0
      %1917 = vmatpush1.bf16.msra.mxu0 0
      %1918 = vmatprep.subr.bf16.mxu0 0
      %1919 = vmatpush1.bf16.msra.mxu0 0
      %1920 = vmatprep.subr.bf16.mxu0 0
      %1921 = vmatpush1.bf16.msra.mxu0 0
      %1922 = vmatprep.subr.bf16.mxu0 0
      %1923 = vmatpush1.bf16.msra.mxu0 0
      %1924 = vmatprep.subr.bf16.mxu0 0
      %1925 = vmatpush1.bf16.msra.mxu0 0
      %1926 = vmatprep.subr.bf16.mxu0 0
      %1927 = vmatpush1.bf16.msra.mxu0 0
      %1928 = vmatprep.subr.bf16.mxu0 0
      %1929 = vmatpush1.bf16.msra.mxu0 0
      %1930 = vmatprep.subr.bf16.mxu0 0
      %1931 = vmatpush1.bf16.msra.mxu0 0
      %1932 = vmatprep.subr.bf16.mxu0 0
      %1933 = vmatpush1.bf16.msra.mxu0 0
      %1934 = vmatprep.subr.bf16.mxu0 0
      %1935 = vmatpush1.bf16.msra.mxu0 0
      %1936 = vmatprep.subr.bf16.mxu0 0
      %1937 = vmatpush1.bf16.msra.mxu0 0
      %1938 = vmatprep.subr.bf16.mxu0 0
      %1939 = vmatpush1.bf16.msra.mxu0 0
      %1940 = vmatprep.subr.bf16.mxu0 0
      %1941 = vmatpush1.bf16.msra.mxu0 0
      %1942 = vmatprep.mubr.bf16.mxu0 0
      %1943 = vmatmul.mubr.bf16.gmra.mrb[0].mxu0 %v1867
      %v1944 = vpop.f32.mrb[0].mxu0
      %v1945 = vadd.f32 0.0, %v1944
      %v1946 = vpop.f32.mrb[0].mxu0
      %v1947 = vadd.f32 0.0, %v1946
      %v1948 = vpop.f32.mrb[0].mxu0
      %v1949 = vpop.f32.mrb[0].mxu0
      %1950 = vdwg.mxu0
      %1951 = vmatprep.subr.bf16.mxu0 %v1855
      %1952 = vmatpush1.bf16.msra.mxu0 %v1854
      %1953 = vmatprep.subr.bf16.mxu0 0
      %1954 = vmatpush1.bf16.msra.mxu0 0
      %1955 = vmatprep.subr.bf16.mxu0 0
      %1956 = vmatpush1.bf16.msra.mxu0 0
      %1957 = vmatprep.subr.bf16.mxu0 0
      %1958 = vmatpush1.bf16.msra.mxu0 0
      %1959 = vmatprep.subr.bf16.mxu0 0
      %1960 = vmatpush1.bf16.msra.mxu0 0
      %1961 = vmatprep.subr.bf16.mxu0 0
      %1962 = vmatpush1.bf16.msra.mxu0 0
      %1963 = vmatprep.subr.bf16.mxu0 0
      %1964 = vmatpush1.bf16.msra.mxu0 0
      %1965 = vmatprep.subr.bf16.mxu0 0
      %1966 = vmatpush1.bf16.msra.mxu0 0
      %1967 = vmatprep.subr.bf16.mxu0 0
      %1968 = vmatpush1.bf16.msra.mxu0 0
      %1969 = vmatprep.subr.bf16.mxu0 0
      %1970 = vmatpush1.bf16.msra.mxu0 0
      %1971 = vmatprep.subr.bf16.mxu0 0
      %1972 = vmatpush1.bf16.msra.mxu0 0
      %1973 = vmatprep.subr.bf16.mxu0 0
      %1974 = vmatpush1.bf16.msra.mxu0 0
      %1975 = vmatprep.subr.bf16.mxu0 0
      %1976 = vmatpush1.bf16.msra.mxu0 0
      %1977 = vmatprep.subr.bf16.mxu0 0
      %1978 = vmatpush1.bf16.msra.mxu0 0
      %1979 = vmatprep.subr.bf16.mxu0 0
      %1980 = vmatpush1.bf16.msra.mxu0 0
      %1981 = vmatprep.subr.bf16.mxu0 0
      %1982 = vmatpush1.bf16.msra.mxu0 0
      %1983 = vmatprep.mubr.bf16.mxu0 0
      %1984 = vmatmul.mubr.bf16.gmra.mrb[0].mxu0 %v1867
      %v1985 = vpop.f32.mrb[0].mxu0
      %v1986 = vadd.f32 0.0, %v1985
      %v1987 = vpop.f32.mrb[0].mxu0
      %v1988 = vadd.f32 0.0, %v1987
      %v1989 = vpop.f32.mrb[0].mxu0
      %v1990 = vpop.f32.mrb[0].mxu0
      %1991 = vdwg.mxu0
      %1992 = vmatprep.subr.bf16.mxu0 %v1857
      %1993 = vmatpush1.bf16.msra.mxu0 %v1856
      %1994 = vmatprep.subr.bf16.mxu0 0
      %1995 = vmatpush1.bf16.msra.mxu0 0
      %1996 = vmatprep.subr.bf16.mxu0 0
      %1997 = vmatpush1.bf16.msra.mxu0 0
      %1998 = vmatprep.subr.bf16.mxu0 0
      %1999 = vmatpush1.bf16.msra.mxu0 0
      %2000 = vmatprep.subr.bf16.mxu0 0
      %2001 = vmatpush1.bf16.msra.mxu0 0
      %2002 = vmatprep.subr.bf16.mxu0 0
      %2003 = vmatpush1.bf16.msra.mxu0 0
      %2004 = vmatprep.subr.bf16.mxu0 0
      %2005 = vmatpush1.bf16.msra.mxu0 0
      %2006 = vmatprep.subr.bf16.mxu0 0
      %2007 = vmatpush1.bf16.msra.mxu0 0
      %2008 = vmatprep.subr.bf16.mxu0 0
      %2009 = vmatpush1.bf16.msra.mxu0 0
      %2010 = vmatprep.subr.bf16.mxu0 0
      %2011 = vmatpush1.bf16.msra.mxu0 0
      %2012 = vmatprep.subr.bf16.mxu0 0
      %2013 = vmatpush1.bf16.msra.mxu0 0
      %2014 = vmatprep.subr.bf16.mxu0 0
      %2015 = vmatpush1.bf16.msra.mxu0 0
      %2016 = vmatprep.subr.bf16.mxu0 0
      %2017 = vmatpush1.bf16.msra.mxu0 0
      %2018 = vmatprep.subr.bf16.mxu0 0
      %2019 = vmatpush1.bf16.msra.mxu0 0
      %2020 = vmatprep.subr.bf16.mxu0 0
      %2021 = vmatpush1.bf16.msra.mxu0 0
      %2022 = vmatprep.subr.bf16.mxu0 0
      %2023 = vmatpush1.bf16.msra.mxu0 0
      %2024 = vmatprep.mubr.bf16.mxu0 0
      %2025 = vmatmul.mubr.bf16.gmra.mrb[0].mxu0 %v1867
      %v2026 = vpop.f32.mrb[0].mxu0
      %v2027 = vadd.f32 0.0, %v2026
      %v2028 = vpop.f32.mrb[0].mxu0
      %v2029 = vadd.f32 0.0, %v2028
      %v2030 = vpop.f32.mrb[0].mxu0
      %v2031 = vpop.f32.mrb[0].mxu0
      %2032 = vdwg.mxu0
      %v2033 = vadd.f32 %v1823, %v1904
      %v2034 = vadd.f32 %v1824, %v1906
      %v2035 = vadd.f32 %v1825, %v1945
      %v2036 = vadd.f32 %v1826, %v1947
      %v2037 = vadd.f32 %v1827, %v1986
      %v2038 = vadd.f32 %v1828, %v1988
      %v2039 = vadd.f32 %v1829, %v2027
      %v2040 = vadd.f32 %v1830, %v2029
      %2041 = vrot.lane.b32.xlu0 %v367, 89
      %v2042 = vpop.permute.xlu0 %2041
      %2043 = vrot.lane.b32.xlu0 %v368, 89
      %v2044 = vpop.permute.xlu0 %2043
      %2045 = vrot.lane.b32.xlu0 %v369, 89
      %v2046 = vpop.permute.xlu0 %2045
      %2047 = vrot.lane.b32.xlu0 %v370, 89
      %v2048 = vpop.permute.xlu0 %2047
      %2049 = vrot.lane.b32.xlu0 %v371, 89
      %v2050 = vpop.permute.xlu0 %2049
      %2051 = vrot.lane.b32.xlu0 %v372, 89
      %v2052 = vpop.permute.xlu0 %2051
      %2053 = vrot.lane.b32.xlu0 %v373, 89
      %v2054 = vpop.permute.xlu0 %2053
      %2055 = vrot.lane.b32.xlu0 %v374, 89
      %v2056 = vpop.permute.xlu0 %2055
      %2057 = vrot.lane.b32.xlu0 %v375, 89
      %v2058 = vpop.permute.xlu0 %2057
      %vm2059 = vcmask 728064
      %v2060 = vsel %vm2059, %v2042, %v2044
      %v2061 = vsel %vm2059, %v2044, %v2046
      %v2062 = vsel %vm2059, %v2046, %v2048
      %v2063 = vsel %vm2059, %v2048, %v2050
      %v2064 = vsel %vm2059, %v2050, %v2052
      %v2065 = vsel %vm2059, %v2052, %v2054
      %v2066 = vsel %vm2059, %v2054, %v2056
      %v2067 = vsel %vm2059, %v2056, %v2058
      %v2077 = vsel %vm411, %v320, 0
      %2079 = vmatprep.subr.bf16.mxu0 %v2061
      %2080 = vmatpush1.bf16.msra.mxu0 %v2060
      %2081 = vmatprep.subr.bf16.mxu0 0
      %2082 = vmatpush1.bf16.msra.mxu0 0
      %2083 = vmatprep.subr.bf16.mxu0 0
      %2084 = vmatpush1.bf16.msra.mxu0 0
      %2085 = vmatprep.subr.bf16.mxu0 0
      %2086 = vmatpush1.bf16.msra.mxu0 0
      %2087 = vmatprep.subr.bf16.mxu0 0
      %2088 = vmatpush1.bf16.msra.mxu0 0
      %2089 = vmatprep.subr.bf16.mxu0 0
      %2090 = vmatpush1.bf16.msra.mxu0 0
      %2091 = vmatprep.subr.bf16.mxu0 0
      %2092 = vmatpush1.bf16.msra.mxu0 0
      %2093 = vmatprep.subr.bf16.mxu0 0
      %2094 = vmatpush1.bf16.msra.mxu0 0
      %2095 = vmatprep.subr.bf16.mxu0 0
      %2096 = vmatpush1.bf16.msra.mxu0 0
      %2097 = vmatprep.subr.bf16.mxu0 0
      %2098 = vmatpush1.bf16.msra.mxu0 0
      %2099 = vmatprep.subr.bf16.mxu0 0
      %2100 = vmatpush1.bf16.msra.mxu0 0
      %2101 = vmatprep.subr.bf16.mxu0 0
      %2102 = vmatpush1.bf16.msra.mxu0 0
      %2103 = vmatprep.subr.bf16.mxu0 0
      %2104 = vmatpush1.bf16.msra.mxu0 0
      %2105 = vmatprep.subr.bf16.mxu0 0
      %2106 = vmatpush1.bf16.msra.mxu0 0
      %2107 = vmatprep.subr.bf16.mxu0 0
      %2108 = vmatpush1.bf16.msra.mxu0 0
      %2109 = vmatprep.subr.bf16.mxu0 0
      %2110 = vmatpush1.bf16.msra.mxu0 0
      %2111 = vmatprep.mubr.bf16.mxu0 0
      %2112 = vmatmul.mubr.bf16.gmra.mrb[0].mxu0 %v2077
      %v2113 = vpop.f32.mrb[0].mxu0
      %v2114 = vadd.f32 0.0, %v2113
      %v2115 = vpop.f32.mrb[0].mxu0
      %v2116 = vadd.f32 0.0, %v2115
      %v2117 = vpop.f32.mrb[0].mxu0
      %v2118 = vpop.f32.mrb[0].mxu0
      %2119 = vdwg.mxu0
      %2120 = vmatprep.subr.bf16.mxu0 %v2063
      %2121 = vmatpush1.bf16.msra.mxu0 %v2062
      %2122 = vmatprep.subr.bf16.mxu0 0
      %2123 = vmatpush1.bf16.msra.mxu0 0
      %2124 = vmatprep.subr.bf16.mxu0 0
      %2125 = vmatpush1.bf16.msra.mxu0 0
      %2126 = vmatprep.subr.bf16.mxu0 0
      %2127 = vmatpush1.bf16.msra.mxu0 0
      %2128 = vmatprep.subr.bf16.mxu0 0
      %2129 = vmatpush1.bf16.msra.mxu0 0
      %2130 = vmatprep.subr.bf16.mxu0 0
      %2131 = vmatpush1.bf16.msra.mxu0 0
      %2132 = vmatprep.subr.bf16.mxu0 0
      %2133 = vmatpush1.bf16.msra.mxu0 0
      %2134 = vmatprep.subr.bf16.mxu0 0
      %2135 = vmatpush1.bf16.msra.mxu0 0
      %2136 = vmatprep.subr.bf16.mxu0 0
      %2137 = vmatpush1.bf16.msra.mxu0 0
      %2138 = vmatprep.subr.bf16.mxu0 0
      %2139 = vmatpush1.bf16.msra.mxu0 0
      %2140 = vmatprep.subr.bf16.mxu0 0
      %2141 = vmatpush1.bf16.msra.mxu0 0
      %2142 = vmatprep.subr.bf16.mxu0 0
      %2143 = vmatpush1.bf16.msra.mxu0 0
      %2144 = vmatprep.subr.bf16.mxu0 0
      %2145 = vmatpush1.bf16.msra.mxu0 0
      %2146 = vmatprep.subr.bf16.mxu0 0
      %2147 = vmatpush1.bf16.msra.mxu0 0
      %2148 = vmatprep.subr.bf16.mxu0 0
      %2149 = vmatpush1.bf16.msra.mxu0 0
      %2150 = vmatprep.subr.bf16.mxu0 0
      %2151 = vmatpush1.bf16.msra.mxu0 0
      %2152 = vmatprep.mubr.bf16.mxu0 0
      %2153 = vmatmul.mubr.bf16.gmra.mrb[0].mxu0 %v2077
      %v2154 = vpop.f32.mrb[0].mxu0
      %v2155 = vadd.f32 0.0, %v2154
      %v2156 = vpop.f32.mrb[0].mxu0
      %v2157 = vadd.f32 0.0, %v2156
      %v2158 = vpop.f32.mrb[0].mxu0
      %v2159 = vpop.f32.mrb[0].mxu0
      %2160 = vdwg.mxu0
      %2161 = vmatprep.subr.bf16.mxu0 %v2065
      %2162 = vmatpush1.bf16.msra.mxu0 %v2064
      %2163 = vmatprep.subr.bf16.mxu0 0
      %2164 = vmatpush1.bf16.msra.mxu0 0
      %2165 = vmatprep.subr.bf16.mxu0 0
      %2166 = vmatpush1.bf16.msra.mxu0 0
      %2167 = vmatprep.subr.bf16.mxu0 0
      %2168 = vmatpush1.bf16.msra.mxu0 0
      %2169 = vmatprep.subr.bf16.mxu0 0
      %2170 = vmatpush1.bf16.msra.mxu0 0
      %2171 = vmatprep.subr.bf16.mxu0 0
      %2172 = vmatpush1.bf16.msra.mxu0 0
      %2173 = vmatprep.subr.bf16.mxu0 0
      %2174 = vmatpush1.bf16.msra.mxu0 0
      %2175 = vmatprep.subr.bf16.mxu0 0
      %2176 = vmatpush1.bf16.msra.mxu0 0
      %2177 = vmatprep.subr.bf16.mxu0 0
      %2178 = vmatpush1.bf16.msra.mxu0 0
      %2179 = vmatprep.subr.bf16.mxu0 0
      %2180 = vmatpush1.bf16.msra.mxu0 0
      %2181 = vmatprep.subr.bf16.mxu0 0
      %2182 = vmatpush1.bf16.msra.mxu0 0
      %2183 = vmatprep.subr.bf16.mxu0 0
      %2184 = vmatpush1.bf16.msra.mxu0 0
      %2185 = vmatprep.subr.bf16.mxu0 0
      %2186 = vmatpush1.bf16.msra.mxu0 0
      %2187 = vmatprep.subr.bf16.mxu0 0
      %2188 = vmatpush1.bf16.msra.mxu0 0
      %2189 = vmatprep.subr.bf16.mxu0 0
      %2190 = vmatpush1.bf16.msra.mxu0 0
      %2191 = vmatprep.subr.bf16.mxu0 0
      %2192 = vmatpush1.bf16.msra.mxu0 0
      %2193 = vmatprep.mubr.bf16.mxu0 0
      %2194 = vmatmul.mubr.bf16.gmra.mrb[0].mxu0 %v2077
      %v2195 = vpop.f32.mrb[0].mxu0
      %v2196 = vadd.f32 0.0, %v2195
      %v2197 = vpop.f32.mrb[0].mxu0
      %v2198 = vadd.f32 0.0, %v2197
      %v2199 = vpop.f32.mrb[0].mxu0
      %v2200 = vpop.f32.mrb[0].mxu0
      %2201 = vdwg.mxu0
      %2202 = vmatprep.subr.bf16.mxu0 %v2067
      %2203 = vmatpush1.bf16.msra.mxu0 %v2066
      %2204 = vmatprep.subr.bf16.mxu0 0
      %2205 = vmatpush1.bf16.msra.mxu0 0
      %2206 = vmatprep.subr.bf16.mxu0 0
      %2207 = vmatpush1.bf16.msra.mxu0 0
      %2208 = vmatprep.subr.bf16.mxu0 0
      %2209 = vmatpush1.bf16.msra.mxu0 0
      %2210 = vmatprep.subr.bf16.mxu0 0
      %2211 = vmatpush1.bf16.msra.mxu0 0
      %2212 = vmatprep.subr.bf16.mxu0 0
      %2213 = vmatpush1.bf16.msra.mxu0 0
      %2214 = vmatprep.subr.bf16.mxu0 0
      %2215 = vmatpush1.bf16.msra.mxu0 0
      %2216 = vmatprep.subr.bf16.mxu0 0
      %2217 = vmatpush1.bf16.msra.mxu0 0
      %2218 = vmatprep.subr.bf16.mxu0 0
      %2219 = vmatpush1.bf16.msra.mxu0 0
      %2220 = vmatprep.subr.bf16.mxu0 0
      %2221 = vmatpush1.bf16.msra.mxu0 0
      %2222 = vmatprep.subr.bf16.mxu0 0
      %2223 = vmatpush1.bf16.msra.mxu0 0
      %2224 = vmatprep.subr.bf16.mxu0 0
      %2225 = vmatpush1.bf16.msra.mxu0 0
      %2226 = vmatprep.subr.bf16.mxu0 0
      %2227 = vmatpush1.bf16.msra.mxu0 0
      %2228 = vmatprep.subr.bf16.mxu0 0
      %2229 = vmatpush1.bf16.msra.mxu0 0
      %2230 = vmatprep.subr.bf16.mxu0 0
      %2231 = vmatpush1.bf16.msra.mxu0 0
      %2232 = vmatprep.subr.bf16.mxu0 0
      %2233 = vmatpush1.bf16.msra.mxu0 0
      %2234 = vmatprep.mubr.bf16.mxu0 0
      %2235 = vmatmul.mubr.bf16.gmra.mrb[0].mxu0 %v2077
      %v2236 = vpop.f32.mrb[0].mxu0
      %v2237 = vadd.f32 0.0, %v2236
      %v2238 = vpop.f32.mrb[0].mxu0
      %v2239 = vadd.f32 0.0, %v2238
      %v2240 = vpop.f32.mrb[0].mxu0
      %v2241 = vpop.f32.mrb[0].mxu0
      %2242 = vdwg.mxu0
      %v2243 = vadd.f32 %v2033, %v2114
      %v2244 = vadd.f32 %v2034, %v2116
      %v2245 = vadd.f32 %v2035, %v2155
      %v2246 = vadd.f32 %v2036, %v2157
      %v2247 = vadd.f32 %v2037, %v2196
      %v2248 = vadd.f32 %v2038, %v2198
      %v2249 = vadd.f32 %v2039, %v2237
      %v2250 = vadd.f32 %v2040, %v2239
      %2251 = vrot.lane.b32.xlu0 %v367, 11
      %v2252 = vpop.permute.xlu0 %2251
      %2253 = vrot.lane.b32.xlu0 %v368, 11
      %v2254 = vpop.permute.xlu0 %2253
      %2255 = vrot.lane.b32.xlu0 %v369, 11
      %v2256 = vpop.permute.xlu0 %2255
      %2257 = vrot.lane.b32.xlu0 %v370, 11
      %v2258 = vpop.permute.xlu0 %2257
      %2259 = vrot.lane.b32.xlu0 %v371, 11
      %v2260 = vpop.permute.xlu0 %2259
      %2261 = vrot.lane.b32.xlu0 %v372, 11
      %v2262 = vpop.permute.xlu0 %2261
      %2263 = vrot.lane.b32.xlu0 %v373, 11
      %v2264 = vpop.permute.xlu0 %2263
      %2265 = vrot.lane.b32.xlu0 %v374, 11
      %v2266 = vpop.permute.xlu0 %2265
      %2267 = vrot.lane.b32.xlu0 %v375, 11
      %v2268 = vpop.permute.xlu0 %2267
      %vm2269 = vcmask 89088
      %v2270 = vsel %vm2269, %v2252, %v2254
      %v2271 = vsel %vm2269, %v2254, %v2256
      %v2272 = vsel %vm2269, %v2256, %v2258
      %v2273 = vsel %vm2269, %v2258, %v2260
      %v2274 = vsel %vm2269, %v2260, %v2262
      %v2275 = vsel %vm2269, %v2262, %v2264
      %v2276 = vsel %vm2269, %v2264, %v2266
      %v2277 = vsel %vm2269, %v2266, %v2268
      %v2287 = vsel %vm411, %v321, 0
      %2289 = vmatprep.subr.bf16.mxu0 %v2271
      %2290 = vmatpush1.bf16.msra.mxu0 %v2270
      %2291 = vmatprep.subr.bf16.mxu0 0
      %2292 = vmatpush1.bf16.msra.mxu0 0
      %2293 = vmatprep.subr.bf16.mxu0 0
      %2294 = vmatpush1.bf16.msra.mxu0 0
      %2295 = vmatprep.subr.bf16.mxu0 0
      %2296 = vmatpush1.bf16.msra.mxu0 0
      %2297 = vmatprep.subr.bf16.mxu0 0
      %2298 = vmatpush1.bf16.msra.mxu0 0
      %2299 = vmatprep.subr.bf16.mxu0 0
      %2300 = vmatpush1.bf16.msra.mxu0 0
      %2301 = vmatprep.subr.bf16.mxu0 0
      %2302 = vmatpush1.bf16.msra.mxu0 0
      %2303 = vmatprep.subr.bf16.mxu0 0
      %2304 = vmatpush1.bf16.msra.mxu0 0
      %2305 = vmatprep.subr.bf16.mxu0 0
      %2306 = vmatpush1.bf16.msra.mxu0 0
      %2307 = vmatprep.subr.bf16.mxu0 0
      %2308 = vmatpush1.bf16.msra.mxu0 0
      %2309 = vmatprep.subr.bf16.mxu0 0
      %2310 = vmatpush1.bf16.msra.mxu0 0
      %2311 = vmatprep.subr.bf16.mxu0 0
      %2312 = vmatpush1.bf16.msra.mxu0 0
      %2313 = vmatprep.subr.bf16.mxu0 0
      %2314 = vmatpush1.bf16.msra.mxu0 0
      %2315 = vmatprep.subr.bf16.mxu0 0
      %2316 = vmatpush1.bf16.msra.mxu0 0
      %2317 = vmatprep.subr.bf16.mxu0 0
      %2318 = vmatpush1.bf16.msra.mxu0 0
      %2319 = vmatprep.subr.bf16.mxu0 0
      %2320 = vmatpush1.bf16.msra.mxu0 0
      %2321 = vmatprep.mubr.bf16.mxu0 0
      %2322 = vmatmul.mubr.bf16.gmra.mrb[0].mxu0 %v2287
      %v2323 = vpop.f32.mrb[0].mxu0
      %v2324 = vadd.f32 0.0, %v2323
      %v2325 = vpop.f32.mrb[0].mxu0
      %v2326 = vadd.f32 0.0, %v2325
      %v2327 = vpop.f32.mrb[0].mxu0
      %v2328 = vpop.f32.mrb[0].mxu0
      %2329 = vdwg.mxu0
      %2330 = vmatprep.subr.bf16.mxu0 %v2273
      %2331 = vmatpush1.bf16.msra.mxu0 %v2272
      %2332 = vmatprep.subr.bf16.mxu0 0
      %2333 = vmatpush1.bf16.msra.mxu0 0
      %2334 = vmatprep.subr.bf16.mxu0 0
      %2335 = vmatpush1.bf16.msra.mxu0 0
      %2336 = vmatprep.subr.bf16.mxu0 0
      %2337 = vmatpush1.bf16.msra.mxu0 0
      %2338 = vmatprep.subr.bf16.mxu0 0
      %2339 = vmatpush1.bf16.msra.mxu0 0
      %2340 = vmatprep.subr.bf16.mxu0 0
      %2341 = vmatpush1.bf16.msra.mxu0 0
      %2342 = vmatprep.subr.bf16.mxu0 0
      %2343 = vmatpush1.bf16.msra.mxu0 0
      %2344 = vmatprep.subr.bf16.mxu0 0
      %2345 = vmatpush1.bf16.msra.mxu0 0
      %2346 = vmatprep.subr.bf16.mxu0 0
      %2347 = vmatpush1.bf16.msra.mxu0 0
      %2348 = vmatprep.subr.bf16.mxu0 0
      %2349 = vmatpush1.bf16.msra.mxu0 0
      %2350 = vmatprep.subr.bf16.mxu0 0
      %2351 = vmatpush1.bf16.msra.mxu0 0
      %2352 = vmatprep.subr.bf16.mxu0 0
      %2353 = vmatpush1.bf16.msra.mxu0 0
      %2354 = vmatprep.subr.bf16.mxu0 0
      %2355 = vmatpush1.bf16.msra.mxu0 0
      %2356 = vmatprep.subr.bf16.mxu0 0
      %2357 = vmatpush1.bf16.msra.mxu0 0
      %2358 = vmatprep.subr.bf16.mxu0 0
      %2359 = vmatpush1.bf16.msra.mxu0 0
      %2360 = vmatprep.subr.bf16.mxu0 0
      %2361 = vmatpush1.bf16.msra.mxu0 0
      %2362 = vmatprep.mubr.bf16.mxu0 0
      %2363 = vmatmul.mubr.bf16.gmra.mrb[0].mxu0 %v2287
      %v2364 = vpop.f32.mrb[0].mxu0
      %v2365 = vadd.f32 0.0, %v2364
      %v2366 = vpop.f32.mrb[0].mxu0
      %v2367 = vadd.f32 0.0, %v2366
      %v2368 = vpop.f32.mrb[0].mxu0
      %v2369 = vpop.f32.mrb[0].mxu0
      %2370 = vdwg.mxu0
      %2371 = vmatprep.subr.bf16.mxu0 %v2275
      %2372 = vmatpush1.bf16.msra.mxu0 %v2274
      %2373 = vmatprep.subr.bf16.mxu0 0
      %2374 = vmatpush1.bf16.msra.mxu0 0
      %2375 = vmatprep.subr.bf16.mxu0 0
      %2376 = vmatpush1.bf16.msra.mxu0 0
      %2377 = vmatprep.subr.bf16.mxu0 0
      %2378 = vmatpush1.bf16.msra.mxu0 0
      %2379 = vmatprep.subr.bf16.mxu0 0
      %2380 = vmatpush1.bf16.msra.mxu0 0
      %2381 = vmatprep.subr.bf16.mxu0 0
      %2382 = vmatpush1.bf16.msra.mxu0 0
      %2383 = vmatprep.subr.bf16.mxu0 0
      %2384 = vmatpush1.bf16.msra.mxu0 0
      %2385 = vmatprep.subr.bf16.mxu0 0
      %2386 = vmatpush1.bf16.msra.mxu0 0
      %2387 = vmatprep.subr.bf16.mxu0 0
      %2388 = vmatpush1.bf16.msra.mxu0 0
      %2389 = vmatprep.subr.bf16.mxu0 0
      %2390 = vmatpush1.bf16.msra.mxu0 0
      %2391 = vmatprep.subr.bf16.mxu0 0
      %2392 = vmatpush1.bf16.msra.mxu0 0
      %2393 = vmatprep.subr.bf16.mxu0 0
      %2394 = vmatpush1.bf16.msra.mxu0 0
      %2395 = vmatprep.subr.bf16.mxu0 0
      %2396 = vmatpush1.bf16.msra.mxu0 0
      %2397 = vmatprep.subr.bf16.mxu0 0
      %2398 = vmatpush1.bf16.msra.mxu0 0
      %2399 = vmatprep.subr.bf16.mxu0 0
      %2400 = vmatpush1.bf16.msra.mxu0 0
      %2401 = vmatprep.subr.bf16.mxu0 0
      %2402 = vmatpush1.bf16.msra.mxu0 0
      %2403 = vmatprep.mubr.bf16.mxu0 0
      %2404 = vmatmul.mubr.bf16.gmra.mrb[0].mxu0 %v2287
      %v2405 = vpop.f32.mrb[0].mxu0
      %v2406 = vadd.f32 0.0, %v2405
      %v2407 = vpop.f32.mrb[0].mxu0
      %v2408 = vadd.f32 0.0, %v2407
      %v2409 = vpop.f32.mrb[0].mxu0
      %v2410 = vpop.f32.mrb[0].mxu0
      %2411 = vdwg.mxu0
      %2412 = vmatprep.subr.bf16.mxu0 %v2277
      %2413 = vmatpush1.bf16.msra.mxu0 %v2276
      %2414 = vmatprep.subr.bf16.mxu0 0
      %2415 = vmatpush1.bf16.msra.mxu0 0
      %2416 = vmatprep.subr.bf16.mxu0 0
      %2417 = vmatpush1.bf16.msra.mxu0 0
      %2418 = vmatprep.subr.bf16.mxu0 0
      %2419 = vmatpush1.bf16.msra.mxu0 0
      %2420 = vmatprep.subr.bf16.mxu0 0
      %2421 = vmatpush1.bf16.msra.mxu0 0
      %2422 = vmatprep.subr.bf16.mxu0 0
      %2423 = vmatpush1.bf16.msra.mxu0 0
      %2424 = vmatprep.subr.bf16.mxu0 0
      %2425 = vmatpush1.bf16.msra.mxu0 0
      %2426 = vmatprep.subr.bf16.mxu0 0
      %2427 = vmatpush1.bf16.msra.mxu0 0
      %2428 = vmatprep.subr.bf16.mxu0 0
      %2429 = vmatpush1.bf16.msra.mxu0 0
      %2430 = vmatprep.subr.bf16.mxu0 0
      %2431 = vmatpush1.bf16.msra.mxu0 0
      %2432 = vmatprep.subr.bf16.mxu0 0
      %2433 = vmatpush1.bf16.msra.mxu0 0
      %2434 = vmatprep.subr.bf16.mxu0 0
      %2435 = vmatpush1.bf16.msra.mxu0 0
      %2436 = vmatprep.subr.bf16.mxu0 0
      %2437 = vmatpush1.bf16.msra.mxu0 0
      %2438 = vmatprep.subr.bf16.mxu0 0
      %2439 = vmatpush1.bf16.msra.mxu0 0
      %2440 = vmatprep.subr.bf16.mxu0 0
      %2441 = vmatpush1.bf16.msra.mxu0 0
      %2442 = vmatprep.subr.bf16.mxu0 0
      %2443 = vmatpush1.bf16.msra.mxu0 0
      %2444 = vmatprep.mubr.bf16.mxu0 0
      %2445 = vmatmul.mubr.bf16.gmra.mrb[0].mxu0 %v2287
      %v2446 = vpop.f32.mrb[0].mxu0
      %v2447 = vadd.f32 0.0, %v2446
      %v2448 = vpop.f32.mrb[0].mxu0
      %v2449 = vadd.f32 0.0, %v2448
      %v2450 = vpop.f32.mrb[0].mxu0
      %v2451 = vpop.f32.mrb[0].mxu0
      %2452 = vdwg.mxu0
      %v2453 = vadd.f32 %v2243, %v2324
      %v2454 = vadd.f32 %v2244, %v2326
      %v2455 = vadd.f32 %v2245, %v2365
      %v2456 = vadd.f32 %v2246, %v2367
      %v2457 = vadd.f32 %v2247, %v2406
      %v2458 = vadd.f32 %v2248, %v2408
      %v2459 = vadd.f32 %v2249, %v2447
      %v2460 = vadd.f32 %v2250, %v2449
      %2461 = vrot.lane.b32.xlu0 %v367, 10
      %v2462 = vpop.permute.xlu0 %2461
      %2463 = vrot.lane.b32.xlu0 %v368, 10
      %v2464 = vpop.permute.xlu0 %2463
      %2465 = vrot.lane.b32.xlu0 %v369, 10
      %v2466 = vpop.permute.xlu0 %2465
      %2467 = vrot.lane.b32.xlu0 %v370, 10
      %v2468 = vpop.permute.xlu0 %2467
      %2469 = vrot.lane.b32.xlu0 %v371, 10
      %v2470 = vpop.permute.xlu0 %2469
      %2471 = vrot.lane.b32.xlu0 %v372, 10
      %v2472 = vpop.permute.xlu0 %2471
      %2473 = vrot.lane.b32.xlu0 %v373, 10
      %v2474 = vpop.permute.xlu0 %2473
      %2475 = vrot.lane.b32.xlu0 %v374, 10
      %v2476 = vpop.permute.xlu0 %2475
      %2477 = vrot.lane.b32.xlu0 %v375, 10
      %v2478 = vpop.permute.xlu0 %2477
      %vm2479 = vcmask 80896
      %v2480 = vsel %vm2479, %v2462, %v2464
      %v2481 = vsel %vm2479, %v2464, %v2466
      %v2482 = vsel %vm2479, %v2466, %v2468
      %v2483 = vsel %vm2479, %v2468, %v2470
      %v2484 = vsel %vm2479, %v2470, %v2472
      %v2485 = vsel %vm2479, %v2472, %v2474
      %v2486 = vsel %vm2479, %v2474, %v2476
      %v2487 = vsel %vm2479, %v2476, %v2478
      %v2497 = vsel %vm411, %v322, 0
      %2499 = vmatprep.subr.bf16.mxu0 %v2481
      %2500 = vmatpush1.bf16.msra.mxu0 %v2480
      %2501 = vmatprep.subr.bf16.mxu0 0
      %2502 = vmatpush1.bf16.msra.mxu0 0
      %2503 = vmatprep.subr.bf16.mxu0 0
      %2504 = vmatpush1.bf16.msra.mxu0 0
      %2505 = vmatprep.subr.bf16.mxu0 0
      %2506 = vmatpush1.bf16.msra.mxu0 0
      %2507 = vmatprep.subr.bf16.mxu0 0
      %2508 = vmatpush1.bf16.msra.mxu0 0
      %2509 = vmatprep.subr.bf16.mxu0 0
      %2510 = vmatpush1.bf16.msra.mxu0 0
      %2511 = vmatprep.subr.bf16.mxu0 0
      %2512 = vmatpush1.bf16.msra.mxu0 0
      %2513 = vmatprep.subr.bf16.mxu0 0
      %2514 = vmatpush1.bf16.msra.mxu0 0
      %2515 = vmatprep.subr.bf16.mxu0 0
      %2516 = vmatpush1.bf16.msra.mxu0 0
      %2517 = vmatprep.subr.bf16.mxu0 0
      %2518 = vmatpush1.bf16.msra.mxu0 0
      %2519 = vmatprep.subr.bf16.mxu0 0
      %2520 = vmatpush1.bf16.msra.mxu0 0
      %2521 = vmatprep.subr.bf16.mxu0 0
      %2522 = vmatpush1.bf16.msra.mxu0 0
      %2523 = vmatprep.subr.bf16.mxu0 0
      %2524 = vmatpush1.bf16.msra.mxu0 0
      %2525 = vmatprep.subr.bf16.mxu0 0
      %2526 = vmatpush1.bf16.msra.mxu0 0
      %2527 = vmatprep.subr.bf16.mxu0 0
      %2528 = vmatpush1.bf16.msra.mxu0 0
      %2529 = vmatprep.subr.bf16.mxu0 0
      %2530 = vmatpush1.bf16.msra.mxu0 0
      %2531 = vmatprep.mubr.bf16.mxu0 0
      %2532 = vmatmul.mubr.bf16.gmra.mrb[0].mxu0 %v2497
      %v2533 = vpop.f32.mrb[0].mxu0
      %v2534 = vadd.f32 0.0, %v2533
      %v2535 = vpop.f32.mrb[0].mxu0
      %v2536 = vadd.f32 0.0, %v2535
      %v2537 = vpop.f32.mrb[0].mxu0
      %v2538 = vpop.f32.mrb[0].mxu0
      %2539 = vdwg.mxu0
      %2540 = vmatprep.subr.bf16.mxu0 %v2483
      %2541 = vmatpush1.bf16.msra.mxu0 %v2482
      %2542 = vmatprep.subr.bf16.mxu0 0
      %2543 = vmatpush1.bf16.msra.mxu0 0
      %2544 = vmatprep.subr.bf16.mxu0 0
      %2545 = vmatpush1.bf16.msra.mxu0 0
      %2546 = vmatprep.subr.bf16.mxu0 0
      %2547 = vmatpush1.bf16.msra.mxu0 0
      %2548 = vmatprep.subr.bf16.mxu0 0
      %2549 = vmatpush1.bf16.msra.mxu0 0
      %2550 = vmatprep.subr.bf16.mxu0 0
      %2551 = vmatpush1.bf16.msra.mxu0 0
      %2552 = vmatprep.subr.bf16.mxu0 0
      %2553 = vmatpush1.bf16.msra.mxu0 0
      %2554 = vmatprep.subr.bf16.mxu0 0
      %2555 = vmatpush1.bf16.msra.mxu0 0
      %2556 = vmatprep.subr.bf16.mxu0 0
      %2557 = vmatpush1.bf16.msra.mxu0 0
      %2558 = vmatprep.subr.bf16.mxu0 0
      %2559 = vmatpush1.bf16.msra.mxu0 0
      %2560 = vmatprep.subr.bf16.mxu0 0
      %2561 = vmatpush1.bf16.msra.mxu0 0
      %2562 = vmatprep.subr.bf16.mxu0 0
      %2563 = vmatpush1.bf16.msra.mxu0 0
      %2564 = vmatprep.subr.bf16.mxu0 0
      %2565 = vmatpush1.bf16.msra.mxu0 0
      %2566 = vmatprep.subr.bf16.mxu0 0
      %2567 = vmatpush1.bf16.msra.mxu0 0
      %2568 = vmatprep.subr.bf16.mxu0 0
      %2569 = vmatpush1.bf16.msra.mxu0 0
      %2570 = vmatprep.subr.bf16.mxu0 0
      %2571 = vmatpush1.bf16.msra.mxu0 0
      %2572 = vmatprep.mubr.bf16.mxu0 0
      %2573 = vmatmul.mubr.bf16.gmra.mrb[0].mxu0 %v2497
      %v2574 = vpop.f32.mrb[0].mxu0
      %v2575 = vadd.f32 0.0, %v2574
      %v2576 = vpop.f32.mrb[0].mxu0
      %v2577 = vadd.f32 0.0, %v2576
      %v2578 = vpop.f32.mrb[0].mxu0
      %v2579 = vpop.f32.mrb[0].mxu0
      %2580 = vdwg.mxu0
      %2581 = vmatprep.subr.bf16.mxu0 %v2485
      %2582 = vmatpush1.bf16.msra.mxu0 %v2484
      %2583 = vmatprep.subr.bf16.mxu0 0
      %2584 = vmatpush1.bf16.msra.mxu0 0
      %2585 = vmatprep.subr.bf16.mxu0 0
      %2586 = vmatpush1.bf16.msra.mxu0 0
      %2587 = vmatprep.subr.bf16.mxu0 0
      %2588 = vmatpush1.bf16.msra.mxu0 0
      %2589 = vmatprep.subr.bf16.mxu0 0
      %2590 = vmatpush1.bf16.msra.mxu0 0
      %2591 = vmatprep.subr.bf16.mxu0 0
      %2592 = vmatpush1.bf16.msra.mxu0 0
      %2593 = vmatprep.subr.bf16.mxu0 0
      %2594 = vmatpush1.bf16.msra.mxu0 0
      %2595 = vmatprep.subr.bf16.mxu0 0
      %2596 = vmatpush1.bf16.msra.mxu0 0
      %2597 = vmatprep.subr.bf16.mxu0 0
      %2598 = vmatpush1.bf16.msra.mxu0 0
      %2599 = vmatprep.subr.bf16.mxu0 0
      %2600 = vmatpush1.bf16.msra.mxu0 0
      %2601 = vmatprep.subr.bf16.mxu0 0
      %2602 = vmatpush1.bf16.msra.mxu0 0
      %2603 = vmatprep.subr.bf16.mxu0 0
      %2604 = vmatpush1.bf16.msra.mxu0 0
      %2605 = vmatprep.subr.bf16.mxu0 0
      %2606 = vmatpush1.bf16.msra.mxu0 0
      %2607 = vmatprep.subr.bf16.mxu0 0
      %2608 = vmatpush1.bf16.msra.mxu0 0
      %2609 = vmatprep.subr.bf16.mxu0 0
      %2610 = vmatpush1.bf16.msra.mxu0 0
      %2611 = vmatprep.subr.bf16.mxu0 0
      %2612 = vmatpush1.bf16.msra.mxu0 0
      %2613 = vmatprep.mubr.bf16.mxu0 0
      %2614 = vmatmul.mubr.bf16.gmra.mrb[0].mxu0 %v2497
      %v2615 = vpop.f32.mrb[0].mxu0
      %v2616 = vadd.f32 0.0, %v2615
      %v2617 = vpop.f32.mrb[0].mxu0
      %v2618 = vadd.f32 0.0, %v2617
      %v2619 = vpop.f32.mrb[0].mxu0
      %v2620 = vpop.f32.mrb[0].mxu0
      %2621 = vdwg.mxu0
      %2622 = vmatprep.subr.bf16.mxu0 %v2487
      %2623 = vmatpush1.bf16.msra.mxu0 %v2486
      %2624 = vmatprep.subr.bf16.mxu0 0
      %2625 = vmatpush1.bf16.msra.mxu0 0
      %2626 = vmatprep.subr.bf16.mxu0 0
      %2627 = vmatpush1.bf16.msra.mxu0 0
      %2628 = vmatprep.subr.bf16.mxu0 0
      %2629 = vmatpush1.bf16.msra.mxu0 0
      %2630 = vmatprep.subr.bf16.mxu0 0
      %2631 = vmatpush1.bf16.msra.mxu0 0
      %2632 = vmatprep.subr.bf16.mxu0 0
      %2633 = vmatpush1.bf16.msra.mxu0 0
      %2634 = vmatprep.subr.bf16.mxu0 0
      %2635 = vmatpush1.bf16.msra.mxu0 0
      %2636 = vmatprep.subr.bf16.mxu0 0
      %2637 = vmatpush1.bf16.msra.mxu0 0
      %2638 = vmatprep.subr.bf16.mxu0 0
      %2639 = vmatpush1.bf16.msra.mxu0 0
      %2640 = vmatprep.subr.bf16.mxu0 0
      %2641 = vmatpush1.bf16.msra.mxu0 0
      %2642 = vmatprep.subr.bf16.mxu0 0
      %2643 = vmatpush1.bf16.msra.mxu0 0
      %2644 = vmatprep.subr.bf16.mxu0 0
      %2645 = vmatpush1.bf16.msra.mxu0 0
      %2646 = vmatprep.subr.bf16.mxu0 0
      %2647 = vmatpush1.bf16.msra.mxu0 0
      %2648 = vmatprep.subr.bf16.mxu0 0
      %2649 = vmatpush1.bf16.msra.mxu0 0
      %2650 = vmatprep.subr.bf16.mxu0 0
      %2651 = vmatpush1.bf16.msra.mxu0 0
      %2652 = vmatprep.subr.bf16.mxu0 0
      %2653 = vmatpush1.bf16.msra.mxu0 0
      %2654 = vmatprep.mubr.bf16.mxu0 0
      %2655 = vmatmul.mubr.bf16.gmra.mrb[0].mxu0 %v2497
      %v2656 = vpop.f32.mrb[0].mxu0
      %v2657 = vadd.f32 0.0, %v2656
      %v2658 = vpop.f32.mrb[0].mxu0
      %v2659 = vadd.f32 0.0, %v2658
      %v2660 = vpop.f32.mrb[0].mxu0
      %v2661 = vpop.f32.mrb[0].mxu0
      %2662 = vdwg.mxu0
      %v2663 = vadd.f32 %v2453, %v2534
      %v2664 = vadd.f32 %v2454, %v2536
      %v2665 = vadd.f32 %v2455, %v2575
      %v2666 = vadd.f32 %v2456, %v2577
      %v2667 = vadd.f32 %v2457, %v2616
      %v2668 = vadd.f32 %v2458, %v2618
      %v2669 = vadd.f32 %v2459, %v2657
      %v2670 = vadd.f32 %v2460, %v2659
      %2671 = vrot.lane.b32.xlu0 %v367, 9
      %v2672 = vpop.permute.xlu0 %2671
      %2673 = vrot.lane.b32.xlu0 %v368, 9
      %v2674 = vpop.permute.xlu0 %2673
      %2675 = vrot.lane.b32.xlu0 %v369, 9
      %v2676 = vpop.permute.xlu0 %2675
      %2677 = vrot.lane.b32.xlu0 %v370, 9
      %v2678 = vpop.permute.xlu0 %2677
      %2679 = vrot.lane.b32.xlu0 %v371, 9
      %v2680 = vpop.permute.xlu0 %2679
      %2681 = vrot.lane.b32.xlu0 %v372, 9
      %v2682 = vpop.permute.xlu0 %2681
      %2683 = vrot.lane.b32.xlu0 %v373, 9
      %v2684 = vpop.permute.xlu0 %2683
      %2685 = vrot.lane.b32.xlu0 %v374, 9
      %v2686 = vpop.permute.xlu0 %2685
      %2687 = vrot.lane.b32.xlu0 %v375, 9
      %v2688 = vpop.permute.xlu0 %2687
      %vm2689 = vcmask 72704
      %v2690 = vsel %vm2689, %v2672, %v2674
      %v2691 = vsel %vm2689, %v2674, %v2676
      %v2692 = vsel %vm2689, %v2676, %v2678
      %v2693 = vsel %vm2689, %v2678, %v2680
      %v2694 = vsel %vm2689, %v2680, %v2682
      %v2695 = vsel %vm2689, %v2682, %v2684
      %v2696 = vsel %vm2689, %v2684, %v2686
      %v2697 = vsel %vm2689, %v2686, %v2688
      %v2707 = vsel %vm411, %v323, 0
      %2709 = vmatprep.subr.bf16.mxu0 %v2691
      %2710 = vmatpush1.bf16.msra.mxu0 %v2690
      %2711 = vmatprep.subr.bf16.mxu0 0
      %2712 = vmatpush1.bf16.msra.mxu0 0
      %2713 = vmatprep.subr.bf16.mxu0 0
      %2714 = vmatpush1.bf16.msra.mxu0 0
      %2715 = vmatprep.subr.bf16.mxu0 0
      %2716 = vmatpush1.bf16.msra.mxu0 0
      %2717 = vmatprep.subr.bf16.mxu0 0
      %2718 = vmatpush1.bf16.msra.mxu0 0
      %2719 = vmatprep.subr.bf16.mxu0 0
      %2720 = vmatpush1.bf16.msra.mxu0 0
      %2721 = vmatprep.subr.bf16.mxu0 0
      %2722 = vmatpush1.bf16.msra.mxu0 0
      %2723 = vmatprep.subr.bf16.mxu0 0
      %2724 = vmatpush1.bf16.msra.mxu0 0
      %2725 = vmatprep.subr.bf16.mxu0 0
      %2726 = vmatpush1.bf16.msra.mxu0 0
      %2727 = vmatprep.subr.bf16.mxu0 0
      %2728 = vmatpush1.bf16.msra.mxu0 0
      %2729 = vmatprep.subr.bf16.mxu0 0
      %2730 = vmatpush1.bf16.msra.mxu0 0
      %2731 = vmatprep.subr.bf16.mxu0 0
      %2732 = vmatpush1.bf16.msra.mxu0 0
      %2733 = vmatprep.subr.bf16.mxu0 0
      %2734 = vmatpush1.bf16.msra.mxu0 0
      %2735 = vmatprep.subr.bf16.mxu0 0
      %2736 = vmatpush1.bf16.msra.mxu0 0
      %2737 = vmatprep.subr.bf16.mxu0 0
      %2738 = vmatpush1.bf16.msra.mxu0 0
      %2739 = vmatprep.subr.bf16.mxu0 0
      %2740 = vmatpush1.bf16.msra.mxu0 0
      %2741 = vmatprep.mubr.bf16.mxu0 0
      %2742 = vmatmul.mubr.bf16.gmra.mrb[0].mxu0 %v2707
      %v2743 = vpop.f32.mrb[0].mxu0
      %v2744 = vadd.f32 0.0, %v2743
      %v2745 = vpop.f32.mrb[0].mxu0
      %v2746 = vadd.f32 0.0, %v2745
      %v2747 = vpop.f32.mrb[0].mxu0
      %v2748 = vpop.f32.mrb[0].mxu0
      %2749 = vdwg.mxu0
      %2750 = vmatprep.subr.bf16.mxu0 %v2693
      %2751 = vmatpush1.bf16.msra.mxu0 %v2692
      %2752 = vmatprep.subr.bf16.mxu0 0
      %2753 = vmatpush1.bf16.msra.mxu0 0
      %2754 = vmatprep.subr.bf16.mxu0 0
      %2755 = vmatpush1.bf16.msra.mxu0 0
      %2756 = vmatprep.subr.bf16.mxu0 0
      %2757 = vmatpush1.bf16.msra.mxu0 0
      %2758 = vmatprep.subr.bf16.mxu0 0
      %2759 = vmatpush1.bf16.msra.mxu0 0
      %2760 = vmatprep.subr.bf16.mxu0 0
      %2761 = vmatpush1.bf16.msra.mxu0 0
      %2762 = vmatprep.subr.bf16.mxu0 0
      %2763 = vmatpush1.bf16.msra.mxu0 0
      %2764 = vmatprep.subr.bf16.mxu0 0
      %2765 = vmatpush1.bf16.msra.mxu0 0
      %2766 = vmatprep.subr.bf16.mxu0 0
      %2767 = vmatpush1.bf16.msra.mxu0 0
      %2768 = vmatprep.subr.bf16.mxu0 0
      %2769 = vmatpush1.bf16.msra.mxu0 0
      %2770 = vmatprep.subr.bf16.mxu0 0
      %2771 = vmatpush1.bf16.msra.mxu0 0
      %2772 = vmatprep.subr.bf16.mxu0 0
      %2773 = vmatpush1.bf16.msra.mxu0 0
      %2774 = vmatprep.subr.bf16.mxu0 0
      %2775 = vmatpush1.bf16.msra.mxu0 0
      %2776 = vmatprep.subr.bf16.mxu0 0
      %2777 = vmatpush1.bf16.msra.mxu0 0
      %2778 = vmatprep.subr.bf16.mxu0 0
      %2779 = vmatpush1.bf16.msra.mxu0 0
      %2780 = vmatprep.subr.bf16.mxu0 0
      %2781 = vmatpush1.bf16.msra.mxu0 0
      %2782 = vmatprep.mubr.bf16.mxu0 0
      %2783 = vmatmul.mubr.bf16.gmra.mrb[0].mxu0 %v2707
      %v2784 = vpop.f32.mrb[0].mxu0
      %v2785 = vadd.f32 0.0, %v2784
      %v2786 = vpop.f32.mrb[0].mxu0
      %v2787 = vadd.f32 0.0, %v2786
      %v2788 = vpop.f32.mrb[0].mxu0
      %v2789 = vpop.f32.mrb[0].mxu0
      %2790 = vdwg.mxu0
      %2791 = vmatprep.subr.bf16.mxu0 %v2695
      %2792 = vmatpush1.bf16.msra.mxu0 %v2694
      %2793 = vmatprep.subr.bf16.mxu0 0
      %2794 = vmatpush1.bf16.msra.mxu0 0
      %2795 = vmatprep.subr.bf16.mxu0 0
      %2796 = vmatpush1.bf16.msra.mxu0 0
      %2797 = vmatprep.subr.bf16.mxu0 0
      %2798 = vmatpush1.bf16.msra.mxu0 0
      %2799 = vmatprep.subr.bf16.mxu0 0
      %2800 = vmatpush1.bf16.msra.mxu0 0
      %2801 = vmatprep.subr.bf16.mxu0 0
      %2802 = vmatpush1.bf16.msra.mxu0 0
      %2803 = vmatprep.subr.bf16.mxu0 0
      %2804 = vmatpush1.bf16.msra.mxu0 0
      %2805 = vmatprep.subr.bf16.mxu0 0
      %2806 = vmatpush1.bf16.msra.mxu0 0
      %2807 = vmatprep.subr.bf16.mxu0 0
      %2808 = vmatpush1.bf16.msra.mxu0 0
      %2809 = vmatprep.subr.bf16.mxu0 0
      %2810 = vmatpush1.bf16.msra.mxu0 0
      %2811 = vmatprep.subr.bf16.mxu0 0
      %2812 = vmatpush1.bf16.msra.mxu0 0
      %2813 = vmatprep.subr.bf16.mxu0 0
      %2814 = vmatpush1.bf16.msra.mxu0 0
      %2815 = vmatprep.subr.bf16.mxu0 0
      %2816 = vmatpush1.bf16.msra.mxu0 0
      %2817 = vmatprep.subr.bf16.mxu0 0
      %2818 = vmatpush1.bf16.msra.mxu0 0
      %2819 = vmatprep.subr.bf16.mxu0 0
      %2820 = vmatpush1.bf16.msra.mxu0 0
      %2821 = vmatprep.subr.bf16.mxu0 0
      %2822 = vmatpush1.bf16.msra.mxu0 0
      %2823 = vmatprep.mubr.bf16.mxu0 0
      %2824 = vmatmul.mubr.bf16.gmra.mrb[0].mxu0 %v2707
      %v2825 = vpop.f32.mrb[0].mxu0
      %v2826 = vadd.f32 0.0, %v2825
      %v2827 = vpop.f32.mrb[0].mxu0
      %v2828 = vadd.f32 0.0, %v2827
      %v2829 = vpop.f32.mrb[0].mxu0
      %v2830 = vpop.f32.mrb[0].mxu0
      %2831 = vdwg.mxu0
      %2832 = vmatprep.subr.bf16.mxu0 %v2697
      %2833 = vmatpush1.bf16.msra.mxu0 %v2696
      %2834 = vmatprep.subr.bf16.mxu0 0
      %2835 = vmatpush1.bf16.msra.mxu0 0
      %2836 = vmatprep.subr.bf16.mxu0 0
      %2837 = vmatpush1.bf16.msra.mxu0 0
      %2838 = vmatprep.subr.bf16.mxu0 0
      %2839 = vmatpush1.bf16.msra.mxu0 0
      %2840 = vmatprep.subr.bf16.mxu0 0
      %2841 = vmatpush1.bf16.msra.mxu0 0
      %2842 = vmatprep.subr.bf16.mxu0 0
      %2843 = vmatpush1.bf16.msra.mxu0 0
      %2844 = vmatprep.subr.bf16.mxu0 0
      %2845 = vmatpush1.bf16.msra.mxu0 0
      %2846 = vmatprep.subr.bf16.mxu0 0
      %2847 = vmatpush1.bf16.msra.mxu0 0
      %2848 = vmatprep.subr.bf16.mxu0 0
      %2849 = vmatpush1.bf16.msra.mxu0 0
      %2850 = vmatprep.subr.bf16.mxu0 0
      %2851 = vmatpush1.bf16.msra.mxu0 0
      %2852 = vmatprep.subr.bf16.mxu0 0
      %2853 = vmatpush1.bf16.msra.mxu0 0
      %2854 = vmatprep.subr.bf16.mxu0 0
      %2855 = vmatpush1.bf16.msra.mxu0 0
      %2856 = vmatprep.subr.bf16.mxu0 0
      %2857 = vmatpush1.bf16.msra.mxu0 0
      %2858 = vmatprep.subr.bf16.mxu0 0
      %2859 = vmatpush1.bf16.msra.mxu0 0
      %2860 = vmatprep.subr.bf16.mxu0 0
      %2861 = vmatpush1.bf16.msra.mxu0 0
      %2862 = vmatprep.subr.bf16.mxu0 0
      %2863 = vmatpush1.bf16.msra.mxu0 0
      %2864 = vmatprep.mubr.bf16.mxu0 0
      %2865 = vmatmul.mubr.bf16.gmra.mrb[0].mxu0 %v2707
      %v2866 = vpop.f32.mrb[0].mxu0
      %v2867 = vadd.f32 0.0, %v2866
      %v2868 = vpop.f32.mrb[0].mxu0
      %v2869 = vadd.f32 0.0, %v2868
      %v2870 = vpop.f32.mrb[0].mxu0
      %v2871 = vpop.f32.mrb[0].mxu0
      %2872 = vdwg.mxu0
      %v2873 = vadd.f32 %v2663, %v2744
      %v2874 = vadd.f32 %v2664, %v2746
      %v2875 = vadd.f32 %v2665, %v2785
      %v2876 = vadd.f32 %v2666, %v2787
      %v2877 = vadd.f32 %v2667, %v2826
      %v2878 = vadd.f32 %v2668, %v2828
      %v2879 = vadd.f32 %v2669, %v2867
      %v2880 = vadd.f32 %v2670, %v2869
      %2881 = vrot.lane.b32.xlu0 %v367, 1
      %v2882 = vpop.permute.xlu0 %2881
      %2883 = vrot.lane.b32.xlu0 %v368, 1
      %v2884 = vpop.permute.xlu0 %2883
      %2885 = vrot.lane.b32.xlu0 %v369, 1
      %v2886 = vpop.permute.xlu0 %2885
      %2887 = vrot.lane.b32.xlu0 %v370, 1
      %v2888 = vpop.permute.xlu0 %2887
      %2889 = vrot.lane.b32.xlu0 %v371, 1
      %v2890 = vpop.permute.xlu0 %2889
      %2891 = vrot.lane.b32.xlu0 %v372, 1
      %v2892 = vpop.permute.xlu0 %2891
      %2893 = vrot.lane.b32.xlu0 %v373, 1
      %v2894 = vpop.permute.xlu0 %2893
      %2895 = vrot.lane.b32.xlu0 %v374, 1
      %v2896 = vpop.permute.xlu0 %2895
      %2897 = vrot.lane.b32.xlu0 %v375, 1
      %v2898 = vpop.permute.xlu0 %2897
      %vm2899 = vcmask 7168
      %v2900 = vsel %vm2899, %v2882, %v2884
      %v2901 = vsel %vm2899, %v2884, %v2886
      %v2902 = vsel %vm2899, %v2886, %v2888
      %v2903 = vsel %vm2899, %v2888, %v2890
      %v2904 = vsel %vm2899, %v2890, %v2892
      %v2905 = vsel %vm2899, %v2892, %v2894
      %v2906 = vsel %vm2899, %v2894, %v2896
      %v2907 = vsel %vm2899, %v2896, %v2898
      %v2917 = vsel %vm411, %v324, 0
      %2919 = vmatprep.subr.bf16.mxu0 %v2901
      %2920 = vmatpush1.bf16.msra.mxu0 %v2900
      %2921 = vmatprep.subr.bf16.mxu0 0
      %2922 = vmatpush1.bf16.msra.mxu0 0
      %2923 = vmatprep.subr.bf16.mxu0 0
      %2924 = vmatpush1.bf16.msra.mxu0 0
      %2925 = vmatprep.subr.bf16.mxu0 0
      %2926 = vmatpush1.bf16.msra.mxu0 0
      %2927 = vmatprep.subr.bf16.mxu0 0
      %2928 = vmatpush1.bf16.msra.mxu0 0
      %2929 = vmatprep.subr.bf16.mxu0 0
      %2930 = vmatpush1.bf16.msra.mxu0 0
      %2931 = vmatprep.subr.bf16.mxu0 0
      %2932 = vmatpush1.bf16.msra.mxu0 0
      %2933 = vmatprep.subr.bf16.mxu0 0
      %2934 = vmatpush1.bf16.msra.mxu0 0
      %2935 = vmatprep.subr.bf16.mxu0 0
      %2936 = vmatpush1.bf16.msra.mxu0 0
      %2937 = vmatprep.subr.bf16.mxu0 0
      %2938 = vmatpush1.bf16.msra.mxu0 0
      %2939 = vmatprep.subr.bf16.mxu0 0
      %2940 = vmatpush1.bf16.msra.mxu0 0
      %2941 = vmatprep.subr.bf16.mxu0 0
      %2942 = vmatpush1.bf16.msra.mxu0 0
      %2943 = vmatprep.subr.bf16.mxu0 0
      %2944 = vmatpush1.bf16.msra.mxu0 0
      %2945 = vmatprep.subr.bf16.mxu0 0
      %2946 = vmatpush1.bf16.msra.mxu0 0
      %2947 = vmatprep.subr.bf16.mxu0 0
      %2948 = vmatpush1.bf16.msra.mxu0 0
      %2949 = vmatprep.subr.bf16.mxu0 0
      %2950 = vmatpush1.bf16.msra.mxu0 0
      %2951 = vmatprep.mubr.bf16.mxu0 0
      %2952 = vmatmul.mubr.bf16.gmra.mrb[0].mxu0 %v2917
      %v2953 = vpop.f32.mrb[0].mxu0
      %v2954 = vadd.f32 0.0, %v2953
      %v2955 = vpop.f32.mrb[0].mxu0
      %v2956 = vadd.f32 0.0, %v2955
      %v2957 = vpop.f32.mrb[0].mxu0
      %v2958 = vpop.f32.mrb[0].mxu0
      %2959 = vdwg.mxu0
      %2960 = vmatprep.subr.bf16.mxu0 %v2903
      %2961 = vmatpush1.bf16.msra.mxu0 %v2902
      %2962 = vmatprep.subr.bf16.mxu0 0
      %2963 = vmatpush1.bf16.msra.mxu0 0
      %2964 = vmatprep.subr.bf16.mxu0 0
      %2965 = vmatpush1.bf16.msra.mxu0 0
      %2966 = vmatprep.subr.bf16.mxu0 0
      %2967 = vmatpush1.bf16.msra.mxu0 0
      %2968 = vmatprep.subr.bf16.mxu0 0
      %2969 = vmatpush1.bf16.msra.mxu0 0
      %2970 = vmatprep.subr.bf16.mxu0 0
      %2971 = vmatpush1.bf16.msra.mxu0 0
      %2972 = vmatprep.subr.bf16.mxu0 0
      %2973 = vmatpush1.bf16.msra.mxu0 0
      %2974 = vmatprep.subr.bf16.mxu0 0
      %2975 = vmatpush1.bf16.msra.mxu0 0
      %2976 = vmatprep.subr.bf16.mxu0 0
      %2977 = vmatpush1.bf16.msra.mxu0 0
      %2978 = vmatprep.subr.bf16.mxu0 0
      %2979 = vmatpush1.bf16.msra.mxu0 0
      %2980 = vmatprep.subr.bf16.mxu0 0
      %2981 = vmatpush1.bf16.msra.mxu0 0
      %2982 = vmatprep.subr.bf16.mxu0 0
      %2983 = vmatpush1.bf16.msra.mxu0 0
      %2984 = vmatprep.subr.bf16.mxu0 0
      %2985 = vmatpush1.bf16.msra.mxu0 0
      %2986 = vmatprep.subr.bf16.mxu0 0
      %2987 = vmatpush1.bf16.msra.mxu0 0
      %2988 = vmatprep.subr.bf16.mxu0 0
      %2989 = vmatpush1.bf16.msra.mxu0 0
      %2990 = vmatprep.subr.bf16.mxu0 0
      %2991 = vmatpush1.bf16.msra.mxu0 0
      %2992 = vmatprep.mubr.bf16.mxu0 0
      %2993 = vmatmul.mubr.bf16.gmra.mrb[0].mxu0 %v2917
      %v2994 = vpop.f32.mrb[0].mxu0
      %v2995 = vadd.f32 0.0, %v2994
      %v2996 = vpop.f32.mrb[0].mxu0
      %v2997 = vadd.f32 0.0, %v2996
      %v2998 = vpop.f32.mrb[0].mxu0
      %v2999 = vpop.f32.mrb[0].mxu0
      %3000 = vdwg.mxu0
      %3001 = vmatprep.subr.bf16.mxu0 %v2905
      %3002 = vmatpush1.bf16.msra.mxu0 %v2904
      %3003 = vmatprep.subr.bf16.mxu0 0
      %3004 = vmatpush1.bf16.msra.mxu0 0
      %3005 = vmatprep.subr.bf16.mxu0 0
      %3006 = vmatpush1.bf16.msra.mxu0 0
      %3007 = vmatprep.subr.bf16.mxu0 0
      %3008 = vmatpush1.bf16.msra.mxu0 0
      %3009 = vmatprep.subr.bf16.mxu0 0
      %3010 = vmatpush1.bf16.msra.mxu0 0
      %3011 = vmatprep.subr.bf16.mxu0 0
      %3012 = vmatpush1.bf16.msra.mxu0 0
      %3013 = vmatprep.subr.bf16.mxu0 0
      %3014 = vmatpush1.bf16.msra.mxu0 0
      %3015 = vmatprep.subr.bf16.mxu0 0
      %3016 = vmatpush1.bf16.msra.mxu0 0
      %3017 = vmatprep.subr.bf16.mxu0 0
      %3018 = vmatpush1.bf16.msra.mxu0 0
      %3019 = vmatprep.subr.bf16.mxu0 0
      %3020 = vmatpush1.bf16.msra.mxu0 0
      %3021 = vmatprep.subr.bf16.mxu0 0
      %3022 = vmatpush1.bf16.msra.mxu0 0
      %3023 = vmatprep.subr.bf16.mxu0 0
      %3024 = vmatpush1.bf16.msra.mxu0 0
      %3025 = vmatprep.subr.bf16.mxu0 0
      %3026 = vmatpush1.bf16.msra.mxu0 0
      %3027 = vmatprep.subr.bf16.mxu0 0
      %3028 = vmatpush1.bf16.msra.mxu0 0
      %3029 = vmatprep.subr.bf16.mxu0 0
      %3030 = vmatpush1.bf16.msra.mxu0 0
      %3031 = vmatprep.subr.bf16.mxu0 0
      %3032 = vmatpush1.bf16.msra.mxu0 0
      %3033 = vmatprep.mubr.bf16.mxu0 0
      %3034 = vmatmul.mubr.bf16.gmra.mrb[0].mxu0 %v2917
      %v3035 = vpop.f32.mrb[0].mxu0
      %v3036 = vadd.f32 0.0, %v3035
      %v3037 = vpop.f32.mrb[0].mxu0
      %v3038 = vadd.f32 0.0, %v3037
      %v3039 = vpop.f32.mrb[0].mxu0
      %v3040 = vpop.f32.mrb[0].mxu0
      %3041 = vdwg.mxu0
      %3042 = vmatprep.subr.bf16.mxu0 %v2907
      %3043 = vmatpush1.bf16.msra.mxu0 %v2906
      %3044 = vmatprep.subr.bf16.mxu0 0
      %3045 = vmatpush1.bf16.msra.mxu0 0
      %3046 = vmatprep.subr.bf16.mxu0 0
      %3047 = vmatpush1.bf16.msra.mxu0 0
      %3048 = vmatprep.subr.bf16.mxu0 0
      %3049 = vmatpush1.bf16.msra.mxu0 0
      %3050 = vmatprep.subr.bf16.mxu0 0
      %3051 = vmatpush1.bf16.msra.mxu0 0
      %3052 = vmatprep.subr.bf16.mxu0 0
      %3053 = vmatpush1.bf16.msra.mxu0 0
      %3054 = vmatprep.subr.bf16.mxu0 0
      %3055 = vmatpush1.bf16.msra.mxu0 0
      %3056 = vmatprep.subr.bf16.mxu0 0
      %3057 = vmatpush1.bf16.msra.mxu0 0
      %3058 = vmatprep.subr.bf16.mxu0 0
      %3059 = vmatpush1.bf16.msra.mxu0 0
      %3060 = vmatprep.subr.bf16.mxu0 0
      %3061 = vmatpush1.bf16.msra.mxu0 0
      %3062 = vmatprep.subr.bf16.mxu0 0
      %3063 = vmatpush1.bf16.msra.mxu0 0
      %3064 = vmatprep.subr.bf16.mxu0 0
      %3065 = vmatpush1.bf16.msra.mxu0 0
      %3066 = vmatprep.subr.bf16.mxu0 0
      %3067 = vmatpush1.bf16.msra.mxu0 0
      %3068 = vmatprep.subr.bf16.mxu0 0
      %3069 = vmatpush1.bf16.msra.mxu0 0
      %3070 = vmatprep.subr.bf16.mxu0 0
      %3071 = vmatpush1.bf16.msra.mxu0 0
      %3072 = vmatprep.subr.bf16.mxu0 0
      %3073 = vmatpush1.bf16.msra.mxu0 0
      %3074 = vmatprep.mubr.bf16.mxu0 0
      %3075 = vmatmul.mubr.bf16.gmra.mrb[0].mxu0 %v2917
      %v3076 = vpop.f32.mrb[0].mxu0
      %v3077 = vadd.f32 0.0, %v3076
      %v3078 = vpop.f32.mrb[0].mxu0
      %v3079 = vadd.f32 0.0, %v3078
      %v3080 = vpop.f32.mrb[0].mxu0
      %v3081 = vpop.f32.mrb[0].mxu0
      %3082 = vdwg.mxu0
      %v3083 = vadd.f32 %v2873, %v2954
      %v3084 = vadd.f32 %v2874, %v2956
      %v3085 = vadd.f32 %v2875, %v2995
      %v3086 = vadd.f32 %v2876, %v2997
      %v3087 = vadd.f32 %v2877, %v3036
      %v3088 = vadd.f32 %v2878, %v3038
      %v3089 = vadd.f32 %v2879, %v3077
      %v3090 = vadd.f32 %v2880, %v3079
      %v3100 = vsel %vm411, %v325, 0
      %3102 = vmatprep.subr.bf16.mxu0 %v369
      %3103 = vmatpush1.bf16.msra.mxu0 %v368
      %3104 = vmatprep.subr.bf16.mxu0 0
      %3105 = vmatpush1.bf16.msra.mxu0 0
      %3106 = vmatprep.subr.bf16.mxu0 0
      %3107 = vmatpush1.bf16.msra.mxu0 0
      %3108 = vmatprep.subr.bf16.mxu0 0
      %3109 = vmatpush1.bf16.msra.mxu0 0
      %3110 = vmatprep.subr.bf16.mxu0 0
      %3111 = vmatpush1.bf16.msra.mxu0 0
      %3112 = vmatprep.subr.bf16.mxu0 0
      %3113 = vmatpush1.bf16.msra.mxu0 0
      %3114 = vmatprep.subr.bf16.mxu0 0
      %3115 = vmatpush1.bf16.msra.mxu0 0
      %3116 = vmatprep.subr.bf16.mxu0 0
      %3117 = vmatpush1.bf16.msra.mxu0 0
      %3118 = vmatprep.subr.bf16.mxu0 0
      %3119 = vmatpush1.bf16.msra.mxu0 0
      %3120 = vmatprep.subr.bf16.mxu0 0
      %3121 = vmatpush1.bf16.msra.mxu0 0
      %3122 = vmatprep.subr.bf16.mxu0 0
      %3123 = vmatpush1.bf16.msra.mxu0 0
      %3124 = vmatprep.subr.bf16.mxu0 0
      %3125 = vmatpush1.bf16.msra.mxu0 0
      %3126 = vmatprep.subr.bf16.mxu0 0
      %3127 = vmatpush1.bf16.msra.mxu0 0
      %3128 = vmatprep.subr.bf16.mxu0 0
      %3129 = vmatpush1.bf16.msra.mxu0 0
      %3130 = vmatprep.subr.bf16.mxu0 0
      %3131 = vmatpush1.bf16.msra.mxu0 0
      %3132 = vmatprep.subr.bf16.mxu0 0
      %3133 = vmatpush1.bf16.msra.mxu0 0
      %3134 = vmatprep.mubr.bf16.mxu0 0
      %3135 = vmatmul.mubr.bf16.gmra.mrb[0].mxu0 %v3100
      %v3136 = vpop.f32.mrb[0].mxu0
      %v3137 = vadd.f32 0.0, %v3136
      %v3138 = vpop.f32.mrb[0].mxu0
      %v3139 = vadd.f32 0.0, %v3138
      %v3140 = vpop.f32.mrb[0].mxu0
      %v3141 = vpop.f32.mrb[0].mxu0
      %3142 = vdwg.mxu0
      %3143 = vmatprep.subr.bf16.mxu0 %v371
      %3144 = vmatpush1.bf16.msra.mxu0 %v370
      %3145 = vmatprep.subr.bf16.mxu0 0
      %3146 = vmatpush1.bf16.msra.mxu0 0
      %3147 = vmatprep.subr.bf16.mxu0 0
      %3148 = vmatpush1.bf16.msra.mxu0 0
      %3149 = vmatprep.subr.bf16.mxu0 0
      %3150 = vmatpush1.bf16.msra.mxu0 0
      %3151 = vmatprep.subr.bf16.mxu0 0
      %3152 = vmatpush1.bf16.msra.mxu0 0
      %3153 = vmatprep.subr.bf16.mxu0 0
      %3154 = vmatpush1.bf16.msra.mxu0 0
      %3155 = vmatprep.subr.bf16.mxu0 0
      %3156 = vmatpush1.bf16.msra.mxu0 0
      %3157 = vmatprep.subr.bf16.mxu0 0
      %3158 = vmatpush1.bf16.msra.mxu0 0
      %3159 = vmatprep.subr.bf16.mxu0 0
      %3160 = vmatpush1.bf16.msra.mxu0 0
      %3161 = vmatprep.subr.bf16.mxu0 0
      %3162 = vmatpush1.bf16.msra.mxu0 0
      %3163 = vmatprep.subr.bf16.mxu0 0
      %3164 = vmatpush1.bf16.msra.mxu0 0
      %3165 = vmatprep.subr.bf16.mxu0 0
      %3166 = vmatpush1.bf16.msra.mxu0 0
      %3167 = vmatprep.subr.bf16.mxu0 0
      %3168 = vmatpush1.bf16.msra.mxu0 0
      %3169 = vmatprep.subr.bf16.mxu0 0
      %3170 = vmatpush1.bf16.msra.mxu0 0
      %3171 = vmatprep.subr.bf16.mxu0 0
      %3172 = vmatpush1.bf16.msra.mxu0 0
      %3173 = vmatprep.subr.bf16.mxu0 0
      %3174 = vmatpush1.bf16.msra.mxu0 0
      %3175 = vmatprep.mubr.bf16.mxu0 0
      %3176 = vmatmul.mubr.bf16.gmra.mrb[0].mxu0 %v3100
      %v3177 = vpop.f32.mrb[0].mxu0
      %v3178 = vadd.f32 0.0, %v3177
      %v3179 = vpop.f32.mrb[0].mxu0
      %v3180 = vadd.f32 0.0, %v3179
      %v3181 = vpop.f32.mrb[0].mxu0
      %v3182 = vpop.f32.mrb[0].mxu0
      %3183 = vdwg.mxu0
      %3184 = vmatprep.subr.bf16.mxu0 %v373
      %3185 = vmatpush1.bf16.msra.mxu0 %v372
      %3186 = vmatprep.subr.bf16.mxu0 0
      %3187 = vmatpush1.bf16.msra.mxu0 0
      %3188 = vmatprep.subr.bf16.mxu0 0
      %3189 = vmatpush1.bf16.msra.mxu0 0
      %3190 = vmatprep.subr.bf16.mxu0 0
      %3191 = vmatpush1.bf16.msra.mxu0 0
      %3192 = vmatprep.subr.bf16.mxu0 0
      %3193 = vmatpush1.bf16.msra.mxu0 0
      %3194 = vmatprep.subr.bf16.mxu0 0
      %3195 = vmatpush1.bf16.msra.mxu0 0
      %3196 = vmatprep.subr.bf16.mxu0 0
      %3197 = vmatpush1.bf16.msra.mxu0 0
      %3198 = vmatprep.subr.bf16.mxu0 0
      %3199 = vmatpush1.bf16.msra.mxu0 0
      %3200 = vmatprep.subr.bf16.mxu0 0
      %3201 = vmatpush1.bf16.msra.mxu0 0
      %3202 = vmatprep.subr.bf16.mxu0 0
      %3203 = vmatpush1.bf16.msra.mxu0 0
      %3204 = vmatprep.subr.bf16.mxu0 0
      %3205 = vmatpush1.bf16.msra.mxu0 0
      %3206 = vmatprep.subr.bf16.mxu0 0
      %3207 = vmatpush1.bf16.msra.mxu0 0
      %3208 = vmatprep.subr.bf16.mxu0 0
      %3209 = vmatpush1.bf16.msra.mxu0 0
      %3210 = vmatprep.subr.bf16.mxu0 0
      %3211 = vmatpush1.bf16.msra.mxu0 0
      %3212 = vmatprep.subr.bf16.mxu0 0
      %3213 = vmatpush1.bf16.msra.mxu0 0
      %3214 = vmatprep.subr.bf16.mxu0 0
      %3215 = vmatpush1.bf16.msra.mxu0 0
      %3216 = vmatprep.mubr.bf16.mxu0 0
      %3217 = vmatmul.mubr.bf16.gmra.mrb[0].mxu0 %v3100
      %v3218 = vpop.f32.mrb[0].mxu0
      %v3219 = vadd.f32 0.0, %v3218
      %v3220 = vpop.f32.mrb[0].mxu0
      %v3221 = vadd.f32 0.0, %v3220
      %v3222 = vpop.f32.mrb[0].mxu0
      %v3223 = vpop.f32.mrb[0].mxu0
      %3224 = vdwg.mxu0
      %3225 = vmatprep.subr.bf16.mxu0 %v375
      %3226 = vmatpush1.bf16.msra.mxu0 %v374
      %3227 = vmatprep.subr.bf16.mxu0 0
      %3228 = vmatpush1.bf16.msra.mxu0 0
      %3229 = vmatprep.subr.bf16.mxu0 0
      %3230 = vmatpush1.bf16.msra.mxu0 0
      %3231 = vmatprep.subr.bf16.mxu0 0
      %3232 = vmatpush1.bf16.msra.mxu0 0
      %3233 = vmatprep.subr.bf16.mxu0 0
      %3234 = vmatpush1.bf16.msra.mxu0 0
      %3235 = vmatprep.subr.bf16.mxu0 0
      %3236 = vmatpush1.bf16.msra.mxu0 0
      %3237 = vmatprep.subr.bf16.mxu0 0
      %3238 = vmatpush1.bf16.msra.mxu0 0
      %3239 = vmatprep.subr.bf16.mxu0 0
      %3240 = vmatpush1.bf16.msra.mxu0 0
      %3241 = vmatprep.subr.bf16.mxu0 0
      %3242 = vmatpush1.bf16.msra.mxu0 0
      %3243 = vmatprep.subr.bf16.mxu0 0
      %3244 = vmatpush1.bf16.msra.mxu0 0
      %3245 = vmatprep.subr.bf16.mxu0 0
      %3246 = vmatpush1.bf16.msra.mxu0 0
      %3247 = vmatprep.subr.bf16.mxu0 0
      %3248 = vmatpush1.bf16.msra.mxu0 0
      %3249 = vmatprep.subr.bf16.mxu0 0
      %3250 = vmatpush1.bf16.msra.mxu0 0
      %3251 = vmatprep.subr.bf16.mxu0 0
      %3252 = vmatpush1.bf16.msra.mxu0 0
      %3253 = vmatprep.subr.bf16.mxu0 0
      %3254 = vmatpush1.bf16.msra.mxu0 0
      %3255 = vmatprep.subr.bf16.mxu0 0
      %3256 = vmatpush1.bf16.msra.mxu0 0
      %3257 = vmatprep.mubr.bf16.mxu0 0
      %3258 = vmatmul.mubr.bf16.gmra.mrb[0].mxu0 %v3100
      %v3259 = vpop.f32.mrb[0].mxu0
      %v3260 = vadd.f32 0.0, %v3259
      %v3261 = vpop.f32.mrb[0].mxu0
      %v3262 = vadd.f32 0.0, %v3261
      %v3263 = vpop.f32.mrb[0].mxu0
      %v3264 = vpop.f32.mrb[0].mxu0
      %3265 = vdwg.mxu0
      %v3266 = vadd.f32 %v3083, %v3137
      %v3267 = vadd.f32 %v3084, %v3139
      %v3268 = vadd.f32 %v3085, %v3178
      %v3269 = vadd.f32 %v3086, %v3180
      %v3270 = vadd.f32 %v3087, %v3219
      %v3271 = vadd.f32 %v3088, %v3221
      %v3272 = vadd.f32 %v3089, %v3260
      %v3273 = vadd.f32 %v3090, %v3262
      %v3274 = vunpack.c.h.b16 %v306
      %v3275 = vunpack.c.h.b16 %v311
      %v3276 = vpack.c.b16 %v3275, %v3274
      %3277 = vrot.lane.b32.xlu0 %v368, 127
      %v3278 = vpop.permute.xlu0 %3277
      %3279 = vrot.lane.b32.xlu0 %v369, 127
      %v3280 = vpop.permute.xlu0 %3279
      %3281 = vrot.lane.b32.xlu0 %v370, 127
      %v3282 = vpop.permute.xlu0 %3281
      %3283 = vrot.lane.b32.xlu0 %v371, 127
      %v3284 = vpop.permute.xlu0 %3283
      %3285 = vrot.lane.b32.xlu0 %v372, 127
      %v3286 = vpop.permute.xlu0 %3285
      %3287 = vrot.lane.b32.xlu0 %v373, 127
      %v3288 = vpop.permute.xlu0 %3287
      %3289 = vrot.lane.b32.xlu0 %v374, 127
      %v3290 = vpop.permute.xlu0 %3289
      %3291 = vrot.lane.b32.xlu0 %v375, 127
      %v3292 = vpop.permute.xlu0 %3291
      %3293 = vrot.lane.b32.xlu0 %v3276, 127
      %v3294 = vpop.permute.xlu0 %3293
      %vm3295 = vcmask 1039360
      %v3296 = vsel %vm3295, %v3278, %v3280
      %v3297 = vsel %vm3295, %v3280, %v3282
      %v3298 = vsel %vm3295, %v3282, %v3284
      %v3299 = vsel %vm3295, %v3284, %v3286
      %v3300 = vsel %vm3295, %v3286, %v3288
      %v3301 = vsel %vm3295, %v3288, %v3290
      %v3302 = vsel %vm3295, %v3290, %v3292
      %v3303 = vsel %vm3295, %v3292, %v3294
      %v3313 = vsel %vm411, %v326, 0
      %3315 = vmatprep.subr.bf16.mxu0 %v3297
      %3316 = vmatpush1.bf16.msra.mxu0 %v3296
      %3317 = vmatprep.subr.bf16.mxu0 0
      %3318 = vmatpush1.bf16.msra.mxu0 0
      %3319 = vmatprep.subr.bf16.mxu0 0
      %3320 = vmatpush1.bf16.msra.mxu0 0
      %3321 = vmatprep.subr.bf16.mxu0 0
      %3322 = vmatpush1.bf16.msra.mxu0 0
      %3323 = vmatprep.subr.bf16.mxu0 0
      %3324 = vmatpush1.bf16.msra.mxu0 0
      %3325 = vmatprep.subr.bf16.mxu0 0
      %3326 = vmatpush1.bf16.msra.mxu0 0
      %3327 = vmatprep.subr.bf16.mxu0 0
      %3328 = vmatpush1.bf16.msra.mxu0 0
      %3329 = vmatprep.subr.bf16.mxu0 0
      %3330 = vmatpush1.bf16.msra.mxu0 0
      %3331 = vmatprep.subr.bf16.mxu0 0
      %3332 = vmatpush1.bf16.msra.mxu0 0
      %3333 = vmatprep.subr.bf16.mxu0 0
      %3334 = vmatpush1.bf16.msra.mxu0 0
      %3335 = vmatprep.subr.bf16.mxu0 0
      %3336 = vmatpush1.bf16.msra.mxu0 0
      %3337 = vmatprep.subr.bf16.mxu0 0
      %3338 = vmatpush1.bf16.msra.mxu0 0
      %3339 = vmatprep.subr.bf16.mxu0 0
      %3340 = vmatpush1.bf16.msra.mxu0 0
      %3341 = vmatprep.subr.bf16.mxu0 0
      %3342 = vmatpush1.bf16.msra.mxu0 0
      %3343 = vmatprep.subr.bf16.mxu0 0
      %3344 = vmatpush1.bf16.msra.mxu0 0
      %3345 = vmatprep.subr.bf16.mxu0 0
      %3346 = vmatpush1.bf16.msra.mxu0 0
      %3347 = vmatprep.mubr.bf16.mxu0 0
      %3348 = vmatmul.mubr.bf16.gmra.mrb[0].mxu0 %v3313
      %v3349 = vpop.f32.mrb[0].mxu0
      %v3350 = vadd.f32 0.0, %v3349
      %v3351 = vpop.f32.mrb[0].mxu0
      %v3352 = vadd.f32 0.0, %v3351
      %v3353 = vpop.f32.mrb[0].mxu0
      %v3354 = vpop.f32.mrb[0].mxu0
      %3355 = vdwg.mxu0
      %3356 = vmatprep.subr.bf16.mxu0 %v3299
      %3357 = vmatpush1.bf16.msra.mxu0 %v3298
      %3358 = vmatprep.subr.bf16.mxu0 0
      %3359 = vmatpush1.bf16.msra.mxu0 0
      %3360 = vmatprep.subr.bf16.mxu0 0
      %3361 = vmatpush1.bf16.msra.mxu0 0
      %3362 = vmatprep.subr.bf16.mxu0 0
      %3363 = vmatpush1.bf16.msra.mxu0 0
      %3364 = vmatprep.subr.bf16.mxu0 0
      %3365 = vmatpush1.bf16.msra.mxu0 0
      %3366 = vmatprep.subr.bf16.mxu0 0
      %3367 = vmatpush1.bf16.msra.mxu0 0
      %3368 = vmatprep.subr.bf16.mxu0 0
      %3369 = vmatpush1.bf16.msra.mxu0 0
      %3370 = vmatprep.subr.bf16.mxu0 0
      %3371 = vmatpush1.bf16.msra.mxu0 0
      %3372 = vmatprep.subr.bf16.mxu0 0
      %3373 = vmatpush1.bf16.msra.mxu0 0
      %3374 = vmatprep.subr.bf16.mxu0 0
      %3375 = vmatpush1.bf16.msra.mxu0 0
      %3376 = vmatprep.subr.bf16.mxu0 0
      %3377 = vmatpush1.bf16.msra.mxu0 0
      %3378 = vmatprep.subr.bf16.mxu0 0
      %3379 = vmatpush1.bf16.msra.mxu0 0
      %3380 = vmatprep.subr.bf16.mxu0 0
      %3381 = vmatpush1.bf16.msra.mxu0 0
      %3382 = vmatprep.subr.bf16.mxu0 0
      %3383 = vmatpush1.bf16.msra.mxu0 0
      %3384 = vmatprep.subr.bf16.mxu0 0
      %3385 = vmatpush1.bf16.msra.mxu0 0
      %3386 = vmatprep.subr.bf16.mxu0 0
      %3387 = vmatpush1.bf16.msra.mxu0 0
      %3388 = vmatprep.mubr.bf16.mxu0 0
      %3389 = vmatmul.mubr.bf16.gmra.mrb[0].mxu0 %v3313
      %v3390 = vpop.f32.mrb[0].mxu0
      %v3391 = vadd.f32 0.0, %v3390
      %v3392 = vpop.f32.mrb[0].mxu0
      %v3393 = vadd.f32 0.0, %v3392
      %v3394 = vpop.f32.mrb[0].mxu0
      %v3395 = vpop.f32.mrb[0].mxu0
      %3396 = vdwg.mxu0
      %3397 = vmatprep.subr.bf16.mxu0 %v3301
      %3398 = vmatpush1.bf16.msra.mxu0 %v3300
      %3399 = vmatprep.subr.bf16.mxu0 0
      %3400 = vmatpush1.bf16.msra.mxu0 0
      %3401 = vmatprep.subr.bf16.mxu0 0
      %3402 = vmatpush1.bf16.msra.mxu0 0
      %3403 = vmatprep.subr.bf16.mxu0 0
      %3404 = vmatpush1.bf16.msra.mxu0 0
      %3405 = vmatprep.subr.bf16.mxu0 0
      %3406 = vmatpush1.bf16.msra.mxu0 0
      %3407 = vmatprep.subr.bf16.mxu0 0
      %3408 = vmatpush1.bf16.msra.mxu0 0
      %3409 = vmatprep.subr.bf16.mxu0 0
      %3410 = vmatpush1.bf16.msra.mxu0 0
      %3411 = vmatprep.subr.bf16.mxu0 0
      %3412 = vmatpush1.bf16.msra.mxu0 0
      %3413 = vmatprep.subr.bf16.mxu0 0
      %3414 = vmatpush1.bf16.msra.mxu0 0
      %3415 = vmatprep.subr.bf16.mxu0 0
      %3416 = vmatpush1.bf16.msra.mxu0 0
      %3417 = vmatprep.subr.bf16.mxu0 0
      %3418 = vmatpush1.bf16.msra.mxu0 0
      %3419 = vmatprep.subr.bf16.mxu0 0
      %3420 = vmatpush1.bf16.msra.mxu0 0
      %3421 = vmatprep.subr.bf16.mxu0 0
      %3422 = vmatpush1.bf16.msra.mxu0 0
      %3423 = vmatprep.subr.bf16.mxu0 0
      %3424 = vmatpush1.bf16.msra.mxu0 0
      %3425 = vmatprep.subr.bf16.mxu0 0
      %3426 = vmatpush1.bf16.msra.mxu0 0
      %3427 = vmatprep.subr.bf16.mxu0 0
      %3428 = vmatpush1.bf16.msra.mxu0 0
      %3429 = vmatprep.mubr.bf16.mxu0 0
      %3430 = vmatmul.mubr.bf16.gmra.mrb[0].mxu0 %v3313
      %v3431 = vpop.f32.mrb[0].mxu0
      %v3432 = vadd.f32 0.0, %v3431
      %v3433 = vpop.f32.mrb[0].mxu0
      %v3434 = vadd.f32 0.0, %v3433
      %v3435 = vpop.f32.mrb[0].mxu0
      %v3436 = vpop.f32.mrb[0].mxu0
      %3437 = vdwg.mxu0
      %3438 = vmatprep.subr.bf16.mxu0 %v3303
      %3439 = vmatpush1.bf16.msra.mxu0 %v3302
      %3440 = vmatprep.subr.bf16.mxu0 0
      %3441 = vmatpush1.bf16.msra.mxu0 0
      %3442 = vmatprep.subr.bf16.mxu0 0
      %3443 = vmatpush1.bf16.msra.mxu0 0
      %3444 = vmatprep.subr.bf16.mxu0 0
      %3445 = vmatpush1.bf16.msra.mxu0 0
      %3446 = vmatprep.subr.bf16.mxu0 0
      %3447 = vmatpush1.bf16.msra.mxu0 0
      %3448 = vmatprep.subr.bf16.mxu0 0
      %3449 = vmatpush1.bf16.msra.mxu0 0
      %3450 = vmatprep.subr.bf16.mxu0 0
      %3451 = vmatpush1.bf16.msra.mxu0 0
      %3452 = vmatprep.subr.bf16.mxu0 0
      %3453 = vmatpush1.bf16.msra.mxu0 0
      %3454 = vmatprep.subr.bf16.mxu0 0
      %3455 = vmatpush1.bf16.msra.mxu0 0
      %3456 = vmatprep.subr.bf16.mxu0 0
      %3457 = vmatpush1.bf16.msra.mxu0 0
      %3458 = vmatprep.subr.bf16.mxu0 0
      %3459 = vmatpush1.bf16.msra.mxu0 0
      %3460 = vmatprep.subr.bf16.mxu0 0
      %3461 = vmatpush1.bf16.msra.mxu0 0
      %3462 = vmatprep.subr.bf16.mxu0 0
      %3463 = vmatpush1.bf16.msra.mxu0 0
      %3464 = vmatprep.subr.bf16.mxu0 0
      %3465 = vmatpush1.bf16.msra.mxu0 0
      %3466 = vmatprep.subr.bf16.mxu0 0
      %3467 = vmatpush1.bf16.msra.mxu0 0
      %3468 = vmatprep.subr.bf16.mxu0 0
      %3469 = vmatpush1.bf16.msra.mxu0 0
      %3470 = vmatprep.mubr.bf16.mxu0 0
      %3471 = vmatmul.mubr.bf16.gmra.mrb[0].mxu0 %v3313
      %v3472 = vpop.f32.mrb[0].mxu0
      %v3473 = vadd.f32 0.0, %v3472
      %v3474 = vpop.f32.mrb[0].mxu0
      %v3475 = vadd.f32 0.0, %v3474
      %v3476 = vpop.f32.mrb[0].mxu0
      %v3477 = vpop.f32.mrb[0].mxu0
      %3478 = vdwg.mxu0
      %v3479 = vadd.f32 %v3266, %v3350
      %v3480 = vadd.f32 %v3267, %v3352
      %v3481 = vadd.f32 %v3268, %v3391
      %v3482 = vadd.f32 %v3269, %v3393
      %v3483 = vadd.f32 %v3270, %v3432
      %v3484 = vadd.f32 %v3271, %v3434
      %v3485 = vadd.f32 %v3272, %v3473
      %v3486 = vadd.f32 %v3273, %v3475
      %3487 = vrot.lane.b32.xlu0 %v368, 119
      %v3488 = vpop.permute.xlu0 %3487
      %3489 = vrot.lane.b32.xlu0 %v369, 119
      %v3490 = vpop.permute.xlu0 %3489
      %3491 = vrot.lane.b32.xlu0 %v370, 119
      %v3492 = vpop.permute.xlu0 %3491
      %3493 = vrot.lane.b32.xlu0 %v371, 119
      %v3494 = vpop.permute.xlu0 %3493
      %3495 = vrot.lane.b32.xlu0 %v372, 119
      %v3496 = vpop.permute.xlu0 %3495
      %3497 = vrot.lane.b32.xlu0 %v373, 119
      %v3498 = vpop.permute.xlu0 %3497
      %3499 = vrot.lane.b32.xlu0 %v374, 119
      %v3500 = vpop.permute.xlu0 %3499
      %3501 = vrot.lane.b32.xlu0 %v375, 119
      %v3502 = vpop.permute.xlu0 %3501
      %3503 = vrot.lane.b32.xlu0 %v3276, 119
      %v3504 = vpop.permute.xlu0 %3503
      %vm3505 = vcmask 973824
      %v3506 = vsel %vm3505, %v3488, %v3490
      %v3507 = vsel %vm3505, %v3490, %v3492
      %v3508 = vsel %vm3505, %v3492, %v3494
      %v3509 = vsel %vm3505, %v3494, %v3496
      %v3510 = vsel %vm3505, %v3496, %v3498
      %v3511 = vsel %vm3505, %v3498, %v3500
      %v3512 = vsel %vm3505, %v3500, %v3502
      %v3513 = vsel %vm3505, %v3502, %v3504
      %v3523 = vsel %vm411, %v327, 0
      %3525 = vmatprep.subr.bf16.mxu0 %v3507
      %3526 = vmatpush1.bf16.msra.mxu0 %v3506
      %3527 = vmatprep.subr.bf16.mxu0 0
      %3528 = vmatpush1.bf16.msra.mxu0 0
      %3529 = vmatprep.subr.bf16.mxu0 0
      %3530 = vmatpush1.bf16.msra.mxu0 0
      %3531 = vmatprep.subr.bf16.mxu0 0
      %3532 = vmatpush1.bf16.msra.mxu0 0
      %3533 = vmatprep.subr.bf16.mxu0 0
      %3534 = vmatpush1.bf16.msra.mxu0 0
      %3535 = vmatprep.subr.bf16.mxu0 0
      %3536 = vmatpush1.bf16.msra.mxu0 0
      %3537 = vmatprep.subr.bf16.mxu0 0
      %3538 = vmatpush1.bf16.msra.mxu0 0
      %3539 = vmatprep.subr.bf16.mxu0 0
      %3540 = vmatpush1.bf16.msra.mxu0 0
      %3541 = vmatprep.subr.bf16.mxu0 0
      %3542 = vmatpush1.bf16.msra.mxu0 0
      %3543 = vmatprep.subr.bf16.mxu0 0
      %3544 = vmatpush1.bf16.msra.mxu0 0
      %3545 = vmatprep.subr.bf16.mxu0 0
      %3546 = vmatpush1.bf16.msra.mxu0 0
      %3547 = vmatprep.subr.bf16.mxu0 0
      %3548 = vmatpush1.bf16.msra.mxu0 0
      %3549 = vmatprep.subr.bf16.mxu0 0
      %3550 = vmatpush1.bf16.msra.mxu0 0
      %3551 = vmatprep.subr.bf16.mxu0 0
      %3552 = vmatpush1.bf16.msra.mxu0 0
      %3553 = vmatprep.subr.bf16.mxu0 0
      %3554 = vmatpush1.bf16.msra.mxu0 0
      %3555 = vmatprep.subr.bf16.mxu0 0
      %3556 = vmatpush1.bf16.msra.mxu0 0
      %3557 = vmatprep.mubr.bf16.mxu0 0
      %3558 = vmatmul.mubr.bf16.gmra.mrb[0].mxu0 %v3523
      %v3559 = vpop.f32.mrb[0].mxu0
      %v3560 = vadd.f32 0.0, %v3559
      %v3561 = vpop.f32.mrb[0].mxu0
      %v3562 = vadd.f32 0.0, %v3561
      %v3563 = vpop.f32.mrb[0].mxu0
      %v3564 = vpop.f32.mrb[0].mxu0
      %3565 = vdwg.mxu0
      %3566 = vmatprep.subr.bf16.mxu0 %v3509
      %3567 = vmatpush1.bf16.msra.mxu0 %v3508
      %3568 = vmatprep.subr.bf16.mxu0 0
      %3569 = vmatpush1.bf16.msra.mxu0 0
      %3570 = vmatprep.subr.bf16.mxu0 0
      %3571 = vmatpush1.bf16.msra.mxu0 0
      %3572 = vmatprep.subr.bf16.mxu0 0
      %3573 = vmatpush1.bf16.msra.mxu0 0
      %3574 = vmatprep.subr.bf16.mxu0 0
      %3575 = vmatpush1.bf16.msra.mxu0 0
      %3576 = vmatprep.subr.bf16.mxu0 0
      %3577 = vmatpush1.bf16.msra.mxu0 0
      %3578 = vmatprep.subr.bf16.mxu0 0
      %3579 = vmatpush1.bf16.msra.mxu0 0
      %3580 = vmatprep.subr.bf16.mxu0 0
      %3581 = vmatpush1.bf16.msra.mxu0 0
      %3582 = vmatprep.subr.bf16.mxu0 0
      %3583 = vmatpush1.bf16.msra.mxu0 0
      %3584 = vmatprep.subr.bf16.mxu0 0
      %3585 = vmatpush1.bf16.msra.mxu0 0
      %3586 = vmatprep.subr.bf16.mxu0 0
      %3587 = vmatpush1.bf16.msra.mxu0 0
      %3588 = vmatprep.subr.bf16.mxu0 0
      %3589 = vmatpush1.bf16.msra.mxu0 0
      %3590 = vmatprep.subr.bf16.mxu0 0
      %3591 = vmatpush1.bf16.msra.mxu0 0
      %3592 = vmatprep.subr.bf16.mxu0 0
      %3593 = vmatpush1.bf16.msra.mxu0 0
      %3594 = vmatprep.subr.bf16.mxu0 0
      %3595 = vmatpush1.bf16.msra.mxu0 0
      %3596 = vmatprep.subr.bf16.mxu0 0
      %3597 = vmatpush1.bf16.msra.mxu0 0
      %3598 = vmatprep.mubr.bf16.mxu0 0
      %3599 = vmatmul.mubr.bf16.gmra.mrb[0].mxu0 %v3523
      %v3600 = vpop.f32.mrb[0].mxu0
      %v3601 = vadd.f32 0.0, %v3600
      %v3602 = vpop.f32.mrb[0].mxu0
      %v3603 = vadd.f32 0.0, %v3602
      %v3604 = vpop.f32.mrb[0].mxu0
      %v3605 = vpop.f32.mrb[0].mxu0
      %3606 = vdwg.mxu0
      %3607 = vmatprep.subr.bf16.mxu0 %v3511
      %3608 = vmatpush1.bf16.msra.mxu0 %v3510
      %3609 = vmatprep.subr.bf16.mxu0 0
      %3610 = vmatpush1.bf16.msra.mxu0 0
      %3611 = vmatprep.subr.bf16.mxu0 0
      %3612 = vmatpush1.bf16.msra.mxu0 0
      %3613 = vmatprep.subr.bf16.mxu0 0
      %3614 = vmatpush1.bf16.msra.mxu0 0
      %3615 = vmatprep.subr.bf16.mxu0 0
      %3616 = vmatpush1.bf16.msra.mxu0 0
      %3617 = vmatprep.subr.bf16.mxu0 0
      %3618 = vmatpush1.bf16.msra.mxu0 0
      %3619 = vmatprep.subr.bf16.mxu0 0
      %3620 = vmatpush1.bf16.msra.mxu0 0
      %3621 = vmatprep.subr.bf16.mxu0 0
      %3622 = vmatpush1.bf16.msra.mxu0 0
      %3623 = vmatprep.subr.bf16.mxu0 0
      %3624 = vmatpush1.bf16.msra.mxu0 0
      %3625 = vmatprep.subr.bf16.mxu0 0
      %3626 = vmatpush1.bf16.msra.mxu0 0
      %3627 = vmatprep.subr.bf16.mxu0 0
      %3628 = vmatpush1.bf16.msra.mxu0 0
      %3629 = vmatprep.subr.bf16.mxu0 0
      %3630 = vmatpush1.bf16.msra.mxu0 0
      %3631 = vmatprep.subr.bf16.mxu0 0
      %3632 = vmatpush1.bf16.msra.mxu0 0
      %3633 = vmatprep.subr.bf16.mxu0 0
      %3634 = vmatpush1.bf16.msra.mxu0 0
      %3635 = vmatprep.subr.bf16.mxu0 0
      %3636 = vmatpush1.bf16.msra.mxu0 0
      %3637 = vmatprep.subr.bf16.mxu0 0
      %3638 = vmatpush1.bf16.msra.mxu0 0
      %3639 = vmatprep.mubr.bf16.mxu0 0
      %3640 = vmatmul.mubr.bf16.gmra.mrb[0].mxu0 %v3523
      %v3641 = vpop.f32.mrb[0].mxu0
      %v3642 = vadd.f32 0.0, %v3641
      %v3643 = vpop.f32.mrb[0].mxu0
      %v3644 = vadd.f32 0.0, %v3643
      %v3645 = vpop.f32.mrb[0].mxu0
      %v3646 = vpop.f32.mrb[0].mxu0
      %3647 = vdwg.mxu0
      %3648 = vmatprep.subr.bf16.mxu0 %v3513
      %3649 = vmatpush1.bf16.msra.mxu0 %v3512
      %3650 = vmatprep.subr.bf16.mxu0 0
      %3651 = vmatpush1.bf16.msra.mxu0 0
      %3652 = vmatprep.subr.bf16.mxu0 0
      %3653 = vmatpush1.bf16.msra.mxu0 0
      %3654 = vmatprep.subr.bf16.mxu0 0
      %3655 = vmatpush1.bf16.msra.mxu0 0
      %3656 = vmatprep.subr.bf16.mxu0 0
      %3657 = vmatpush1.bf16.msra.mxu0 0
      %3658 = vmatprep.subr.bf16.mxu0 0
      %3659 = vmatpush1.bf16.msra.mxu0 0
      %3660 = vmatprep.subr.bf16.mxu0 0
      %3661 = vmatpush1.bf16.msra.mxu0 0
      %3662 = vmatprep.subr.bf16.mxu0 0
      %3663 = vmatpush1.bf16.msra.mxu0 0
      %3664 = vmatprep.subr.bf16.mxu0 0
      %3665 = vmatpush1.bf16.msra.mxu0 0
      %3666 = vmatprep.subr.bf16.mxu0 0
      %3667 = vmatpush1.bf16.msra.mxu0 0
      %3668 = vmatprep.subr.bf16.mxu0 0
      %3669 = vmatpush1.bf16.msra.mxu0 0
      %3670 = vmatprep.subr.bf16.mxu0 0
      %3671 = vmatpush1.bf16.msra.mxu0 0
      %3672 = vmatprep.subr.bf16.mxu0 0
      %3673 = vmatpush1.bf16.msra.mxu0 0
      %3674 = vmatprep.subr.bf16.mxu0 0
      %3675 = vmatpush1.bf16.msra.mxu0 0
      %3676 = vmatprep.subr.bf16.mxu0 0
      %3677 = vmatpush1.bf16.msra.mxu0 0
      %3678 = vmatprep.subr.bf16.mxu0 0
      %3679 = vmatpush1.bf16.msra.mxu0 0
      %3680 = vmatprep.mubr.bf16.mxu0 0
      %3681 = vmatmul.mubr.bf16.gmra.mrb[0].mxu0 %v3523
      %v3682 = vpop.f32.mrb[0].mxu0
      %v3683 = vadd.f32 0.0, %v3682
      %v3684 = vpop.f32.mrb[0].mxu0
      %v3685 = vadd.f32 0.0, %v3684
      %v3686 = vpop.f32.mrb[0].mxu0
      %v3687 = vpop.f32.mrb[0].mxu0
      %3688 = vdwg.mxu0
      %v3689 = vadd.f32 %v3479, %v3560
      %v3690 = vadd.f32 %v3480, %v3562
      %v3691 = vadd.f32 %v3481, %v3601
      %v3692 = vadd.f32 %v3482, %v3603
      %v3693 = vadd.f32 %v3483, %v3642
      %v3694 = vadd.f32 %v3484, %v3644
      %v3695 = vadd.f32 %v3485, %v3683
      %v3696 = vadd.f32 %v3486, %v3685
      %3697 = vrot.lane.b32.xlu0 %v368, 118
      %v3698 = vpop.permute.xlu0 %3697
      %3699 = vrot.lane.b32.xlu0 %v369, 118
      %v3700 = vpop.permute.xlu0 %3699
      %3701 = vrot.lane.b32.xlu0 %v370, 118
      %v3702 = vpop.permute.xlu0 %3701
      %3703 = vrot.lane.b32.xlu0 %v371, 118
      %v3704 = vpop.permute.xlu0 %3703
      %3705 = vrot.lane.b32.xlu0 %v372, 118
      %v3706 = vpop.permute.xlu0 %3705
      %3707 = vrot.lane.b32.xlu0 %v373, 118
      %v3708 = vpop.permute.xlu0 %3707
      %3709 = vrot.lane.b32.xlu0 %v374, 118
      %v3710 = vpop.permute.xlu0 %3709
      %3711 = vrot.lane.b32.xlu0 %v375, 118
      %v3712 = vpop.permute.xlu0 %3711
      %3713 = vrot.lane.b32.xlu0 %v3276, 118
      %v3714 = vpop.permute.xlu0 %3713
      %vm3715 = vcmask 965632
      %v3716 = vsel %vm3715, %v3698, %v3700
      %v3717 = vsel %vm3715, %v3700, %v3702
      %v3718 = vsel %vm3715, %v3702, %v3704
      %v3719 = vsel %vm3715, %v3704, %v3706
      %v3720 = vsel %vm3715, %v3706, %v3708
      %v3721 = vsel %vm3715, %v3708, %v3710
      %v3722 = vsel %vm3715, %v3710, %v3712
      %v3723 = vsel %vm3715, %v3712, %v3714
      %v3733 = vsel %vm411, %v328, 0
      %3735 = vmatprep.subr.bf16.mxu0 %v3717
      %3736 = vmatpush1.bf16.msra.mxu0 %v3716
      %3737 = vmatprep.subr.bf16.mxu0 0
      %3738 = vmatpush1.bf16.msra.mxu0 0
      %3739 = vmatprep.subr.bf16.mxu0 0
      %3740 = vmatpush1.bf16.msra.mxu0 0
      %3741 = vmatprep.subr.bf16.mxu0 0
      %3742 = vmatpush1.bf16.msra.mxu0 0
      %3743 = vmatprep.subr.bf16.mxu0 0
      %3744 = vmatpush1.bf16.msra.mxu0 0
      %3745 = vmatprep.subr.bf16.mxu0 0
      %3746 = vmatpush1.bf16.msra.mxu0 0
      %3747 = vmatprep.subr.bf16.mxu0 0
      %3748 = vmatpush1.bf16.msra.mxu0 0
      %3749 = vmatprep.subr.bf16.mxu0 0
      %3750 = vmatpush1.bf16.msra.mxu0 0
      %3751 = vmatprep.subr.bf16.mxu0 0
      %3752 = vmatpush1.bf16.msra.mxu0 0
      %3753 = vmatprep.subr.bf16.mxu0 0
      %3754 = vmatpush1.bf16.msra.mxu0 0
      %3755 = vmatprep.subr.bf16.mxu0 0
      %3756 = vmatpush1.bf16.msra.mxu0 0
      %3757 = vmatprep.subr.bf16.mxu0 0
      %3758 = vmatpush1.bf16.msra.mxu0 0
      %3759 = vmatprep.subr.bf16.mxu0 0
      %3760 = vmatpush1.bf16.msra.mxu0 0
      %3761 = vmatprep.subr.bf16.mxu0 0
      %3762 = vmatpush1.bf16.msra.mxu0 0
      %3763 = vmatprep.subr.bf16.mxu0 0
      %3764 = vmatpush1.bf16.msra.mxu0 0
      %3765 = vmatprep.subr.bf16.mxu0 0
      %3766 = vmatpush1.bf16.msra.mxu0 0
      %3767 = vmatprep.mubr.bf16.mxu0 0
      %3768 = vmatmul.mubr.bf16.gmra.mrb[0].mxu0 %v3733
      %v3769 = vpop.f32.mrb[0].mxu0
      %v3770 = vadd.f32 0.0, %v3769
      %v3771 = vpop.f32.mrb[0].mxu0
      %v3772 = vadd.f32 0.0, %v3771
      %v3773 = vpop.f32.mrb[0].mxu0
      %v3774 = vpop.f32.mrb[0].mxu0
      %3775 = vdwg.mxu0
      %3776 = vmatprep.subr.bf16.mxu0 %v3719
      %3777 = vmatpush1.bf16.msra.mxu0 %v3718
      %3778 = vmatprep.subr.bf16.mxu0 0
      %3779 = vmatpush1.bf16.msra.mxu0 0
      %3780 = vmatprep.subr.bf16.mxu0 0
      %3781 = vmatpush1.bf16.msra.mxu0 0
      %3782 = vmatprep.subr.bf16.mxu0 0
      %3783 = vmatpush1.bf16.msra.mxu0 0
      %3784 = vmatprep.subr.bf16.mxu0 0
      %3785 = vmatpush1.bf16.msra.mxu0 0
      %3786 = vmatprep.subr.bf16.mxu0 0
      %3787 = vmatpush1.bf16.msra.mxu0 0
      %3788 = vmatprep.subr.bf16.mxu0 0
      %3789 = vmatpush1.bf16.msra.mxu0 0
      %3790 = vmatprep.subr.bf16.mxu0 0
      %3791 = vmatpush1.bf16.msra.mxu0 0
      %3792 = vmatprep.subr.bf16.mxu0 0
      %3793 = vmatpush1.bf16.msra.mxu0 0
      %3794 = vmatprep.subr.bf16.mxu0 0
      %3795 = vmatpush1.bf16.msra.mxu0 0
      %3796 = vmatprep.subr.bf16.mxu0 0
      %3797 = vmatpush1.bf16.msra.mxu0 0
      %3798 = vmatprep.subr.bf16.mxu0 0
      %3799 = vmatpush1.bf16.msra.mxu0 0
      %3800 = vmatprep.subr.bf16.mxu0 0
      %3801 = vmatpush1.bf16.msra.mxu0 0
      %3802 = vmatprep.subr.bf16.mxu0 0
      %3803 = vmatpush1.bf16.msra.mxu0 0
      %3804 = vmatprep.subr.bf16.mxu0 0
      %3805 = vmatpush1.bf16.msra.mxu0 0
      %3806 = vmatprep.subr.bf16.mxu0 0
      %3807 = vmatpush1.bf16.msra.mxu0 0
      %3808 = vmatprep.mubr.bf16.mxu0 0
      %3809 = vmatmul.mubr.bf16.gmra.mrb[0].mxu0 %v3733
      %v3810 = vpop.f32.mrb[0].mxu0
      %v3811 = vadd.f32 0.0, %v3810
      %v3812 = vpop.f32.mrb[0].mxu0
      %v3813 = vadd.f32 0.0, %v3812
      %v3814 = vpop.f32.mrb[0].mxu0
      %v3815 = vpop.f32.mrb[0].mxu0
      %3816 = vdwg.mxu0
      %3817 = vmatprep.subr.bf16.mxu0 %v3721
      %3818 = vmatpush1.bf16.msra.mxu0 %v3720
      %3819 = vmatprep.subr.bf16.mxu0 0
      %3820 = vmatpush1.bf16.msra.mxu0 0
      %3821 = vmatprep.subr.bf16.mxu0 0
      %3822 = vmatpush1.bf16.msra.mxu0 0
      %3823 = vmatprep.subr.bf16.mxu0 0
      %3824 = vmatpush1.bf16.msra.mxu0 0
      %3825 = vmatprep.subr.bf16.mxu0 0
      %3826 = vmatpush1.bf16.msra.mxu0 0
      %3827 = vmatprep.subr.bf16.mxu0 0
      %3828 = vmatpush1.bf16.msra.mxu0 0
      %3829 = vmatprep.subr.bf16.mxu0 0
      %3830 = vmatpush1.bf16.msra.mxu0 0
      %3831 = vmatprep.subr.bf16.mxu0 0
      %3832 = vmatpush1.bf16.msra.mxu0 0
      %3833 = vmatprep.subr.bf16.mxu0 0
      %3834 = vmatpush1.bf16.msra.mxu0 0
      %3835 = vmatprep.subr.bf16.mxu0 0
      %3836 = vmatpush1.bf16.msra.mxu0 0
      %3837 = vmatprep.subr.bf16.mxu0 0
      %3838 = vmatpush1.bf16.msra.mxu0 0
      %3839 = vmatprep.subr.bf16.mxu0 0
      %3840 = vmatpush1.bf16.msra.mxu0 0
      %3841 = vmatprep.subr.bf16.mxu0 0
      %3842 = vmatpush1.bf16.msra.mxu0 0
      %3843 = vmatprep.subr.bf16.mxu0 0
      %3844 = vmatpush1.bf16.msra.mxu0 0
      %3845 = vmatprep.subr.bf16.mxu0 0
      %3846 = vmatpush1.bf16.msra.mxu0 0
      %3847 = vmatprep.subr.bf16.mxu0 0
      %3848 = vmatpush1.bf16.msra.mxu0 0
      %3849 = vmatprep.mubr.bf16.mxu0 0
      %3850 = vmatmul.mubr.bf16.gmra.mrb[0].mxu0 %v3733
      %v3851 = vpop.f32.mrb[0].mxu0
      %v3852 = vadd.f32 0.0, %v3851
      %v3853 = vpop.f32.mrb[0].mxu0
      %v3854 = vadd.f32 0.0, %v3853
      %v3855 = vpop.f32.mrb[0].mxu0
      %v3856 = vpop.f32.mrb[0].mxu0
      %3857 = vdwg.mxu0
      %3858 = vmatprep.subr.bf16.mxu0 %v3723
      %3859 = vmatpush1.bf16.msra.mxu0 %v3722
      %3860 = vmatprep.subr.bf16.mxu0 0
      %3861 = vmatpush1.bf16.msra.mxu0 0
      %3862 = vmatprep.subr.bf16.mxu0 0
      %3863 = vmatpush1.bf16.msra.mxu0 0
      %3864 = vmatprep.subr.bf16.mxu0 0
      %3865 = vmatpush1.bf16.msra.mxu0 0
      %3866 = vmatprep.subr.bf16.mxu0 0
      %3867 = vmatpush1.bf16.msra.mxu0 0
      %3868 = vmatprep.subr.bf16.mxu0 0
      %3869 = vmatpush1.bf16.msra.mxu0 0
      %3870 = vmatprep.subr.bf16.mxu0 0
      %3871 = vmatpush1.bf16.msra.mxu0 0
      %3872 = vmatprep.subr.bf16.mxu0 0
      %3873 = vmatpush1.bf16.msra.mxu0 0
      %3874 = vmatprep.subr.bf16.mxu0 0
      %3875 = vmatpush1.bf16.msra.mxu0 0
      %3876 = vmatprep.subr.bf16.mxu0 0
      %3877 = vmatpush1.bf16.msra.mxu0 0
      %3878 = vmatprep.subr.bf16.mxu0 0
      %3879 = vmatpush1.bf16.msra.mxu0 0
      %3880 = vmatprep.subr.bf16.mxu0 0
      %3881 = vmatpush1.bf16.msra.mxu0 0
      %3882 = vmatprep.subr.bf16.mxu0 0
      %3883 = vmatpush1.bf16.msra.mxu0 0
      %3884 = vmatprep.subr.bf16.mxu0 0
      %3885 = vmatpush1.bf16.msra.mxu0 0
      %3886 = vmatprep.subr.bf16.mxu0 0
      %3887 = vmatpush1.bf16.msra.mxu0 0
      %3888 = vmatprep.subr.bf16.mxu0 0
      %3889 = vmatpush1.bf16.msra.mxu0 0
      %3890 = vmatprep.mubr.bf16.mxu0 0
      %3891 = vmatmul.mubr.bf16.gmra.mrb[0].mxu0 %v3733
      %v3892 = vpop.f32.mrb[0].mxu0
      %v3893 = vadd.f32 0.0, %v3892
      %v3894 = vpop.f32.mrb[0].mxu0
      %v3895 = vadd.f32 0.0, %v3894
      %v3896 = vpop.f32.mrb[0].mxu0
      %v3897 = vpop.f32.mrb[0].mxu0
      %3898 = vdwg.mxu0
      %v3899 = vadd.f32 %v3689, %v3770
      %v3900 = vadd.f32 %v3690, %v3772
      %v3901 = vadd.f32 %v3691, %v3811
      %v3902 = vadd.f32 %v3692, %v3813
      %v3903 = vadd.f32 %v3693, %v3852
      %v3904 = vadd.f32 %v3694, %v3854
      %v3905 = vadd.f32 %v3695, %v3893
      %v3906 = vadd.f32 %v3696, %v3895
      %3907 = vrot.lane.b32.xlu0 %v368, 117
      %v3908 = vpop.permute.xlu0 %3907
      %3909 = vrot.lane.b32.xlu0 %v369, 117
      %v3910 = vpop.permute.xlu0 %3909
      %3911 = vrot.lane.b32.xlu0 %v370, 117
      %v3912 = vpop.permute.xlu0 %3911
      %3913 = vrot.lane.b32.xlu0 %v371, 117
      %v3914 = vpop.permute.xlu0 %3913
      %3915 = vrot.lane.b32.xlu0 %v372, 117
      %v3916 = vpop.permute.xlu0 %3915
      %3917 = vrot.lane.b32.xlu0 %v373, 117
      %v3918 = vpop.permute.xlu0 %3917
      %3919 = vrot.lane.b32.xlu0 %v374, 117
      %v3920 = vpop.permute.xlu0 %3919
      %3921 = vrot.lane.b32.xlu0 %v375, 117
      %v3922 = vpop.permute.xlu0 %3921
      %3923 = vrot.lane.b32.xlu0 %v3276, 117
      %v3924 = vpop.permute.xlu0 %3923
      %vm3925 = vcmask 957440
      %v3926 = vsel %vm3925, %v3908, %v3910
      %v3927 = vsel %vm3925, %v3910, %v3912
      %v3928 = vsel %vm3925, %v3912, %v3914
      %v3929 = vsel %vm3925, %v3914, %v3916
      %v3930 = vsel %vm3925, %v3916, %v3918
      %v3931 = vsel %vm3925, %v3918, %v3920
      %v3932 = vsel %vm3925, %v3920, %v3922
      %v3933 = vsel %vm3925, %v3922, %v3924
      %v3943 = vsel %vm411, %v329, 0
      %3945 = vmatprep.subr.bf16.mxu0 %v3927
      %3946 = vmatpush1.bf16.msra.mxu0 %v3926
      %3947 = vmatprep.subr.bf16.mxu0 0
      %3948 = vmatpush1.bf16.msra.mxu0 0
      %3949 = vmatprep.subr.bf16.mxu0 0
      %3950 = vmatpush1.bf16.msra.mxu0 0
      %3951 = vmatprep.subr.bf16.mxu0 0
      %3952 = vmatpush1.bf16.msra.mxu0 0
      %3953 = vmatprep.subr.bf16.mxu0 0
      %3954 = vmatpush1.bf16.msra.mxu0 0
      %3955 = vmatprep.subr.bf16.mxu0 0
      %3956 = vmatpush1.bf16.msra.mxu0 0
      %3957 = vmatprep.subr.bf16.mxu0 0
      %3958 = vmatpush1.bf16.msra.mxu0 0
      %3959 = vmatprep.subr.bf16.mxu0 0
      %3960 = vmatpush1.bf16.msra.mxu0 0
      %3961 = vmatprep.subr.bf16.mxu0 0
      %3962 = vmatpush1.bf16.msra.mxu0 0
      %3963 = vmatprep.subr.bf16.mxu0 0
      %3964 = vmatpush1.bf16.msra.mxu0 0
      %3965 = vmatprep.subr.bf16.mxu0 0
      %3966 = vmatpush1.bf16.msra.mxu0 0
      %3967 = vmatprep.subr.bf16.mxu0 0
      %3968 = vmatpush1.bf16.msra.mxu0 0
      %3969 = vmatprep.subr.bf16.mxu0 0
      %3970 = vmatpush1.bf16.msra.mxu0 0
      %3971 = vmatprep.subr.bf16.mxu0 0
      %3972 = vmatpush1.bf16.msra.mxu0 0
      %3973 = vmatprep.subr.bf16.mxu0 0
      %3974 = vmatpush1.bf16.msra.mxu0 0
      %3975 = vmatprep.subr.bf16.mxu0 0
      %3976 = vmatpush1.bf16.msra.mxu0 0
      %3977 = vmatprep.mubr.bf16.mxu0 0
      %3978 = vmatmul.mubr.bf16.gmra.mrb[0].mxu0 %v3943
      %v3979 = vpop.f32.mrb[0].mxu0
      %v3980 = vadd.f32 0.0, %v3979
      %v3981 = vpop.f32.mrb[0].mxu0
      %v3982 = vadd.f32 0.0, %v3981
      %v3983 = vpop.f32.mrb[0].mxu0
      %v3984 = vpop.f32.mrb[0].mxu0
      %3985 = vdwg.mxu0
      %3986 = vmatprep.subr.bf16.mxu0 %v3929
      %3987 = vmatpush1.bf16.msra.mxu0 %v3928
      %3988 = vmatprep.subr.bf16.mxu0 0
      %3989 = vmatpush1.bf16.msra.mxu0 0
      %3990 = vmatprep.subr.bf16.mxu0 0
      %3991 = vmatpush1.bf16.msra.mxu0 0
      %3992 = vmatprep.subr.bf16.mxu0 0
      %3993 = vmatpush1.bf16.msra.mxu0 0
      %3994 = vmatprep.subr.bf16.mxu0 0
      %3995 = vmatpush1.bf16.msra.mxu0 0
      %3996 = vmatprep.subr.bf16.mxu0 0
      %3997 = vmatpush1.bf16.msra.mxu0 0
      %3998 = vmatprep.subr.bf16.mxu0 0
      %3999 = vmatpush1.bf16.msra.mxu0 0
      %4000 = vmatprep.subr.bf16.mxu0 0
      %4001 = vmatpush1.bf16.msra.mxu0 0
      %4002 = vmatprep.subr.bf16.mxu0 0
      %4003 = vmatpush1.bf16.msra.mxu0 0
      %4004 = vmatprep.subr.bf16.mxu0 0
      %4005 = vmatpush1.bf16.msra.mxu0 0
      %4006 = vmatprep.subr.bf16.mxu0 0
      %4007 = vmatpush1.bf16.msra.mxu0 0
      %4008 = vmatprep.subr.bf16.mxu0 0
      %4009 = vmatpush1.bf16.msra.mxu0 0
      %4010 = vmatprep.subr.bf16.mxu0 0
      %4011 = vmatpush1.bf16.msra.mxu0 0
      %4012 = vmatprep.subr.bf16.mxu0 0
      %4013 = vmatpush1.bf16.msra.mxu0 0
      %4014 = vmatprep.subr.bf16.mxu0 0
      %4015 = vmatpush1.bf16.msra.mxu0 0
      %4016 = vmatprep.subr.bf16.mxu0 0
      %4017 = vmatpush1.bf16.msra.mxu0 0
      %4018 = vmatprep.mubr.bf16.mxu0 0
      %4019 = vmatmul.mubr.bf16.gmra.mrb[0].mxu0 %v3943
      %v4020 = vpop.f32.mrb[0].mxu0
      %v4021 = vadd.f32 0.0, %v4020
      %v4022 = vpop.f32.mrb[0].mxu0
      %v4023 = vadd.f32 0.0, %v4022
      %v4024 = vpop.f32.mrb[0].mxu0
      %v4025 = vpop.f32.mrb[0].mxu0
      %4026 = vdwg.mxu0
      %4027 = vmatprep.subr.bf16.mxu0 %v3931
      %4028 = vmatpush1.bf16.msra.mxu0 %v3930
      %4029 = vmatprep.subr.bf16.mxu0 0
      %4030 = vmatpush1.bf16.msra.mxu0 0
      %4031 = vmatprep.subr.bf16.mxu0 0
      %4032 = vmatpush1.bf16.msra.mxu0 0
      %4033 = vmatprep.subr.bf16.mxu0 0
      %4034 = vmatpush1.bf16.msra.mxu0 0
      %4035 = vmatprep.subr.bf16.mxu0 0
      %4036 = vmatpush1.bf16.msra.mxu0 0
      %4037 = vmatprep.subr.bf16.mxu0 0
      %4038 = vmatpush1.bf16.msra.mxu0 0
      %4039 = vmatprep.subr.bf16.mxu0 0
      %4040 = vmatpush1.bf16.msra.mxu0 0
      %4041 = vmatprep.subr.bf16.mxu0 0
      %4042 = vmatpush1.bf16.msra.mxu0 0
      %4043 = vmatprep.subr.bf16.mxu0 0
      %4044 = vmatpush1.bf16.msra.mxu0 0
      %4045 = vmatprep.subr.bf16.mxu0 0
      %4046 = vmatpush1.bf16.msra.mxu0 0
      %4047 = vmatprep.subr.bf16.mxu0 0
      %4048 = vmatpush1.bf16.msra.mxu0 0
      %4049 = vmatprep.subr.bf16.mxu0 0
      %4050 = vmatpush1.bf16.msra.mxu0 0
      %4051 = vmatprep.subr.bf16.mxu0 0
      %4052 = vmatpush1.bf16.msra.mxu0 0
      %4053 = vmatprep.subr.bf16.mxu0 0
      %4054 = vmatpush1.bf16.msra.mxu0 0
      %4055 = vmatprep.subr.bf16.mxu0 0
      %4056 = vmatpush1.bf16.msra.mxu0 0
      %4057 = vmatprep.subr.bf16.mxu0 0
      %4058 = vmatpush1.bf16.msra.mxu0 0
      %4059 = vmatprep.mubr.bf16.mxu0 0
      %4060 = vmatmul.mubr.bf16.gmra.mrb[0].mxu0 %v3943
      %v4061 = vpop.f32.mrb[0].mxu0
      %v4062 = vadd.f32 0.0, %v4061
      %v4063 = vpop.f32.mrb[0].mxu0
      %v4064 = vadd.f32 0.0, %v4063
      %v4065 = vpop.f32.mrb[0].mxu0
      %v4066 = vpop.f32.mrb[0].mxu0
      %4067 = vdwg.mxu0
      %4068 = vmatprep.subr.bf16.mxu0 %v3933
      %4069 = vmatpush1.bf16.msra.mxu0 %v3932
      %4070 = vmatprep.subr.bf16.mxu0 0
      %4071 = vmatpush1.bf16.msra.mxu0 0
      %4072 = vmatprep.subr.bf16.mxu0 0
      %4073 = vmatpush1.bf16.msra.mxu0 0
      %4074 = vmatprep.subr.bf16.mxu0 0
      %4075 = vmatpush1.bf16.msra.mxu0 0
      %4076 = vmatprep.subr.bf16.mxu0 0
      %4077 = vmatpush1.bf16.msra.mxu0 0
      %4078 = vmatprep.subr.bf16.mxu0 0
      %4079 = vmatpush1.bf16.msra.mxu0 0
      %4080 = vmatprep.subr.bf16.mxu0 0
      %4081 = vmatpush1.bf16.msra.mxu0 0
      %4082 = vmatprep.subr.bf16.mxu0 0
      %4083 = vmatpush1.bf16.msra.mxu0 0
      %4084 = vmatprep.subr.bf16.mxu0 0
      %4085 = vmatpush1.bf16.msra.mxu0 0
      %4086 = vmatprep.subr.bf16.mxu0 0
      %4087 = vmatpush1.bf16.msra.mxu0 0
      %4088 = vmatprep.subr.bf16.mxu0 0
      %4089 = vmatpush1.bf16.msra.mxu0 0
      %4090 = vmatprep.subr.bf16.mxu0 0
      %4091 = vmatpush1.bf16.msra.mxu0 0
      %4092 = vmatprep.subr.bf16.mxu0 0
      %4093 = vmatpush1.bf16.msra.mxu0 0
      %4094 = vmatprep.subr.bf16.mxu0 0
      %4095 = vmatpush1.bf16.msra.mxu0 0
      %4096 = vmatprep.subr.bf16.mxu0 0
      %4097 = vmatpush1.bf16.msra.mxu0 0
      %4098 = vmatprep.subr.bf16.mxu0 0
      %4099 = vmatpush1.bf16.msra.mxu0 0
      %4100 = vmatprep.mubr.bf16.mxu0 0
      %4101 = vmatmul.mubr.bf16.gmra.mrb[0].mxu0 %v3943
      %v4102 = vpop.f32.mrb[0].mxu0
      %v4103 = vadd.f32 0.0, %v4102
      %v4104 = vpop.f32.mrb[0].mxu0
      %v4105 = vadd.f32 0.0, %v4104
      %v4106 = vpop.f32.mrb[0].mxu0
      %v4107 = vpop.f32.mrb[0].mxu0
      %4108 = vdwg.mxu0
      %v4109 = vadd.f32 %v3899, %v3980
      %v4110 = vadd.f32 %v3900, %v3982
      %v4111 = vadd.f32 %v3901, %v4021
      %v4112 = vadd.f32 %v3902, %v4023
      %v4113 = vadd.f32 %v3903, %v4062
      %v4114 = vadd.f32 %v3904, %v4064
      %v4115 = vadd.f32 %v3905, %v4103
      %v4116 = vadd.f32 %v3906, %v4105
      %4117 = vrot.lane.b32.xlu0 %v368, 39
      %v4118 = vpop.permute.xlu0 %4117
      %4119 = vrot.lane.b32.xlu0 %v369, 39
      %v4120 = vpop.permute.xlu0 %4119
      %4121 = vrot.lane.b32.xlu0 %v370, 39
      %v4122 = vpop.permute.xlu0 %4121
      %4123 = vrot.lane.b32.xlu0 %v371, 39
      %v4124 = vpop.permute.xlu0 %4123
      %4125 = vrot.lane.b32.xlu0 %v372, 39
      %v4126 = vpop.permute.xlu0 %4125
      %4127 = vrot.lane.b32.xlu0 %v373, 39
      %v4128 = vpop.permute.xlu0 %4127
      %4129 = vrot.lane.b32.xlu0 %v374, 39
      %v4130 = vpop.permute.xlu0 %4129
      %4131 = vrot.lane.b32.xlu0 %v375, 39
      %v4132 = vpop.permute.xlu0 %4131
      %4133 = vrot.lane.b32.xlu0 %v3276, 39
      %v4134 = vpop.permute.xlu0 %4133
      %vm4135 = vcmask 318464
      %v4136 = vsel %vm4135, %v4118, %v4120
      %v4137 = vsel %vm4135, %v4120, %v4122
      %v4138 = vsel %vm4135, %v4122, %v4124
      %v4139 = vsel %vm4135, %v4124, %v4126
      %v4140 = vsel %vm4135, %v4126, %v4128
      %v4141 = vsel %vm4135, %v4128, %v4130
      %v4142 = vsel %vm4135, %v4130, %v4132
      %v4143 = vsel %vm4135, %v4132, %v4134
      %v4153 = vsel %vm411, %v330, 0
      %4155 = vmatprep.subr.bf16.mxu0 %v4137
      %4156 = vmatpush1.bf16.msra.mxu0 %v4136
      %4157 = vmatprep.subr.bf16.mxu0 0
      %4158 = vmatpush1.bf16.msra.mxu0 0
      %4159 = vmatprep.subr.bf16.mxu0 0
      %4160 = vmatpush1.bf16.msra.mxu0 0
      %4161 = vmatprep.subr.bf16.mxu0 0
      %4162 = vmatpush1.bf16.msra.mxu0 0
      %4163 = vmatprep.subr.bf16.mxu0 0
      %4164 = vmatpush1.bf16.msra.mxu0 0
      %4165 = vmatprep.subr.bf16.mxu0 0
      %4166 = vmatpush1.bf16.msra.mxu0 0
      %4167 = vmatprep.subr.bf16.mxu0 0
      %4168 = vmatpush1.bf16.msra.mxu0 0
      %4169 = vmatprep.subr.bf16.mxu0 0
      %4170 = vmatpush1.bf16.msra.mxu0 0
      %4171 = vmatprep.subr.bf16.mxu0 0
      %4172 = vmatpush1.bf16.msra.mxu0 0
      %4173 = vmatprep.subr.bf16.mxu0 0
      %4174 = vmatpush1.bf16.msra.mxu0 0
      %4175 = vmatprep.subr.bf16.mxu0 0
      %4176 = vmatpush1.bf16.msra.mxu0 0
      %4177 = vmatprep.subr.bf16.mxu0 0
      %4178 = vmatpush1.bf16.msra.mxu0 0
      %4179 = vmatprep.subr.bf16.mxu0 0
      %4180 = vmatpush1.bf16.msra.mxu0 0
      %4181 = vmatprep.subr.bf16.mxu0 0
      %4182 = vmatpush1.bf16.msra.mxu0 0
      %4183 = vmatprep.subr.bf16.mxu0 0
      %4184 = vmatpush1.bf16.msra.mxu0 0
      %4185 = vmatprep.subr.bf16.mxu0 0
      %4186 = vmatpush1.bf16.msra.mxu0 0
      %4187 = vmatprep.mubr.bf16.mxu0 0
      %4188 = vmatmul.mubr.bf16.gmra.mrb[0].mxu0 %v4153
      %v4189 = vpop.f32.mrb[0].mxu0
      %v4190 = vadd.f32 0.0, %v4189
      %v4191 = vpop.f32.mrb[0].mxu0
      %v4192 = vadd.f32 0.0, %v4191
      %v4193 = vpop.f32.mrb[0].mxu0
      %v4194 = vpop.f32.mrb[0].mxu0
      %4195 = vdwg.mxu0
      %4196 = vmatprep.subr.bf16.mxu0 %v4139
      %4197 = vmatpush1.bf16.msra.mxu0 %v4138
      %4198 = vmatprep.subr.bf16.mxu0 0
      %4199 = vmatpush1.bf16.msra.mxu0 0
      %4200 = vmatprep.subr.bf16.mxu0 0
      %4201 = vmatpush1.bf16.msra.mxu0 0
      %4202 = vmatprep.subr.bf16.mxu0 0
      %4203 = vmatpush1.bf16.msra.mxu0 0
      %4204 = vmatprep.subr.bf16.mxu0 0
      %4205 = vmatpush1.bf16.msra.mxu0 0
      %4206 = vmatprep.subr.bf16.mxu0 0
      %4207 = vmatpush1.bf16.msra.mxu0 0
      %4208 = vmatprep.subr.bf16.mxu0 0
      %4209 = vmatpush1.bf16.msra.mxu0 0
      %4210 = vmatprep.subr.bf16.mxu0 0
      %4211 = vmatpush1.bf16.msra.mxu0 0
      %4212 = vmatprep.subr.bf16.mxu0 0
      %4213 = vmatpush1.bf16.msra.mxu0 0
      %4214 = vmatprep.subr.bf16.mxu0 0
      %4215 = vmatpush1.bf16.msra.mxu0 0
      %4216 = vmatprep.subr.bf16.mxu0 0
      %4217 = vmatpush1.bf16.msra.mxu0 0
      %4218 = vmatprep.subr.bf16.mxu0 0
      %4219 = vmatpush1.bf16.msra.mxu0 0
      %4220 = vmatprep.subr.bf16.mxu0 0
      %4221 = vmatpush1.bf16.msra.mxu0 0
      %4222 = vmatprep.subr.bf16.mxu0 0
      %4223 = vmatpush1.bf16.msra.mxu0 0
      %4224 = vmatprep.subr.bf16.mxu0 0
      %4225 = vmatpush1.bf16.msra.mxu0 0
      %4226 = vmatprep.subr.bf16.mxu0 0
      %4227 = vmatpush1.bf16.msra.mxu0 0
      %4228 = vmatprep.mubr.bf16.mxu0 0
      %4229 = vmatmul.mubr.bf16.gmra.mrb[0].mxu0 %v4153
      %v4230 = vpop.f32.mrb[0].mxu0
      %v4231 = vadd.f32 0.0, %v4230
      %v4232 = vpop.f32.mrb[0].mxu0
      %v4233 = vadd.f32 0.0, %v4232
      %v4234 = vpop.f32.mrb[0].mxu0
      %v4235 = vpop.f32.mrb[0].mxu0
      %4236 = vdwg.mxu0
      %4237 = vmatprep.subr.bf16.mxu0 %v4141
      %4238 = vmatpush1.bf16.msra.mxu0 %v4140
      %4239 = vmatprep.subr.bf16.mxu0 0
      %4240 = vmatpush1.bf16.msra.mxu0 0
      %4241 = vmatprep.subr.bf16.mxu0 0
      %4242 = vmatpush1.bf16.msra.mxu0 0
      %4243 = vmatprep.subr.bf16.mxu0 0
      %4244 = vmatpush1.bf16.msra.mxu0 0
      %4245 = vmatprep.subr.bf16.mxu0 0
      %4246 = vmatpush1.bf16.msra.mxu0 0
      %4247 = vmatprep.subr.bf16.mxu0 0
      %4248 = vmatpush1.bf16.msra.mxu0 0
      %4249 = vmatprep.subr.bf16.mxu0 0
      %4250 = vmatpush1.bf16.msra.mxu0 0
      %4251 = vmatprep.subr.bf16.mxu0 0
      %4252 = vmatpush1.bf16.msra.mxu0 0
      %4253 = vmatprep.subr.bf16.mxu0 0
      %4254 = vmatpush1.bf16.msra.mxu0 0
      %4255 = vmatprep.subr.bf16.mxu0 0
      %4256 = vmatpush1.bf16.msra.mxu0 0
      %4257 = vmatprep.subr.bf16.mxu0 0
      %4258 = vmatpush1.bf16.msra.mxu0 0
      %4259 = vmatprep.subr.bf16.mxu0 0
      %4260 = vmatpush1.bf16.msra.mxu0 0
      %4261 = vmatprep.subr.bf16.mxu0 0
      %4262 = vmatpush1.bf16.msra.mxu0 0
      %4263 = vmatprep.subr.bf16.mxu0 0
      %4264 = vmatpush1.bf16.msra.mxu0 0
      %4265 = vmatprep.subr.bf16.mxu0 0
      %4266 = vmatpush1.bf16.msra.mxu0 0
      %4267 = vmatprep.subr.bf16.mxu0 0
      %4268 = vmatpush1.bf16.msra.mxu0 0
      %4269 = vmatprep.mubr.bf16.mxu0 0
      %4270 = vmatmul.mubr.bf16.gmra.mrb[0].mxu0 %v4153
      %v4271 = vpop.f32.mrb[0].mxu0
      %v4272 = vadd.f32 0.0, %v4271
      %v4273 = vpop.f32.mrb[0].mxu0
      %v4274 = vadd.f32 0.0, %v4273
      %v4275 = vpop.f32.mrb[0].mxu0
      %v4276 = vpop.f32.mrb[0].mxu0
      %4277 = vdwg.mxu0
      %4278 = vmatprep.subr.bf16.mxu0 %v4143
      %4279 = vmatpush1.bf16.msra.mxu0 %v4142
      %4280 = vmatprep.subr.bf16.mxu0 0
      %4281 = vmatpush1.bf16.msra.mxu0 0
      %4282 = vmatprep.subr.bf16.mxu0 0
      %4283 = vmatpush1.bf16.msra.mxu0 0
      %4284 = vmatprep.subr.bf16.mxu0 0
      %4285 = vmatpush1.bf16.msra.mxu0 0
      %4286 = vmatprep.subr.bf16.mxu0 0
      %4287 = vmatpush1.bf16.msra.mxu0 0
      %4288 = vmatprep.subr.bf16.mxu0 0
      %4289 = vmatpush1.bf16.msra.mxu0 0
      %4290 = vmatprep.subr.bf16.mxu0 0
      %4291 = vmatpush1.bf16.msra.mxu0 0
      %4292 = vmatprep.subr.bf16.mxu0 0
      %4293 = vmatpush1.bf16.msra.mxu0 0
      %4294 = vmatprep.subr.bf16.mxu0 0
      %4295 = vmatpush1.bf16.msra.mxu0 0
      %4296 = vmatprep.subr.bf16.mxu0 0
      %4297 = vmatpush1.bf16.msra.mxu0 0
      %4298 = vmatprep.subr.bf16.mxu0 0
      %4299 = vmatpush1.bf16.msra.mxu0 0
      %4300 = vmatprep.subr.bf16.mxu0 0
      %4301 = vmatpush1.bf16.msra.mxu0 0
      %4302 = vmatprep.subr.bf16.mxu0 0
      %4303 = vmatpush1.bf16.msra.mxu0 0
      %4304 = vmatprep.subr.bf16.mxu0 0
      %4305 = vmatpush1.bf16.msra.mxu0 0
      %4306 = vmatprep.subr.bf16.mxu0 0
      %4307 = vmatpush1.bf16.msra.mxu0 0
      %4308 = vmatprep.subr.bf16.mxu0 0
      %4309 = vmatpush1.bf16.msra.mxu0 0
      %4310 = vmatprep.mubr.bf16.mxu0 0
      %4311 = vmatmul.mubr.bf16.gmra.mrb[0].mxu0 %v4153
      %v4312 = vpop.f32.mrb[0].mxu0
      %v4313 = vadd.f32 0.0, %v4312
      %v4314 = vpop.f32.mrb[0].mxu0
      %v4315 = vadd.f32 0.0, %v4314
      %v4316 = vpop.f32.mrb[0].mxu0
      %v4317 = vpop.f32.mrb[0].mxu0
      %4318 = vdwg.mxu0
      %v4319 = vadd.f32 %v4109, %v4190
      %v4320 = vadd.f32 %v4110, %v4192
      %v4321 = vadd.f32 %v4111, %v4231
      %v4322 = vadd.f32 %v4112, %v4233
      %v4323 = vadd.f32 %v4113, %v4272
      %v4324 = vadd.f32 %v4114, %v4274
      %v4325 = vadd.f32 %v4115, %v4313
      %v4326 = vadd.f32 %v4116, %v4315
      %4327 = vrot.lane.b32.xlu0 %v368, 38
      %v4328 = vpop.permute.xlu0 %4327
      %4329 = vrot.lane.b32.xlu0 %v369, 38
      %v4330 = vpop.permute.xlu0 %4329
      %4331 = vrot.lane.b32.xlu0 %v370, 38
      %v4332 = vpop.permute.xlu0 %4331
      %4333 = vrot.lane.b32.xlu0 %v371, 38
      %v4334 = vpop.permute.xlu0 %4333
      %4335 = vrot.lane.b32.xlu0 %v372, 38
      %v4336 = vpop.permute.xlu0 %4335
      %4337 = vrot.lane.b32.xlu0 %v373, 38
      %v4338 = vpop.permute.xlu0 %4337
      %4339 = vrot.lane.b32.xlu0 %v374, 38
      %v4340 = vpop.permute.xlu0 %4339
      %4341 = vrot.lane.b32.xlu0 %v375, 38
      %v4342 = vpop.permute.xlu0 %4341
      %4343 = vrot.lane.b32.xlu0 %v3276, 38
      %v4344 = vpop.permute.xlu0 %4343
      %vm4345 = vcmask 310272
      %v4346 = vsel %vm4345, %v4328, %v4330
      %v4347 = vsel %vm4345, %v4330, %v4332
      %v4348 = vsel %vm4345, %v4332, %v4334
      %v4349 = vsel %vm4345, %v4334, %v4336
      %v4350 = vsel %vm4345, %v4336, %v4338
      %v4351 = vsel %vm4345, %v4338, %v4340
      %v4352 = vsel %vm4345, %v4340, %v4342
      %v4353 = vsel %vm4345, %v4342, %v4344
      %v4363 = vsel %vm411, %v331, 0
      %4365 = vmatprep.subr.bf16.mxu0 %v4347
      %4366 = vmatpush1.bf16.msra.mxu0 %v4346
      %4367 = vmatprep.subr.bf16.mxu0 0
      %4368 = vmatpush1.bf16.msra.mxu0 0
      %4369 = vmatprep.subr.bf16.mxu0 0
      %4370 = vmatpush1.bf16.msra.mxu0 0
      %4371 = vmatprep.subr.bf16.mxu0 0
      %4372 = vmatpush1.bf16.msra.mxu0 0
      %4373 = vmatprep.subr.bf16.mxu0 0
      %4374 = vmatpush1.bf16.msra.mxu0 0
      %4375 = vmatprep.subr.bf16.mxu0 0
      %4376 = vmatpush1.bf16.msra.mxu0 0
      %4377 = vmatprep.subr.bf16.mxu0 0
      %4378 = vmatpush1.bf16.msra.mxu0 0
      %4379 = vmatprep.subr.bf16.mxu0 0
      %4380 = vmatpush1.bf16.msra.mxu0 0
      %4381 = vmatprep.subr.bf16.mxu0 0
      %4382 = vmatpush1.bf16.msra.mxu0 0
      %4383 = vmatprep.subr.bf16.mxu0 0
      %4384 = vmatpush1.bf16.msra.mxu0 0
      %4385 = vmatprep.subr.bf16.mxu0 0
      %4386 = vmatpush1.bf16.msra.mxu0 0
      %4387 = vmatprep.subr.bf16.mxu0 0
      %4388 = vmatpush1.bf16.msra.mxu0 0
      %4389 = vmatprep.subr.bf16.mxu0 0
      %4390 = vmatpush1.bf16.msra.mxu0 0
      %4391 = vmatprep.subr.bf16.mxu0 0
      %4392 = vmatpush1.bf16.msra.mxu0 0
      %4393 = vmatprep.subr.bf16.mxu0 0
      %4394 = vmatpush1.bf16.msra.mxu0 0
      %4395 = vmatprep.subr.bf16.mxu0 0
      %4396 = vmatpush1.bf16.msra.mxu0 0
      %4397 = vmatprep.mubr.bf16.mxu0 0
      %4398 = vmatmul.mubr.bf16.gmra.mrb[0].mxu0 %v4363
      %v4399 = vpop.f32.mrb[0].mxu0
      %v4400 = vadd.f32 0.0, %v4399
      %v4401 = vpop.f32.mrb[0].mxu0
      %v4402 = vadd.f32 0.0, %v4401
      %v4403 = vpop.f32.mrb[0].mxu0
      %v4404 = vpop.f32.mrb[0].mxu0
      %4405 = vdwg.mxu0
      %4406 = vmatprep.subr.bf16.mxu0 %v4349
      %4407 = vmatpush1.bf16.msra.mxu0 %v4348
      %4408 = vmatprep.subr.bf16.mxu0 0
      %4409 = vmatpush1.bf16.msra.mxu0 0
      %4410 = vmatprep.subr.bf16.mxu0 0
      %4411 = vmatpush1.bf16.msra.mxu0 0
      %4412 = vmatprep.subr.bf16.mxu0 0
      %4413 = vmatpush1.bf16.msra.mxu0 0
      %4414 = vmatprep.subr.bf16.mxu0 0
      %4415 = vmatpush1.bf16.msra.mxu0 0
      %4416 = vmatprep.subr.bf16.mxu0 0
      %4417 = vmatpush1.bf16.msra.mxu0 0
      %4418 = vmatprep.subr.bf16.mxu0 0
      %4419 = vmatpush1.bf16.msra.mxu0 0
      %4420 = vmatprep.subr.bf16.mxu0 0
      %4421 = vmatpush1.bf16.msra.mxu0 0
      %4422 = vmatprep.subr.bf16.mxu0 0
      %4423 = vmatpush1.bf16.msra.mxu0 0
      %4424 = vmatprep.subr.bf16.mxu0 0
      %4425 = vmatpush1.bf16.msra.mxu0 0
      %4426 = vmatprep.subr.bf16.mxu0 0
      %4427 = vmatpush1.bf16.msra.mxu0 0
      %4428 = vmatprep.subr.bf16.mxu0 0
      %4429 = vmatpush1.bf16.msra.mxu0 0
      %4430 = vmatprep.subr.bf16.mxu0 0
      %4431 = vmatpush1.bf16.msra.mxu0 0
      %4432 = vmatprep.subr.bf16.mxu0 0
      %4433 = vmatpush1.bf16.msra.mxu0 0
      %4434 = vmatprep.subr.bf16.mxu0 0
      %4435 = vmatpush1.bf16.msra.mxu0 0
      %4436 = vmatprep.subr.bf16.mxu0 0
      %4437 = vmatpush1.bf16.msra.mxu0 0
      %4438 = vmatprep.mubr.bf16.mxu0 0
      %4439 = vmatmul.mubr.bf16.gmra.mrb[0].mxu0 %v4363
      %v4440 = vpop.f32.mrb[0].mxu0
      %v4441 = vadd.f32 0.0, %v4440
      %v4442 = vpop.f32.mrb[0].mxu0
      %v4443 = vadd.f32 0.0, %v4442
      %v4444 = vpop.f32.mrb[0].mxu0
      %v4445 = vpop.f32.mrb[0].mxu0
      %4446 = vdwg.mxu0
      %4447 = vmatprep.subr.bf16.mxu0 %v4351
      %4448 = vmatpush1.bf16.msra.mxu0 %v4350
      %4449 = vmatprep.subr.bf16.mxu0 0
      %4450 = vmatpush1.bf16.msra.mxu0 0
      %4451 = vmatprep.subr.bf16.mxu0 0
      %4452 = vmatpush1.bf16.msra.mxu0 0
      %4453 = vmatprep.subr.bf16.mxu0 0
      %4454 = vmatpush1.bf16.msra.mxu0 0
      %4455 = vmatprep.subr.bf16.mxu0 0
      %4456 = vmatpush1.bf16.msra.mxu0 0
      %4457 = vmatprep.subr.bf16.mxu0 0
      %4458 = vmatpush1.bf16.msra.mxu0 0
      %4459 = vmatprep.subr.bf16.mxu0 0
      %4460 = vmatpush1.bf16.msra.mxu0 0
      %4461 = vmatprep.subr.bf16.mxu0 0
      %4462 = vmatpush1.bf16.msra.mxu0 0
      %4463 = vmatprep.subr.bf16.mxu0 0
      %4464 = vmatpush1.bf16.msra.mxu0 0
      %4465 = vmatprep.subr.bf16.mxu0 0
      %4466 = vmatpush1.bf16.msra.mxu0 0
      %4467 = vmatprep.subr.bf16.mxu0 0
      %4468 = vmatpush1.bf16.msra.mxu0 0
      %4469 = vmatprep.subr.bf16.mxu0 0
      %4470 = vmatpush1.bf16.msra.mxu0 0
      %4471 = vmatprep.subr.bf16.mxu0 0
      %4472 = vmatpush1.bf16.msra.mxu0 0
      %4473 = vmatprep.subr.bf16.mxu0 0
      %4474 = vmatpush1.bf16.msra.mxu0 0
      %4475 = vmatprep.subr.bf16.mxu0 0
      %4476 = vmatpush1.bf16.msra.mxu0 0
      %4477 = vmatprep.subr.bf16.mxu0 0
      %4478 = vmatpush1.bf16.msra.mxu0 0
      %4479 = vmatprep.mubr.bf16.mxu0 0
      %4480 = vmatmul.mubr.bf16.gmra.mrb[0].mxu0 %v4363
      %v4481 = vpop.f32.mrb[0].mxu0
      %v4482 = vadd.f32 0.0, %v4481
      %v4483 = vpop.f32.mrb[0].mxu0
      %v4484 = vadd.f32 0.0, %v4483
      %v4485 = vpop.f32.mrb[0].mxu0
      %v4486 = vpop.f32.mrb[0].mxu0
      %4487 = vdwg.mxu0
      %4488 = vmatprep.subr.bf16.mxu0 %v4353
      %4489 = vmatpush1.bf16.msra.mxu0 %v4352
      %4490 = vmatprep.subr.bf16.mxu0 0
      %4491 = vmatpush1.bf16.msra.mxu0 0
      %4492 = vmatprep.subr.bf16.mxu0 0
      %4493 = vmatpush1.bf16.msra.mxu0 0
      %4494 = vmatprep.subr.bf16.mxu0 0
      %4495 = vmatpush1.bf16.msra.mxu0 0
      %4496 = vmatprep.subr.bf16.mxu0 0
      %4497 = vmatpush1.bf16.msra.mxu0 0
      %4498 = vmatprep.subr.bf16.mxu0 0
      %4499 = vmatpush1.bf16.msra.mxu0 0
      %4500 = vmatprep.subr.bf16.mxu0 0
      %4501 = vmatpush1.bf16.msra.mxu0 0
      %4502 = vmatprep.subr.bf16.mxu0 0
      %4503 = vmatpush1.bf16.msra.mxu0 0
      %4504 = vmatprep.subr.bf16.mxu0 0
      %4505 = vmatpush1.bf16.msra.mxu0 0
      %4506 = vmatprep.subr.bf16.mxu0 0
      %4507 = vmatpush1.bf16.msra.mxu0 0
      %4508 = vmatprep.subr.bf16.mxu0 0
      %4509 = vmatpush1.bf16.msra.mxu0 0
      %4510 = vmatprep.subr.bf16.mxu0 0
      %4511 = vmatpush1.bf16.msra.mxu0 0
      %4512 = vmatprep.subr.bf16.mxu0 0
      %4513 = vmatpush1.bf16.msra.mxu0 0
      %4514 = vmatprep.subr.bf16.mxu0 0
      %4515 = vmatpush1.bf16.msra.mxu0 0
      %4516 = vmatprep.subr.bf16.mxu0 0
      %4517 = vmatpush1.bf16.msra.mxu0 0
      %4518 = vmatprep.subr.bf16.mxu0 0
      %4519 = vmatpush1.bf16.msra.mxu0 0
      %4520 = vmatprep.mubr.bf16.mxu0 0
      %4521 = vmatmul.mubr.bf16.gmra.mrb[0].mxu0 %v4363
      %v4522 = vpop.f32.mrb[0].mxu0
      %v4523 = vadd.f32 0.0, %v4522
      %v4524 = vpop.f32.mrb[0].mxu0
      %v4525 = vadd.f32 0.0, %v4524
      %v4526 = vpop.f32.mrb[0].mxu0
      %v4527 = vpop.f32.mrb[0].mxu0
      %4528 = vdwg.mxu0
      %v4529 = vadd.f32 %v4319, %v4400
      %v4530 = vadd.f32 %v4320, %v4402
      %v4531 = vadd.f32 %v4321, %v4441
      %v4532 = vadd.f32 %v4322, %v4443
      %v4533 = vadd.f32 %v4323, %v4482
      %v4534 = vadd.f32 %v4324, %v4484
      %v4535 = vadd.f32 %v4325, %v4523
      %v4536 = vadd.f32 %v4326, %v4525
      %4537 = vrot.lane.b32.xlu0 %v368, 37
      %v4538 = vpop.permute.xlu0 %4537
      %4539 = vrot.lane.b32.xlu0 %v369, 37
      %v4540 = vpop.permute.xlu0 %4539
      %4541 = vrot.lane.b32.xlu0 %v370, 37
      %v4542 = vpop.permute.xlu0 %4541
      %4543 = vrot.lane.b32.xlu0 %v371, 37
      %v4544 = vpop.permute.xlu0 %4543
      %4545 = vrot.lane.b32.xlu0 %v372, 37
      %v4546 = vpop.permute.xlu0 %4545
      %4547 = vrot.lane.b32.xlu0 %v373, 37
      %v4548 = vpop.permute.xlu0 %4547
      %4549 = vrot.lane.b32.xlu0 %v374, 37
      %v4550 = vpop.permute.xlu0 %4549
      %4551 = vrot.lane.b32.xlu0 %v375, 37
      %v4552 = vpop.permute.xlu0 %4551
      %4553 = vrot.lane.b32.xlu0 %v3276, 37
      %v4554 = vpop.permute.xlu0 %4553
      %vm4555 = vcmask 302080
      %v4556 = vsel %vm4555, %v4538, %v4540
      %v4557 = vsel %vm4555, %v4540, %v4542
      %v4558 = vsel %vm4555, %v4542, %v4544
      %v4559 = vsel %vm4555, %v4544, %v4546
      %v4560 = vsel %vm4555, %v4546, %v4548
      %v4561 = vsel %vm4555, %v4548, %v4550
      %v4562 = vsel %vm4555, %v4550, %v4552
      %v4563 = vsel %vm4555, %v4552, %v4554
      %v4573 = vsel %vm411, %v332, 0
      %4575 = vmatprep.subr.bf16.mxu0 %v4557
      %4576 = vmatpush1.bf16.msra.mxu0 %v4556
      %4577 = vmatprep.subr.bf16.mxu0 0
      %4578 = vmatpush1.bf16.msra.mxu0 0
      %4579 = vmatprep.subr.bf16.mxu0 0
      %4580 = vmatpush1.bf16.msra.mxu0 0
      %4581 = vmatprep.subr.bf16.mxu0 0
      %4582 = vmatpush1.bf16.msra.mxu0 0
      %4583 = vmatprep.subr.bf16.mxu0 0
      %4584 = vmatpush1.bf16.msra.mxu0 0
      %4585 = vmatprep.subr.bf16.mxu0 0
      %4586 = vmatpush1.bf16.msra.mxu0 0
      %4587 = vmatprep.subr.bf16.mxu0 0
      %4588 = vmatpush1.bf16.msra.mxu0 0
      %4589 = vmatprep.subr.bf16.mxu0 0
      %4590 = vmatpush1.bf16.msra.mxu0 0
      %4591 = vmatprep.subr.bf16.mxu0 0
      %4592 = vmatpush1.bf16.msra.mxu0 0
      %4593 = vmatprep.subr.bf16.mxu0 0
      %4594 = vmatpush1.bf16.msra.mxu0 0
      %4595 = vmatprep.subr.bf16.mxu0 0
      %4596 = vmatpush1.bf16.msra.mxu0 0
      %4597 = vmatprep.subr.bf16.mxu0 0
      %4598 = vmatpush1.bf16.msra.mxu0 0
      %4599 = vmatprep.subr.bf16.mxu0 0
      %4600 = vmatpush1.bf16.msra.mxu0 0
      %4601 = vmatprep.subr.bf16.mxu0 0
      %4602 = vmatpush1.bf16.msra.mxu0 0
      %4603 = vmatprep.subr.bf16.mxu0 0
      %4604 = vmatpush1.bf16.msra.mxu0 0
      %4605 = vmatprep.subr.bf16.mxu0 0
      %4606 = vmatpush1.bf16.msra.mxu0 0
      %4607 = vmatprep.mubr.bf16.mxu0 0
      %4608 = vmatmul.mubr.bf16.gmra.mrb[0].mxu0 %v4573
      %v4609 = vpop.f32.mrb[0].mxu0
      %v4610 = vadd.f32 0.0, %v4609
      %v4611 = vpop.f32.mrb[0].mxu0
      %v4612 = vadd.f32 0.0, %v4611
      %v4613 = vpop.f32.mrb[0].mxu0
      %v4614 = vpop.f32.mrb[0].mxu0
      %4615 = vdwg.mxu0
      %4616 = vmatprep.subr.bf16.mxu0 %v4559
      %4617 = vmatpush1.bf16.msra.mxu0 %v4558
      %4618 = vmatprep.subr.bf16.mxu0 0
      %4619 = vmatpush1.bf16.msra.mxu0 0
      %4620 = vmatprep.subr.bf16.mxu0 0
      %4621 = vmatpush1.bf16.msra.mxu0 0
      %4622 = vmatprep.subr.bf16.mxu0 0
      %4623 = vmatpush1.bf16.msra.mxu0 0
      %4624 = vmatprep.subr.bf16.mxu0 0
      %4625 = vmatpush1.bf16.msra.mxu0 0
      %4626 = vmatprep.subr.bf16.mxu0 0
      %4627 = vmatpush1.bf16.msra.mxu0 0
      %4628 = vmatprep.subr.bf16.mxu0 0
      %4629 = vmatpush1.bf16.msra.mxu0 0
      %4630 = vmatprep.subr.bf16.mxu0 0
      %4631 = vmatpush1.bf16.msra.mxu0 0
      %4632 = vmatprep.subr.bf16.mxu0 0
      %4633 = vmatpush1.bf16.msra.mxu0 0
      %4634 = vmatprep.subr.bf16.mxu0 0
      %4635 = vmatpush1.bf16.msra.mxu0 0
      %4636 = vmatprep.subr.bf16.mxu0 0
      %4637 = vmatpush1.bf16.msra.mxu0 0
      %4638 = vmatprep.subr.bf16.mxu0 0
      %4639 = vmatpush1.bf16.msra.mxu0 0
      %4640 = vmatprep.subr.bf16.mxu0 0
      %4641 = vmatpush1.bf16.msra.mxu0 0
      %4642 = vmatprep.subr.bf16.mxu0 0
      %4643 = vmatpush1.bf16.msra.mxu0 0
      %4644 = vmatprep.subr.bf16.mxu0 0
      %4645 = vmatpush1.bf16.msra.mxu0 0
      %4646 = vmatprep.subr.bf16.mxu0 0
      %4647 = vmatpush1.bf16.msra.mxu0 0
      %4648 = vmatprep.mubr.bf16.mxu0 0
      %4649 = vmatmul.mubr.bf16.gmra.mrb[0].mxu0 %v4573
      %v4650 = vpop.f32.mrb[0].mxu0
      %v4651 = vadd.f32 0.0, %v4650
      %v4652 = vpop.f32.mrb[0].mxu0
      %v4653 = vadd.f32 0.0, %v4652
      %v4654 = vpop.f32.mrb[0].mxu0
      %v4655 = vpop.f32.mrb[0].mxu0
      %4656 = vdwg.mxu0
      %4657 = vmatprep.subr.bf16.mxu0 %v4561
      %4658 = vmatpush1.bf16.msra.mxu0 %v4560
      %4659 = vmatprep.subr.bf16.mxu0 0
      %4660 = vmatpush1.bf16.msra.mxu0 0
      %4661 = vmatprep.subr.bf16.mxu0 0
      %4662 = vmatpush1.bf16.msra.mxu0 0
      %4663 = vmatprep.subr.bf16.mxu0 0
      %4664 = vmatpush1.bf16.msra.mxu0 0
      %4665 = vmatprep.subr.bf16.mxu0 0
      %4666 = vmatpush1.bf16.msra.mxu0 0
      %4667 = vmatprep.subr.bf16.mxu0 0
      %4668 = vmatpush1.bf16.msra.mxu0 0
      %4669 = vmatprep.subr.bf16.mxu0 0
      %4670 = vmatpush1.bf16.msra.mxu0 0
      %4671 = vmatprep.subr.bf16.mxu0 0
      %4672 = vmatpush1.bf16.msra.mxu0 0
      %4673 = vmatprep.subr.bf16.mxu0 0
      %4674 = vmatpush1.bf16.msra.mxu0 0
      %4675 = vmatprep.subr.bf16.mxu0 0
      %4676 = vmatpush1.bf16.msra.mxu0 0
      %4677 = vmatprep.subr.bf16.mxu0 0
      %4678 = vmatpush1.bf16.msra.mxu0 0
      %4679 = vmatprep.subr.bf16.mxu0 0
      %4680 = vmatpush1.bf16.msra.mxu0 0
      %4681 = vmatprep.subr.bf16.mxu0 0
      %4682 = vmatpush1.bf16.msra.mxu0 0
      %4683 = vmatprep.subr.bf16.mxu0 0
      %4684 = vmatpush1.bf16.msra.mxu0 0
      %4685 = vmatprep.subr.bf16.mxu0 0
      %4686 = vmatpush1.bf16.msra.mxu0 0
      %4687 = vmatprep.subr.bf16.mxu0 0
      %4688 = vmatpush1.bf16.msra.mxu0 0
      %4689 = vmatprep.mubr.bf16.mxu0 0
      %4690 = vmatmul.mubr.bf16.gmra.mrb[0].mxu0 %v4573
      %v4691 = vpop.f32.mrb[0].mxu0
      %v4692 = vadd.f32 0.0, %v4691
      %v4693 = vpop.f32.mrb[0].mxu0
      %v4694 = vadd.f32 0.0, %v4693
      %v4695 = vpop.f32.mrb[0].mxu0
      %v4696 = vpop.f32.mrb[0].mxu0
      %4697 = vdwg.mxu0
      %4698 = vmatprep.subr.bf16.mxu0 %v4563
      %4699 = vmatpush1.bf16.msra.mxu0 %v4562
      %4700 = vmatprep.subr.bf16.mxu0 0
      %4701 = vmatpush1.bf16.msra.mxu0 0
      %4702 = vmatprep.subr.bf16.mxu0 0
      %4703 = vmatpush1.bf16.msra.mxu0 0
      %4704 = vmatprep.subr.bf16.mxu0 0
      %4705 = vmatpush1.bf16.msra.mxu0 0
      %4706 = vmatprep.subr.bf16.mxu0 0
      %4707 = vmatpush1.bf16.msra.mxu0 0
      %4708 = vmatprep.subr.bf16.mxu0 0
      %4709 = vmatpush1.bf16.msra.mxu0 0
      %4710 = vmatprep.subr.bf16.mxu0 0
      %4711 = vmatpush1.bf16.msra.mxu0 0
      %4712 = vmatprep.subr.bf16.mxu0 0
      %4713 = vmatpush1.bf16.msra.mxu0 0
      %4714 = vmatprep.subr.bf16.mxu0 0
      %4715 = vmatpush1.bf16.msra.mxu0 0
      %4716 = vmatprep.subr.bf16.mxu0 0
      %4717 = vmatpush1.bf16.msra.mxu0 0
      %4718 = vmatprep.subr.bf16.mxu0 0
      %4719 = vmatpush1.bf16.msra.mxu0 0
      %4720 = vmatprep.subr.bf16.mxu0 0
      %4721 = vmatpush1.bf16.msra.mxu0 0
      %4722 = vmatprep.subr.bf16.mxu0 0
      %4723 = vmatpush1.bf16.msra.mxu0 0
      %4724 = vmatprep.subr.bf16.mxu0 0
      %4725 = vmatpush1.bf16.msra.mxu0 0
      %4726 = vmatprep.subr.bf16.mxu0 0
      %4727 = vmatpush1.bf16.msra.mxu0 0
      %4728 = vmatprep.subr.bf16.mxu0 0
      %4729 = vmatpush1.bf16.msra.mxu0 0
      %4730 = vmatprep.mubr.bf16.mxu0 0
      %4731 = vmatmul.mubr.bf16.gmra.mrb[0].mxu0 %v4573
      %v4732 = vpop.f32.mrb[0].mxu0
      %v4733 = vadd.f32 0.0, %v4732
      %v4734 = vpop.f32.mrb[0].mxu0
      %v4735 = vadd.f32 0.0, %v4734
      %v4736 = vpop.f32.mrb[0].mxu0
      %v4737 = vpop.f32.mrb[0].mxu0
      %4738 = vdwg.mxu0
      %v4739 = vadd.f32 %v4529, %v4610
      %v4740 = vadd.f32 %v4530, %v4612
      %v4741 = vadd.f32 %v4531, %v4651
      %v4742 = vadd.f32 %v4532, %v4653
      %v4743 = vadd.f32 %v4533, %v4692
      %v4744 = vadd.f32 %v4534, %v4694
      %v4745 = vadd.f32 %v4535, %v4733
      %v4746 = vadd.f32 %v4536, %v4735
      %4747 = vrot.lane.b32.xlu0 %v368, 29
      %v4748 = vpop.permute.xlu0 %4747
      %4749 = vrot.lane.b32.xlu0 %v369, 29
      %v4750 = vpop.permute.xlu0 %4749
      %4751 = vrot.lane.b32.xlu0 %v370, 29
      %v4752 = vpop.permute.xlu0 %4751
      %4753 = vrot.lane.b32.xlu0 %v371, 29
      %v4754 = vpop.permute.xlu0 %4753
      %4755 = vrot.lane.b32.xlu0 %v372, 29
      %v4756 = vpop.permute.xlu0 %4755
      %4757 = vrot.lane.b32.xlu0 %v373, 29
      %v4758 = vpop.permute.xlu0 %4757
      %4759 = vrot.lane.b32.xlu0 %v374, 29
      %v4760 = vpop.permute.xlu0 %4759
      %4761 = vrot.lane.b32.xlu0 %v375, 29
      %v4762 = vpop.permute.xlu0 %4761
      %4763 = vrot.lane.b32.xlu0 %v3276, 29
      %v4764 = vpop.permute.xlu0 %4763
      %vm4765 = vcmask 236544
      %v4766 = vsel %vm4765, %v4748, %v4750
      %v4767 = vsel %vm4765, %v4750, %v4752
      %v4768 = vsel %vm4765, %v4752, %v4754
      %v4769 = vsel %vm4765, %v4754, %v4756
      %v4770 = vsel %vm4765, %v4756, %v4758
      %v4771 = vsel %vm4765, %v4758, %v4760
      %v4772 = vsel %vm4765, %v4760, %v4762
      %v4773 = vsel %vm4765, %v4762, %v4764
      %v4783 = vsel %vm411, %v333, 0
      %4785 = vmatprep.subr.bf16.mxu0 %v4767
      %4786 = vmatpush1.bf16.msra.mxu0 %v4766
      %4787 = vmatprep.subr.bf16.mxu0 0
      %4788 = vmatpush1.bf16.msra.mxu0 0
      %4789 = vmatprep.subr.bf16.mxu0 0
      %4790 = vmatpush1.bf16.msra.mxu0 0
      %4791 = vmatprep.subr.bf16.mxu0 0
      %4792 = vmatpush1.bf16.msra.mxu0 0
      %4793 = vmatprep.subr.bf16.mxu0 0
      %4794 = vmatpush1.bf16.msra.mxu0 0
      %4795 = vmatprep.subr.bf16.mxu0 0
      %4796 = vmatpush1.bf16.msra.mxu0 0
      %4797 = vmatprep.subr.bf16.mxu0 0
      %4798 = vmatpush1.bf16.msra.mxu0 0
      %4799 = vmatprep.subr.bf16.mxu0 0
      %4800 = vmatpush1.bf16.msra.mxu0 0
      %4801 = vmatprep.subr.bf16.mxu0 0
      %4802 = vmatpush1.bf16.msra.mxu0 0
      %4803 = vmatprep.subr.bf16.mxu0 0
      %4804 = vmatpush1.bf16.msra.mxu0 0
      %4805 = vmatprep.subr.bf16.mxu0 0
      %4806 = vmatpush1.bf16.msra.mxu0 0
      %4807 = vmatprep.subr.bf16.mxu0 0
      %4808 = vmatpush1.bf16.msra.mxu0 0
      %4809 = vmatprep.subr.bf16.mxu0 0
      %4810 = vmatpush1.bf16.msra.mxu0 0
      %4811 = vmatprep.subr.bf16.mxu0 0
      %4812 = vmatpush1.bf16.msra.mxu0 0
      %4813 = vmatprep.subr.bf16.mxu0 0
      %4814 = vmatpush1.bf16.msra.mxu0 0
      %4815 = vmatprep.subr.bf16.mxu0 0
      %4816 = vmatpush1.bf16.msra.mxu0 0
      %4817 = vmatprep.mubr.bf16.mxu0 0
      %4818 = vmatmul.mubr.bf16.gmra.mrb[0].mxu0 %v4783
      %v4819 = vpop.f32.mrb[0].mxu0
      %v4820 = vadd.f32 0.0, %v4819
      %v4821 = vpop.f32.mrb[0].mxu0
      %v4822 = vadd.f32 0.0, %v4821
      %v4823 = vpop.f32.mrb[0].mxu0
      %v4824 = vpop.f32.mrb[0].mxu0
      %4825 = vdwg.mxu0
      %4826 = vmatprep.subr.bf16.mxu0 %v4769
      %4827 = vmatpush1.bf16.msra.mxu0 %v4768
      %4828 = vmatprep.subr.bf16.mxu0 0
      %4829 = vmatpush1.bf16.msra.mxu0 0
      %4830 = vmatprep.subr.bf16.mxu0 0
      %4831 = vmatpush1.bf16.msra.mxu0 0
      %4832 = vmatprep.subr.bf16.mxu0 0
      %4833 = vmatpush1.bf16.msra.mxu0 0
      %4834 = vmatprep.subr.bf16.mxu0 0
      %4835 = vmatpush1.bf16.msra.mxu0 0
      %4836 = vmatprep.subr.bf16.mxu0 0
      %4837 = vmatpush1.bf16.msra.mxu0 0
      %4838 = vmatprep.subr.bf16.mxu0 0
      %4839 = vmatpush1.bf16.msra.mxu0 0
      %4840 = vmatprep.subr.bf16.mxu0 0
      %4841 = vmatpush1.bf16.msra.mxu0 0
      %4842 = vmatprep.subr.bf16.mxu0 0
      %4843 = vmatpush1.bf16.msra.mxu0 0
      %4844 = vmatprep.subr.bf16.mxu0 0
      %4845 = vmatpush1.bf16.msra.mxu0 0
      %4846 = vmatprep.subr.bf16.mxu0 0
      %4847 = vmatpush1.bf16.msra.mxu0 0
      %4848 = vmatprep.subr.bf16.mxu0 0
      %4849 = vmatpush1.bf16.msra.mxu0 0
      %4850 = vmatprep.subr.bf16.mxu0 0
      %4851 = vmatpush1.bf16.msra.mxu0 0
      %4852 = vmatprep.subr.bf16.mxu0 0
      %4853 = vmatpush1.bf16.msra.mxu0 0
      %4854 = vmatprep.subr.bf16.mxu0 0
      %4855 = vmatpush1.bf16.msra.mxu0 0
      %4856 = vmatprep.subr.bf16.mxu0 0
      %4857 = vmatpush1.bf16.msra.mxu0 0
      %4858 = vmatprep.mubr.bf16.mxu0 0
      %4859 = vmatmul.mubr.bf16.gmra.mrb[0].mxu0 %v4783
      %v4860 = vpop.f32.mrb[0].mxu0
      %v4861 = vadd.f32 0.0, %v4860
      %v4862 = vpop.f32.mrb[0].mxu0
      %v4863 = vadd.f32 0.0, %v4862
      %v4864 = vpop.f32.mrb[0].mxu0
      %v4865 = vpop.f32.mrb[0].mxu0
      %4866 = vdwg.mxu0
      %4867 = vmatprep.subr.bf16.mxu0 %v4771
      %4868 = vmatpush1.bf16.msra.mxu0 %v4770
      %4869 = vmatprep.subr.bf16.mxu0 0
      %4870 = vmatpush1.bf16.msra.mxu0 0
      %4871 = vmatprep.subr.bf16.mxu0 0
      %4872 = vmatpush1.bf16.msra.mxu0 0
      %4873 = vmatprep.subr.bf16.mxu0 0
      %4874 = vmatpush1.bf16.msra.mxu0 0
      %4875 = vmatprep.subr.bf16.mxu0 0
      %4876 = vmatpush1.bf16.msra.mxu0 0
      %4877 = vmatprep.subr.bf16.mxu0 0
      %4878 = vmatpush1.bf16.msra.mxu0 0
      %4879 = vmatprep.subr.bf16.mxu0 0
      %4880 = vmatpush1.bf16.msra.mxu0 0
      %4881 = vmatprep.subr.bf16.mxu0 0
      %4882 = vmatpush1.bf16.msra.mxu0 0
      %4883 = vmatprep.subr.bf16.mxu0 0
      %4884 = vmatpush1.bf16.msra.mxu0 0
      %4885 = vmatprep.subr.bf16.mxu0 0
      %4886 = vmatpush1.bf16.msra.mxu0 0
      %4887 = vmatprep.subr.bf16.mxu0 0
      %4888 = vmatpush1.bf16.msra.mxu0 0
      %4889 = vmatprep.subr.bf16.mxu0 0
      %4890 = vmatpush1.bf16.msra.mxu0 0
      %4891 = vmatprep.subr.bf16.mxu0 0
      %4892 = vmatpush1.bf16.msra.mxu0 0
      %4893 = vmatprep.subr.bf16.mxu0 0
      %4894 = vmatpush1.bf16.msra.mxu0 0
      %4895 = vmatprep.subr.bf16.mxu0 0
      %4896 = vmatpush1.bf16.msra.mxu0 0
      %4897 = vmatprep.subr.bf16.mxu0 0
      %4898 = vmatpush1.bf16.msra.mxu0 0
      %4899 = vmatprep.mubr.bf16.mxu0 0
      %4900 = vmatmul.mubr.bf16.gmra.mrb[0].mxu0 %v4783
      %v4901 = vpop.f32.mrb[0].mxu0
      %v4902 = vadd.f32 0.0, %v4901
      %v4903 = vpop.f32.mrb[0].mxu0
      %v4904 = vadd.f32 0.0, %v4903
      %v4905 = vpop.f32.mrb[0].mxu0
      %v4906 = vpop.f32.mrb[0].mxu0
      %4907 = vdwg.mxu0
      %4908 = vmatprep.subr.bf16.mxu0 %v4773
      %4909 = vmatpush1.bf16.msra.mxu0 %v4772
      %4910 = vmatprep.subr.bf16.mxu0 0
      %4911 = vmatpush1.bf16.msra.mxu0 0
      %4912 = vmatprep.subr.bf16.mxu0 0
      %4913 = vmatpush1.bf16.msra.mxu0 0
      %4914 = vmatprep.subr.bf16.mxu0 0
      %4915 = vmatpush1.bf16.msra.mxu0 0
      %4916 = vmatprep.subr.bf16.mxu0 0
      %4917 = vmatpush1.bf16.msra.mxu0 0
      %4918 = vmatprep.subr.bf16.mxu0 0
      %4919 = vmatpush1.bf16.msra.mxu0 0
      %4920 = vmatprep.subr.bf16.mxu0 0
      %4921 = vmatpush1.bf16.msra.mxu0 0
      %4922 = vmatprep.subr.bf16.mxu0 0
      %4923 = vmatpush1.bf16.msra.mxu0 0
      %4924 = vmatprep.subr.bf16.mxu0 0
      %4925 = vmatpush1.bf16.msra.mxu0 0
      %4926 = vmatprep.subr.bf16.mxu0 0
      %4927 = vmatpush1.bf16.msra.mxu0 0
      %4928 = vmatprep.subr.bf16.mxu0 0
      %4929 = vmatpush1.bf16.msra.mxu0 0
      %4930 = vmatprep.subr.bf16.mxu0 0
      %4931 = vmatpush1.bf16.msra.mxu0 0
      %4932 = vmatprep.subr.bf16.mxu0 0
      %4933 = vmatpush1.bf16.msra.mxu0 0
      %4934 = vmatprep.subr.bf16.mxu0 0
      %4935 = vmatpush1.bf16.msra.mxu0 0
      %4936 = vmatprep.subr.bf16.mxu0 0
      %4937 = vmatpush1.bf16.msra.mxu0 0
      %4938 = vmatprep.subr.bf16.mxu0 0
      %4939 = vmatpush1.bf16.msra.mxu0 0
      %4940 = vmatprep.mubr.bf16.mxu0 0
      %4941 = vmatmul.mubr.bf16.gmra.mrb[0].mxu0 %v4783
      %v4942 = vpop.f32.mrb[0].mxu0
      %v4943 = vadd.f32 0.0, %v4942
      %v4944 = vpop.f32.mrb[0].mxu0
      %v4945 = vadd.f32 0.0, %v4944
      %v4946 = vpop.f32.mrb[0].mxu0
      %v4947 = vpop.f32.mrb[0].mxu0
      %4948 = vdwg.mxu0
      %v4949 = vadd.f32 %v4739, %v4820
      %v4950 = vadd.f32 %v4740, %v4822
      %v4951 = vadd.f32 %v4741, %v4861
      %v4952 = vadd.f32 %v4742, %v4863
      %v4953 = vadd.f32 %v4743, %v4902
      %v4954 = vadd.f32 %v4744, %v4904
      %v4955 = vadd.f32 %v4745, %v4943
      %v4956 = vadd.f32 %v4746, %v4945
      %4957 = vrot.lane.b32.xlu0 %v368, 28
      %v4958 = vpop.permute.xlu0 %4957
      %4959 = vrot.lane.b32.xlu0 %v369, 28
      %v4960 = vpop.permute.xlu0 %4959
      %4961 = vrot.lane.b32.xlu0 %v370, 28
      %v4962 = vpop.permute.xlu0 %4961
      %4963 = vrot.lane.b32.xlu0 %v371, 28
      %v4964 = vpop.permute.xlu0 %4963
      %4965 = vrot.lane.b32.xlu0 %v372, 28
      %v4966 = vpop.permute.xlu0 %4965
      %4967 = vrot.lane.b32.xlu0 %v373, 28
      %v4968 = vpop.permute.xlu0 %4967
      %4969 = vrot.lane.b32.xlu0 %v374, 28
      %v4970 = vpop.permute.xlu0 %4969
      %4971 = vrot.lane.b32.xlu0 %v375, 28
      %v4972 = vpop.permute.xlu0 %4971
      %4973 = vrot.lane.b32.xlu0 %v3276, 28
      %v4974 = vpop.permute.xlu0 %4973
      %vm4975 = vcmask 228352
      %v4976 = vsel %vm4975, %v4958, %v4960
      %v4977 = vsel %vm4975, %v4960, %v4962
      %v4978 = vsel %vm4975, %v4962, %v4964
      %v4979 = vsel %vm4975, %v4964, %v4966
      %v4980 = vsel %vm4975, %v4966, %v4968
      %v4981 = vsel %vm4975, %v4968, %v4970
      %v4982 = vsel %vm4975, %v4970, %v4972
      %v4983 = vsel %vm4975, %v4972, %v4974
      %v4993 = vsel %vm411, %v334, 0
      %4995 = vmatprep.subr.bf16.mxu0 %v4977
      %4996 = vmatpush1.bf16.msra.mxu0 %v4976
      %4997 = vmatprep.subr.bf16.mxu0 0
      %4998 = vmatpush1.bf16.msra.mxu0 0
      %4999 = vmatprep.subr.bf16.mxu0 0
      %5000 = vmatpush1.bf16.msra.mxu0 0
      %5001 = vmatprep.subr.bf16.mxu0 0
      %5002 = vmatpush1.bf16.msra.mxu0 0
      %5003 = vmatprep.subr.bf16.mxu0 0
      %5004 = vmatpush1.bf16.msra.mxu0 0
      %5005 = vmatprep.subr.bf16.mxu0 0
      %5006 = vmatpush1.bf16.msra.mxu0 0
      %5007 = vmatprep.subr.bf16.mxu0 0
      %5008 = vmatpush1.bf16.msra.mxu0 0
      %5009 = vmatprep.subr.bf16.mxu0 0
      %5010 = vmatpush1.bf16.msra.mxu0 0
      %5011 = vmatprep.subr.bf16.mxu0 0
      %5012 = vmatpush1.bf16.msra.mxu0 0
      %5013 = vmatprep.subr.bf16.mxu0 0
      %5014 = vmatpush1.bf16.msra.mxu0 0
      %5015 = vmatprep.subr.bf16.mxu0 0
      %5016 = vmatpush1.bf16.msra.mxu0 0
      %5017 = vmatprep.subr.bf16.mxu0 0
      %5018 = vmatpush1.bf16.msra.mxu0 0
      %5019 = vmatprep.subr.bf16.mxu0 0
      %5020 = vmatpush1.bf16.msra.mxu0 0
      %5021 = vmatprep.subr.bf16.mxu0 0
      %5022 = vmatpush1.bf16.msra.mxu0 0
      %5023 = vmatprep.subr.bf16.mxu0 0
      %5024 = vmatpush1.bf16.msra.mxu0 0
      %5025 = vmatprep.subr.bf16.mxu0 0
      %5026 = vmatpush1.bf16.msra.mxu0 0
      %5027 = vmatprep.mubr.bf16.mxu0 0
      %5028 = vmatmul.mubr.bf16.gmra.mrb[0].mxu0 %v4993
      %v5029 = vpop.f32.mrb[0].mxu0
      %v5030 = vadd.f32 0.0, %v5029
      %v5031 = vpop.f32.mrb[0].mxu0
      %v5032 = vadd.f32 0.0, %v5031
      %v5033 = vpop.f32.mrb[0].mxu0
      %v5034 = vpop.f32.mrb[0].mxu0
      %5035 = vdwg.mxu0
      %5036 = vmatprep.subr.bf16.mxu0 %v4979
      %5037 = vmatpush1.bf16.msra.mxu0 %v4978
      %5038 = vmatprep.subr.bf16.mxu0 0
      %5039 = vmatpush1.bf16.msra.mxu0 0
      %5040 = vmatprep.subr.bf16.mxu0 0
      %5041 = vmatpush1.bf16.msra.mxu0 0
      %5042 = vmatprep.subr.bf16.mxu0 0
      %5043 = vmatpush1.bf16.msra.mxu0 0
      %5044 = vmatprep.subr.bf16.mxu0 0
      %5045 = vmatpush1.bf16.msra.mxu0 0
      %5046 = vmatprep.subr.bf16.mxu0 0
      %5047 = vmatpush1.bf16.msra.mxu0 0
      %5048 = vmatprep.subr.bf16.mxu0 0
      %5049 = vmatpush1.bf16.msra.mxu0 0
      %5050 = vmatprep.subr.bf16.mxu0 0
      %5051 = vmatpush1.bf16.msra.mxu0 0
      %5052 = vmatprep.subr.bf16.mxu0 0
      %5053 = vmatpush1.bf16.msra.mxu0 0
      %5054 = vmatprep.subr.bf16.mxu0 0
      %5055 = vmatpush1.bf16.msra.mxu0 0
      %5056 = vmatprep.subr.bf16.mxu0 0
      %5057 = vmatpush1.bf16.msra.mxu0 0
      %5058 = vmatprep.subr.bf16.mxu0 0
      %5059 = vmatpush1.bf16.msra.mxu0 0
      %5060 = vmatprep.subr.bf16.mxu0 0
      %5061 = vmatpush1.bf16.msra.mxu0 0
      %5062 = vmatprep.subr.bf16.mxu0 0
      %5063 = vmatpush1.bf16.msra.mxu0 0
      %5064 = vmatprep.subr.bf16.mxu0 0
      %5065 = vmatpush1.bf16.msra.mxu0 0
      %5066 = vmatprep.subr.bf16.mxu0 0
      %5067 = vmatpush1.bf16.msra.mxu0 0
      %5068 = vmatprep.mubr.bf16.mxu0 0
      %5069 = vmatmul.mubr.bf16.gmra.mrb[0].mxu0 %v4993
      %v5070 = vpop.f32.mrb[0].mxu0
      %v5071 = vadd.f32 0.0, %v5070
      %v5072 = vpop.f32.mrb[0].mxu0
      %v5073 = vadd.f32 0.0, %v5072
      %v5074 = vpop.f32.mrb[0].mxu0
      %v5075 = vpop.f32.mrb[0].mxu0
      %5076 = vdwg.mxu0
      %5077 = vmatprep.subr.bf16.mxu0 %v4981
      %5078 = vmatpush1.bf16.msra.mxu0 %v4980
      %5079 = vmatprep.subr.bf16.mxu0 0
      %5080 = vmatpush1.bf16.msra.mxu0 0
      %5081 = vmatprep.subr.bf16.mxu0 0
      %5082 = vmatpush1.bf16.msra.mxu0 0
      %5083 = vmatprep.subr.bf16.mxu0 0
      %5084 = vmatpush1.bf16.msra.mxu0 0
      %5085 = vmatprep.subr.bf16.mxu0 0
      %5086 = vmatpush1.bf16.msra.mxu0 0
      %5087 = vmatprep.subr.bf16.mxu0 0
      %5088 = vmatpush1.bf16.msra.mxu0 0
      %5089 = vmatprep.subr.bf16.mxu0 0
      %5090 = vmatpush1.bf16.msra.mxu0 0
      %5091 = vmatprep.subr.bf16.mxu0 0
      %5092 = vmatpush1.bf16.msra.mxu0 0
      %5093 = vmatprep.subr.bf16.mxu0 0
      %5094 = vmatpush1.bf16.msra.mxu0 0
      %5095 = vmatprep.subr.bf16.mxu0 0
      %5096 = vmatpush1.bf16.msra.mxu0 0
      %5097 = vmatprep.subr.bf16.mxu0 0
      %5098 = vmatpush1.bf16.msra.mxu0 0
      %5099 = vmatprep.subr.bf16.mxu0 0
      %5100 = vmatpush1.bf16.msra.mxu0 0
      %5101 = vmatprep.subr.bf16.mxu0 0
      %5102 = vmatpush1.bf16.msra.mxu0 0
      %5103 = vmatprep.subr.bf16.mxu0 0
      %5104 = vmatpush1.bf16.msra.mxu0 0
      %5105 = vmatprep.subr.bf16.mxu0 0
      %5106 = vmatpush1.bf16.msra.mxu0 0
      %5107 = vmatprep.subr.bf16.mxu0 0
      %5108 = vmatpush1.bf16.msra.mxu0 0
      %5109 = vmatprep.mubr.bf16.mxu0 0
      %5110 = vmatmul.mubr.bf16.gmra.mrb[0].mxu0 %v4993
      %v5111 = vpop.f32.mrb[0].mxu0
      %v5112 = vadd.f32 0.0, %v5111
      %v5113 = vpop.f32.mrb[0].mxu0
      %v5114 = vadd.f32 0.0, %v5113
      %v5115 = vpop.f32.mrb[0].mxu0
      %v5116 = vpop.f32.mrb[0].mxu0
      %5117 = vdwg.mxu0
      %5118 = vmatprep.subr.bf16.mxu0 %v4983
      %5119 = vmatpush1.bf16.msra.mxu0 %v4982
      %5120 = vmatprep.subr.bf16.mxu0 0
      %5121 = vmatpush1.bf16.msra.mxu0 0
      %5122 = vmatprep.subr.bf16.mxu0 0
      %5123 = vmatpush1.bf16.msra.mxu0 0
      %5124 = vmatprep.subr.bf16.mxu0 0
      %5125 = vmatpush1.bf16.msra.mxu0 0
      %5126 = vmatprep.subr.bf16.mxu0 0
      %5127 = vmatpush1.bf16.msra.mxu0 0
      %5128 = vmatprep.subr.bf16.mxu0 0
      %5129 = vmatpush1.bf16.msra.mxu0 0
      %5130 = vmatprep.subr.bf16.mxu0 0
      %5131 = vmatpush1.bf16.msra.mxu0 0
      %5132 = vmatprep.subr.bf16.mxu0 0
      %5133 = vmatpush1.bf16.msra.mxu0 0
      %5134 = vmatprep.subr.bf16.mxu0 0
      %5135 = vmatpush1.bf16.msra.mxu0 0
      %5136 = vmatprep.subr.bf16.mxu0 0
      %5137 = vmatpush1.bf16.msra.mxu0 0
      %5138 = vmatprep.subr.bf16.mxu0 0
      %5139 = vmatpush1.bf16.msra.mxu0 0
      %5140 = vmatprep.subr.bf16.mxu0 0
      %5141 = vmatpush1.bf16.msra.mxu0 0
      %5142 = vmatprep.subr.bf16.mxu0 0
      %5143 = vmatpush1.bf16.msra.mxu0 0
      %5144 = vmatprep.subr.bf16.mxu0 0
      %5145 = vmatpush1.bf16.msra.mxu0 0
      %5146 = vmatprep.subr.bf16.mxu0 0
      %5147 = vmatpush1.bf16.msra.mxu0 0
      %5148 = vmatprep.subr.bf16.mxu0 0
      %5149 = vmatpush1.bf16.msra.mxu0 0
      %5150 = vmatprep.mubr.bf16.mxu0 0
      %5151 = vmatmul.mubr.bf16.gmra.mrb[0].mxu0 %v4993
      %v5152 = vpop.f32.mrb[0].mxu0
      %v5153 = vadd.f32 0.0, %v5152
      %v5154 = vpop.f32.mrb[0].mxu0
      %v5155 = vadd.f32 0.0, %v5154
      %v5156 = vpop.f32.mrb[0].mxu0
      %v5157 = vpop.f32.mrb[0].mxu0
      %5158 = vdwg.mxu0
      %v5159 = vadd.f32 %v4949, %v5030
      %v5160 = vadd.f32 %v4950, %v5032
      %v5161 = vadd.f32 %v4951, %v5071
      %v5162 = vadd.f32 %v4952, %v5073
      %v5163 = vadd.f32 %v4953, %v5112
      %v5164 = vadd.f32 %v4954, %v5114
      %v5165 = vadd.f32 %v4955, %v5153
      %v5166 = vadd.f32 %v4956, %v5155
      %5167 = vrot.lane.b32.xlu0 %v368, 27
      %v5168 = vpop.permute.xlu0 %5167
      %5169 = vrot.lane.b32.xlu0 %v369, 27
      %v5170 = vpop.permute.xlu0 %5169
      %5171 = vrot.lane.b32.xlu0 %v370, 27
      %v5172 = vpop.permute.xlu0 %5171
      %5173 = vrot.lane.b32.xlu0 %v371, 27
      %v5174 = vpop.permute.xlu0 %5173
      %5175 = vrot.lane.b32.xlu0 %v372, 27
      %v5176 = vpop.permute.xlu0 %5175
      %5177 = vrot.lane.b32.xlu0 %v373, 27
      %v5178 = vpop.permute.xlu0 %5177
      %5179 = vrot.lane.b32.xlu0 %v374, 27
      %v5180 = vpop.permute.xlu0 %5179
      %5181 = vrot.lane.b32.xlu0 %v375, 27
      %v5182 = vpop.permute.xlu0 %5181
      %5183 = vrot.lane.b32.xlu0 %v3276, 27
      %v5184 = vpop.permute.xlu0 %5183
      %vm5185 = vcmask 220160
      %v5186 = vsel %vm5185, %v5168, %v5170
      %v5187 = vsel %vm5185, %v5170, %v5172
      %v5188 = vsel %vm5185, %v5172, %v5174
      %v5189 = vsel %vm5185, %v5174, %v5176
      %v5190 = vsel %vm5185, %v5176, %v5178
      %v5191 = vsel %vm5185, %v5178, %v5180
      %v5192 = vsel %vm5185, %v5180, %v5182
      %v5193 = vsel %vm5185, %v5182, %v5184
      %v5203 = vsel %vm411, %v335, 0
      %5205 = vmatprep.subr.bf16.mxu0 %v5187
      %5206 = vmatpush1.bf16.msra.mxu0 %v5186
      %5207 = vmatprep.subr.bf16.mxu0 0
      %5208 = vmatpush1.bf16.msra.mxu0 0
      %5209 = vmatprep.subr.bf16.mxu0 0
      %5210 = vmatpush1.bf16.msra.mxu0 0
      %5211 = vmatprep.subr.bf16.mxu0 0
      %5212 = vmatpush1.bf16.msra.mxu0 0
      %5213 = vmatprep.subr.bf16.mxu0 0
      %5214 = vmatpush1.bf16.msra.mxu0 0
      %5215 = vmatprep.subr.bf16.mxu0 0
      %5216 = vmatpush1.bf16.msra.mxu0 0
      %5217 = vmatprep.subr.bf16.mxu0 0
      %5218 = vmatpush1.bf16.msra.mxu0 0
      %5219 = vmatprep.subr.bf16.mxu0 0
      %5220 = vmatpush1.bf16.msra.mxu0 0
      %5221 = vmatprep.subr.bf16.mxu0 0
      %5222 = vmatpush1.bf16.msra.mxu0 0
      %5223 = vmatprep.subr.bf16.mxu0 0
      %5224 = vmatpush1.bf16.msra.mxu0 0
      %5225 = vmatprep.subr.bf16.mxu0 0
      %5226 = vmatpush1.bf16.msra.mxu0 0
      %5227 = vmatprep.subr.bf16.mxu0 0
      %5228 = vmatpush1.bf16.msra.mxu0 0
      %5229 = vmatprep.subr.bf16.mxu0 0
      %5230 = vmatpush1.bf16.msra.mxu0 0
      %5231 = vmatprep.subr.bf16.mxu0 0
      %5232 = vmatpush1.bf16.msra.mxu0 0
      %5233 = vmatprep.subr.bf16.mxu0 0
      %5234 = vmatpush1.bf16.msra.mxu0 0
      %5235 = vmatprep.subr.bf16.mxu0 0
      %5236 = vmatpush1.bf16.msra.mxu0 0
      %5237 = vmatprep.mubr.bf16.mxu0 0
      %5238 = vmatmul.mubr.bf16.gmra.mrb[0].mxu0 %v5203
      %v5239 = vpop.f32.mrb[0].mxu0
      %v5240 = vadd.f32 0.0, %v5239
      %v5241 = vpop.f32.mrb[0].mxu0
      %v5242 = vadd.f32 0.0, %v5241
      %v5243 = vpop.f32.mrb[0].mxu0
      %v5244 = vpop.f32.mrb[0].mxu0
      %5245 = vdwg.mxu0
      %5246 = vmatprep.subr.bf16.mxu0 %v5189
      %5247 = vmatpush1.bf16.msra.mxu0 %v5188
      %5248 = vmatprep.subr.bf16.mxu0 0
      %5249 = vmatpush1.bf16.msra.mxu0 0
      %5250 = vmatprep.subr.bf16.mxu0 0
      %5251 = vmatpush1.bf16.msra.mxu0 0
      %5252 = vmatprep.subr.bf16.mxu0 0
      %5253 = vmatpush1.bf16.msra.mxu0 0
      %5254 = vmatprep.subr.bf16.mxu0 0
      %5255 = vmatpush1.bf16.msra.mxu0 0
      %5256 = vmatprep.subr.bf16.mxu0 0
      %5257 = vmatpush1.bf16.msra.mxu0 0
      %5258 = vmatprep.subr.bf16.mxu0 0
      %5259 = vmatpush1.bf16.msra.mxu0 0
      %5260 = vmatprep.subr.bf16.mxu0 0
      %5261 = vmatpush1.bf16.msra.mxu0 0
      %5262 = vmatprep.subr.bf16.mxu0 0
      %5263 = vmatpush1.bf16.msra.mxu0 0
      %5264 = vmatprep.subr.bf16.mxu0 0
      %5265 = vmatpush1.bf16.msra.mxu0 0
      %5266 = vmatprep.subr.bf16.mxu0 0
      %5267 = vmatpush1.bf16.msra.mxu0 0
      %5268 = vmatprep.subr.bf16.mxu0 0
      %5269 = vmatpush1.bf16.msra.mxu0 0
      %5270 = vmatprep.subr.bf16.mxu0 0
      %5271 = vmatpush1.bf16.msra.mxu0 0
      %5272 = vmatprep.subr.bf16.mxu0 0
      %5273 = vmatpush1.bf16.msra.mxu0 0
      %5274 = vmatprep.subr.bf16.mxu0 0
      %5275 = vmatpush1.bf16.msra.mxu0 0
      %5276 = vmatprep.subr.bf16.mxu0 0
      %5277 = vmatpush1.bf16.msra.mxu0 0
      %5278 = vmatprep.mubr.bf16.mxu0 0
      %5279 = vmatmul.mubr.bf16.gmra.mrb[0].mxu0 %v5203
      %v5280 = vpop.f32.mrb[0].mxu0
      %v5281 = vadd.f32 0.0, %v5280
      %v5282 = vpop.f32.mrb[0].mxu0
      %v5283 = vadd.f32 0.0, %v5282
      %v5284 = vpop.f32.mrb[0].mxu0
      %v5285 = vpop.f32.mrb[0].mxu0
      %5286 = vdwg.mxu0
      %5287 = vmatprep.subr.bf16.mxu0 %v5191
      %5288 = vmatpush1.bf16.msra.mxu0 %v5190
      %5289 = vmatprep.subr.bf16.mxu0 0
      %5290 = vmatpush1.bf16.msra.mxu0 0
      %5291 = vmatprep.subr.bf16.mxu0 0
      %5292 = vmatpush1.bf16.msra.mxu0 0
      %5293 = vmatprep.subr.bf16.mxu0 0
      %5294 = vmatpush1.bf16.msra.mxu0 0
      %5295 = vmatprep.subr.bf16.mxu0 0
      %5296 = vmatpush1.bf16.msra.mxu0 0
      %5297 = vmatprep.subr.bf16.mxu0 0
      %5298 = vmatpush1.bf16.msra.mxu0 0
      %5299 = vmatprep.subr.bf16.mxu0 0
      %5300 = vmatpush1.bf16.msra.mxu0 0
      %5301 = vmatprep.subr.bf16.mxu0 0
      %5302 = vmatpush1.bf16.msra.mxu0 0
      %5303 = vmatprep.subr.bf16.mxu0 0
      %5304 = vmatpush1.bf16.msra.mxu0 0
      %5305 = vmatprep.subr.bf16.mxu0 0
      %5306 = vmatpush1.bf16.msra.mxu0 0
      %5307 = vmatprep.subr.bf16.mxu0 0
      %5308 = vmatpush1.bf16.msra.mxu0 0
      %5309 = vmatprep.subr.bf16.mxu0 0
      %5310 = vmatpush1.bf16.msra.mxu0 0
      %5311 = vmatprep.subr.bf16.mxu0 0
      %5312 = vmatpush1.bf16.msra.mxu0 0
      %5313 = vmatprep.subr.bf16.mxu0 0
      %5314 = vmatpush1.bf16.msra.mxu0 0
      %5315 = vmatprep.subr.bf16.mxu0 0
      %5316 = vmatpush1.bf16.msra.mxu0 0
      %5317 = vmatprep.subr.bf16.mxu0 0
      %5318 = vmatpush1.bf16.msra.mxu0 0
      %5319 = vmatprep.mubr.bf16.mxu0 0
      %5320 = vmatmul.mubr.bf16.gmra.mrb[0].mxu0 %v5203
      %v5321 = vpop.f32.mrb[0].mxu0
      %v5322 = vadd.f32 0.0, %v5321
      %v5323 = vpop.f32.mrb[0].mxu0
      %v5324 = vadd.f32 0.0, %v5323
      %v5325 = vpop.f32.mrb[0].mxu0
      %v5326 = vpop.f32.mrb[0].mxu0
      %5327 = vdwg.mxu0
      %5328 = vmatprep.subr.bf16.mxu0 %v5193
      %5329 = vmatpush1.bf16.msra.mxu0 %v5192
      %5330 = vmatprep.subr.bf16.mxu0 0
      %5331 = vmatpush1.bf16.msra.mxu0 0
      %5332 = vmatprep.subr.bf16.mxu0 0
      %5333 = vmatpush1.bf16.msra.mxu0 0
      %5334 = vmatprep.subr.bf16.mxu0 0
      %5335 = vmatpush1.bf16.msra.mxu0 0
      %5336 = vmatprep.subr.bf16.mxu0 0
      %5337 = vmatpush1.bf16.msra.mxu0 0
      %5338 = vmatprep.subr.bf16.mxu0 0
      %5339 = vmatpush1.bf16.msra.mxu0 0
      %5340 = vmatprep.subr.bf16.mxu0 0
      %5341 = vmatpush1.bf16.msra.mxu0 0
      %5342 = vmatprep.subr.bf16.mxu0 0
      %5343 = vmatpush1.bf16.msra.mxu0 0
      %5344 = vmatprep.subr.bf16.mxu0 0
      %5345 = vmatpush1.bf16.msra.mxu0 0
      %5346 = vmatprep.subr.bf16.mxu0 0
      %5347 = vmatpush1.bf16.msra.mxu0 0
      %5348 = vmatprep.subr.bf16.mxu0 0
      %5349 = vmatpush1.bf16.msra.mxu0 0
      %5350 = vmatprep.subr.bf16.mxu0 0
      %5351 = vmatpush1.bf16.msra.mxu0 0
      %5352 = vmatprep.subr.bf16.mxu0 0
      %5353 = vmatpush1.bf16.msra.mxu0 0
      %5354 = vmatprep.subr.bf16.mxu0 0
      %5355 = vmatpush1.bf16.msra.mxu0 0
      %5356 = vmatprep.subr.bf16.mxu0 0
      %5357 = vmatpush1.bf16.msra.mxu0 0
      %5358 = vmatprep.subr.bf16.mxu0 0
      %5359 = vmatpush1.bf16.msra.mxu0 0
      %5360 = vmatprep.mubr.bf16.mxu0 0
      %5361 = vmatmul.mubr.bf16.gmra.mrb[0].mxu0 %v5203
      %v5362 = vpop.f32.mrb[0].mxu0
      %v5363 = vadd.f32 0.0, %v5362
      %v5364 = vpop.f32.mrb[0].mxu0
      %v5365 = vadd.f32 0.0, %v5364
      %v5366 = vpop.f32.mrb[0].mxu0
      %v5367 = vpop.f32.mrb[0].mxu0
      %5368 = vdwg.mxu0
      %v5369 = vadd.f32 %v5159, %v5240
      %v5370 = vadd.f32 %v5160, %v5242
      %v5371 = vadd.f32 %v5161, %v5281
      %v5372 = vadd.f32 %v5162, %v5283
      %v5373 = vadd.f32 %v5163, %v5322
      %v5374 = vadd.f32 %v5164, %v5324
      %v5375 = vadd.f32 %v5165, %v5363
      %v5376 = vadd.f32 %v5166, %v5365
      %5377 = vrot.lane.b32.xlu0 %v368, 19
      %v5378 = vpop.permute.xlu0 %5377
      %5379 = vrot.lane.b32.xlu0 %v369, 19
      %v5380 = vpop.permute.xlu0 %5379
      %5381 = vrot.lane.b32.xlu0 %v370, 19
      %v5382 = vpop.permute.xlu0 %5381
      %5383 = vrot.lane.b32.xlu0 %v371, 19
      %v5384 = vpop.permute.xlu0 %5383
      %5385 = vrot.lane.b32.xlu0 %v372, 19
      %v5386 = vpop.permute.xlu0 %5385
      %5387 = vrot.lane.b32.xlu0 %v373, 19
      %v5388 = vpop.permute.xlu0 %5387
      %5389 = vrot.lane.b32.xlu0 %v374, 19
      %v5390 = vpop.permute.xlu0 %5389
      %5391 = vrot.lane.b32.xlu0 %v375, 19
      %v5392 = vpop.permute.xlu0 %5391
      %5393 = vrot.lane.b32.xlu0 %v3276, 19
      %v5394 = vpop.permute.xlu0 %5393
      %vm5395 = vcmask 154624
      %v5396 = vsel %vm5395, %v5378, %v5380
      %v5397 = vsel %vm5395, %v5380, %v5382
      %v5398 = vsel %vm5395, %v5382, %v5384
      %v5399 = vsel %vm5395, %v5384, %v5386
      %v5400 = vsel %vm5395, %v5386, %v5388
      %v5401 = vsel %vm5395, %v5388, %v5390
      %v5402 = vsel %vm5395, %v5390, %v5392
      %v5403 = vsel %vm5395, %v5392, %v5394
      %v5413 = vsel %vm411, %v336, 0
      %5415 = vmatprep.subr.bf16.mxu0 %v5397
      %5416 = vmatpush1.bf16.msra.mxu0 %v5396
      %5417 = vmatprep.subr.bf16.mxu0 0
      %5418 = vmatpush1.bf16.msra.mxu0 0
      %5419 = vmatprep.subr.bf16.mxu0 0
      %5420 = vmatpush1.bf16.msra.mxu0 0
      %5421 = vmatprep.subr.bf16.mxu0 0
      %5422 = vmatpush1.bf16.msra.mxu0 0
      %5423 = vmatprep.subr.bf16.mxu0 0
      %5424 = vmatpush1.bf16.msra.mxu0 0
      %5425 = vmatprep.subr.bf16.mxu0 0
      %5426 = vmatpush1.bf16.msra.mxu0 0
      %5427 = vmatprep.subr.bf16.mxu0 0
      %5428 = vmatpush1.bf16.msra.mxu0 0
      %5429 = vmatprep.subr.bf16.mxu0 0
      %5430 = vmatpush1.bf16.msra.mxu0 0
      %5431 = vmatprep.subr.bf16.mxu0 0
      %5432 = vmatpush1.bf16.msra.mxu0 0
      %5433 = vmatprep.subr.bf16.mxu0 0
      %5434 = vmatpush1.bf16.msra.mxu0 0
      %5435 = vmatprep.subr.bf16.mxu0 0
      %5436 = vmatpush1.bf16.msra.mxu0 0
      %5437 = vmatprep.subr.bf16.mxu0 0
      %5438 = vmatpush1.bf16.msra.mxu0 0
      %5439 = vmatprep.subr.bf16.mxu0 0
      %5440 = vmatpush1.bf16.msra.mxu0 0
      %5441 = vmatprep.subr.bf16.mxu0 0
      %5442 = vmatpush1.bf16.msra.mxu0 0
      %5443 = vmatprep.subr.bf16.mxu0 0
      %5444 = vmatpush1.bf16.msra.mxu0 0
      %5445 = vmatprep.subr.bf16.mxu0 0
      %5446 = vmatpush1.bf16.msra.mxu0 0
      %5447 = vmatprep.mubr.bf16.mxu0 0
      %5448 = vmatmul.mubr.bf16.gmra.mrb[0].mxu0 %v5413
      %v5449 = vpop.f32.mrb[0].mxu0
      %v5450 = vadd.f32 0.0, %v5449
      %v5451 = vpop.f32.mrb[0].mxu0
      %v5452 = vadd.f32 0.0, %v5451
      %v5453 = vpop.f32.mrb[0].mxu0
      %v5454 = vpop.f32.mrb[0].mxu0
      %5455 = vdwg.mxu0
      %5456 = vmatprep.subr.bf16.mxu0 %v5399
      %5457 = vmatpush1.bf16.msra.mxu0 %v5398
      %5458 = vmatprep.subr.bf16.mxu0 0
      %5459 = vmatpush1.bf16.msra.mxu0 0
      %5460 = vmatprep.subr.bf16.mxu0 0
      %5461 = vmatpush1.bf16.msra.mxu0 0
      %5462 = vmatprep.subr.bf16.mxu0 0
      %5463 = vmatpush1.bf16.msra.mxu0 0
      %5464 = vmatprep.subr.bf16.mxu0 0
      %5465 = vmatpush1.bf16.msra.mxu0 0
      %5466 = vmatprep.subr.bf16.mxu0 0
      %5467 = vmatpush1.bf16.msra.mxu0 0
      %5468 = vmatprep.subr.bf16.mxu0 0
      %5469 = vmatpush1.bf16.msra.mxu0 0
      %5470 = vmatprep.subr.bf16.mxu0 0
      %5471 = vmatpush1.bf16.msra.mxu0 0
      %5472 = vmatprep.subr.bf16.mxu0 0
      %5473 = vmatpush1.bf16.msra.mxu0 0
      %5474 = vmatprep.subr.bf16.mxu0 0
      %5475 = vmatpush1.bf16.msra.mxu0 0
      %5476 = vmatprep.subr.bf16.mxu0 0
      %5477 = vmatpush1.bf16.msra.mxu0 0
      %5478 = vmatprep.subr.bf16.mxu0 0
      %5479 = vmatpush1.bf16.msra.mxu0 0
      %5480 = vmatprep.subr.bf16.mxu0 0
      %5481 = vmatpush1.bf16.msra.mxu0 0
      %5482 = vmatprep.subr.bf16.mxu0 0
      %5483 = vmatpush1.bf16.msra.mxu0 0
      %5484 = vmatprep.subr.bf16.mxu0 0
      %5485 = vmatpush1.bf16.msra.mxu0 0
      %5486 = vmatprep.subr.bf16.mxu0 0
      %5487 = vmatpush1.bf16.msra.mxu0 0
      %5488 = vmatprep.mubr.bf16.mxu0 0
      %5489 = vmatmul.mubr.bf16.gmra.mrb[0].mxu0 %v5413
      %v5490 = vpop.f32.mrb[0].mxu0
      %v5491 = vadd.f32 0.0, %v5490
      %v5492 = vpop.f32.mrb[0].mxu0
      %v5493 = vadd.f32 0.0, %v5492
      %v5494 = vpop.f32.mrb[0].mxu0
      %v5495 = vpop.f32.mrb[0].mxu0
      %5496 = vdwg.mxu0
      %5497 = vmatprep.subr.bf16.mxu0 %v5401
      %5498 = vmatpush1.bf16.msra.mxu0 %v5400
      %5499 = vmatprep.subr.bf16.mxu0 0
      %5500 = vmatpush1.bf16.msra.mxu0 0
      %5501 = vmatprep.subr.bf16.mxu0 0
      %5502 = vmatpush1.bf16.msra.mxu0 0
      %5503 = vmatprep.subr.bf16.mxu0 0
      %5504 = vmatpush1.bf16.msra.mxu0 0
      %5505 = vmatprep.subr.bf16.mxu0 0
      %5506 = vmatpush1.bf16.msra.mxu0 0
      %5507 = vmatprep.subr.bf16.mxu0 0
      %5508 = vmatpush1.bf16.msra.mxu0 0
      %5509 = vmatprep.subr.bf16.mxu0 0
      %5510 = vmatpush1.bf16.msra.mxu0 0
      %5511 = vmatprep.subr.bf16.mxu0 0
      %5512 = vmatpush1.bf16.msra.mxu0 0
      %5513 = vmatprep.subr.bf16.mxu0 0
      %5514 = vmatpush1.bf16.msra.mxu0 0
      %5515 = vmatprep.subr.bf16.mxu0 0
      %5516 = vmatpush1.bf16.msra.mxu0 0
      %5517 = vmatprep.subr.bf16.mxu0 0
      %5518 = vmatpush1.bf16.msra.mxu0 0
      %5519 = vmatprep.subr.bf16.mxu0 0
      %5520 = vmatpush1.bf16.msra.mxu0 0
      %5521 = vmatprep.subr.bf16.mxu0 0
      %5522 = vmatpush1.bf16.msra.mxu0 0
      %5523 = vmatprep.subr.bf16.mxu0 0
      %5524 = vmatpush1.bf16.msra.mxu0 0
      %5525 = vmatprep.subr.bf16.mxu0 0
      %5526 = vmatpush1.bf16.msra.mxu0 0
      %5527 = vmatprep.subr.bf16.mxu0 0
      %5528 = vmatpush1.bf16.msra.mxu0 0
      %5529 = vmatprep.mubr.bf16.mxu0 0
      %5530 = vmatmul.mubr.bf16.gmra.mrb[0].mxu0 %v5413
      %v5531 = vpop.f32.mrb[0].mxu0
      %v5532 = vadd.f32 0.0, %v5531
      %v5533 = vpop.f32.mrb[0].mxu0
      %v5534 = vadd.f32 0.0, %v5533
      %v5535 = vpop.f32.mrb[0].mxu0
      %v5536 = vpop.f32.mrb[0].mxu0
      %5537 = vdwg.mxu0
      %5538 = vmatprep.subr.bf16.mxu0 %v5403
      %5539 = vmatpush1.bf16.msra.mxu0 %v5402
      %5540 = vmatprep.subr.bf16.mxu0 0
      %5541 = vmatpush1.bf16.msra.mxu0 0
      %5542 = vmatprep.subr.bf16.mxu0 0
      %5543 = vmatpush1.bf16.msra.mxu0 0
      %5544 = vmatprep.subr.bf16.mxu0 0
      %5545 = vmatpush1.bf16.msra.mxu0 0
      %5546 = vmatprep.subr.bf16.mxu0 0
      %5547 = vmatpush1.bf16.msra.mxu0 0
      %5548 = vmatprep.subr.bf16.mxu0 0
      %5549 = vmatpush1.bf16.msra.mxu0 0
      %5550 = vmatprep.subr.bf16.mxu0 0
      %5551 = vmatpush1.bf16.msra.mxu0 0
      %5552 = vmatprep.subr.bf16.mxu0 0
      %5553 = vmatpush1.bf16.msra.mxu0 0
      %5554 = vmatprep.subr.bf16.mxu0 0
      %5555 = vmatpush1.bf16.msra.mxu0 0
      %5556 = vmatprep.subr.bf16.mxu0 0
      %5557 = vmatpush1.bf16.msra.mxu0 0
      %5558 = vmatprep.subr.bf16.mxu0 0
      %5559 = vmatpush1.bf16.msra.mxu0 0
      %5560 = vmatprep.subr.bf16.mxu0 0
      %5561 = vmatpush1.bf16.msra.mxu0 0
      %5562 = vmatprep.subr.bf16.mxu0 0
      %5563 = vmatpush1.bf16.msra.mxu0 0
      %5564 = vmatprep.subr.bf16.mxu0 0
      %5565 = vmatpush1.bf16.msra.mxu0 0
      %5566 = vmatprep.subr.bf16.mxu0 0
      %5567 = vmatpush1.bf16.msra.mxu0 0
      %5568 = vmatprep.subr.bf16.mxu0 0
      %5569 = vmatpush1.bf16.msra.mxu0 0
      %5570 = vmatprep.mubr.bf16.mxu0 0
      %5571 = vmatmul.mubr.bf16.gmra.mrb[0].mxu0 %v5413
      %v5572 = vpop.f32.mrb[0].mxu0
      %v5573 = vadd.f32 0.0, %v5572
      %v5574 = vpop.f32.mrb[0].mxu0
      %v5575 = vadd.f32 0.0, %v5574
      %v5576 = vpop.f32.mrb[0].mxu0
      %v5577 = vpop.f32.mrb[0].mxu0
      %5578 = vdwg.mxu0
      %v5579 = vadd.f32 %v5369, %v5450
      %v5580 = vadd.f32 %v5370, %v5452
      %v5581 = vadd.f32 %v5371, %v5491
      %v5582 = vadd.f32 %v5372, %v5493
      %v5583 = vadd.f32 %v5373, %v5532
      %v5584 = vadd.f32 %v5374, %v5534
      %v5585 = vadd.f32 %v5375, %v5573
      %v5586 = vadd.f32 %v5376, %v5575
      %5587 = vrot.lane.b32.xlu0 %v368, 18
      %v5588 = vpop.permute.xlu0 %5587
      %5589 = vrot.lane.b32.xlu0 %v369, 18
      %v5590 = vpop.permute.xlu0 %5589
      %5591 = vrot.lane.b32.xlu0 %v370, 18
      %v5592 = vpop.permute.xlu0 %5591
      %5593 = vrot.lane.b32.xlu0 %v371, 18
      %v5594 = vpop.permute.xlu0 %5593
      %5595 = vrot.lane.b32.xlu0 %v372, 18
      %v5596 = vpop.permute.xlu0 %5595
      %5597 = vrot.lane.b32.xlu0 %v373, 18
      %v5598 = vpop.permute.xlu0 %5597
      %5599 = vrot.lane.b32.xlu0 %v374, 18
      %v5600 = vpop.permute.xlu0 %5599
      %5601 = vrot.lane.b32.xlu0 %v375, 18
      %v5602 = vpop.permute.xlu0 %5601
      %5603 = vrot.lane.b32.xlu0 %v3276, 18
      %v5604 = vpop.permute.xlu0 %5603
      %vm5605 = vcmask 146432
      %v5606 = vsel %vm5605, %v5588, %v5590
      %v5607 = vsel %vm5605, %v5590, %v5592
      %v5608 = vsel %vm5605, %v5592, %v5594
      %v5609 = vsel %vm5605, %v5594, %v5596
      %v5610 = vsel %vm5605, %v5596, %v5598
      %v5611 = vsel %vm5605, %v5598, %v5600
      %v5612 = vsel %vm5605, %v5600, %v5602
      %v5613 = vsel %vm5605, %v5602, %v5604
      %v5623 = vsel %vm411, %v337, 0
      %5625 = vmatprep.subr.bf16.mxu0 %v5607
      %5626 = vmatpush1.bf16.msra.mxu0 %v5606
      %5627 = vmatprep.subr.bf16.mxu0 0
      %5628 = vmatpush1.bf16.msra.mxu0 0
      %5629 = vmatprep.subr.bf16.mxu0 0
      %5630 = vmatpush1.bf16.msra.mxu0 0
      %5631 = vmatprep.subr.bf16.mxu0 0
      %5632 = vmatpush1.bf16.msra.mxu0 0
      %5633 = vmatprep.subr.bf16.mxu0 0
      %5634 = vmatpush1.bf16.msra.mxu0 0
      %5635 = vmatprep.subr.bf16.mxu0 0
      %5636 = vmatpush1.bf16.msra.mxu0 0
      %5637 = vmatprep.subr.bf16.mxu0 0
      %5638 = vmatpush1.bf16.msra.mxu0 0
      %5639 = vmatprep.subr.bf16.mxu0 0
      %5640 = vmatpush1.bf16.msra.mxu0 0
      %5641 = vmatprep.subr.bf16.mxu0 0
      %5642 = vmatpush1.bf16.msra.mxu0 0
      %5643 = vmatprep.subr.bf16.mxu0 0
      %5644 = vmatpush1.bf16.msra.mxu0 0
      %5645 = vmatprep.subr.bf16.mxu0 0
      %5646 = vmatpush1.bf16.msra.mxu0 0
      %5647 = vmatprep.subr.bf16.mxu0 0
      %5648 = vmatpush1.bf16.msra.mxu0 0
      %5649 = vmatprep.subr.bf16.mxu0 0
      %5650 = vmatpush1.bf16.msra.mxu0 0
      %5651 = vmatprep.subr.bf16.mxu0 0
      %5652 = vmatpush1.bf16.msra.mxu0 0
      %5653 = vmatprep.subr.bf16.mxu0 0
      %5654 = vmatpush1.bf16.msra.mxu0 0
      %5655 = vmatprep.subr.bf16.mxu0 0
      %5656 = vmatpush1.bf16.msra.mxu0 0
      %5657 = vmatprep.mubr.bf16.mxu0 0
      %5658 = vmatmul.mubr.bf16.gmra.mrb[0].mxu0 %v5623
      %v5659 = vpop.f32.mrb[0].mxu0
      %v5660 = vadd.f32 0.0, %v5659
      %v5661 = vpop.f32.mrb[0].mxu0
      %v5662 = vadd.f32 0.0, %v5661
      %v5663 = vpop.f32.mrb[0].mxu0
      %v5664 = vpop.f32.mrb[0].mxu0
      %5665 = vdwg.mxu0
      %5666 = vmatprep.subr.bf16.mxu0 %v5609
      %5667 = vmatpush1.bf16.msra.mxu0 %v5608
      %5668 = vmatprep.subr.bf16.mxu0 0
      %5669 = vmatpush1.bf16.msra.mxu0 0
      %5670 = vmatprep.subr.bf16.mxu0 0
      %5671 = vmatpush1.bf16.msra.mxu0 0
      %5672 = vmatprep.subr.bf16.mxu0 0
      %5673 = vmatpush1.bf16.msra.mxu0 0
      %5674 = vmatprep.subr.bf16.mxu0 0
      %5675 = vmatpush1.bf16.msra.mxu0 0
      %5676 = vmatprep.subr.bf16.mxu0 0
      %5677 = vmatpush1.bf16.msra.mxu0 0
      %5678 = vmatprep.subr.bf16.mxu0 0
      %5679 = vmatpush1.bf16.msra.mxu0 0
      %5680 = vmatprep.subr.bf16.mxu0 0
      %5681 = vmatpush1.bf16.msra.mxu0 0
      %5682 = vmatprep.subr.bf16.mxu0 0
      %5683 = vmatpush1.bf16.msra.mxu0 0
      %5684 = vmatprep.subr.bf16.mxu0 0
      %5685 = vmatpush1.bf16.msra.mxu0 0
      %5686 = vmatprep.subr.bf16.mxu0 0
      %5687 = vmatpush1.bf16.msra.mxu0 0
      %5688 = vmatprep.subr.bf16.mxu0 0
      %5689 = vmatpush1.bf16.msra.mxu0 0
      %5690 = vmatprep.subr.bf16.mxu0 0
      %5691 = vmatpush1.bf16.msra.mxu0 0
      %5692 = vmatprep.subr.bf16.mxu0 0
      %5693 = vmatpush1.bf16.msra.mxu0 0
      %5694 = vmatprep.subr.bf16.mxu0 0
      %5695 = vmatpush1.bf16.msra.mxu0 0
      %5696 = vmatprep.subr.bf16.mxu0 0
      %5697 = vmatpush1.bf16.msra.mxu0 0
      %5698 = vmatprep.mubr.bf16.mxu0 0
      %5699 = vmatmul.mubr.bf16.gmra.mrb[0].mxu0 %v5623
      %v5700 = vpop.f32.mrb[0].mxu0
      %v5701 = vadd.f32 0.0, %v5700
      %v5702 = vpop.f32.mrb[0].mxu0
      %v5703 = vadd.f32 0.0, %v5702
      %v5704 = vpop.f32.mrb[0].mxu0
      %v5705 = vpop.f32.mrb[0].mxu0
      %5706 = vdwg.mxu0
      %5707 = vmatprep.subr.bf16.mxu0 %v5611
      %5708 = vmatpush1.bf16.msra.mxu0 %v5610
      %5709 = vmatprep.subr.bf16.mxu0 0
      %5710 = vmatpush1.bf16.msra.mxu0 0
      %5711 = vmatprep.subr.bf16.mxu0 0
      %5712 = vmatpush1.bf16.msra.mxu0 0
      %5713 = vmatprep.subr.bf16.mxu0 0
      %5714 = vmatpush1.bf16.msra.mxu0 0
      %5715 = vmatprep.subr.bf16.mxu0 0
      %5716 = vmatpush1.bf16.msra.mxu0 0
      %5717 = vmatprep.subr.bf16.mxu0 0
      %5718 = vmatpush1.bf16.msra.mxu0 0
      %5719 = vmatprep.subr.bf16.mxu0 0
      %5720 = vmatpush1.bf16.msra.mxu0 0
      %5721 = vmatprep.subr.bf16.mxu0 0
      %5722 = vmatpush1.bf16.msra.mxu0 0
      %5723 = vmatprep.subr.bf16.mxu0 0
      %5724 = vmatpush1.bf16.msra.mxu0 0
      %5725 = vmatprep.subr.bf16.mxu0 0
      %5726 = vmatpush1.bf16.msra.mxu0 0
      %5727 = vmatprep.subr.bf16.mxu0 0
      %5728 = vmatpush1.bf16.msra.mxu0 0
      %5729 = vmatprep.subr.bf16.mxu0 0
      %5730 = vmatpush1.bf16.msra.mxu0 0
      %5731 = vmatprep.subr.bf16.mxu0 0
      %5732 = vmatpush1.bf16.msra.mxu0 0
      %5733 = vmatprep.subr.bf16.mxu0 0
      %5734 = vmatpush1.bf16.msra.mxu0 0
      %5735 = vmatprep.subr.bf16.mxu0 0
      %5736 = vmatpush1.bf16.msra.mxu0 0
      %5737 = vmatprep.subr.bf16.mxu0 0
      %5738 = vmatpush1.bf16.msra.mxu0 0
      %5739 = vmatprep.mubr.bf16.mxu0 0
      %5740 = vmatmul.mubr.bf16.gmra.mrb[0].mxu0 %v5623
      %v5741 = vpop.f32.mrb[0].mxu0
      %v5742 = vadd.f32 0.0, %v5741
      %v5743 = vpop.f32.mrb[0].mxu0
      %v5744 = vadd.f32 0.0, %v5743
      %v5745 = vpop.f32.mrb[0].mxu0
      %v5746 = vpop.f32.mrb[0].mxu0
      %5747 = vdwg.mxu0
      %5748 = vmatprep.subr.bf16.mxu0 %v5613
      %5749 = vmatpush1.bf16.msra.mxu0 %v5612
      %5750 = vmatprep.subr.bf16.mxu0 0
      %5751 = vmatpush1.bf16.msra.mxu0 0
      %5752 = vmatprep.subr.bf16.mxu0 0
      %5753 = vmatpush1.bf16.msra.mxu0 0
      %5754 = vmatprep.subr.bf16.mxu0 0
      %5755 = vmatpush1.bf16.msra.mxu0 0
      %5756 = vmatprep.subr.bf16.mxu0 0
      %5757 = vmatpush1.bf16.msra.mxu0 0
      %5758 = vmatprep.subr.bf16.mxu0 0
      %5759 = vmatpush1.bf16.msra.mxu0 0
      %5760 = vmatprep.subr.bf16.mxu0 0
      %5761 = vmatpush1.bf16.msra.mxu0 0
      %5762 = vmatprep.subr.bf16.mxu0 0
      %5763 = vmatpush1.bf16.msra.mxu0 0
      %5764 = vmatprep.subr.bf16.mxu0 0
      %5765 = vmatpush1.bf16.msra.mxu0 0
      %5766 = vmatprep.subr.bf16.mxu0 0
      %5767 = vmatpush1.bf16.msra.mxu0 0
      %5768 = vmatprep.subr.bf16.mxu0 0
      %5769 = vmatpush1.bf16.msra.mxu0 0
      %5770 = vmatprep.subr.bf16.mxu0 0
      %5771 = vmatpush1.bf16.msra.mxu0 0
      %5772 = vmatprep.subr.bf16.mxu0 0
      %5773 = vmatpush1.bf16.msra.mxu0 0
      %5774 = vmatprep.subr.bf16.mxu0 0
      %5775 = vmatpush1.bf16.msra.mxu0 0
      %5776 = vmatprep.subr.bf16.mxu0 0
      %5777 = vmatpush1.bf16.msra.mxu0 0
      %5778 = vmatprep.subr.bf16.mxu0 0
      %5779 = vmatpush1.bf16.msra.mxu0 0
      %5780 = vmatprep.mubr.bf16.mxu0 0
      %5781 = vmatmul.mubr.bf16.gmra.mrb[0].mxu0 %v5623
      %v5782 = vpop.f32.mrb[0].mxu0
      %v5783 = vadd.f32 0.0, %v5782
      %v5784 = vpop.f32.mrb[0].mxu0
      %v5785 = vadd.f32 0.0, %v5784
      %v5786 = vpop.f32.mrb[0].mxu0
      %v5787 = vpop.f32.mrb[0].mxu0
      %5788 = vdwg.mxu0
      %v5789 = vadd.f32 %v5579, %v5660
      %v5790 = vadd.f32 %v5580, %v5662
      %v5791 = vadd.f32 %v5581, %v5701
      %v5792 = vadd.f32 %v5582, %v5703
      %v5793 = vadd.f32 %v5583, %v5742
      %v5794 = vadd.f32 %v5584, %v5744
      %v5795 = vadd.f32 %v5585, %v5783
      %v5796 = vadd.f32 %v5586, %v5785
      %5797 = vrot.lane.b32.xlu0 %v368, 17
      %v5798 = vpop.permute.xlu0 %5797
      %5799 = vrot.lane.b32.xlu0 %v369, 17
      %v5800 = vpop.permute.xlu0 %5799
      %5801 = vrot.lane.b32.xlu0 %v370, 17
      %v5802 = vpop.permute.xlu0 %5801
      %5803 = vrot.lane.b32.xlu0 %v371, 17
      %v5804 = vpop.permute.xlu0 %5803
      %5805 = vrot.lane.b32.xlu0 %v372, 17
      %v5806 = vpop.permute.xlu0 %5805
      %5807 = vrot.lane.b32.xlu0 %v373, 17
      %v5808 = vpop.permute.xlu0 %5807
      %5809 = vrot.lane.b32.xlu0 %v374, 17
      %v5810 = vpop.permute.xlu0 %5809
      %5811 = vrot.lane.b32.xlu0 %v375, 17
      %v5812 = vpop.permute.xlu0 %5811
      %5813 = vrot.lane.b32.xlu0 %v3276, 17
      %v5814 = vpop.permute.xlu0 %5813
      %vm5815 = vcmask 138240
      %v5816 = vsel %vm5815, %v5798, %v5800
      %v5817 = vsel %vm5815, %v5800, %v5802
      %v5818 = vsel %vm5815, %v5802, %v5804
      %v5819 = vsel %vm5815, %v5804, %v5806
      %v5820 = vsel %vm5815, %v5806, %v5808
      %v5821 = vsel %vm5815, %v5808, %v5810
      %v5822 = vsel %vm5815, %v5810, %v5812
      %v5823 = vsel %vm5815, %v5812, %v5814
      %v5833 = vsel %vm411, %v338, 0
      %5835 = vmatprep.subr.bf16.mxu0 %v5817
      %5836 = vmatpush1.bf16.msra.mxu0 %v5816
      %5837 = vmatprep.subr.bf16.mxu0 0
      %5838 = vmatpush1.bf16.msra.mxu0 0
      %5839 = vmatprep.subr.bf16.mxu0 0
      %5840 = vmatpush1.bf16.msra.mxu0 0
      %5841 = vmatprep.subr.bf16.mxu0 0
      %5842 = vmatpush1.bf16.msra.mxu0 0
      %5843 = vmatprep.subr.bf16.mxu0 0
      %5844 = vmatpush1.bf16.msra.mxu0 0
      %5845 = vmatprep.subr.bf16.mxu0 0
      %5846 = vmatpush1.bf16.msra.mxu0 0
      %5847 = vmatprep.subr.bf16.mxu0 0
      %5848 = vmatpush1.bf16.msra.mxu0 0
      %5849 = vmatprep.subr.bf16.mxu0 0
      %5850 = vmatpush1.bf16.msra.mxu0 0
      %5851 = vmatprep.subr.bf16.mxu0 0
      %5852 = vmatpush1.bf16.msra.mxu0 0
      %5853 = vmatprep.subr.bf16.mxu0 0
      %5854 = vmatpush1.bf16.msra.mxu0 0
      %5855 = vmatprep.subr.bf16.mxu0 0
      %5856 = vmatpush1.bf16.msra.mxu0 0
      %5857 = vmatprep.subr.bf16.mxu0 0
      %5858 = vmatpush1.bf16.msra.mxu0 0
      %5859 = vmatprep.subr.bf16.mxu0 0
      %5860 = vmatpush1.bf16.msra.mxu0 0
      %5861 = vmatprep.subr.bf16.mxu0 0
      %5862 = vmatpush1.bf16.msra.mxu0 0
      %5863 = vmatprep.subr.bf16.mxu0 0
      %5864 = vmatpush1.bf16.msra.mxu0 0
      %5865 = vmatprep.subr.bf16.mxu0 0
      %5866 = vmatpush1.bf16.msra.mxu0 0
      %5867 = vmatprep.mubr.bf16.mxu0 0
      %5868 = vmatmul.mubr.bf16.gmra.mrb[0].mxu0 %v5833
      %v5869 = vpop.f32.mrb[0].mxu0
      %v5870 = vadd.f32 0.0, %v5869
      %v5871 = vpop.f32.mrb[0].mxu0
      %v5872 = vadd.f32 0.0, %v5871
      %v5873 = vpop.f32.mrb[0].mxu0
      %v5874 = vpop.f32.mrb[0].mxu0
      %5875 = vdwg.mxu0
      %5876 = vmatprep.subr.bf16.mxu0 %v5819
      %5877 = vmatpush1.bf16.msra.mxu0 %v5818
      %5878 = vmatprep.subr.bf16.mxu0 0
      %5879 = vmatpush1.bf16.msra.mxu0 0
      %5880 = vmatprep.subr.bf16.mxu0 0
      %5881 = vmatpush1.bf16.msra.mxu0 0
      %5882 = vmatprep.subr.bf16.mxu0 0
      %5883 = vmatpush1.bf16.msra.mxu0 0
      %5884 = vmatprep.subr.bf16.mxu0 0
      %5885 = vmatpush1.bf16.msra.mxu0 0
      %5886 = vmatprep.subr.bf16.mxu0 0
      %5887 = vmatpush1.bf16.msra.mxu0 0
      %5888 = vmatprep.subr.bf16.mxu0 0
      %5889 = vmatpush1.bf16.msra.mxu0 0
      %5890 = vmatprep.subr.bf16.mxu0 0
      %5891 = vmatpush1.bf16.msra.mxu0 0
      %5892 = vmatprep.subr.bf16.mxu0 0
      %5893 = vmatpush1.bf16.msra.mxu0 0
      %5894 = vmatprep.subr.bf16.mxu0 0
      %5895 = vmatpush1.bf16.msra.mxu0 0
      %5896 = vmatprep.subr.bf16.mxu0 0
      %5897 = vmatpush1.bf16.msra.mxu0 0
      %5898 = vmatprep.subr.bf16.mxu0 0
      %5899 = vmatpush1.bf16.msra.mxu0 0
      %5900 = vmatprep.subr.bf16.mxu0 0
      %5901 = vmatpush1.bf16.msra.mxu0 0
      %5902 = vmatprep.subr.bf16.mxu0 0
      %5903 = vmatpush1.bf16.msra.mxu0 0
      %5904 = vmatprep.subr.bf16.mxu0 0
      %5905 = vmatpush1.bf16.msra.mxu0 0
      %5906 = vmatprep.subr.bf16.mxu0 0
      %5907 = vmatpush1.bf16.msra.mxu0 0
      %5908 = vmatprep.mubr.bf16.mxu0 0
      %5909 = vmatmul.mubr.bf16.gmra.mrb[0].mxu0 %v5833
      %v5910 = vpop.f32.mrb[0].mxu0
      %v5911 = vadd.f32 0.0, %v5910
      %v5912 = vpop.f32.mrb[0].mxu0
      %v5913 = vadd.f32 0.0, %v5912
      %v5914 = vpop.f32.mrb[0].mxu0
      %v5915 = vpop.f32.mrb[0].mxu0
      %5916 = vdwg.mxu0
      %5917 = vmatprep.subr.bf16.mxu0 %v5821
      %5918 = vmatpush1.bf16.msra.mxu0 %v5820
      %5919 = vmatprep.subr.bf16.mxu0 0
      %5920 = vmatpush1.bf16.msra.mxu0 0
      %5921 = vmatprep.subr.bf16.mxu0 0
      %5922 = vmatpush1.bf16.msra.mxu0 0
      %5923 = vmatprep.subr.bf16.mxu0 0
      %5924 = vmatpush1.bf16.msra.mxu0 0
      %5925 = vmatprep.subr.bf16.mxu0 0
      %5926 = vmatpush1.bf16.msra.mxu0 0
      %5927 = vmatprep.subr.bf16.mxu0 0
      %5928 = vmatpush1.bf16.msra.mxu0 0
      %5929 = vmatprep.subr.bf16.mxu0 0
      %5930 = vmatpush1.bf16.msra.mxu0 0
      %5931 = vmatprep.subr.bf16.mxu0 0
      %5932 = vmatpush1.bf16.msra.mxu0 0
      %5933 = vmatprep.subr.bf16.mxu0 0
      %5934 = vmatpush1.bf16.msra.mxu0 0
      %5935 = vmatprep.subr.bf16.mxu0 0
      %5936 = vmatpush1.bf16.msra.mxu0 0
      %5937 = vmatprep.subr.bf16.mxu0 0
      %5938 = vmatpush1.bf16.msra.mxu0 0
      %5939 = vmatprep.subr.bf16.mxu0 0
      %5940 = vmatpush1.bf16.msra.mxu0 0
      %5941 = vmatprep.subr.bf16.mxu0 0
      %5942 = vmatpush1.bf16.msra.mxu0 0
      %5943 = vmatprep.subr.bf16.mxu0 0
      %5944 = vmatpush1.bf16.msra.mxu0 0
      %5945 = vmatprep.subr.bf16.mxu0 0
      %5946 = vmatpush1.bf16.msra.mxu0 0
      %5947 = vmatprep.subr.bf16.mxu0 0
      %5948 = vmatpush1.bf16.msra.mxu0 0
      %5949 = vmatprep.mubr.bf16.mxu0 0
      %5950 = vmatmul.mubr.bf16.gmra.mrb[0].mxu0 %v5833
      %v5951 = vpop.f32.mrb[0].mxu0
      %v5952 = vadd.f32 0.0, %v5951
      %v5953 = vpop.f32.mrb[0].mxu0
      %v5954 = vadd.f32 0.0, %v5953
      %v5955 = vpop.f32.mrb[0].mxu0
      %v5956 = vpop.f32.mrb[0].mxu0
      %5957 = vdwg.mxu0
      %5958 = vmatprep.subr.bf16.mxu0 %v5823
      %5959 = vmatpush1.bf16.msra.mxu0 %v5822
      %5960 = vmatprep.subr.bf16.mxu0 0
      %5961 = vmatpush1.bf16.msra.mxu0 0
      %5962 = vmatprep.subr.bf16.mxu0 0
      %5963 = vmatpush1.bf16.msra.mxu0 0
      %5964 = vmatprep.subr.bf16.mxu0 0
      %5965 = vmatpush1.bf16.msra.mxu0 0
      %5966 = vmatprep.subr.bf16.mxu0 0
      %5967 = vmatpush1.bf16.msra.mxu0 0
      %5968 = vmatprep.subr.bf16.mxu0 0
      %5969 = vmatpush1.bf16.msra.mxu0 0
      %5970 = vmatprep.subr.bf16.mxu0 0
      %5971 = vmatpush1.bf16.msra.mxu0 0
      %5972 = vmatprep.subr.bf16.mxu0 0
      %5973 = vmatpush1.bf16.msra.mxu0 0
      %5974 = vmatprep.subr.bf16.mxu0 0
      %5975 = vmatpush1.bf16.msra.mxu0 0
      %5976 = vmatprep.subr.bf16.mxu0 0
      %5977 = vmatpush1.bf16.msra.mxu0 0
      %5978 = vmatprep.subr.bf16.mxu0 0
      %5979 = vmatpush1.bf16.msra.mxu0 0
      %5980 = vmatprep.subr.bf16.mxu0 0
      %5981 = vmatpush1.bf16.msra.mxu0 0
      %5982 = vmatprep.subr.bf16.mxu0 0
      %5983 = vmatpush1.bf16.msra.mxu0 0
      %5984 = vmatprep.subr.bf16.mxu0 0
      %5985 = vmatpush1.bf16.msra.mxu0 0
      %5986 = vmatprep.subr.bf16.mxu0 0
      %5987 = vmatpush1.bf16.msra.mxu0 0
      %5988 = vmatprep.subr.bf16.mxu0 0
      %5989 = vmatpush1.bf16.msra.mxu0 0
      %5990 = vmatprep.mubr.bf16.mxu0 0
      %5991 = vmatmul.mubr.bf16.gmra.mrb[0].mxu0 %v5833
      %v5992 = vpop.f32.mrb[0].mxu0
      %v5993 = vadd.f32 0.0, %v5992
      %v5994 = vpop.f32.mrb[0].mxu0
      %v5995 = vadd.f32 0.0, %v5994
      %v5996 = vpop.f32.mrb[0].mxu0
      %v5997 = vpop.f32.mrb[0].mxu0
      %5998 = vdwg.mxu0
      %v5999 = vadd.f32 %v5789, %v5870
      %v6000 = vadd.f32 %v5790, %v5872
      %v6001 = vadd.f32 %v5791, %v5911
      %v6002 = vadd.f32 %v5792, %v5913
      %v6003 = vadd.f32 %v5793, %v5952
      %v6004 = vadd.f32 %v5794, %v5954
      %v6005 = vadd.f32 %v5795, %v5993
      %v6006 = vadd.f32 %v5796, %v5995
      %v6007 = vld [vmem:[%s2] sm:$0xff]
      %v6009 = vlaneseq
      %v6010 = vshrl.u32 %v6009, 7
      %v6011 = vsub.s32 0, %v6010
      %v6012 = vrot.slane %v6007, %v6011
      %v6013 = vlaneseq
      %v6014 = vshrl.u32 %v6013, 7
      %v6015 = vsub.s32 1, %v6014
      %v6016 = vrot.slane %v6007, %v6015
      %v6017 = vlaneseq
      %v6018 = vshrl.u32 %v6017, 7
      %v6019 = vsub.s32 2, %v6018
      %v6020 = vrot.slane %v6007, %v6019
      %v6021 = vlaneseq
      %v6022 = vshrl.u32 %v6021, 7
      %v6023 = vsub.s32 3, %v6022
      %v6024 = vrot.slane %v6007, %v6023
      %v6025 = vlaneseq
      %v6026 = vshrl.u32 %v6025, 7
      %v6027 = vsub.s32 4, %v6026
      %v6028 = vrot.slane %v6007, %v6027
      %v6029 = vlaneseq
      %v6030 = vshrl.u32 %v6029, 7
      %v6031 = vsub.s32 5, %v6030
      %v6032 = vrot.slane %v6007, %v6031
      %v6033 = vlaneseq
      %v6034 = vshrl.u32 %v6033, 7
      %v6035 = vsub.s32 6, %v6034
      %v6036 = vrot.slane %v6007, %v6035
      %v6037 = vlaneseq
      %v6038 = vshrl.u32 %v6037, 7
      %v6039 = vsub.s32 7, %v6038
      %v6040 = vrot.slane %v6007, %v6039
      %v6049 = vmul.f32 %v5999, %v6012
      %v6050 = vmul.f32 %v6000, %v6016
      %v6051 = vmul.f32 %v6001, %v6020
      %v6052 = vmul.f32 %v6002, %v6024
      %v6053 = vmul.f32 %v6003, %v6028
      %v6054 = vmul.f32 %v6004, %v6032
      %v6055 = vmul.f32 %v6005, %v6036
      %v6056 = vmul.f32 %v6006, %v6040
      %v6057 = vadd.f32 %v6049, %v6050
      %v6058 = vadd.f32 %v6057, %v6051
      %v6059 = vadd.f32 %v6058, %v6052
      %v6060 = vadd.f32 %v6059, %v6053
      %v6061 = vadd.f32 %v6060, %v6054
      %v6062 = vadd.f32 %v6061, %v6055
      %v6063 = vadd.f32 %v6062, %v6056
      %6064 = vadd.xlane.f32.xlu0 %v6063
      %v6065 = vpop.xlane.xlu0 %6064
      %v6066 = vrot.slane %v6065, 4
      %v6067 = vadd.f32 %v6065, %v6066
      %v6068 = vrot.slane %v6067, 2
      %v6069 = vadd.f32 %v6067, %v6068
      %v6070 = vrot.slane %v6069, 1
      %v6071 = vadd.f32 %v6069, %v6070
      %s6072 = vtos %v6071
      %v6073 = vstv %s6072
      %v6074 = vrcp.pop 4096.0
      %v6075 = vmul.f32 %v6073, %v6074
      %v6076 = vsub.f32 %v5999, %v6075
      %v6077 = vsub.f32 %v6000, %v6075
      %v6078 = vsub.f32 %v6001, %v6075
      %v6079 = vsub.f32 %v6002, %v6075
      %v6080 = vsub.f32 %v6003, %v6075
      %v6081 = vsub.f32 %v6004, %v6075
      %v6082 = vsub.f32 %v6005, %v6075
      %v6083 = vsub.f32 %v6006, %v6075
      %v6084 = vmul.f32 %v6076, %v6012
      %v6085 = vmul.f32 %v6077, %v6016
      %v6086 = vmul.f32 %v6078, %v6020
      %v6087 = vmul.f32 %v6079, %v6024
      %v6088 = vmul.f32 %v6080, %v6028
      %v6089 = vmul.f32 %v6081, %v6032
      %v6090 = vmul.f32 %v6082, %v6036
      %v6091 = vmul.f32 %v6083, %v6040
      %v6092 = vmul.f32 %v6084, %v6084
      %v6093 = vmul.f32 %v6085, %v6085
      %v6094 = vmul.f32 %v6086, %v6086
      %v6095 = vmul.f32 %v6087, %v6087
      %v6096 = vmul.f32 %v6088, %v6088
      %v6097 = vmul.f32 %v6089, %v6089
      %v6098 = vmul.f32 %v6090, %v6090
      %v6099 = vmul.f32 %v6091, %v6091
      %v6100 = vadd.f32 %v6092, %v6093
      %v6101 = vadd.f32 %v6100, %v6094
      %v6102 = vadd.f32 %v6101, %v6095
      %v6103 = vadd.f32 %v6102, %v6096
      %v6104 = vadd.f32 %v6103, %v6097
      %v6105 = vadd.f32 %v6104, %v6098
      %v6106 = vadd.f32 %v6105, %v6099
      %6107 = vadd.xlane.f32.xlu0 %v6106
      %v6108 = vpop.xlane.xlu0 %6107
      %v6109 = vrot.slane %v6108, 4
      %v6110 = vadd.f32 %v6108, %v6109
      %v6111 = vrot.slane %v6110, 2
      %v6112 = vadd.f32 %v6110, %v6111
      %v6113 = vrot.slane %v6112, 1
      %v6114 = vadd.f32 %v6112, %v6113
      %s6115 = vtos %v6114
      %v6116 = vstv %s6115
      %v6117 = vmul.f32 %v6116, %v6074
      %v6118 = vadd.f32 %v6117, 1e-05
      %v6119 = vrsqrt.pop %v6118
      %v6120 = vld [vmem:[%s287] sm:$0xff]
      %v6121 = vmul.f32 %v6119, %v6120
      %6123 = vset.pattern.permute.xlu0 0
      %6124 = vperm.xlu0 %6123, %v6121
      %v6125 = vpop.permute.xlu0 %6124
      %v6127 = vmul.f32 %v6076, %v6125
      %v6128 = vmul.f32 %v6077, %v6125
      %v6129 = vmul.f32 %v6078, %v6125
      %v6130 = vmul.f32 %v6079, %v6125
      %v6131 = vmul.f32 %v6080, %v6125
      %v6132 = vmul.f32 %v6081, %v6125
      %v6133 = vmul.f32 %v6082, %v6125
      %v6134 = vmul.f32 %v6083, %v6125
      %v6135 = vld [vmem:[%s291] sm:$0xff]
      %6137 = vset.pattern.permute.xlu0 0
      %6138 = vperm.xlu0 %6137, %v6135
      %v6139 = vpop.permute.xlu0 %6138
      %v6141 = vadd.f32 %v6127, %v6139
      %v6142 = vadd.f32 %v6128, %v6139
      %v6143 = vadd.f32 %v6129, %v6139
      %v6144 = vadd.f32 %v6130, %v6139
      %v6145 = vadd.f32 %v6131, %v6139
      %v6146 = vadd.f32 %v6132, %v6139
      %v6147 = vadd.f32 %v6133, %v6139
      %v6148 = vadd.f32 %v6134, %v6139
      %v6149 = vmax.f32 %v6141, 0.0
      %v6150 = vmax.f32 %v6142, 0.0
      %v6151 = vmax.f32 %v6143, 0.0
      %v6152 = vmax.f32 %v6144, 0.0
      %v6153 = vmax.f32 %v6145, 0.0
      %v6154 = vmax.f32 %v6146, 0.0
      %v6155 = vmax.f32 %v6147, 0.0
      %v6156 = vmax.f32 %v6148, 0.0
      %6157 = vst [vmem:[%s300] sm:$0xff] %v6149
      %6158 = vst [vmem:[%s300 + $0x8] sm:$0xff] %v6150
      %6159 = vst [vmem:[%s300 + $0x10] sm:$0xff] %v6151
      %6160 = vst [vmem:[%s300 + $0x18] sm:$0xff] %v6152
      %6161 = vst [vmem:[%s300 + $0x20] sm:$0xff] %v6153
      %6162 = vst [vmem:[%s300 + $0x28] sm:$0xff] %v6154
      %6163 = vst [vmem:[%s300 + $0x30] sm:$0xff] %v6155
      %6164 = vst [vmem:[%s300 + $0x38] sm:$0xff] %v6156
      %p6165 = scmp.lt.s32.totalorder %s20, 1
      %s6166 = scalar_select %p6165, %s20, 1
      %p6167 = scmp.lt.s32.totalorder %s21, 1
      %s6168 = scalar_select %p6167, %s21, 1
      %s6169 = smul.addr %s6168, 8
      %s6170 = smul.addr %s6166, 16
      %s6171 = sadd.s32 %s6169, %s6170
      %s6172 = smul.addr %s6171, 8
      %s6173 = scalar_lea.vmem %s5, %s6172
      // Predicated region
      $region41: #{residual_inner_pallas.1} parent=39 // pred_check
        %p6174 = pneg %p173
      $region42: #{residual_inner_pallas.1} parent=39 // pred_check_branch
        %6176 = sbr.rel (%p6174) target = $region44
      $region43: #{residual_inner_pallas.1} parent=39 // pred_region
        _
      $region44: #{residual_inner_pallas.1} parent=39 // pred_fallthru
        _
    $region40: #{residual_inner_pallas.1} parent=5 // pred_fallthru
      _
    %p6177 = scmp.le.s32.totalorder 2, %s11
    // Predicated region
    $region45: #{residual_inner_pallas.1} parent=5 // pred_check
      %p6178 = pneg %p6177
    $region46: #{residual_inner_pallas.1} parent=5 // pred_check_branch
      %6180 = sbr.rel (%p6178) target = $region48
    $region47: #{residual_inner_pallas.1} parent=5 // pred_region
      %s6181 = ssub.s32 %s11, 2
      // Predicated region
      $region49: #{residual_inner_pallas.1} parent=47 // pred_check
        %p6182 = pneg %p179
      $region50: #{residual_inner_pallas.1} parent=47 // pred_check_branch
        %6184 = sbr.rel (%p6182) target = $region52
      $region51: #{residual_inner_pallas.1} parent=47 // pred_region
        %p6185 = scmp.lt.s32.totalorder %s22, 1
        %s6186 = scalar_select %p6185, %s22, 1
        %p6187 = scmp.lt.s32.totalorder %s23, 1
        %s6188 = scalar_select %p6187, %s23, 1
        %s6189 = smul.addr %s6188, 8
        %s6190 = smul.addr %s6186, 16
        %s6191 = sadd.s32 %s6189, %s6190
        %s6192 = smul.addr %s6191, 8
        %s6193 = scalar_lea.vmem %s5, %s6192
      $region52: #{residual_inner_pallas.1} parent=47 // pred_fallthru
        _
    $region48: #{residual_inner_pallas.1} parent=5 // pred_fallthru
      _
  $region6: #{residual_inner_pallas.1} parent=0 // loop_footer
    %s15 = sadd.s32 1, %s11
  $region7: #{residual_inner_pallas.1} parent=0 // loop_footer_branch
    %10 = sbr.rel target = $region3
  $region8: #{residual_inner_pallas.1} parent=0 // loop_exit
    _

</llo_original>
